<compile_context>
chip_gen: v6e
topology: v6e:2x2x1
jax: 0.10.0
libtpu: 0.0.40
codegen_flags: <defaults>
</compile_context>

<pallas_src>
import functools
import math

import jax
import jax.numpy as jnp
from jax.experimental import pallas as pl
from jax.experimental.pallas import tpu as pltpu


# --------------------------------------------------------------------------------------
# In-kernel helpers (pure functions of jnp arrays).
# --------------------------------------------------------------------------------------
def _split_heads(mat, nhead, dh, base):
    """(T, >= base + nhead*dh) -> (nhead, T, dh) via lane slices stacked on a new major
    axis (no 3-D transpose; slices are 128-aligned at production F=1024)."""
    return jnp.stack(
        [mat[:, base + h * dh: base + (h + 1) * dh] for h in range(nhead)], axis=0)


def _merge_heads(ctx):
    """(H, T, dh) -> (T, H*dh) via a lane-axis concatenate (no 3-D transpose)."""
    return jnp.concatenate([ctx[h] for h in range(ctx.shape[0])], axis=1)


def _softmax_last(s):
    s = s - jnp.max(s, axis=-1, keepdims=True)
    p = jnp.exp(s)
    return p * pl.reciprocal(jnp.sum(p, axis=-1, keepdims=True), approx=True)


def _l2_normalize(t):
    # torch F.normalize(p=2, dim=-1): t / max(||t||_2, 1e-12)
    ss = jnp.sum(t * t, axis=-1, keepdims=True)
    return t * jax.lax.rsqrt(jnp.maximum(ss, 1e-24))


def _mhsa_fc(x_in, wqkv, bqkv, wo, bo, fc_w, fc_b, nhead, key_mask):
    """Packed-QKV multi-head self-attention + fused output projection + shared FC + ReLU.

    x_in : (T, F);  wqkv : (F, 3F);  bqkv : (1, 3F);  wo : (F, F);  bo : (1, F)
    key_mask : None or (1, 1, T) additive mask applied to the key axis of the scores.
    """
    T, F = x_in.shape
    dh = F // nhead
    scale = 1.0 / math.sqrt(dh)

    qkv = jnp.dot(x_in, wqkv, preferred_element_type=jnp.float32) + bqkv      # (T, 3F)
    q = _split_heads(qkv, nhead, dh, 0)                                       # (H, T, dh)
    k = _split_heads(qkv, nhead, dh, F)
    v = _split_heads(qkv, nhead, dh, 2 * F)

    s = jnp.einsum('hid,hjd->hij', q, k, preferred_element_type=jnp.float32) * scale
    if key_mask is not None:
        s = s + key_mask
    p = _softmax_last(s)                                                      # (H, T, T)
    ctx = jnp.einsum('hij,hjd->hid', p, v, preferred_element_type=jnp.float32)
    att = jnp.dot(_merge_heads(ctx), wo, preferred_element_type=jnp.float32) + bo
    y = jnp.dot(att, fc_w, preferred_element_type=jnp.float32) + fc_b
    return jnp.maximum(y, 0.0)


# --------------------------------------------------------------------------------------
# Fused kernel: grid = (batch, segment).  Segment axis is sequential ("arbitrary").
# --------------------------------------------------------------------------------------
def _encoder_kernel(x_ref,
                    g_wqkv_ref, g_bqkv_ref, g_wo_ref, g_bo_ref,
                    l_wqkv_ref, l_bqkv_ref, l_wo_ref, l_bo_ref,
                    fc_w_ref, fc_b_ref,
                    gamma_ref, beta_ref, enc_w_ref, enc_b_ref,
                    o_ref,
                    g_scr, wv_scr,
                    *, num_head, local_head, num_segments, seg_size, seq_len):
    seg = pl.program_id(1)
    S = seq_len
    T = seg_size
    s_pad, F = x_ref.shape                          # (NS*T, F) -- leading batch squeezed

    fc_w = fc_w_ref[...]                            # shared MultiAttention FC (F, F)
    fc_b = fc_b_ref[...]                            # (1, F)

    # ---- global branch: runs once per batch element, result persists in g_scr --------
    @pl.when(seg == 0)
    def _():
        xg = x_ref[...].astype(jnp.float32)                                  # (S_pad, F)
        if s_pad > S:
            kpos = jax.lax.broadcasted_iota(jnp.int32, (1, 1, s_pad), 2)
            gmask = jnp.where(kpos < S, 0.0, -1e30).astype(jnp.float32)
        else:
            gmask = None
        g_scr[...] = _mhsa_fc(xg, g_wqkv_ref[...], g_bqkv_ref[...],
                              g_wo_ref[...], g_bo_ref[...],
                              fc_w, fc_b, num_head, gmask)

    # ---- this grid step's local segment: MHSA + FC, normalize-add, scatter to wv -----
    left = seg * T
    if T % 8 == 0:
        left = pl.multiple_of(left, 8)              # aligned dynamic slices at prod sizes
    x_loc = x_ref[pl.ds(left, T), :].astype(jnp.float32)                     # (T, F)
    kpos = jax.lax.broadcasted_iota(jnp.int32, (1, 1, T), 2)
    lmask = jnp.where(left + kpos < S, 0.0, -1e30).astype(jnp.float32)       # ragged tail
    local_out = _mhsa_fc(x_loc, l_wqkv_ref[...], l_bqkv_ref[...],
                         l_wo_ref[...], l_bo_ref[...],
                         fc_w, fc_b, local_head, lmask)

    wv_scr[pl.ds(left, T), :] = (_l2_normalize(g_scr[pl.ds(left, T), :])
                                 + _l2_normalize(local_out))

    # ---- encoder head after the last segment: LayerNorm(eps=1e-5) -> Linear -> ReLU --
    @pl.when(seg == num_segments - 1)
    def _():
        wv = wv_scr[0:S, :]
        mu = jnp.mean(wv, axis=-1, keepdims=True)
        var = jnp.mean((wv - mu) * (wv - mu), axis=-1, keepdims=True)
        xn = (wv - mu) * jax.lax.rsqrt(var + 1e-5)
        xn = xn * gamma_ref[...] + beta_ref[...]
        y = jnp.dot(xn, enc_w_ref[...], preferred_element_type=jnp.float32) + enc_b_ref[...]
        o_ref[...] = jnp.maximum(y, 0.0).astype(o_ref.dtype)


# --------------------------------------------------------------------------------------
# Wrapper.
# --------------------------------------------------------------------------------------
def local_global_encoder(x, params, *, num_segments, num_head, local_attention_head):
    """x: (B, S, F) -> (B, S, F).  One fused pallas_call, grid = (B, num_segments)."""
    B, S, F = x.shape
    T = math.ceil(S / num_segments)
    S_pad = num_segments * T

    # Zero-pad the sequence so every per-segment slice is in-bounds; padded keys are
    # masked inside the kernel and padded rows never reach the output.
    x_pad = jnp.pad(x, ((0, 0), (0, S_pad - S), (0, 0))) if S_pad > S else x

    g_args = (params["g_wqkv"], params["g_bqkv"], params["g_wo"], params["g_bo"])
    l_args = (params["l_wqkv"], params["l_bqkv"], params["l_wo"], params["l_bo"])
    tail_args = (params["ma_fc_w"], params["ma_fc_b"],
                 params["ln_gamma"], params["ln_beta"],
                 params["enc_fc_w"], params["enc_fc_b"])

    kernel = functools.partial(_encoder_kernel,
                               num_head=num_head,
                               local_head=local_attention_head,
                               num_segments=num_segments,
                               seg_size=T,
                               seq_len=S)

    # Advisory cost estimate (helps XLA schedule around the custom call).
    d, dl = F // num_head, F // local_attention_head
    flops = B * (6 * S_pad * F * F + 4 * num_head * S_pad * S_pad * d + 4 * S_pad * F * F
                 + num_segments * (6 * T * F * F
                                   + 4 * local_attention_head * T * T * dl
                                   + 4 * T * F * F)
                 + 2 * S * F * F)
    transcendentals = B * (num_head * S_pad * S_pad
                           + num_segments * local_attention_head * T * T)
    bytes_accessed = 4 * (int(x.size) + B * S * F) \
        + 4 * sum(int(p.size) for p in params.values())

    def build_and_run(single_buffer_weights):
        def const_spec(arr):
            zeros = (0,) * arr.ndim
            if single_buffer_weights:
                # Grid-invariant weights: single-buffered -- double-buffering a constant
                # block only doubles its VMEM footprint with zero overlap benefit.
                return pl.BlockSpec(arr.shape, lambda b, s: zeros,
                                    pipeline_mode=pl.Buffered(1))
            return pl.BlockSpec(arr.shape, lambda b, s: zeros)

        def seg_spec(arr):
            trailing = (0,) * (arr.ndim - 1)
            # Only ONE segment's local-attention weights are VMEM-resident at a time.
            return pl.BlockSpec((None,) + arr.shape[1:], lambda b, s: (s,) + trailing)

        x_spec = pl.BlockSpec((None, S_pad, F), lambda b, s: (b, 0, 0))
        o_spec = pl.BlockSpec((None, S, F), lambda b, s: (b, 0, 0))
        in_specs = ([x_spec]
                    + [const_spec(a) for a in g_args]
                    + [seg_spec(a) for a in l_args]
                    + [const_spec(a) for a in tail_args])

        return pl.pallas_call(
            kernel,
            out_shape=jax.ShapeDtypeStruct((B, S, F), x.dtype),
            grid_spec=pltpu.PrefetchScalarGridSpec(
                num_scalar_prefetch=0,
                grid=(B, num_segments),
                in_specs=in_specs,
                out_specs=o_spec,
                scratch_shapes=[pltpu.VMEM((S_pad, F), jnp.float32),    # global branch
                                pltpu.VMEM((S_pad, F), jnp.float32)]),  # weighted_value
            compiler_params=pltpu.CompilerParams(
                dimension_semantics=("parallel", "arbitrary"),
                vmem_limit_bytes=64 * 1024 * 1024),  # tune per chip at production F
            cost_estimate=pl.CostEstimate(flops=int(flops),
                                          transcendentals=int(transcendentals),
                                          bytes_accessed=int(bytes_accessed)),
        )(x_pad, *g_args, *l_args, *tail_args)

    try:
        return build_and_run(single_buffer_weights=True)
    except Exception:
        # pipeline_mode=pl.Buffered(1) unsupported on this jax build -> default buffering.
        return build_and_run(single_buffer_weights=False)


# --------------------------------------------------------------------------------------
# Parameter construction (deterministic, nn.Linear-style uniform init), packed into the
# (F, 3F) / stacked-(NS, ...) layouts the kernel consumes.
# --------------------------------------------------------------------------------------
def init_linear(key, fan_in, fan_out):
    k1, k2 = jax.random.split(key)
    bound = 1.0 / math.sqrt(fan_in)
    w = jax.random.uniform(k1, (fan_in, fan_out), jnp.float32, -bound, bound)
    b = jax.random.uniform(k2, (1, fan_out), jnp.float32, -bound, bound)
    return w, b


def init_attention_packed(key, F, nhead):
    assert F % nhead == 0, "num_feature must be divisible by the head count"
    ks = jax.random.split(key, 4)
    wq, bq = init_linear(ks[0], F, F)
    wk, bk = init_linear(ks[1], F, F)
    wv, bv = init_linear(ks[2], F, F)
    wo, bo = init_linear(ks[3], F, F)
    wqkv = jnp.concatenate([wq, wk, wv], axis=1)    # (F, 3F)
    bqkv = jnp.concatenate([bq, bk, bv], axis=1)    # (1, 3F)
    return wqkv, bqkv, wo, bo


def init_local_global_encoder(key, num_feature, num_segments, num_head, local_head):
    F = num_feature
    keys = jax.random.split(key, 4 + num_segments)
    g_wqkv, g_bqkv, g_wo, g_bo = init_attention_packed(keys[0], F, num_head)
    locals_ = [init_attention_packed(keys[1 + s], F, local_head)
               for s in range(num_segments)]
    l_wqkv = jnp.stack([t[0] for t in locals_])     # (NS, F, 3F)
    l_bqkv = jnp.stack([t[1] for t in locals_])     # (NS, 1, 3F)
    l_wo = jnp.stack([t[2] for t in locals_])       # (NS, F, F)
    l_bo = jnp.stack([t[3] for t in locals_])       # (NS, 1, F)
    fc_w, fc_b = init_linear(keys[1 + num_segments], F, F)
    enc_w, enc_b = init_linear(keys[2 + num_segments], F, F)
    return {
        "g_wqkv": g_wqkv, "g_bqkv": g_bqkv, "g_wo": g_wo, "g_bo": g_bo,
        "l_wqkv": l_wqkv, "l_bqkv": l_bqkv, "l_wo": l_wo, "l_bo": l_bo,
        "ma_fc_w": fc_w, "ma_fc_b": fc_b,
        "ln_gamma": jnp.ones((1, F), jnp.float32),
        "ln_beta": jnp.zeros((1, F), jnp.float32),
        "enc_fc_w": enc_w, "enc_fc_b": enc_b,
    }


if __name__ == "__main__":
    # Small config consistent with the module:
    #   batch=2, seq=18, num_feature=32, num_head=8,
    #   num_segments=5 (segment_size=ceil(18/5)=4, last segment has length 2),
    #   local_attention_head=4.
    B, S, F = 2, 18, 32
    NUM_HEAD = 8
    NUM_SEGMENTS = 5
    LOCAL_HEAD = 4

    key = jax.random.PRNGKey(0)
    k_x, k_p = jax.random.split(key)
    x = jax.random.normal(k_x, (B, S, F), jnp.float32)
    params = init_local_global_encoder(k_p, F, NUM_SEGMENTS, NUM_HEAD, LOCAL_HEAD)

    out = local_global_encoder(
        x, params,
        num_segments=NUM_SEGMENTS, num_head=NUM_HEAD,
        local_attention_head=LOCAL_HEAD)
    out = jax.block_until_ready(out)
    assert out.shape == (B, S, F)
    assert bool(jnp.all(jnp.isfinite(out)))
    print("KERNEL_OK")
</pallas_src>

<mosaic_0001>
module attributes {stable_mosaic.version = 11 : i64} {
  func.func @_encoder_kernel(%arg0: i32, %arg1: i32, %arg2: memref<1x20x32xf32, #tpu.memory_space<vmem>>, %arg3: memref<32x96xf32, #tpu.memory_space<vmem>>, %arg4: memref<1x96xf32, #tpu.memory_space<vmem>>, %arg5: memref<32x32xf32, #tpu.memory_space<vmem>>, %arg6: memref<1x32xf32, #tpu.memory_space<vmem>>, %arg7: memref<1x32x96xf32, #tpu.memory_space<vmem>>, %arg8: memref<1x1x96xf32, #tpu.memory_space<vmem>>, %arg9: memref<1x32x32xf32, #tpu.memory_space<vmem>>, %arg10: memref<1x1x32xf32, #tpu.memory_space<vmem>>, %arg11: memref<32x32xf32, #tpu.memory_space<vmem>>, %arg12: memref<1x32xf32, #tpu.memory_space<vmem>>, %arg13: memref<1x32xf32, #tpu.memory_space<vmem>>, %arg14: memref<1x32xf32, #tpu.memory_space<vmem>>, %arg15: memref<32x32xf32, #tpu.memory_space<vmem>>, %arg16: memref<1x32xf32, #tpu.memory_space<vmem>>, %arg17: memref<1x18x32xf32, #tpu.memory_space<vmem>>, %arg18: memref<20x32xf32, #tpu.memory_space<vmem>>, %arg19: memref<20x32xf32, #tpu.memory_space<vmem>>) attributes {dimension_semantics = [#tpu.dimension_semantics<parallel>, #tpu.dimension_semantics<arbitrary>], iteration_bounds = array<i64: 2, 5>, scalar_prefetch = 0 : i64, scratch_operands = 2 : i64, tpu.core_type = #tpu.core_type<tc>, window_params = [{transform_indices = @transform_0, window_bounds = array<i64: 1, 20, 32>}, {pipeline_mode = #tpu.pipeline_mode<synchronous>, transform_indices = @transform_1, window_bounds = array<i64: 32, 96>}, {pipeline_mode = #tpu.pipeline_mode<synchronous>, transform_indices = @transform_2, window_bounds = array<i64: 1, 96>}, {pipeline_mode = #tpu.pipeline_mode<synchronous>, transform_indices = @transform_3, window_bounds = array<i64: 32, 32>}, {pipeline_mode = #tpu.pipeline_mode<synchronous>, transform_indices = @transform_4, window_bounds = array<i64: 1, 32>}, {transform_indices = @transform_5, window_bounds = array<i64: 1, 32, 96>}, {transform_indices = @transform_6, window_bounds = array<i64: 1, 1, 96>}, {transform_indices = @transform_7, window_bounds = array<i64: 1, 32, 32>}, {transform_indices = @transform_8, window_bounds = array<i64: 1, 1, 32>}, {pipeline_mode = #tpu.pipeline_mode<synchronous>, transform_indices = @transform_9, window_bounds = array<i64: 32, 32>}, {pipeline_mode = #tpu.pipeline_mode<synchronous>, transform_indices = @transform_10, window_bounds = array<i64: 1, 32>}, {pipeline_mode = #tpu.pipeline_mode<synchronous>, transform_indices = @transform_11, window_bounds = array<i64: 1, 32>}, {pipeline_mode = #tpu.pipeline_mode<synchronous>, transform_indices = @transform_12, window_bounds = array<i64: 1, 32>}, {pipeline_mode = #tpu.pipeline_mode<synchronous>, transform_indices = @transform_13, window_bounds = array<i64: 32, 32>}, {pipeline_mode = #tpu.pipeline_mode<synchronous>, transform_indices = @transform_14, window_bounds = array<i64: 1, 32>}, {transform_indices = @transform_15, window_bounds = array<i64: 1, 18, 32>}]} {
    %c0 = arith.constant 0 : index
    %c0_0 = arith.constant 0 : index
    %0 = vector.load %arg11[%c0, %c0_0] : memref<32x32xf32, #tpu.memory_space<vmem>>, vector<32x32xf32>
    %c0_1 = arith.constant 0 : index
    %c0_2 = arith.constant 0 : index
    %1 = vector.load %arg12[%c0_1, %c0_2] : memref<1x32xf32, #tpu.memory_space<vmem>>, vector<1x32xf32>
    %c0_i32 = arith.constant 0 : i32
    %2 = arith.cmpi eq, %arg1, %c0_i32 : i32
    %3 = arith.extui %2 : i1 to i32
    %c0_i32_3 = arith.constant 0 : i32
    %4 = arith.cmpi ne, %3, %c0_i32_3 : i32
    scf.if %4 {
      %c0_36 = arith.constant 0 : index
      %c0_37 = arith.constant 0 : index
      %c0_38 = arith.constant 0 : index
      %112 = vector.load %arg2[%c0_36, %c0_37, %c0_38] : memref<1x20x32xf32, #tpu.memory_space<vmem>>, vector<1x20x32xf32>
      %113 = vector.shape_cast %112 : vector<1x20x32xf32> to vector<20x32xf32>
      %114 = tpu.iota {dimensions = array<i32: 2>} : vector<1x1x20xi32>
      %c18_i32_39 = arith.constant 18 : i32
      %115 = vector.broadcast %c18_i32_39 : i32 to vector<1x1x20xi32>
      %116 = arith.cmpi slt, %114, %115 : vector<1x1x20xi32>
      %cst_40 = arith.constant 0.000000e+00 : f32
      %cst_41 = arith.constant -1.000000e+30 : f32
      %117 = vector.broadcast %cst_40 : f32 to vector<1x1x20xf32>
      %118 = vector.broadcast %cst_41 : f32 to vector<1x1x20xf32>
      %119 = arith.select %116, %117, %118 : vector<1x1x20xi1>, vector<1x1x20xf32>
      %c0_42 = arith.constant 0 : index
      %c0_43 = arith.constant 0 : index
      %120 = vector.load %arg3[%c0_42, %c0_43] : memref<32x96xf32, #tpu.memory_space<vmem>>, vector<32x96xf32>
      %c0_44 = arith.constant 0 : index
      %c0_45 = arith.constant 0 : index
      %121 = vector.load %arg4[%c0_44, %c0_45] : memref<1x96xf32, #tpu.memory_space<vmem>>, vector<1x96xf32>
      %c0_46 = arith.constant 0 : index
      %c0_47 = arith.constant 0 : index
      %122 = vector.load %arg5[%c0_46, %c0_47] : memref<32x32xf32, #tpu.memory_space<vmem>>, vector<32x32xf32>
      %c0_48 = arith.constant 0 : index
      %c0_49 = arith.constant 0 : index
      %123 = vector.load %arg6[%c0_48, %c0_49] : memref<1x32xf32, #tpu.memory_space<vmem>>, vector<1x32xf32>
      %cst_50 = arith.constant dense<0.000000e+00> : vector<20x96xf32>
      %124 = tpu.matmul %113, %120, %cst_50 {dimension_numbers = #tpu.dot_dimension_numbers<[1], [0], [0], [1], [0, 0, 1, 1], [], []>} : vector<20x32xf32>, vector<32x96xf32>, vector<20x96xf32> -> vector<20x96xf32>
      %125 = vector.broadcast %121 : vector<1x96xf32> to vector<20x96xf32>
      %126 = arith.addf %124, %125 : vector<20x96xf32>
      %127 = vector.extract_strided_slice %126 {offsets = [0, 0], sizes = [20, 4], strides = [1, 1]} : vector<20x96xf32> to vector<20x4xf32>
      %128 = vector.extract_strided_slice %126 {offsets = [0, 4], sizes = [20, 4], strides = [1, 1]} : vector<20x96xf32> to vector<20x4xf32>
      %129 = vector.extract_strided_slice %126 {offsets = [0, 8], sizes = [20, 4], strides = [1, 1]} : vector<20x96xf32> to vector<20x4xf32>
      %130 = vector.extract_strided_slice %126 {offsets = [0, 12], sizes = [20, 4], strides = [1, 1]} : vector<20x96xf32> to vector<20x4xf32>
      %131 = vector.extract_strided_slice %126 {offsets = [0, 16], sizes = [20, 4], strides = [1, 1]} : vector<20x96xf32> to vector<20x4xf32>
      %132 = vector.extract_strided_slice %126 {offsets = [0, 20], sizes = [20, 4], strides = [1, 1]} : vector<20x96xf32> to vector<20x4xf32>
      %133 = vector.extract_strided_slice %126 {offsets = [0, 24], sizes = [20, 4], strides = [1, 1]} : vector<20x96xf32> to vector<20x4xf32>
      %134 = vector.extract_strided_slice %126 {offsets = [0, 28], sizes = [20, 4], strides = [1, 1]} : vector<20x96xf32> to vector<20x4xf32>
      %135 = vector.shape_cast %127 : vector<20x4xf32> to vector<1x20x4xf32>
      %136 = vector.shape_cast %128 : vector<20x4xf32> to vector<1x20x4xf32>
      %137 = vector.shape_cast %129 : vector<20x4xf32> to vector<1x20x4xf32>
      %138 = vector.shape_cast %130 : vector<20x4xf32> to vector<1x20x4xf32>
      %139 = vector.shape_cast %131 : vector<20x4xf32> to vector<1x20x4xf32>
      %140 = vector.shape_cast %132 : vector<20x4xf32> to vector<1x20x4xf32>
      %141 = vector.shape_cast %133 : vector<20x4xf32> to vector<1x20x4xf32>
      %142 = vector.shape_cast %134 : vector<20x4xf32> to vector<1x20x4xf32>
      %143 = tpu.concatenate %135, %136, %137, %138, %139, %140, %141, %142 in 0 : vector<1x20x4xf32>, vector<1x20x4xf32>, vector<1x20x4xf32>, vector<1x20x4xf32>, vector<1x20x4xf32>, vector<1x20x4xf32>, vector<1x20x4xf32>, vector<1x20x4xf32> -> vector<8x20x4xf32>
      %144 = vector.extract_strided_slice %126 {offsets = [0, 32], sizes = [20, 4], strides = [1, 1]} : vector<20x96xf32> to vector<20x4xf32>
      %145 = vector.extract_strided_slice %126 {offsets = [0, 36], sizes = [20, 4], strides = [1, 1]} : vector<20x96xf32> to vector<20x4xf32>
      %146 = vector.extract_strided_slice %126 {offsets = [0, 40], sizes = [20, 4], strides = [1, 1]} : vector<20x96xf32> to vector<20x4xf32>
      %147 = vector.extract_strided_slice %126 {offsets = [0, 44], sizes = [20, 4], strides = [1, 1]} : vector<20x96xf32> to vector<20x4xf32>
      %148 = vector.extract_strided_slice %126 {offsets = [0, 48], sizes = [20, 4], strides = [1, 1]} : vector<20x96xf32> to vector<20x4xf32>
      %149 = vector.extract_strided_slice %126 {offsets = [0, 52], sizes = [20, 4], strides = [1, 1]} : vector<20x96xf32> to vector<20x4xf32>
      %150 = vector.extract_strided_slice %126 {offsets = [0, 56], sizes = [20, 4], strides = [1, 1]} : vector<20x96xf32> to vector<20x4xf32>
      %151 = vector.extract_strided_slice %126 {offsets = [0, 60], sizes = [20, 4], strides = [1, 1]} : vector<20x96xf32> to vector<20x4xf32>
      %152 = vector.shape_cast %144 : vector<20x4xf32> to vector<1x20x4xf32>
      %153 = vector.shape_cast %145 : vector<20x4xf32> to vector<1x20x4xf32>
      %154 = vector.shape_cast %146 : vector<20x4xf32> to vector<1x20x4xf32>
      %155 = vector.shape_cast %147 : vector<20x4xf32> to vector<1x20x4xf32>
      %156 = vector.shape_cast %148 : vector<20x4xf32> to vector<1x20x4xf32>
      %157 = vector.shape_cast %149 : vector<20x4xf32> to vector<1x20x4xf32>
      %158 = vector.shape_cast %150 : vector<20x4xf32> to vector<1x20x4xf32>
      %159 = vector.shape_cast %151 : vector<20x4xf32> to vector<1x20x4xf32>
      %160 = tpu.concatenate %152, %153, %154, %155, %156, %157, %158, %159 in 0 : vector<1x20x4xf32>, vector<1x20x4xf32>, vector<1x20x4xf32>, vector<1x20x4xf32>, vector<1x20x4xf32>, vector<1x20x4xf32>, vector<1x20x4xf32>, vector<1x20x4xf32> -> vector<8x20x4xf32>
      %161 = vector.extract_strided_slice %126 {offsets = [0, 64], sizes = [20, 4], strides = [1, 1]} : vector<20x96xf32> to vector<20x4xf32>
      %162 = vector.extract_strided_slice %126 {offsets = [0, 68], sizes = [20, 4], strides = [1, 1]} : vector<20x96xf32> to vector<20x4xf32>
      %163 = vector.extract_strided_slice %126 {offsets = [0, 72], sizes = [20, 4], strides = [1, 1]} : vector<20x96xf32> to vector<20x4xf32>
      %164 = vector.extract_strided_slice %126 {offsets = [0, 76], sizes = [20, 4], strides = [1, 1]} : vector<20x96xf32> to vector<20x4xf32>
      %165 = vector.extract_strided_slice %126 {offsets = [0, 80], sizes = [20, 4], strides = [1, 1]} : vector<20x96xf32> to vector<20x4xf32>
      %166 = vector.extract_strided_slice %126 {offsets = [0, 84], sizes = [20, 4], strides = [1, 1]} : vector<20x96xf32> to vector<20x4xf32>
      %167 = vector.extract_strided_slice %126 {offsets = [0, 88], sizes = [20, 4], strides = [1, 1]} : vector<20x96xf32> to vector<20x4xf32>
      %168 = vector.extract_strided_slice %126 {offsets = [0, 92], sizes = [20, 4], strides = [1, 1]} : vector<20x96xf32> to vector<20x4xf32>
      %169 = vector.shape_cast %161 : vector<20x4xf32> to vector<1x20x4xf32>
      %170 = vector.shape_cast %162 : vector<20x4xf32> to vector<1x20x4xf32>
      %171 = vector.shape_cast %163 : vector<20x4xf32> to vector<1x20x4xf32>
      %172 = vector.shape_cast %164 : vector<20x4xf32> to vector<1x20x4xf32>
      %173 = vector.shape_cast %165 : vector<20x4xf32> to vector<1x20x4xf32>
      %174 = vector.shape_cast %166 : vector<20x4xf32> to vector<1x20x4xf32>
      %175 = vector.shape_cast %167 : vector<20x4xf32> to vector<1x20x4xf32>
      %176 = vector.shape_cast %168 : vector<20x4xf32> to vector<1x20x4xf32>
      %177 = tpu.concatenate %169, %170, %171, %172, %173, %174, %175, %176 in 0 : vector<1x20x4xf32>, vector<1x20x4xf32>, vector<1x20x4xf32>, vector<1x20x4xf32>, vector<1x20x4xf32>, vector<1x20x4xf32>, vector<1x20x4xf32>, vector<1x20x4xf32> -> vector<8x20x4xf32>
      "tpu.trace_start"() <{level = 10 : i32, message = "hid,hjd->hij"}> : () -> ()
      %cst_51 = arith.constant dense<0.000000e+00> : vector<8x20x20xf32>
      %178 = tpu.matmul %143, %160, %cst_51 {dimension_numbers = #tpu.dot_dimension_numbers<[2], [2], [1], [1], [0, 0, 0, 1, 1, 1], [0], [0]>} : vector<8x20x4xf32>, vector<8x20x4xf32>, vector<8x20x20xf32> -> vector<8x20x20xf32>
      "tpu.trace_stop"() : () -> ()
      %cst_52 = arith.constant 5.000000e-01 : f32
      %179 = vector.broadcast %cst_52 : f32 to vector<8x20x20xf32>
      %180 = arith.mulf %178, %179 : vector<8x20x20xf32>
      %181 = vector.broadcast %119 : vector<1x1x20xf32> to vector<8x20x20xf32>
      %182 = arith.addf %180, %181 : vector<8x20x20xf32>
      %cst_53 = arith.constant dense<0xFF800000> : vector<8x20xf32>
      %183 = vector.multi_reduction <maximumf>, %182, %cst_53 [2] : vector<8x20x20xf32> to vector<8x20xf32>
      %184 = vector.shape_cast %183 : vector<8x20xf32> to vector<8x20x1xf32>
      %185 = vector.broadcast %184 : vector<8x20x1xf32> to vector<8x20x20xf32>
      %186 = arith.subf %182, %185 : vector<8x20x20xf32>
      %187 = math.exp %186 : vector<8x20x20xf32>
      %cst_54 = arith.constant dense<0.000000e+00> : vector<8x20xf32>
      %188 = vector.multi_reduction <add>, %187, %cst_54 [2] : vector<8x20x20xf32> to vector<8x20xf32>
      %189 = vector.shape_cast %188 : vector<8x20xf32> to vector<8x20x1xf32>
      %190 = tpu.reciprocal %189 {approx = true} : vector<8x20x1xf32> -> vector<8x20x1xf32>
      %191 = vector.broadcast %190 : vector<8x20x1xf32> to vector<8x20x20xf32>
      %192 = arith.mulf %187, %191 : vector<8x20x20xf32>
      "tpu.trace_start"() <{level = 10 : i32, message = "hij,hjd->hid"}> : () -> ()
      %cst_55 = arith.constant dense<0.000000e+00> : vector<8x20x4xf32>
      %193 = tpu.matmul %192, %177, %cst_55 {dimension_numbers = #tpu.dot_dimension_numbers<[2], [1], [1], [2], [0, 0, 0, 1, 1, 2], [0], [0]>} : vector<8x20x20xf32>, vector<8x20x4xf32>, vector<8x20x4xf32> -> vector<8x20x4xf32>
      "tpu.trace_stop"() : () -> ()
      %194 = vector.extract_strided_slice %193 {offsets = [0, 0, 0], sizes = [1, 20, 4], strides = [1, 1, 1]} : vector<8x20x4xf32> to vector<1x20x4xf32>
      %195 = vector.shape_cast %194 : vector<1x20x4xf32> to vector<20x4xf32>
      %196 = vector.extract_strided_slice %193 {offsets = [1, 0, 0], sizes = [1, 20, 4], strides = [1, 1, 1]} : vector<8x20x4xf32> to vector<1x20x4xf32>
      %197 = vector.shape_cast %196 : vector<1x20x4xf32> to vector<20x4xf32>
      %198 = vector.extract_strided_slice %193 {offsets = [2, 0, 0], sizes = [1, 20, 4], strides = [1, 1, 1]} : vector<8x20x4xf32> to vector<1x20x4xf32>
      %199 = vector.shape_cast %198 : vector<1x20x4xf32> to vector<20x4xf32>
      %200 = vector.extract_strided_slice %193 {offsets = [3, 0, 0], sizes = [1, 20, 4], strides = [1, 1, 1]} : vector<8x20x4xf32> to vector<1x20x4xf32>
      %201 = vector.shape_cast %200 : vector<1x20x4xf32> to vector<20x4xf32>
      %202 = vector.extract_strided_slice %193 {offsets = [4, 0, 0], sizes = [1, 20, 4], strides = [1, 1, 1]} : vector<8x20x4xf32> to vector<1x20x4xf32>
      %203 = vector.shape_cast %202 : vector<1x20x4xf32> to vector<20x4xf32>
      %204 = vector.extract_strided_slice %193 {offsets = [5, 0, 0], sizes = [1, 20, 4], strides = [1, 1, 1]} : vector<8x20x4xf32> to vector<1x20x4xf32>
      %205 = vector.shape_cast %204 : vector<1x20x4xf32> to vector<20x4xf32>
      %206 = vector.extract_strided_slice %193 {offsets = [6, 0, 0], sizes = [1, 20, 4], strides = [1, 1, 1]} : vector<8x20x4xf32> to vector<1x20x4xf32>
      %207 = vector.shape_cast %206 : vector<1x20x4xf32> to vector<20x4xf32>
      %208 = vector.extract_strided_slice %193 {offsets = [7, 0, 0], sizes = [1, 20, 4], strides = [1, 1, 1]} : vector<8x20x4xf32> to vector<1x20x4xf32>
      %209 = vector.shape_cast %208 : vector<1x20x4xf32> to vector<20x4xf32>
      %210 = tpu.concatenate %195, %197, %199, %201, %203, %205, %207, %209 in 1 : vector<20x4xf32>, vector<20x4xf32>, vector<20x4xf32>, vector<20x4xf32>, vector<20x4xf32>, vector<20x4xf32>, vector<20x4xf32>, vector<20x4xf32> -> vector<20x32xf32>
      %cst_56 = arith.constant dense<0.000000e+00> : vector<20x32xf32>
      %211 = tpu.matmul %210, %122, %cst_56 {dimension_numbers = #tpu.dot_dimension_numbers<[1], [0], [0], [1], [0, 0, 1, 1], [], []>} : vector<20x32xf32>, vector<32x32xf32>, vector<20x32xf32> -> vector<20x32xf32>
      %212 = vector.broadcast %123 : vector<1x32xf32> to vector<20x32xf32>
      %213 = arith.addf %211, %212 : vector<20x32xf32>
      %cst_57 = arith.constant dense<0.000000e+00> : vector<20x32xf32>
      %214 = tpu.matmul %213, %0, %cst_57 {dimension_numbers = #tpu.dot_dimension_numbers<[1], [0], [0], [1], [0, 0, 1, 1], [], []>} : vector<20x32xf32>, vector<32x32xf32>, vector<20x32xf32> -> vector<20x32xf32>
      %215 = vector.broadcast %1 : vector<1x32xf32> to vector<20x32xf32>
      %216 = arith.addf %214, %215 : vector<20x32xf32>
      %cst_58 = arith.constant 0.000000e+00 : f32
      %217 = vector.broadcast %cst_58 : f32 to vector<20x32xf32>
      %218 = arith.maximumf %216, %217 : vector<20x32xf32>
      %c0_59 = arith.constant 0 : index
      %c0_60 = arith.constant 0 : index
      %219 = vector.load %arg18[%c0_59, %c0_60] : memref<20x32xf32, #tpu.memory_space<vmem>>, vector<20x32xf32>
      tpu.vector_store %arg18[%c0_59, %c0_60], %218 {strides = array<i32>} : memref<20x32xf32, #tpu.memory_space<vmem>>, vector<20x32xf32>,
    } else {
    }
    %c4_i32 = arith.constant 4 : i32
    %5 = arith.muli %arg1, %c4_i32 : i32
    %c0_4 = arith.constant 0 : index
    %6 = arith.index_cast %5 : i32 to index
    %c0_5 = arith.constant 0 : index
    %7 = vector.load %arg2[%c0_4, %6, %c0_5] : memref<1x20x32xf32, #tpu.memory_space<vmem>>, vector<1x4x32xf32>
    %8 = vector.shape_cast %7 : vector<1x4x32xf32> to vector<4x32xf32>
    %9 = tpu.iota {dimensions = array<i32: 2>} : vector<1x1x4xi32>
    %10 = vector.broadcast %5 : i32 to vector<1x1x4xi32>
    %11 = arith.addi %10, %9 : vector<1x1x4xi32>
    %c18_i32 = arith.constant 18 : i32
    %12 = vector.broadcast %c18_i32 : i32 to vector<1x1x4xi32>
    %13 = arith.cmpi slt, %11, %12 : vector<1x1x4xi32>
    %cst = arith.constant 0.000000e+00 : f32
    %cst_6 = arith.constant -1.000000e+30 : f32
    %14 = vector.broadcast %cst : f32 to vector<1x1x4xf32>
    %15 = vector.broadcast %cst_6 : f32 to vector<1x1x4xf32>
    %16 = arith.select %13, %14, %15 : vector<1x1x4xi1>, vector<1x1x4xf32>
    %c0_7 = arith.constant 0 : index
    %c0_8 = arith.constant 0 : index
    %c0_9 = arith.constant 0 : index
    %17 = vector.load %arg7[%c0_7, %c0_8, %c0_9] : memref<1x32x96xf32, #tpu.memory_space<vmem>>, vector<1x32x96xf32>
    %18 = vector.shape_cast %17 : vector<1x32x96xf32> to vector<32x96xf32>
    %c0_10 = arith.constant 0 : index
    %c0_11 = arith.constant 0 : index
    %c0_12 = arith.constant 0 : index
    %19 = vector.load %arg8[%c0_10, %c0_11, %c0_12] : memref<1x1x96xf32, #tpu.memory_space<vmem>>, vector<1x1x96xf32>
    %20 = vector.shape_cast %19 : vector<1x1x96xf32> to vector<1x96xf32>
    %c0_13 = arith.constant 0 : index
    %c0_14 = arith.constant 0 : index
    %c0_15 = arith.constant 0 : index
    %21 = vector.load %arg9[%c0_13, %c0_14, %c0_15] : memref<1x32x32xf32, #tpu.memory_space<vmem>>, vector<1x32x32xf32>
    %22 = vector.shape_cast %21 : vector<1x32x32xf32> to vector<32x32xf32>
    %c0_16 = arith.constant 0 : index
    %c0_17 = arith.constant 0 : index
    %c0_18 = arith.constant 0 : index
    %23 = vector.load %arg10[%c0_16, %c0_17, %c0_18] : memref<1x1x32xf32, #tpu.memory_space<vmem>>, vector<1x1x32xf32>
    %24 = vector.shape_cast %23 : vector<1x1x32xf32> to vector<1x32xf32>
    %cst_19 = arith.constant dense<0.000000e+00> : vector<4x96xf32>
    %25 = tpu.matmul %8, %18, %cst_19 {dimension_numbers = #tpu.dot_dimension_numbers<[1], [0], [0], [1], [0, 0, 1, 1], [], []>} : vector<4x32xf32>, vector<32x96xf32>, vector<4x96xf32> -> vector<4x96xf32>
    %26 = vector.broadcast %20 : vector<1x96xf32> to vector<4x96xf32>
    %27 = arith.addf %25, %26 : vector<4x96xf32>
    %28 = vector.extract_strided_slice %27 {offsets = [0, 0], sizes = [4, 8], strides = [1, 1]} : vector<4x96xf32> to vector<4x8xf32>
    %29 = vector.extract_strided_slice %27 {offsets = [0, 8], sizes = [4, 8], strides = [1, 1]} : vector<4x96xf32> to vector<4x8xf32>
    %30 = vector.extract_strided_slice %27 {offsets = [0, 16], sizes = [4, 8], strides = [1, 1]} : vector<4x96xf32> to vector<4x8xf32>
    %31 = vector.extract_strided_slice %27 {offsets = [0, 24], sizes = [4, 8], strides = [1, 1]} : vector<4x96xf32> to vector<4x8xf32>
    %32 = vector.shape_cast %28 : vector<4x8xf32> to vector<1x4x8xf32>
    %33 = vector.shape_cast %29 : vector<4x8xf32> to vector<1x4x8xf32>
    %34 = vector.shape_cast %30 : vector<4x8xf32> to vector<1x4x8xf32>
    %35 = vector.shape_cast %31 : vector<4x8xf32> to vector<1x4x8xf32>
    %36 = tpu.concatenate %32, %33, %34, %35 in 0 : vector<1x4x8xf32>, vector<1x4x8xf32>, vector<1x4x8xf32>, vector<1x4x8xf32> -> vector<4x4x8xf32>
    %37 = vector.extract_strided_slice %27 {offsets = [0, 32], sizes = [4, 8], strides = [1, 1]} : vector<4x96xf32> to vector<4x8xf32>
    %38 = vector.extract_strided_slice %27 {offsets = [0, 40], sizes = [4, 8], strides = [1, 1]} : vector<4x96xf32> to vector<4x8xf32>
    %39 = vector.extract_strided_slice %27 {offsets = [0, 48], sizes = [4, 8], strides = [1, 1]} : vector<4x96xf32> to vector<4x8xf32>
    %40 = vector.extract_strided_slice %27 {offsets = [0, 56], sizes = [4, 8], strides = [1, 1]} : vector<4x96xf32> to vector<4x8xf32>
    %41 = vector.shape_cast %37 : vector<4x8xf32> to vector<1x4x8xf32>
    %42 = vector.shape_cast %38 : vector<4x8xf32> to vector<1x4x8xf32>
    %43 = vector.shape_cast %39 : vector<4x8xf32> to vector<1x4x8xf32>
    %44 = vector.shape_cast %40 : vector<4x8xf32> to vector<1x4x8xf32>
    %45 = tpu.concatenate %41, %42, %43, %44 in 0 : vector<1x4x8xf32>, vector<1x4x8xf32>, vector<1x4x8xf32>, vector<1x4x8xf32> -> vector<4x4x8xf32>
    %46 = vector.extract_strided_slice %27 {offsets = [0, 64], sizes = [4, 8], strides = [1, 1]} : vector<4x96xf32> to vector<4x8xf32>
    %47 = vector.extract_strided_slice %27 {offsets = [0, 72], sizes = [4, 8], strides = [1, 1]} : vector<4x96xf32> to vector<4x8xf32>
    %48 = vector.extract_strided_slice %27 {offsets = [0, 80], sizes = [4, 8], strides = [1, 1]} : vector<4x96xf32> to vector<4x8xf32>
    %49 = vector.extract_strided_slice %27 {offsets = [0, 88], sizes = [4, 8], strides = [1, 1]} : vector<4x96xf32> to vector<4x8xf32>
    %50 = vector.shape_cast %46 : vector<4x8xf32> to vector<1x4x8xf32>
    %51 = vector.shape_cast %47 : vector<4x8xf32> to vector<1x4x8xf32>
    %52 = vector.shape_cast %48 : vector<4x8xf32> to vector<1x4x8xf32>
    %53 = vector.shape_cast %49 : vector<4x8xf32> to vector<1x4x8xf32>
    %54 = tpu.concatenate %50, %51, %52, %53 in 0 : vector<1x4x8xf32>, vector<1x4x8xf32>, vector<1x4x8xf32>, vector<1x4x8xf32> -> vector<4x4x8xf32>
    "tpu.trace_start"() <{level = 10 : i32, message = "hid,hjd->hij"}> : () -> ()
    %cst_20 = arith.constant dense<0.000000e+00> : vector<4x4x4xf32>
    %55 = tpu.matmul %36, %45, %cst_20 {dimension_numbers = #tpu.dot_dimension_numbers<[2], [2], [1], [1], [0, 0, 0, 1, 1, 1], [0], [0]>} : vector<4x4x8xf32>, vector<4x4x8xf32>, vector<4x4x4xf32> -> vector<4x4x4xf32>
    "tpu.trace_stop"() : () -> ()
    %cst_21 = arith.constant 0.353553385 : f32
    %56 = vector.broadcast %cst_21 : f32 to vector<4x4x4xf32>
    %57 = arith.mulf %55, %56 : vector<4x4x4xf32>
    %58 = vector.broadcast %16 : vector<1x1x4xf32> to vector<4x4x4xf32>
    %59 = arith.addf %57, %58 : vector<4x4x4xf32>
    %cst_22 = arith.constant dense<0xFF800000> : vector<4x4xf32>
    %60 = vector.multi_reduction <maximumf>, %59, %cst_22 [2] : vector<4x4x4xf32> to vector<4x4xf32>
    %61 = vector.shape_cast %60 : vector<4x4xf32> to vector<4x4x1xf32>
    %62 = vector.broadcast %61 : vector<4x4x1xf32> to vector<4x4x4xf32>
    %63 = arith.subf %59, %62 : vector<4x4x4xf32>
    %64 = math.exp %63 : vector<4x4x4xf32>
    %cst_23 = arith.constant dense<0.000000e+00> : vector<4x4xf32>
    %65 = vector.multi_reduction <add>, %64, %cst_23 [2] : vector<4x4x4xf32> to vector<4x4xf32>
    %66 = vector.shape_cast %65 : vector<4x4xf32> to vector<4x4x1xf32>
    %67 = tpu.reciprocal %66 {approx = true} : vector<4x4x1xf32> -> vector<4x4x1xf32>
    %68 = vector.broadcast %67 : vector<4x4x1xf32> to vector<4x4x4xf32>
    %69 = arith.mulf %64, %68 : vector<4x4x4xf32>
    "tpu.trace_start"() <{level = 10 : i32, message = "hij,hjd->hid"}> : () -> ()
    %cst_24 = arith.constant dense<0.000000e+00> : vector<4x4x8xf32>
    %70 = tpu.matmul %69, %54, %cst_24 {dimension_numbers = #tpu.dot_dimension_numbers<[2], [1], [1], [2], [0, 0, 0, 1, 1, 2], [0], [0]>} : vector<4x4x4xf32>, vector<4x4x8xf32>, vector<4x4x8xf32> -> vector<4x4x8xf32>
    "tpu.trace_stop"() : () -> ()
    %71 = vector.extract_strided_slice %70 {offsets = [0, 0, 0], sizes = [1, 4, 8], strides = [1, 1, 1]} : vector<4x4x8xf32> to vector<1x4x8xf32>
    %72 = vector.shape_cast %71 : vector<1x4x8xf32> to vector<4x8xf32>
    %73 = vector.extract_strided_slice %70 {offsets = [1, 0, 0], sizes = [1, 4, 8], strides = [1, 1, 1]} : vector<4x4x8xf32> to vector<1x4x8xf32>
    %74 = vector.shape_cast %73 : vector<1x4x8xf32> to vector<4x8xf32>
    %75 = vector.extract_strided_slice %70 {offsets = [2, 0, 0], sizes = [1, 4, 8], strides = [1, 1, 1]} : vector<4x4x8xf32> to vector<1x4x8xf32>
    %76 = vector.shape_cast %75 : vector<1x4x8xf32> to vector<4x8xf32>
    %77 = vector.extract_strided_slice %70 {offsets = [3, 0, 0], sizes = [1, 4, 8], strides = [1, 1, 1]} : vector<4x4x8xf32> to vector<1x4x8xf32>
    %78 = vector.shape_cast %77 : vector<1x4x8xf32> to vector<4x8xf32>
    %79 = tpu.concatenate %72, %74, %76, %78 in 1 : vector<4x8xf32>, vector<4x8xf32>, vector<4x8xf32>, vector<4x8xf32> -> vector<4x32xf32>
    %cst_25 = arith.constant dense<0.000000e+00> : vector<4x32xf32>
    %80 = tpu.matmul %79, %22, %cst_25 {dimension_numbers = #tpu.dot_dimension_numbers<[1], [0], [0], [1], [0, 0, 1, 1], [], []>} : vector<4x32xf32>, vector<32x32xf32>, vector<4x32xf32> -> vector<4x32xf32>
    %81 = vector.broadcast %24 : vector<1x32xf32> to vector<4x32xf32>
    %82 = arith.addf %80, %81 : vector<4x32xf32>
    %cst_26 = arith.constant dense<0.000000e+00> : vector<4x32xf32>
    %83 = tpu.matmul %82, %0, %cst_26 {dimension_numbers = #tpu.dot_dimension_numbers<[1], [0], [0], [1], [0, 0, 1, 1], [], []>} : vector<4x32xf32>, vector<32x32xf32>, vector<4x32xf32> -> vector<4x32xf32>
    %84 = vector.broadcast %1 : vector<1x32xf32> to vector<4x32xf32>
    %85 = arith.addf %83, %84 : vector<4x32xf32>
    %cst_27 = arith.constant 0.000000e+00 : f32
    %86 = vector.broadcast %cst_27 : f32 to vector<4x32xf32>
    %87 = arith.maximumf %85, %86 : vector<4x32xf32>
    %88 = arith.index_cast %5 : i32 to index
    %c0_28 = arith.constant 0 : index
    %89 = vector.load %arg18[%88, %c0_28] : memref<20x32xf32, #tpu.memory_space<vmem>>, vector<4x32xf32>
    %90 = arith.mulf %89, %89 : vector<4x32xf32>
    %cst_29 = arith.constant dense<0.000000e+00> : vector<4xf32>
    %91 = vector.multi_reduction <add>, %90, %cst_29 [1] : vector<4x32xf32> to vector<4xf32>
    %92 = vector.shape_cast %91 : vector<4xf32> to vector<4x1xf32>
    %cst_30 = arith.constant 1.000000e-24 : f32
    %93 = vector.broadcast %cst_30 : f32 to vector<4x1xf32>
    %94 = arith.maximumf %92, %93 : vector<4x1xf32>
    %95 = math.rsqrt %94 : vector<4x1xf32>
    %96 = vector.broadcast %95 : vector<4x1xf32> to vector<4x32xf32>
    %97 = arith.mulf %89, %96 : vector<4x32xf32>
    %98 = arith.mulf %87, %87 : vector<4x32xf32>
    %cst_31 = arith.constant dense<0.000000e+00> : vector<4xf32>
    %99 = vector.multi_reduction <add>, %98, %cst_31 [1] : vector<4x32xf32> to vector<4xf32>
    %100 = vector.shape_cast %99 : vector<4xf32> to vector<4x1xf32>
    %cst_32 = arith.constant 1.000000e-24 : f32
    %101 = vector.broadcast %cst_32 : f32 to vector<4x1xf32>
    %102 = arith.maximumf %100, %101 : vector<4x1xf32>
    %103 = math.rsqrt %102 : vector<4x1xf32>
    %104 = vector.broadcast %103 : vector<4x1xf32> to vector<4x32xf32>
    %105 = arith.mulf %87, %104 : vector<4x32xf32>
    %106 = arith.addf %97, %105 : vector<4x32xf32>
    %107 = arith.index_cast %5 : i32 to index
    %c0_33 = arith.constant 0 : index
    %108 = vector.load %arg19[%107, %c0_33] : memref<20x32xf32, #tpu.memory_space<vmem>>, vector<4x32xf32>
    tpu.vector_store %arg19[%107, %c0_33], %106 {strides = array<i32>} : memref<20x32xf32, #tpu.memory_space<vmem>>, vector<4x32xf32>,
    %c4_i32_34 = arith.constant 4 : i32
    %109 = arith.cmpi eq, %arg1, %c4_i32_34 : i32
    %110 = arith.extui %109 : i1 to i32
    %c0_i32_35 = arith.constant 0 : i32
    %111 = arith.cmpi ne, %110, %c0_i32_35 : i32
    scf.if %111 {
      %c0_36 = arith.constant 0 : index
      %c0_37 = arith.constant 0 : index
      %112 = vector.load %arg19[%c0_36, %c0_37] : memref<20x32xf32, #tpu.memory_space<vmem>>, vector<18x32xf32>
      %cst_38 = arith.constant dense<0.000000e+00> : vector<18xf32>
      %113 = vector.multi_reduction <add>, %112, %cst_38 [1] : vector<18x32xf32> to vector<18xf32>
      %114 = vector.shape_cast %113 : vector<18xf32> to vector<18x1xf32>
      %cst_39 = arith.constant 3.200000e+01 : f32
      %115 = vector.broadcast %cst_39 : f32 to vector<18x1xf32>
      %116 = arith.divf %114, %115 : vector<18x1xf32>
      %117 = vector.broadcast %116 : vector<18x1xf32> to vector<18x32xf32>
      %118 = arith.subf %112, %117 : vector<18x32xf32>
      %119 = vector.broadcast %116 : vector<18x1xf32> to vector<18x32xf32>
      %120 = arith.subf %112, %119 : vector<18x32xf32>
      %121 = arith.mulf %118, %120 : vector<18x32xf32>
      %cst_40 = arith.constant dense<0.000000e+00> : vector<18xf32>
      %122 = vector.multi_reduction <add>, %121, %cst_40 [1] : vector<18x32xf32> to vector<18xf32>
      %123 = vector.shape_cast %122 : vector<18xf32> to vector<18x1xf32>
      %cst_41 = arith.constant 3.200000e+01 : f32
      %124 = vector.broadcast %cst_41 : f32 to vector<18x1xf32>
      %125 = arith.divf %123, %124 : vector<18x1xf32>
      %126 = vector.broadcast %116 : vector<18x1xf32> to vector<18x32xf32>
      %127 = arith.subf %112, %126 : vector<18x32xf32>
      %cst_42 = arith.constant 9.99999974E-6 : f32
      %128 = vector.broadcast %cst_42 : f32 to vector<18x1xf32>
      %129 = arith.addf %125, %128 : vector<18x1xf32>
      %130 = math.rsqrt %129 : vector<18x1xf32>
      %131 = vector.broadcast %130 : vector<18x1xf32> to vector<18x32xf32>
      %132 = arith.mulf %127, %131 : vector<18x32xf32>
      %c0_43 = arith.constant 0 : index
      %c0_44 = arith.constant 0 : index
      %133 = vector.load %arg13[%c0_43, %c0_44] : memref<1x32xf32, #tpu.memory_space<vmem>>, vector<1x32xf32>
      %134 = vector.broadcast %133 : vector<1x32xf32> to vector<18x32xf32>
      %135 = arith.mulf %132, %134 : vector<18x32xf32>
      %c0_45 = arith.constant 0 : index
      %c0_46 = arith.constant 0 : index
      %136 = vector.load %arg14[%c0_45, %c0_46] : memref<1x32xf32, #tpu.memory_space<vmem>>, vector<1x32xf32>
      %137 = vector.broadcast %136 : vector<1x32xf32> to vector<18x32xf32>
      %138 = arith.addf %135, %137 : vector<18x32xf32>
      %c0_47 = arith.constant 0 : index
      %c0_48 = arith.constant 0 : index
      %139 = vector.load %arg15[%c0_47, %c0_48] : memref<32x32xf32, #tpu.memory_space<vmem>>, vector<32x32xf32>
      %cst_49 = arith.constant dense<0.000000e+00> : vector<18x32xf32>
      %140 = tpu.matmul %138, %139, %cst_49 {dimension_numbers = #tpu.dot_dimension_numbers<[1], [0], [0], [1], [0, 0, 1, 1], [], []>} : vector<18x32xf32>, vector<32x32xf32>, vector<18x32xf32> -> vector<18x32xf32>
      %c0_50 = arith.constant 0 : index
      %c0_51 = arith.constant 0 : index
      %141 = vector.load %arg16[%c0_50, %c0_51] : memref<1x32xf32, #tpu.memory_space<vmem>>, vector<1x32xf32>
      %142 = vector.broadcast %141 : vector<1x32xf32> to vector<18x32xf32>
      %143 = arith.addf %140, %142 : vector<18x32xf32>
      %cst_52 = arith.constant 0.000000e+00 : f32
      %144 = vector.broadcast %cst_52 : f32 to vector<18x32xf32>
      %145 = arith.maximumf %143, %144 : vector<18x32xf32>
      %c0_53 = arith.constant 0 : index
      %c0_54 = arith.constant 0 : index
      %c0_55 = arith.constant 0 : index
      %146 = vector.load %arg17[%c0_53, %c0_54, %c0_55] : memref<1x18x32xf32, #tpu.memory_space<vmem>>, vector<1x18x32xf32>
      %147 = vector.shape_cast %146 : vector<1x18x32xf32> to vector<18x32xf32>
      %148 = vector.shape_cast %145 : vector<18x32xf32> to vector<1x18x32xf32>
      tpu.vector_store %arg17[%c0_53, %c0_54, %c0_55], %148 {strides = array<i32>} : memref<1x18x32xf32, #tpu.memory_space<vmem>>, vector<1x18x32xf32>,
    } else {
    }
    return
  }
  func.func @transform_0(%arg0: i32, %arg1: i32) -> (i32, i32, i32) {
    %c0_i32 = arith.constant 0 : i32
    %c0_i32_0 = arith.constant 0 : i32
    %c0_i32_1 = arith.constant 0 : i32
    return %arg0, %c0_i32, %c0_i32_0 : i32, i32, i32
  }
  func.func @transform_1(%arg0: i32, %arg1: i32) -> (i32, i32) {
    %c0_i32 = arith.constant 0 : i32
    %c0_i32_0 = arith.constant 0 : i32
    %c0_i32_1 = arith.constant 0 : i32
    return %c0_i32, %c0_i32_0 : i32, i32
  }
  func.func @transform_2(%arg0: i32, %arg1: i32) -> (i32, i32) {
    %c0_i32 = arith.constant 0 : i32
    %c0_i32_0 = arith.constant 0 : i32
    %c0_i32_1 = arith.constant 0 : i32
    return %c0_i32, %c0_i32_0 : i32, i32
  }
  func.func @transform_3(%arg0: i32, %arg1: i32) -> (i32, i32) {
    %c0_i32 = arith.constant 0 : i32
    %c0_i32_0 = arith.constant 0 : i32
    %c0_i32_1 = arith.constant 0 : i32
    return %c0_i32, %c0_i32_0 : i32, i32
  }
  func.func @transform_4(%arg0: i32, %arg1: i32) -> (i32, i32) {
    %c0_i32 = arith.constant 0 : i32
    %c0_i32_0 = arith.constant 0 : i32
    %c0_i32_1 = arith.constant 0 : i32
    return %c0_i32, %c0_i32_0 : i32, i32
  }
  func.func @transform_5(%arg0: i32, %arg1: i32) -> (i32, i32, i32) {
    %c0_i32 = arith.constant 0 : i32
    %c0_i32_0 = arith.constant 0 : i32
    %c0_i32_1 = arith.constant 0 : i32
    return %arg1, %c0_i32, %c0_i32_0 : i32, i32, i32
  }
  func.func @transform_6(%arg0: i32, %arg1: i32) -> (i32, i32, i32) {
    %c0_i32 = arith.constant 0 : i32
    %c0_i32_0 = arith.constant 0 : i32
    %c0_i32_1 = arith.constant 0 : i32
    return %arg1, %c0_i32, %c0_i32_0 : i32, i32, i32
  }
  func.func @transform_7(%arg0: i32, %arg1: i32) -> (i32, i32, i32) {
    %c0_i32 = arith.constant 0 : i32
    %c0_i32_0 = arith.constant 0 : i32
    %c0_i32_1 = arith.constant 0 : i32
    return %arg1, %c0_i32, %c0_i32_0 : i32, i32, i32
  }
  func.func @transform_8(%arg0: i32, %arg1: i32) -> (i32, i32, i32) {
    %c0_i32 = arith.constant 0 : i32
    %c0_i32_0 = arith.constant 0 : i32
    %c0_i32_1 = arith.constant 0 : i32
    return %arg1, %c0_i32, %c0_i32_0 : i32, i32, i32
  }
  func.func @transform_9(%arg0: i32, %arg1: i32) -> (i32, i32) {
    %c0_i32 = arith.constant 0 : i32
    %c0_i32_0 = arith.constant 0 : i32
    %c0_i32_1 = arith.constant 0 : i32
    return %c0_i32, %c0_i32_0 : i32, i32
  }
  func.func @transform_10(%arg0: i32, %arg1: i32) -> (i32, i32) {
    %c0_i32 = arith.constant 0 : i32
    %c0_i32_0 = arith.constant 0 : i32
    %c0_i32_1 = arith.constant 0 : i32
    return %c0_i32, %c0_i32_0 : i32, i32
  }
  func.func @transform_11(%arg0: i32, %arg1: i32) -> (i32, i32) {
    %c0_i32 = arith.constant 0 : i32
    %c0_i32_0 = arith.constant 0 : i32
    %c0_i32_1 = arith.constant 0 : i32
    return %c0_i32, %c0_i32_0 : i32, i32
  }
  func.func @transform_12(%arg0: i32, %arg1: i32) -> (i32, i32) {
    %c0_i32 = arith.constant 0 : i32
    %c0_i32_0 = arith.constant 0 : i32
    %c0_i32_1 = arith.constant 0 : i32
    return %c0_i32, %c0_i32_0 : i32, i32
  }
  func.func @transform_13(%arg0: i32, %arg1: i32) -> (i32, i32) {
    %c0_i32 = arith.constant 0 : i32
    %c0_i32_0 = arith.constant 0 : i32
    %c0_i32_1 = arith.constant 0 : i32
    return %c0_i32, %c0_i32_0 : i32, i32
  }
  func.func @transform_14(%arg0: i32, %arg1: i32) -> (i32, i32) {
    %c0_i32 = arith.constant 0 : i32
    %c0_i32_0 = arith.constant 0 : i32
    %c0_i32_1 = arith.constant 0 : i32
    return %c0_i32, %c0_i32_0 : i32, i32
  }
  func.func @transform_15(%arg0: i32, %arg1: i32) -> (i32, i32, i32) {
    %c0_i32 = arith.constant 0 : i32
    %c0_i32_0 = arith.constant 0 : i32
    %c0_i32_1 = arith.constant 0 : i32
    return %arg0, %c0_i32, %c0_i32_0 : i32, i32, i32
  }
}

module attributes {stable_mosaic.version = 11 : i64} {
  func.func @_encoder_kernel(%arg0: i32, %arg1: i32, %arg2: memref<1x20x32xf32, #tpu.memory_space<vmem>>, %arg3: memref<32x96xf32, #tpu.memory_space<vmem>>, %arg4: memref<1x96xf32, #tpu.memory_space<vmem>>, %arg5: memref<32x32xf32, #tpu.memory_space<vmem>>, %arg6: memref<1x32xf32, #tpu.memory_space<vmem>>, %arg7: memref<1x32x96xf32, #tpu.memory_space<vmem>>, %arg8: memref<1x1x96xf32, #tpu.memory_space<vmem>>, %arg9: memref<1x32x32xf32, #tpu.memory_space<vmem>>, %arg10: memref<1x1x32xf32, #tpu.memory_space<vmem>>, %arg11: memref<32x32xf32, #tpu.memory_space<vmem>>, %arg12: memref<1x32xf32, #tpu.memory_space<vmem>>, %arg13: memref<1x32xf32, #tpu.memory_space<vmem>>, %arg14: memref<1x32xf32, #tpu.memory_space<vmem>>, %arg15: memref<32x32xf32, #tpu.memory_space<vmem>>, %arg16: memref<1x32xf32, #tpu.memory_space<vmem>>, %arg17: memref<1x18x32xf32, #tpu.memory_space<vmem>>, %arg18: memref<20x32xf32, #tpu.memory_space<vmem>>, %arg19: memref<20x32xf32, #tpu.memory_space<vmem>>) attributes {dimension_semantics = [#tpu.dimension_semantics<parallel>, #tpu.dimension_semantics<arbitrary>], iteration_bounds = array<i64: 2, 5>, scalar_prefetch = 0 : i64, scratch_operands = 2 : i64, tpu.core_type = #tpu.core_type<tc>, window_params = [{transform_indices = @transform_0, window_bounds = array<i64: 1, 20, 32>}, {pipeline_mode = #tpu.pipeline_mode<synchronous>, transform_indices = @transform_1, window_bounds = array<i64: 32, 96>}, {pipeline_mode = #tpu.pipeline_mode<synchronous>, transform_indices = @transform_2, window_bounds = array<i64: 1, 96>}, {pipeline_mode = #tpu.pipeline_mode<synchronous>, transform_indices = @transform_3, window_bounds = array<i64: 32, 32>}, {pipeline_mode = #tpu.pipeline_mode<synchronous>, transform_indices = @transform_4, window_bounds = array<i64: 1, 32>}, {transform_indices = @transform_5, window_bounds = array<i64: 1, 32, 96>}, {transform_indices = @transform_6, window_bounds = array<i64: 1, 1, 96>}, {transform_indices = @transform_7, window_bounds = array<i64: 1, 32, 32>}, {transform_indices = @transform_8, window_bounds = array<i64: 1, 1, 32>}, {pipeline_mode = #tpu.pipeline_mode<synchronous>, transform_indices = @transform_9, window_bounds = array<i64: 32, 32>}, {pipeline_mode = #tpu.pipeline_mode<synchronous>, transform_indices = @transform_10, window_bounds = array<i64: 1, 32>}, {pipeline_mode = #tpu.pipeline_mode<synchronous>, transform_indices = @transform_11, window_bounds = array<i64: 1, 32>}, {pipeline_mode = #tpu.pipeline_mode<synchronous>, transform_indices = @transform_12, window_bounds = array<i64: 1, 32>}, {pipeline_mode = #tpu.pipeline_mode<synchronous>, transform_indices = @transform_13, window_bounds = array<i64: 32, 32>}, {pipeline_mode = #tpu.pipeline_mode<synchronous>, transform_indices = @transform_14, window_bounds = array<i64: 1, 32>}, {transform_indices = @transform_15, window_bounds = array<i64: 1, 18, 32>}]} {
    %c0 = arith.constant 0 : index
    %c0_0 = arith.constant 0 : index
    %0 = vector.load %arg11[%c0, %c0_0] : memref<32x32xf32, #tpu.memory_space<vmem>>, vector<32x32xf32>
    %c0_1 = arith.constant 0 : index
    %c0_2 = arith.constant 0 : index
    %1 = vector.load %arg12[%c0_1, %c0_2] : memref<1x32xf32, #tpu.memory_space<vmem>>, vector<1x32xf32>
    %c0_i32 = arith.constant 0 : i32
    %2 = arith.cmpi eq, %arg1, %c0_i32 : i32
    %3 = arith.extui %2 : i1 to i32
    %c0_i32_3 = arith.constant 0 : i32
    %4 = arith.cmpi ne, %3, %c0_i32_3 : i32
    scf.if %4 {
      %c0_36 = arith.constant 0 : index
      %c0_37 = arith.constant 0 : index
      %c0_38 = arith.constant 0 : index
      %112 = vector.load %arg2[%c0_36, %c0_37, %c0_38] : memref<1x20x32xf32, #tpu.memory_space<vmem>>, vector<1x20x32xf32>
      %113 = vector.shape_cast %112 : vector<1x20x32xf32> to vector<20x32xf32>
      %114 = tpu.iota {dimensions = array<i32: 2>} : vector<1x1x20xi32>
      %c18_i32_39 = arith.constant 18 : i32
      %115 = vector.broadcast %c18_i32_39 : i32 to vector<1x1x20xi32>
      %116 = arith.cmpi slt, %114, %115 : vector<1x1x20xi32>
      %cst_40 = arith.constant 0.000000e+00 : f32
      %cst_41 = arith.constant -1.000000e+30 : f32
      %117 = vector.broadcast %cst_40 : f32 to vector<1x1x20xf32>
      %118 = vector.broadcast %cst_41 : f32 to vector<1x1x20xf32>
      %119 = arith.select %116, %117, %118 : vector<1x1x20xi1>, vector<1x1x20xf32>
      %c0_42 = arith.constant 0 : index
      %c0_43 = arith.constant 0 : index
      %120 = vector.load %arg3[%c0_42, %c0_43] : memref<32x96xf32, #tpu.memory_space<vmem>>, vector<32x96xf32>
      %c0_44 = arith.constant 0 : index
      %c0_45 = arith.constant 0 : index
      %121 = vector.load %arg4[%c0_44, %c0_45] : memref<1x96xf32, #tpu.memory_space<vmem>>, vector<1x96xf32>
      %c0_46 = arith.constant 0 : index
      %c0_47 = arith.constant 0 : index
      %122 = vector.load %arg5[%c0_46, %c0_47] : memref<32x32xf32, #tpu.memory_space<vmem>>, vector<32x32xf32>
      %c0_48 = arith.constant 0 : index
      %c0_49 = arith.constant 0 : index
      %123 = vector.load %arg6[%c0_48, %c0_49] : memref<1x32xf32, #tpu.memory_space<vmem>>, vector<1x32xf32>
      %cst_50 = arith.constant dense<0.000000e+00> : vector<20x96xf32>
      %124 = tpu.matmul %113, %120, %cst_50 {dimension_numbers = #tpu.dot_dimension_numbers<[1], [0], [0], [1], [0, 0, 1, 1], [], []>} : vector<20x32xf32>, vector<32x96xf32>, vector<20x96xf32> -> vector<20x96xf32>
      %125 = vector.broadcast %121 : vector<1x96xf32> to vector<20x96xf32>
      %126 = arith.addf %124, %125 : vector<20x96xf32>
      %127 = vector.extract_strided_slice %126 {offsets = [0, 0], sizes = [20, 4], strides = [1, 1]} : vector<20x96xf32> to vector<20x4xf32>
      %128 = vector.extract_strided_slice %126 {offsets = [0, 4], sizes = [20, 4], strides = [1, 1]} : vector<20x96xf32> to vector<20x4xf32>
      %129 = vector.extract_strided_slice %126 {offsets = [0, 8], sizes = [20, 4], strides = [1, 1]} : vector<20x96xf32> to vector<20x4xf32>
      %130 = vector.extract_strided_slice %126 {offsets = [0, 12], sizes = [20, 4], strides = [1, 1]} : vector<20x96xf32> to vector<20x4xf32>
      %131 = vector.extract_strided_slice %126 {offsets = [0, 16], sizes = [20, 4], strides = [1, 1]} : vector<20x96xf32> to vector<20x4xf32>
      %132 = vector.extract_strided_slice %126 {offsets = [0, 20], sizes = [20, 4], strides = [1, 1]} : vector<20x96xf32> to vector<20x4xf32>
      %133 = vector.extract_strided_slice %126 {offsets = [0, 24], sizes = [20, 4], strides = [1, 1]} : vector<20x96xf32> to vector<20x4xf32>
      %134 = vector.extract_strided_slice %126 {offsets = [0, 28], sizes = [20, 4], strides = [1, 1]} : vector<20x96xf32> to vector<20x4xf32>
      %135 = vector.shape_cast %127 : vector<20x4xf32> to vector<1x20x4xf32>
      %136 = vector.shape_cast %128 : vector<20x4xf32> to vector<1x20x4xf32>
      %137 = vector.shape_cast %129 : vector<20x4xf32> to vector<1x20x4xf32>
      %138 = vector.shape_cast %130 : vector<20x4xf32> to vector<1x20x4xf32>
      %139 = vector.shape_cast %131 : vector<20x4xf32> to vector<1x20x4xf32>
      %140 = vector.shape_cast %132 : vector<20x4xf32> to vector<1x20x4xf32>
      %141 = vector.shape_cast %133 : vector<20x4xf32> to vector<1x20x4xf32>
      %142 = vector.shape_cast %134 : vector<20x4xf32> to vector<1x20x4xf32>
      %143 = tpu.concatenate %135, %136, %137, %138, %139, %140, %141, %142 in 0 : vector<1x20x4xf32>, vector<1x20x4xf32>, vector<1x20x4xf32>, vector<1x20x4xf32>, vector<1x20x4xf32>, vector<1x20x4xf32>, vector<1x20x4xf32>, vector<1x20x4xf32> -> vector<8x20x4xf32>
      %144 = vector.extract_strided_slice %126 {offsets = [0, 32], sizes = [20, 4], strides = [1, 1]} : vector<20x96xf32> to vector<20x4xf32>
      %145 = vector.extract_strided_slice %126 {offsets = [0, 36], sizes = [20, 4], strides = [1, 1]} : vector<20x96xf32> to vector<20x4xf32>
      %146 = vector.extract_strided_slice %126 {offsets = [0, 40], sizes = [20, 4], strides = [1, 1]} : vector<20x96xf32> to vector<20x4xf32>
      %147 = vector.extract_strided_slice %126 {offsets = [0, 44], sizes = [20, 4], strides = [1, 1]} : vector<20x96xf32> to vector<20x4xf32>
      %148 = vector.extract_strided_slice %126 {offsets = [0, 48], sizes = [20, 4], strides = [1, 1]} : vector<20x96xf32> to vector<20x4xf32>
      %149 = vector.extract_strided_slice %126 {offsets = [0, 52], sizes = [20, 4], strides = [1, 1]} : vector<20x96xf32> to vector<20x4xf32>
      %150 = vector.extract_strided_slice %126 {offsets = [0, 56], sizes = [20, 4], strides = [1, 1]} : vector<20x96xf32> to vector<20x4xf32>
      %151 = vector.extract_strided_slice %126 {offsets = [0, 60], sizes = [20, 4], strides = [1, 1]} : vector<20x96xf32> to vector<20x4xf32>
      %152 = vector.shape_cast %144 : vector<20x4xf32> to vector<1x20x4xf32>
      %153 = vector.shape_cast %145 : vector<20x4xf32> to vector<1x20x4xf32>
      %154 = vector.shape_cast %146 : vector<20x4xf32> to vector<1x20x4xf32>
      %155 = vector.shape_cast %147 : vector<20x4xf32> to vector<1x20x4xf32>
      %156 = vector.shape_cast %148 : vector<20x4xf32> to vector<1x20x4xf32>
      %157 = vector.shape_cast %149 : vector<20x4xf32> to vector<1x20x4xf32>
      %158 = vector.shape_cast %150 : vector<20x4xf32> to vector<1x20x4xf32>
      %159 = vector.shape_cast %151 : vector<20x4xf32> to vector<1x20x4xf32>
      %160 = tpu.concatenate %152, %153, %154, %155, %156, %157, %158, %159 in 0 : vector<1x20x4xf32>, vector<1x20x4xf32>, vector<1x20x4xf32>, vector<1x20x4xf32>, vector<1x20x4xf32>, vector<1x20x4xf32>, vector<1x20x4xf32>, vector<1x20x4xf32> -> vector<8x20x4xf32>
      %161 = vector.extract_strided_slice %126 {offsets = [0, 64], sizes = [20, 4], strides = [1, 1]} : vector<20x96xf32> to vector<20x4xf32>
      %162 = vector.extract_strided_slice %126 {offsets = [0, 68], sizes = [20, 4], strides = [1, 1]} : vector<20x96xf32> to vector<20x4xf32>
      %163 = vector.extract_strided_slice %126 {offsets = [0, 72], sizes = [20, 4], strides = [1, 1]} : vector<20x96xf32> to vector<20x4xf32>
      %164 = vector.extract_strided_slice %126 {offsets = [0, 76], sizes = [20, 4], strides = [1, 1]} : vector<20x96xf32> to vector<20x4xf32>
      %165 = vector.extract_strided_slice %126 {offsets = [0, 80], sizes = [20, 4], strides = [1, 1]} : vector<20x96xf32> to vector<20x4xf32>
      %166 = vector.extract_strided_slice %126 {offsets = [0, 84], sizes = [20, 4], strides = [1, 1]} : vector<20x96xf32> to vector<20x4xf32>
      %167 = vector.extract_strided_slice %126 {offsets = [0, 88], sizes = [20, 4], strides = [1, 1]} : vector<20x96xf32> to vector<20x4xf32>
      %168 = vector.extract_strided_slice %126 {offsets = [0, 92], sizes = [20, 4], strides = [1, 1]} : vector<20x96xf32> to vector<20x4xf32>
      %169 = vector.shape_cast %161 : vector<20x4xf32> to vector<1x20x4xf32>
      %170 = vector.shape_cast %162 : vector<20x4xf32> to vector<1x20x4xf32>
      %171 = vector.shape_cast %163 : vector<20x4xf32> to vector<1x20x4xf32>
      %172 = vector.shape_cast %164 : vector<20x4xf32> to vector<1x20x4xf32>
      %173 = vector.shape_cast %165 : vector<20x4xf32> to vector<1x20x4xf32>
      %174 = vector.shape_cast %166 : vector<20x4xf32> to vector<1x20x4xf32>
      %175 = vector.shape_cast %167 : vector<20x4xf32> to vector<1x20x4xf32>
      %176 = vector.shape_cast %168 : vector<20x4xf32> to vector<1x20x4xf32>
      %177 = tpu.concatenate %169, %170, %171, %172, %173, %174, %175, %176 in 0 : vector<1x20x4xf32>, vector<1x20x4xf32>, vector<1x20x4xf32>, vector<1x20x4xf32>, vector<1x20x4xf32>, vector<1x20x4xf32>, vector<1x20x4xf32>, vector<1x20x4xf32> -> vector<8x20x4xf32>
      "tpu.trace_start"() <{level = 10 : i32, message = "hid,hjd->hij"}> : () -> ()
      %cst_51 = arith.constant dense<0.000000e+00> : vector<8x20x20xf32>
      %178 = tpu.matmul %143, %160, %cst_51 {dimension_numbers = #tpu.dot_dimension_numbers<[2], [2], [1], [1], [0, 0, 0, 1, 1, 1], [0], [0]>} : vector<8x20x4xf32>, vector<8x20x4xf32>, vector<8x20x20xf32> -> vector<8x20x20xf32>
      "tpu.trace_stop"() : () -> ()
      %cst_52 = arith.constant 5.000000e-01 : f32
      %179 = vector.broadcast %cst_52 : f32 to vector<8x20x20xf32>
      %180 = arith.mulf %178, %179 : vector<8x20x20xf32>
      %181 = vector.broadcast %119 : vector<1x1x20xf32> to vector<8x20x20xf32>
      %182 = arith.addf %180, %181 : vector<8x20x20xf32>
      %cst_53 = arith.constant dense<0xFF800000> : vector<8x20xf32>
      %183 = vector.multi_reduction <maximumf>, %182, %cst_53 [2] : vector<8x20x20xf32> to vector<8x20xf32>
      %184 = vector.shape_cast %183 : vector<8x20xf32> to vector<8x20x1xf32>
      %185 = vector.broadcast %184 : vector<8x20x1xf32> to vector<8x20x20xf32>
      %186 = arith.subf %182, %185 : vector<8x20x20xf32>
      %187 = math.exp %186 : vector<8x20x20xf32>
      %cst_54 = arith.constant dense<0.000000e+00> : vector<8x20xf32>
      %188 = vector.multi_reduction <add>, %187, %cst_54 [2] : vector<8x20x20xf32> to vector<8x20xf32>
      %189 = vector.shape_cast %188 : vector<8x20xf32> to vector<8x20x1xf32>
      %190 = tpu.reciprocal %189 {approx = true} : vector<8x20x1xf32> -> vector<8x20x1xf32>
      %191 = vector.broadcast %190 : vector<8x20x1xf32> to vector<8x20x20xf32>
      %192 = arith.mulf %187, %191 : vector<8x20x20xf32>
      "tpu.trace_start"() <{level = 10 : i32, message = "hij,hjd->hid"}> : () -> ()
      %cst_55 = arith.constant dense<0.000000e+00> : vector<8x20x4xf32>
      %193 = tpu.matmul %192, %177, %cst_55 {dimension_numbers = #tpu.dot_dimension_numbers<[2], [1], [1], [2], [0, 0, 0, 1, 1, 2], [0], [0]>} : vector<8x20x20xf32>, vector<8x20x4xf32>, vector<8x20x4xf32> -> vector<8x20x4xf32>
      "tpu.trace_stop"() : () -> ()
      %194 = vector.extract_strided_slice %193 {offsets = [0, 0, 0], sizes = [1, 20, 4], strides = [1, 1, 1]} : vector<8x20x4xf32> to vector<1x20x4xf32>
      %195 = vector.shape_cast %194 : vector<1x20x4xf32> to vector<20x4xf32>
      %196 = vector.extract_strided_slice %193 {offsets = [1, 0, 0], sizes = [1, 20, 4], strides = [1, 1, 1]} : vector<8x20x4xf32> to vector<1x20x4xf32>
      %197 = vector.shape_cast %196 : vector<1x20x4xf32> to vector<20x4xf32>
      %198 = vector.extract_strided_slice %193 {offsets = [2, 0, 0], sizes = [1, 20, 4], strides = [1, 1, 1]} : vector<8x20x4xf32> to vector<1x20x4xf32>
      %199 = vector.shape_cast %198 : vector<1x20x4xf32> to vector<20x4xf32>
      %200 = vector.extract_strided_slice %193 {offsets = [3, 0, 0], sizes = [1, 20, 4], strides = [1, 1, 1]} : vector<8x20x4xf32> to vector<1x20x4xf32>
      %201 = vector.shape_cast %200 : vector<1x20x4xf32> to vector<20x4xf32>
      %202 = vector.extract_strided_slice %193 {offsets = [4, 0, 0], sizes = [1, 20, 4], strides = [1, 1, 1]} : vector<8x20x4xf32> to vector<1x20x4xf32>
      %203 = vector.shape_cast %202 : vector<1x20x4xf32> to vector<20x4xf32>
      %204 = vector.extract_strided_slice %193 {offsets = [5, 0, 0], sizes = [1, 20, 4], strides = [1, 1, 1]} : vector<8x20x4xf32> to vector<1x20x4xf32>
      %205 = vector.shape_cast %204 : vector<1x20x4xf32> to vector<20x4xf32>
      %206 = vector.extract_strided_slice %193 {offsets = [6, 0, 0], sizes = [1, 20, 4], strides = [1, 1, 1]} : vector<8x20x4xf32> to vector<1x20x4xf32>
      %207 = vector.shape_cast %206 : vector<1x20x4xf32> to vector<20x4xf32>
      %208 = vector.extract_strided_slice %193 {offsets = [7, 0, 0], sizes = [1, 20, 4], strides = [1, 1, 1]} : vector<8x20x4xf32> to vector<1x20x4xf32>
      %209 = vector.shape_cast %208 : vector<1x20x4xf32> to vector<20x4xf32>
      %210 = tpu.concatenate %195, %197, %199, %201, %203, %205, %207, %209 in 1 : vector<20x4xf32>, vector<20x4xf32>, vector<20x4xf32>, vector<20x4xf32>, vector<20x4xf32>, vector<20x4xf32>, vector<20x4xf32>, vector<20x4xf32> -> vector<20x32xf32>
      %cst_56 = arith.constant dense<0.000000e+00> : vector<20x32xf32>
      %211 = tpu.matmul %210, %122, %cst_56 {dimension_numbers = #tpu.dot_dimension_numbers<[1], [0], [0], [1], [0, 0, 1, 1], [], []>} : vector<20x32xf32>, vector<32x32xf32>, vector<20x32xf32> -> vector<20x32xf32>
      %212 = vector.broadcast %123 : vector<1x32xf32> to vector<20x32xf32>
      %213 = arith.addf %211, %212 : vector<20x32xf32>
      %cst_57 = arith.constant dense<0.000000e+00> : vector<20x32xf32>
      %214 = tpu.matmul %213, %0, %cst_57 {dimension_numbers = #tpu.dot_dimension_numbers<[1], [0], [0], [1], [0, 0, 1, 1], [], []>} : vector<20x32xf32>, vector<32x32xf32>, vector<20x32xf32> -> vector<20x32xf32>
      %215 = vector.broadcast %1 : vector<1x32xf32> to vector<20x32xf32>
      %216 = arith.addf %214, %215 : vector<20x32xf32>
      %cst_58 = arith.constant 0.000000e+00 : f32
      %217 = vector.broadcast %cst_58 : f32 to vector<20x32xf32>
      %218 = arith.maximumf %216, %217 : vector<20x32xf32>
      %c0_59 = arith.constant 0 : index
      %c0_60 = arith.constant 0 : index
      %219 = vector.load %arg18[%c0_59, %c0_60] : memref<20x32xf32, #tpu.memory_space<vmem>>, vector<20x32xf32>
      tpu.vector_store %arg18[%c0_59, %c0_60], %218 {strides = array<i32>} : memref<20x32xf32, #tpu.memory_space<vmem>>, vector<20x32xf32>,
    } else {
    }
    %c4_i32 = arith.constant 4 : i32
    %5 = arith.muli %arg1, %c4_i32 : i32
    %c0_4 = arith.constant 0 : index
    %6 = arith.index_cast %5 : i32 to index
    %c0_5 = arith.constant 0 : index
    %7 = vector.load %arg2[%c0_4, %6, %c0_5] : memref<1x20x32xf32, #tpu.memory_space<vmem>>, vector<1x4x32xf32>
    %8 = vector.shape_cast %7 : vector<1x4x32xf32> to vector<4x32xf32>
    %9 = tpu.iota {dimensions = array<i32: 2>} : vector<1x1x4xi32>
    %10 = vector.broadcast %5 : i32 to vector<1x1x4xi32>
    %11 = arith.addi %10, %9 : vector<1x1x4xi32>
    %c18_i32 = arith.constant 18 : i32
    %12 = vector.broadcast %c18_i32 : i32 to vector<1x1x4xi32>
    %13 = arith.cmpi slt, %11, %12 : vector<1x1x4xi32>
    %cst = arith.constant 0.000000e+00 : f32
    %cst_6 = arith.constant -1.000000e+30 : f32
    %14 = vector.broadcast %cst : f32 to vector<1x1x4xf32>
    %15 = vector.broadcast %cst_6 : f32 to vector<1x1x4xf32>
    %16 = arith.select %13, %14, %15 : vector<1x1x4xi1>, vector<1x1x4xf32>
    %c0_7 = arith.constant 0 : index
    %c0_8 = arith.constant 0 : index
    %c0_9 = arith.constant 0 : index
    %17 = vector.load %arg7[%c0_7, %c0_8, %c0_9] : memref<1x32x96xf32, #tpu.memory_space<vmem>>, vector<1x32x96xf32>
    %18 = vector.shape_cast %17 : vector<1x32x96xf32> to vector<32x96xf32>
    %c0_10 = arith.constant 0 : index
    %c0_11 = arith.constant 0 : index
    %c0_12 = arith.constant 0 : index
    %19 = vector.load %arg8[%c0_10, %c0_11, %c0_12] : memref<1x1x96xf32, #tpu.memory_space<vmem>>, vector<1x1x96xf32>
    %20 = vector.shape_cast %19 : vector<1x1x96xf32> to vector<1x96xf32>
    %c0_13 = arith.constant 0 : index
    %c0_14 = arith.constant 0 : index
    %c0_15 = arith.constant 0 : index
    %21 = vector.load %arg9[%c0_13, %c0_14, %c0_15] : memref<1x32x32xf32, #tpu.memory_space<vmem>>, vector<1x32x32xf32>
    %22 = vector.shape_cast %21 : vector<1x32x32xf32> to vector<32x32xf32>
    %c0_16 = arith.constant 0 : index
    %c0_17 = arith.constant 0 : index
    %c0_18 = arith.constant 0 : index
    %23 = vector.load %arg10[%c0_16, %c0_17, %c0_18] : memref<1x1x32xf32, #tpu.memory_space<vmem>>, vector<1x1x32xf32>
    %24 = vector.shape_cast %23 : vector<1x1x32xf32> to vector<1x32xf32>
    %cst_19 = arith.constant dense<0.000000e+00> : vector<4x96xf32>
    %25 = tpu.matmul %8, %18, %cst_19 {dimension_numbers = #tpu.dot_dimension_numbers<[1], [0], [0], [1], [0, 0, 1, 1], [], []>} : vector<4x32xf32>, vector<32x96xf32>, vector<4x96xf32> -> vector<4x96xf32>
    %26 = vector.broadcast %20 : vector<1x96xf32> to vector<4x96xf32>
    %27 = arith.addf %25, %26 : vector<4x96xf32>
    %28 = vector.extract_strided_slice %27 {offsets = [0, 0], sizes = [4, 8], strides = [1, 1]} : vector<4x96xf32> to vector<4x8xf32>
    %29 = vector.extract_strided_slice %27 {offsets = [0, 8], sizes = [4, 8], strides = [1, 1]} : vector<4x96xf32> to vector<4x8xf32>
    %30 = vector.extract_strided_slice %27 {offsets = [0, 16], sizes = [4, 8], strides = [1, 1]} : vector<4x96xf32> to vector<4x8xf32>
    %31 = vector.extract_strided_slice %27 {offsets = [0, 24], sizes = [4, 8], strides = [1, 1]} : vector<4x96xf32> to vector<4x8xf32>
    %32 = vector.shape_cast %28 : vector<4x8xf32> to vector<1x4x8xf32>
    %33 = vector.shape_cast %29 : vector<4x8xf32> to vector<1x4x8xf32>
    %34 = vector.shape_cast %30 : vector<4x8xf32> to vector<1x4x8xf32>
    %35 = vector.shape_cast %31 : vector<4x8xf32> to vector<1x4x8xf32>
    %36 = tpu.concatenate %32, %33, %34, %35 in 0 : vector<1x4x8xf32>, vector<1x4x8xf32>, vector<1x4x8xf32>, vector<1x4x8xf32> -> vector<4x4x8xf32>
    %37 = vector.extract_strided_slice %27 {offsets = [0, 32], sizes = [4, 8], strides = [1, 1]} : vector<4x96xf32> to vector<4x8xf32>
    %38 = vector.extract_strided_slice %27 {offsets = [0, 40], sizes = [4, 8], strides = [1, 1]} : vector<4x96xf32> to vector<4x8xf32>
    %39 = vector.extract_strided_slice %27 {offsets = [0, 48], sizes = [4, 8], strides = [1, 1]} : vector<4x96xf32> to vector<4x8xf32>
    %40 = vector.extract_strided_slice %27 {offsets = [0, 56], sizes = [4, 8], strides = [1, 1]} : vector<4x96xf32> to vector<4x8xf32>
    %41 = vector.shape_cast %37 : vector<4x8xf32> to vector<1x4x8xf32>
    %42 = vector.shape_cast %38 : vector<4x8xf32> to vector<1x4x8xf32>
    %43 = vector.shape_cast %39 : vector<4x8xf32> to vector<1x4x8xf32>
    %44 = vector.shape_cast %40 : vector<4x8xf32> to vector<1x4x8xf32>
    %45 = tpu.concatenate %41, %42, %43, %44 in 0 : vector<1x4x8xf32>, vector<1x4x8xf32>, vector<1x4x8xf32>, vector<1x4x8xf32> -> vector<4x4x8xf32>
    %46 = vector.extract_strided_slice %27 {offsets = [0, 64], sizes = [4, 8], strides = [1, 1]} : vector<4x96xf32> to vector<4x8xf32>
    %47 = vector.extract_strided_slice %27 {offsets = [0, 72], sizes = [4, 8], strides = [1, 1]} : vector<4x96xf32> to vector<4x8xf32>
    %48 = vector.extract_strided_slice %27 {offsets = [0, 80], sizes = [4, 8], strides = [1, 1]} : vector<4x96xf32> to vector<4x8xf32>
    %49 = vector.extract_strided_slice %27 {offsets = [0, 88], sizes = [4, 8], strides = [1, 1]} : vector<4x96xf32> to vector<4x8xf32>
    %50 = vector.shape_cast %46 : vector<4x8xf32> to vector<1x4x8xf32>
    %51 = vector.shape_cast %47 : vector<4x8xf32> to vector<1x4x8xf32>
    %52 = vector.shape_cast %48 : vector<4x8xf32> to vector<1x4x8xf32>
    %53 = vector.shape_cast %49 : vector<4x8xf32> to vector<1x4x8xf32>
    %54 = tpu.concatenate %50, %51, %52, %53 in 0 : vector<1x4x8xf32>, vector<1x4x8xf32>, vector<1x4x8xf32>, vector<1x4x8xf32> -> vector<4x4x8xf32>
    "tpu.trace_start"() <{level = 10 : i32, message = "hid,hjd->hij"}> : () -> ()
    %cst_20 = arith.constant dense<0.000000e+00> : vector<4x4x4xf32>
    %55 = tpu.matmul %36, %45, %cst_20 {dimension_numbers = #tpu.dot_dimension_numbers<[2], [2], [1], [1], [0, 0, 0, 1, 1, 1], [0], [0]>} : vector<4x4x8xf32>, vector<4x4x8xf32>, vector<4x4x4xf32> -> vector<4x4x4xf32>
    "tpu.trace_stop"() : () -> ()
    %cst_21 = arith.constant 0.353553385 : f32
    %56 = vector.broadcast %cst_21 : f32 to vector<4x4x4xf32>
    %57 = arith.mulf %55, %56 : vector<4x4x4xf32>
    %58 = vector.broadcast %16 : vector<1x1x4xf32> to vector<4x4x4xf32>
    %59 = arith.addf %57, %58 : vector<4x4x4xf32>
    %cst_22 = arith.constant dense<0xFF800000> : vector<4x4xf32>
    %60 = vector.multi_reduction <maximumf>, %59, %cst_22 [2] : vector<4x4x4xf32> to vector<4x4xf32>
    %61 = vector.shape_cast %60 : vector<4x4xf32> to vector<4x4x1xf32>
    %62 = vector.broadcast %61 : vector<4x4x1xf32> to vector<4x4x4xf32>
    %63 = arith.subf %59, %62 : vector<4x4x4xf32>
    %64 = math.exp %63 : vector<4x4x4xf32>
    %cst_23 = arith.constant dense<0.000000e+00> : vector<4x4xf32>
    %65 = vector.multi_reduction <add>, %64, %cst_23 [2] : vector<4x4x4xf32> to vector<4x4xf32>
    %66 = vector.shape_cast %65 : vector<4x4xf32> to vector<4x4x1xf32>
    %67 = tpu.reciprocal %66 {approx = true} : vector<4x4x1xf32> -> vector<4x4x1xf32>
    %68 = vector.broadcast %67 : vector<4x4x1xf32> to vector<4x4x4xf32>
    %69 = arith.mulf %64, %68 : vector<4x4x4xf32>
    "tpu.trace_start"() <{level = 10 : i32, message = "hij,hjd->hid"}> : () -> ()
    %cst_24 = arith.constant dense<0.000000e+00> : vector<4x4x8xf32>
    %70 = tpu.matmul %69, %54, %cst_24 {dimension_numbers = #tpu.dot_dimension_numbers<[2], [1], [1], [2], [0, 0, 0, 1, 1, 2], [0], [0]>} : vector<4x4x4xf32>, vector<4x4x8xf32>, vector<4x4x8xf32> -> vector<4x4x8xf32>
    "tpu.trace_stop"() : () -> ()
    %71 = vector.extract_strided_slice %70 {offsets = [0, 0, 0], sizes = [1, 4, 8], strides = [1, 1, 1]} : vector<4x4x8xf32> to vector<1x4x8xf32>
    %72 = vector.shape_cast %71 : vector<1x4x8xf32> to vector<4x8xf32>
    %73 = vector.extract_strided_slice %70 {offsets = [1, 0, 0], sizes = [1, 4, 8], strides = [1, 1, 1]} : vector<4x4x8xf32> to vector<1x4x8xf32>
    %74 = vector.shape_cast %73 : vector<1x4x8xf32> to vector<4x8xf32>
    %75 = vector.extract_strided_slice %70 {offsets = [2, 0, 0], sizes = [1, 4, 8], strides = [1, 1, 1]} : vector<4x4x8xf32> to vector<1x4x8xf32>
    %76 = vector.shape_cast %75 : vector<1x4x8xf32> to vector<4x8xf32>
    %77 = vector.extract_strided_slice %70 {offsets = [3, 0, 0], sizes = [1, 4, 8], strides = [1, 1, 1]} : vector<4x4x8xf32> to vector<1x4x8xf32>
    %78 = vector.shape_cast %77 : vector<1x4x8xf32> to vector<4x8xf32>
    %79 = tpu.concatenate %72, %74, %76, %78 in 1 : vector<4x8xf32>, vector<4x8xf32>, vector<4x8xf32>, vector<4x8xf32> -> vector<4x32xf32>
    %cst_25 = arith.constant dense<0.000000e+00> : vector<4x32xf32>
    %80 = tpu.matmul %79, %22, %cst_25 {dimension_numbers = #tpu.dot_dimension_numbers<[1], [0], [0], [1], [0, 0, 1, 1], [], []>} : vector<4x32xf32>, vector<32x32xf32>, vector<4x32xf32> -> vector<4x32xf32>
    %81 = vector.broadcast %24 : vector<1x32xf32> to vector<4x32xf32>
    %82 = arith.addf %80, %81 : vector<4x32xf32>
    %cst_26 = arith.constant dense<0.000000e+00> : vector<4x32xf32>
    %83 = tpu.matmul %82, %0, %cst_26 {dimension_numbers = #tpu.dot_dimension_numbers<[1], [0], [0], [1], [0, 0, 1, 1], [], []>} : vector<4x32xf32>, vector<32x32xf32>, vector<4x32xf32> -> vector<4x32xf32>
    %84 = vector.broadcast %1 : vector<1x32xf32> to vector<4x32xf32>
    %85 = arith.addf %83, %84 : vector<4x32xf32>
    %cst_27 = arith.constant 0.000000e+00 : f32
    %86 = vector.broadcast %cst_27 : f32 to vector<4x32xf32>
    %87 = arith.maximumf %85, %86 : vector<4x32xf32>
    %88 = arith.index_cast %5 : i32 to index
    %c0_28 = arith.constant 0 : index
    %89 = vector.load %arg18[%88, %c0_28] : memref<20x32xf32, #tpu.memory_space<vmem>>, vector<4x32xf32>
    %90 = arith.mulf %89, %89 : vector<4x32xf32>
    %cst_29 = arith.constant dense<0.000000e+00> : vector<4xf32>
    %91 = vector.multi_reduction <add>, %90, %cst_29 [1] : vector<4x32xf32> to vector<4xf32>
    %92 = vector.shape_cast %91 : vector<4xf32> to vector<4x1xf32>
    %cst_30 = arith.constant 1.000000e-24 : f32
    %93 = vector.broadcast %cst_30 : f32 to vector<4x1xf32>
    %94 = arith.maximumf %92, %93 : vector<4x1xf32>
    %95 = math.rsqrt %94 : vector<4x1xf32>
    %96 = vector.broadcast %95 : vector<4x1xf32> to vector<4x32xf32>
    %97 = arith.mulf %89, %96 : vector<4x32xf32>
    %98 = arith.mulf %87, %87 : vector<4x32xf32>
    %cst_31 = arith.constant dense<0.000000e+00> : vector<4xf32>
    %99 = vector.multi_reduction <add>, %98, %cst_31 [1] : vector<4x32xf32> to vector<4xf32>
    %100 = vector.shape_cast %99 : vector<4xf32> to vector<4x1xf32>
    %cst_32 = arith.constant 1.000000e-24 : f32
    %101 = vector.broadcast %cst_32 : f32 to vector<4x1xf32>
    %102 = arith.maximumf %100, %101 : vector<4x1xf32>
    %103 = math.rsqrt %102 : vector<4x1xf32>
    %104 = vector.broadcast %103 : vector<4x1xf32> to vector<4x32xf32>
    %105 = arith.mulf %87, %104 : vector<4x32xf32>
    %106 = arith.addf %97, %105 : vector<4x32xf32>
    %107 = arith.index_cast %5 : i32 to index
    %c0_33 = arith.constant 0 : index
    %108 = vector.load %arg19[%107, %c0_33] : memref<20x32xf32, #tpu.memory_space<vmem>>, vector<4x32xf32>
    tpu.vector_store %arg19[%107, %c0_33], %106 {strides = array<i32>} : memref<20x32xf32, #tpu.memory_space<vmem>>, vector<4x32xf32>,
    %c4_i32_34 = arith.constant 4 : i32
    %109 = arith.cmpi eq, %arg1, %c4_i32_34 : i32
    %110 = arith.extui %109 : i1 to i32
    %c0_i32_35 = arith.constant 0 : i32
    %111 = arith.cmpi ne, %110, %c0_i32_35 : i32
    scf.if %111 {
      %c0_36 = arith.constant 0 : index
      %c0_37 = arith.constant 0 : index
      %112 = vector.load %arg19[%c0_36, %c0_37] : memref<20x32xf32, #tpu.memory_space<vmem>>, vector<18x32xf32>
      %cst_38 = arith.constant dense<0.000000e+00> : vector<18xf32>
      %113 = vector.multi_reduction <add>, %112, %cst_38 [1] : vector<18x32xf32> to vector<18xf32>
      %114 = vector.shape_cast %113 : vector<18xf32> to vector<18x1xf32>
      %cst_39 = arith.constant 3.200000e+01 : f32
      %115 = vector.broadcast %cst_39 : f32 to vector<18x1xf32>
      %116 = arith.divf %114, %115 : vector<18x1xf32>
      %117 = vector.broadcast %116 : vector<18x1xf32> to vector<18x32xf32>
      %118 = arith.subf %112, %117 : vector<18x32xf32>
      %119 = vector.broadcast %116 : vector<18x1xf32> to vector<18x32xf32>
      %120 = arith.subf %112, %119 : vector<18x32xf32>
      %121 = arith.mulf %118, %120 : vector<18x32xf32>
      %cst_40 = arith.constant dense<0.000000e+00> : vector<18xf32>
      %122 = vector.multi_reduction <add>, %121, %cst_40 [1] : vector<18x32xf32> to vector<18xf32>
      %123 = vector.shape_cast %122 : vector<18xf32> to vector<18x1xf32>
      %cst_41 = arith.constant 3.200000e+01 : f32
      %124 = vector.broadcast %cst_41 : f32 to vector<18x1xf32>
      %125 = arith.divf %123, %124 : vector<18x1xf32>
      %126 = vector.broadcast %116 : vector<18x1xf32> to vector<18x32xf32>
      %127 = arith.subf %112, %126 : vector<18x32xf32>
      %cst_42 = arith.constant 9.99999974E-6 : f32
      %128 = vector.broadcast %cst_42 : f32 to vector<18x1xf32>
      %129 = arith.addf %125, %128 : vector<18x1xf32>
      %130 = math.rsqrt %129 : vector<18x1xf32>
      %131 = vector.broadcast %130 : vector<18x1xf32> to vector<18x32xf32>
      %132 = arith.mulf %127, %131 : vector<18x32xf32>
      %c0_43 = arith.constant 0 : index
      %c0_44 = arith.constant 0 : index
      %133 = vector.load %arg13[%c0_43, %c0_44] : memref<1x32xf32, #tpu.memory_space<vmem>>, vector<1x32xf32>
      %134 = vector.broadcast %133 : vector<1x32xf32> to vector<18x32xf32>
      %135 = arith.mulf %132, %134 : vector<18x32xf32>
      %c0_45 = arith.constant 0 : index
      %c0_46 = arith.constant 0 : index
      %136 = vector.load %arg14[%c0_45, %c0_46] : memref<1x32xf32, #tpu.memory_space<vmem>>, vector<1x32xf32>
      %137 = vector.broadcast %136 : vector<1x32xf32> to vector<18x32xf32>
      %138 = arith.addf %135, %137 : vector<18x32xf32>
      %c0_47 = arith.constant 0 : index
      %c0_48 = arith.constant 0 : index
      %139 = vector.load %arg15[%c0_47, %c0_48] : memref<32x32xf32, #tpu.memory_space<vmem>>, vector<32x32xf32>
      %cst_49 = arith.constant dense<0.000000e+00> : vector<18x32xf32>
      %140 = tpu.matmul %138, %139, %cst_49 {dimension_numbers = #tpu.dot_dimension_numbers<[1], [0], [0], [1], [0, 0, 1, 1], [], []>} : vector<18x32xf32>, vector<32x32xf32>, vector<18x32xf32> -> vector<18x32xf32>
      %c0_50 = arith.constant 0 : index
      %c0_51 = arith.constant 0 : index
      %141 = vector.load %arg16[%c0_50, %c0_51] : memref<1x32xf32, #tpu.memory_space<vmem>>, vector<1x32xf32>
      %142 = vector.broadcast %141 : vector<1x32xf32> to vector<18x32xf32>
      %143 = arith.addf %140, %142 : vector<18x32xf32>
      %cst_52 = arith.constant 0.000000e+00 : f32
      %144 = vector.broadcast %cst_52 : f32 to vector<18x32xf32>
      %145 = arith.maximumf %143, %144 : vector<18x32xf32>
      %c0_53 = arith.constant 0 : index
      %c0_54 = arith.constant 0 : index
      %c0_55 = arith.constant 0 : index
      %146 = vector.load %arg17[%c0_53, %c0_54, %c0_55] : memref<1x18x32xf32, #tpu.memory_space<vmem>>, vector<1x18x32xf32>
      %147 = vector.shape_cast %146 : vector<1x18x32xf32> to vector<18x32xf32>
      %148 = vector.shape_cast %145 : vector<18x32xf32> to vector<1x18x32xf32>
      tpu.vector_store %arg17[%c0_53, %c0_54, %c0_55], %148 {strides = array<i32>} : memref<1x18x32xf32, #tpu.memory_space<vmem>>, vector<1x18x32xf32>,
    } else {
    }
    return
  }
  func.func @transform_0(%arg0: i32, %arg1: i32) -> (i32, i32, i32) {
    %c0_i32 = arith.constant 0 : i32
    %c0_i32_0 = arith.constant 0 : i32
    %c0_i32_1 = arith.constant 0 : i32
    return %arg0, %c0_i32, %c0_i32_0 : i32, i32, i32
  }
  func.func @transform_1(%arg0: i32, %arg1: i32) -> (i32, i32) {
    %c0_i32 = arith.constant 0 : i32
    %c0_i32_0 = arith.constant 0 : i32
    %c0_i32_1 = arith.constant 0 : i32
    return %c0_i32, %c0_i32_0 : i32, i32
  }
  func.func @transform_2(%arg0: i32, %arg1: i32) -> (i32, i32) {
    %c0_i32 = arith.constant 0 : i32
    %c0_i32_0 = arith.constant 0 : i32
    %c0_i32_1 = arith.constant 0 : i32
    return %c0_i32, %c0_i32_0 : i32, i32
  }
  func.func @transform_3(%arg0: i32, %arg1: i32) -> (i32, i32) {
    %c0_i32 = arith.constant 0 : i32
    %c0_i32_0 = arith.constant 0 : i32
    %c0_i32_1 = arith.constant 0 : i32
    return %c0_i32, %c0_i32_0 : i32, i32
  }
  func.func @transform_4(%arg0: i32, %arg1: i32) -> (i32, i32) {
    %c0_i32 = arith.constant 0 : i32
    %c0_i32_0 = arith.constant 0 : i32
    %c0_i32_1 = arith.constant 0 : i32
    return %c0_i32, %c0_i32_0 : i32, i32
  }
  func.func @transform_5(%arg0: i32, %arg1: i32) -> (i32, i32, i32) {
    %c0_i32 = arith.constant 0 : i32
    %c0_i32_0 = arith.constant 0 : i32
    %c0_i32_1 = arith.constant 0 : i32
    return %arg1, %c0_i32, %c0_i32_0 : i32, i32, i32
  }
  func.func @transform_6(%arg0: i32, %arg1: i32) -> (i32, i32, i32) {
    %c0_i32 = arith.constant 0 : i32
    %c0_i32_0 = arith.constant 0 : i32
    %c0_i32_1 = arith.constant 0 : i32
    return %arg1, %c0_i32, %c0_i32_0 : i32, i32, i32
  }
  func.func @transform_7(%arg0: i32, %arg1: i32) -> (i32, i32, i32) {
    %c0_i32 = arith.constant 0 : i32
    %c0_i32_0 = arith.constant 0 : i32
    %c0_i32_1 = arith.constant 0 : i32
    return %arg1, %c0_i32, %c0_i32_0 : i32, i32, i32
  }
  func.func @transform_8(%arg0: i32, %arg1: i32) -> (i32, i32, i32) {
    %c0_i32 = arith.constant 0 : i32
    %c0_i32_0 = arith.constant 0 : i32
    %c0_i32_1 = arith.constant 0 : i32
    return %arg1, %c0_i32, %c0_i32_0 : i32, i32, i32
  }
  func.func @transform_9(%arg0: i32, %arg1: i32) -> (i32, i32) {
    %c0_i32 = arith.constant 0 : i32
    %c0_i32_0 = arith.constant 0 : i32
    %c0_i32_1 = arith.constant 0 : i32
    return %c0_i32, %c0_i32_0 : i32, i32
  }
  func.func @transform_10(%arg0: i32, %arg1: i32) -> (i32, i32) {
    %c0_i32 = arith.constant 0 : i32
    %c0_i32_0 = arith.constant 0 : i32
    %c0_i32_1 = arith.constant 0 : i32
    return %c0_i32, %c0_i32_0 : i32, i32
  }
  func.func @transform_11(%arg0: i32, %arg1: i32) -> (i32, i32) {
    %c0_i32 = arith.constant 0 : i32
    %c0_i32_0 = arith.constant 0 : i32
    %c0_i32_1 = arith.constant 0 : i32
    return %c0_i32, %c0_i32_0 : i32, i32
  }
  func.func @transform_12(%arg0: i32, %arg1: i32) -> (i32, i32) {
    %c0_i32 = arith.constant 0 : i32
    %c0_i32_0 = arith.constant 0 : i32
    %c0_i32_1 = arith.constant 0 : i32
    return %c0_i32, %c0_i32_0 : i32, i32
  }
  func.func @transform_13(%arg0: i32, %arg1: i32) -> (i32, i32) {
    %c0_i32 = arith.constant 0 : i32
    %c0_i32_0 = arith.constant 0 : i32
    %c0_i32_1 = arith.constant 0 : i32
    return %c0_i32, %c0_i32_0 : i32, i32
  }
  func.func @transform_14(%arg0: i32, %arg1: i32) -> (i32, i32) {
    %c0_i32 = arith.constant 0 : i32
    %c0_i32_0 = arith.constant 0 : i32
    %c0_i32_1 = arith.constant 0 : i32
    return %c0_i32, %c0_i32_0 : i32, i32
  }
  func.func @transform_15(%arg0: i32, %arg1: i32) -> (i32, i32, i32) {
    %c0_i32 = arith.constant 0 : i32
    %c0_i32_0 = arith.constant 0 : i32
    %c0_i32_1 = arith.constant 0 : i32
    return %arg0, %c0_i32, %c0_i32_0 : i32, i32, i32
  }
}

</mosaic_0001>

<llo_original>
// kernel: tpu_custom_call.1
$region0: #{tpu_custom_call.1}
  #allocation0 [shape = 'u32[]', space=smem, size = 0x4, offset = 0x4, fixed_abs, tag = 'smem constant byte address 0x4 - core index']
  #allocation1 [shape = 'u32[144,128]{1,0:T(1,128)}', space=vmem, size = 0x12000, scoped, tag = 'internal scratch']
  #allocation2 [shape = 'f32[20,32]{1,0:T(8,128)}', space=vmem, size = 0x3000, scoped, tag = 'scratch operand']
  #allocation3 [shape = 'f32[20,32]{1,0:T(8,128)}', space=vmem, size = 0x3000, scoped, tag = 'scratch operand']
  %s0 = inlined_call_operand.vmem [shape: f32[2,20,32], index: 0, kind: input, shape index: {}]
  %s1 = inlined_call_operand.vmem [shape: f32[32,96], index: 1, kind: input, shape index: {}]
  %s2 = inlined_call_operand.vmem [shape: f32[1,96], index: 2, kind: input, shape index: {}]
  %s3 = inlined_call_operand.vmem [shape: f32[32,32], index: 3, kind: input, shape index: {}]
  %s4 = inlined_call_operand.hbm [shape: f32[1,32], index: 4, kind: input, shape index: {}]
  %s5 = inlined_call_operand.hbm [shape: f32[5,32,96], index: 5, kind: input, shape index: {}]
  %s6 = inlined_call_operand.hbm [shape: f32[5,1,96], index: 6, kind: input, shape index: {}]
  %s7 = inlined_call_operand.hbm [shape: f32[5,32,32], index: 7, kind: input, shape index: {}]
  %s8 = inlined_call_operand.vmem [shape: f32[5,1,32], index: 8, kind: input, shape index: {}]
  %s9 = inlined_call_operand.vmem [shape: f32[32,32], index: 9, kind: input, shape index: {}]
  %s10 = inlined_call_operand.vmem [shape: f32[1,32], index: 10, kind: input, shape index: {}]
  %s11 = inlined_call_operand.vmem [shape: f32[1,32], index: 11, kind: input, shape index: {}]
  %s12 = inlined_call_operand.vmem [shape: f32[1,32], index: 12, kind: input, shape index: {}]
  %s13 = inlined_call_operand.hbm [shape: f32[32,32], index: 13, kind: input, shape index: {}]
  %s14 = inlined_call_operand.vmem [shape: f32[1,32], index: 14, kind: input, shape index: {}]
  %s15 = inlined_call_operand.vmem [shape: f32[2,18,32], index: 15, kind: output, shape index: {}]
  %s16 = sld [smem:[#allocation0]]
  $region121: #{tpu_custom_call.1} parent=0
    _
  %s18 = ssub.s32 1, %s16
  %s19 = scalar_select 0, %s18, %s16
  $region1: #{tpu_custom_call.1} parent=0
    #allocation4 [shape = 'u8[512]{0}', space=vmem, size = 0x400, scoped, tag = 'input window, operand 4, single buffered']
    #allocation5 [shape = 's32[2]{0}', space=sflag, size = 0x8, scoped, tag = 'scoped memory for tpu_custom_call.1']
    #allocation6 [shape = 'u8[32768]{0}', space=vmem, size = 0x8000, scoped, tag = 'input window, operand 5']
    #allocation7 [shape = 's32[2]{0}', space=sflag, size = 0x8, scoped, tag = 'scoped memory for tpu_custom_call.1']
    #allocation8 [shape = 'u8[1024]{0}', space=vmem, size = 0x400, scoped, tag = 'input window, operand 6']
    #allocation9 [shape = 'u8[32768]{0}', space=vmem, size = 0x8000, scoped, tag = 'input window, operand 7']
    #allocation10 [shape = 's32[2]{0}', space=sflag, size = 0x8, scoped, tag = 'scoped memory for tpu_custom_call.1']
    #allocation11 [shape = 'u8[16384]{0}', space=vmem, size = 0x4000, scoped, tag = 'input window, operand 13, single buffered']
    %20 = vsyncpa [#allocation5], 0
    %21 = vsyncpa [#allocation7], 0
    %s22 = scalar_lea.sflag [#allocation7], 1
    %23 = vsyncpa %s22, 0
    %24 = vsyncpa [#allocation10], 0
    %s25 = scalar_lea.sflag [#allocation10], 1
    %26 = vsyncpa %s25, 0
    loop: start=0, step=1, limit=12
    $region2: #{tpu_custom_call.1} parent=1 // loop_pre_header
      _
    $region3: #{tpu_custom_call.1} parent=1 // loop_header
      %s28 = sphi 0, %s32
      %p29 = scmp.ge.s32.totalorder %s28, 12
      %s35 = sphi 0, %s47
      %s36 = sphi 0, %s43
      %s37 = sphi 0, %s35
      %s38 = sphi 0, %s36
      %s39 = sphi 0, %s37
      %s40 = sphi 0, %s38
      %s50 = sphi 0, %s52
      %s53 = sphi 0, %s50
      %s54 = sphi 0, %s53
      %s70 = sphi 0, %s54
      %s74 = sphi 0, %s74
      %s76 = sphi 0, %s74
      %s77 = sphi 0, %s76
      %s91 = sphi 0, %s77
      %s95 = sphi 0, %s95
      %s97 = sphi 0, %s95
      %s98 = sphi 0, %s97
      %s112 = sphi 0, %s98
      %s116 = sphi 0, %s116
      %s118 = sphi 0, %s116
      %s119 = sphi 0, %s118
      %s133 = sphi 0, %s119
      %s137 = sphi 0, %s137
      %s139 = sphi 0, %s137
      %s140 = sphi 0, %s139
      %s154 = sphi 0, %s140
      %s160 = sphi 0, %s162
      %s163 = sphi 0, %s160
      %s164 = sphi 0, %s163
      %s180 = sphi 0, %s164
      %s186 = sphi 0, %s188
      %s189 = sphi 0, %s186
      %s190 = sphi 0, %s189
      %s206 = sphi 0, %s190
      %s212 = sphi 0, %s214
      %s215 = sphi 0, %s212
      %s216 = sphi 0, %s215
      %s232 = sphi 0, %s216
      %s238 = sphi 0, %s240
      %s241 = sphi 0, %s238
      %s242 = sphi 0, %s241
      %s258 = sphi 0, %s242
      %s262 = sphi 0, %s262
      %s264 = sphi 0, %s262
      %s265 = sphi 0, %s264
      %s279 = sphi 0, %s265
      %s283 = sphi 0, %s283
      %s285 = sphi 0, %s283
      %s286 = sphi 0, %s285
      %s300 = sphi 0, %s286
      %s304 = sphi 0, %s304
      %s306 = sphi 0, %s304
      %s307 = sphi 0, %s306
      %s321 = sphi 0, %s307
      %s325 = sphi 0, %s325
      %s327 = sphi 0, %s325
      %s328 = sphi 0, %s327
      %s342 = sphi 0, %s328
      %s346 = sphi 0, %s346
      %s348 = sphi 0, %s346
      %s349 = sphi 0, %s348
      %s363 = sphi 0, %s349
      %s367 = sphi 0, %s367
      %s369 = sphi 0, %s367
      %s370 = sphi 0, %s369
      %s384 = sphi 0, %s370
      %s390 = sphi 0, %s392
      %s393 = sphi 0, %s390
      %s394 = sphi 0, %s393
      %s410 = sphi 0, %s394
    $region4: #{tpu_custom_call.1} parent=1 // loop_header_branch
      %31 = sbr.rel (%p29) target = $region8
    $region5: #{tpu_custom_call.1} parent=1 // loop_body
      %s33 = ssub.s32 %s28, 1
      %s34 = ssub.s32 %s28, 2
      %s41 = sadd.s32 1, %s36
      %p42 = scmp.ge.s32.totalorder %s41, 5
      %s43 = scalar_select %p42, 0, %s41
      %s44 = sadd.s32 1, %s35
      %s45 = scalar_select %p42, %s44, %s35
      %p46 = scmp.ge.s32.totalorder %s45, 2
      %s47 = scalar_select %p46, 0, %s45
      %s48 = ssub.s32 %s35, %s47
      %p49 = scmp.eq.s32.totalorder %s48, 0
      %s51 = sadd.s32 %s50, 1
      %s52 = scalar_select %p49, %s50, %s51
      %p55 = pneg %p49
      %p56 = scmp.eq.s32.totalorder %s28, 9
      %p57 = por %p55, %p56
      %p58 = scmp.ne.s32.totalorder %s50, %s53
      %p59 = scmp.eq.s32.totalorder %s28, 0
      %p60 = por %p58, %p59
      %p61 = scmp.ne.s32.totalorder %s50, %s53
      %p62 = scmp.eq.s32.totalorder %s33, 9
      %p63 = por %p61, %p62
      %p64 = scmp.ne.s32.totalorder %s53, %s54
      %p65 = scmp.eq.s32.totalorder %s33, 0
      %p66 = por %p64, %p65
      %p67 = scmp.ne.s32.totalorder %s53, %s54
      %p68 = scmp.eq.s32.totalorder %s34, 9
      %p69 = por %p67, %p68
      %p71 = scmp.ne.s32.totalorder %s54, %s70
      %p72 = scmp.eq.s32.totalorder %s34, 0
      %p73 = por %p71, %p72
      %s75 = sadd.s32 %s74, 1
      %p78 = scmp.eq.s32.totalorder %s28, 9
      %p79 = scmp.ne.s32.totalorder %s74, %s76
      %p80 = scmp.eq.s32.totalorder %s28, 0
      %p81 = por %p79, %p80
      %p82 = scmp.ne.s32.totalorder %s74, %s76
      %p83 = scmp.eq.s32.totalorder %s33, 9
      %p84 = por %p82, %p83
      %p85 = scmp.ne.s32.totalorder %s76, %s77
      %p86 = scmp.eq.s32.totalorder %s33, 0
      %p87 = por %p85, %p86
      %p88 = scmp.ne.s32.totalorder %s76, %s77
      %p89 = scmp.eq.s32.totalorder %s34, 9
      %p90 = por %p88, %p89
      %p92 = scmp.ne.s32.totalorder %s77, %s91
      %p93 = scmp.eq.s32.totalorder %s34, 0
      %p94 = por %p92, %p93
      %s96 = sadd.s32 %s95, 1
      %p99 = scmp.eq.s32.totalorder %s28, 9
      %p100 = scmp.ne.s32.totalorder %s95, %s97
      %p101 = scmp.eq.s32.totalorder %s28, 0
      %p102 = por %p100, %p101
      %p103 = scmp.ne.s32.totalorder %s95, %s97
      %p104 = scmp.eq.s32.totalorder %s33, 9
      %p105 = por %p103, %p104
      %p106 = scmp.ne.s32.totalorder %s97, %s98
      %p107 = scmp.eq.s32.totalorder %s33, 0
      %p108 = por %p106, %p107
      %p109 = scmp.ne.s32.totalorder %s97, %s98
      %p110 = scmp.eq.s32.totalorder %s34, 9
      %p111 = por %p109, %p110
      %p113 = scmp.ne.s32.totalorder %s98, %s112
      %p114 = scmp.eq.s32.totalorder %s34, 0
      %p115 = por %p113, %p114
      %s117 = sadd.s32 %s116, 1
      %p120 = scmp.eq.s32.totalorder %s28, 9
      %p121 = scmp.ne.s32.totalorder %s116, %s118
      %p122 = scmp.eq.s32.totalorder %s28, 0
      %p123 = por %p121, %p122
      %p124 = scmp.ne.s32.totalorder %s116, %s118
      %p125 = scmp.eq.s32.totalorder %s33, 9
      %p126 = por %p124, %p125
      %p127 = scmp.ne.s32.totalorder %s118, %s119
      %p128 = scmp.eq.s32.totalorder %s33, 0
      %p129 = por %p127, %p128
      %p130 = scmp.ne.s32.totalorder %s118, %s119
      %p131 = scmp.eq.s32.totalorder %s34, 9
      %p132 = por %p130, %p131
      %p134 = scmp.ne.s32.totalorder %s119, %s133
      %p135 = scmp.eq.s32.totalorder %s34, 0
      %p136 = por %p134, %p135
      %s138 = sadd.s32 %s137, 1
      %p141 = scmp.eq.s32.totalorder %s28, 9
      %p142 = scmp.ne.s32.totalorder %s137, %s139
      %p143 = scmp.eq.s32.totalorder %s28, 0
      %p144 = por %p142, %p143
      %p145 = scmp.ne.s32.totalorder %s137, %s139
      %p146 = scmp.eq.s32.totalorder %s33, 9
      %p147 = por %p145, %p146
      %p148 = scmp.ne.s32.totalorder %s139, %s140
      %p149 = scmp.eq.s32.totalorder %s33, 0
      %p150 = por %p148, %p149
      %p151 = scmp.ne.s32.totalorder %s139, %s140
      %p152 = scmp.eq.s32.totalorder %s34, 9
      %p153 = por %p151, %p152
      %p155 = scmp.ne.s32.totalorder %s140, %s154
      %p156 = scmp.eq.s32.totalorder %s34, 0
      %p157 = por %p155, %p156
      %s158 = ssub.s32 %s36, %s43
      %p159 = scmp.eq.s32.totalorder %s158, 0
      %s161 = sadd.s32 %s160, 1
      %s162 = scalar_select %p159, %s160, %s161
      %p165 = pneg %p159
      %p166 = scmp.eq.s32.totalorder %s28, 9
      %p167 = por %p165, %p166
      %p168 = scmp.ne.s32.totalorder %s160, %s163
      %p169 = scmp.eq.s32.totalorder %s28, 0
      %p170 = por %p168, %p169
      %p171 = scmp.ne.s32.totalorder %s160, %s163
      %p172 = scmp.eq.s32.totalorder %s33, 9
      %p173 = por %p171, %p172
      %p174 = scmp.ne.s32.totalorder %s163, %s164
      %p175 = scmp.eq.s32.totalorder %s33, 0
      %p176 = por %p174, %p175
      %p177 = scmp.ne.s32.totalorder %s163, %s164
      %p178 = scmp.eq.s32.totalorder %s34, 9
      %p179 = por %p177, %p178
      %p181 = scmp.ne.s32.totalorder %s164, %s180
      %p182 = scmp.eq.s32.totalorder %s34, 0
      %p183 = por %p181, %p182
      %s184 = ssub.s32 %s36, %s43
      %p185 = scmp.eq.s32.totalorder %s184, 0
      %s187 = sadd.s32 %s186, 1
      %s188 = scalar_select %p185, %s186, %s187
      %p191 = pneg %p185
      %p192 = scmp.eq.s32.totalorder %s28, 9
      %p193 = por %p191, %p192
      %p194 = scmp.ne.s32.totalorder %s186, %s189
      %p195 = scmp.eq.s32.totalorder %s28, 0
      %p196 = por %p194, %p195
      %p197 = scmp.ne.s32.totalorder %s186, %s189
      %p198 = scmp.eq.s32.totalorder %s33, 9
      %p199 = por %p197, %p198
      %p200 = scmp.ne.s32.totalorder %s189, %s190
      %p201 = scmp.eq.s32.totalorder %s33, 0
      %p202 = por %p200, %p201
      %p203 = scmp.ne.s32.totalorder %s189, %s190
      %p204 = scmp.eq.s32.totalorder %s34, 9
      %p205 = por %p203, %p204
      %p207 = scmp.ne.s32.totalorder %s190, %s206
      %p208 = scmp.eq.s32.totalorder %s34, 0
      %p209 = por %p207, %p208
      %s210 = ssub.s32 %s36, %s43
      %p211 = scmp.eq.s32.totalorder %s210, 0
      %s213 = sadd.s32 %s212, 1
      %s214 = scalar_select %p211, %s212, %s213
      %p217 = pneg %p211
      %p218 = scmp.eq.s32.totalorder %s28, 9
      %p219 = por %p217, %p218
      %p220 = scmp.ne.s32.totalorder %s212, %s215
      %p221 = scmp.eq.s32.totalorder %s28, 0
      %p222 = por %p220, %p221
      %p223 = scmp.ne.s32.totalorder %s212, %s215
      %p224 = scmp.eq.s32.totalorder %s33, 9
      %p225 = por %p223, %p224
      %p226 = scmp.ne.s32.totalorder %s215, %s216
      %p227 = scmp.eq.s32.totalorder %s33, 0
      %p228 = por %p226, %p227
      %p229 = scmp.ne.s32.totalorder %s215, %s216
      %p230 = scmp.eq.s32.totalorder %s34, 9
      %p231 = por %p229, %p230
      %p233 = scmp.ne.s32.totalorder %s216, %s232
      %p234 = scmp.eq.s32.totalorder %s34, 0
      %p235 = por %p233, %p234
      %s236 = ssub.s32 %s36, %s43
      %p237 = scmp.eq.s32.totalorder %s236, 0
      %s239 = sadd.s32 %s238, 1
      %s240 = scalar_select %p237, %s238, %s239
      %p243 = pneg %p237
      %p244 = scmp.eq.s32.totalorder %s28, 9
      %p245 = por %p243, %p244
      %p246 = scmp.ne.s32.totalorder %s238, %s241
      %p247 = scmp.eq.s32.totalorder %s28, 0
      %p248 = por %p246, %p247
      %p249 = scmp.ne.s32.totalorder %s238, %s241
      %p250 = scmp.eq.s32.totalorder %s33, 9
      %p251 = por %p249, %p250
      %p252 = scmp.ne.s32.totalorder %s241, %s242
      %p253 = scmp.eq.s32.totalorder %s33, 0
      %p254 = por %p252, %p253
      %p255 = scmp.ne.s32.totalorder %s241, %s242
      %p256 = scmp.eq.s32.totalorder %s34, 9
      %p257 = por %p255, %p256
      %p259 = scmp.ne.s32.totalorder %s242, %s258
      %p260 = scmp.eq.s32.totalorder %s34, 0
      %p261 = por %p259, %p260
      %s263 = sadd.s32 %s262, 1
      %p266 = scmp.eq.s32.totalorder %s28, 9
      %p267 = scmp.ne.s32.totalorder %s262, %s264
      %p268 = scmp.eq.s32.totalorder %s28, 0
      %p269 = por %p267, %p268
      %p270 = scmp.ne.s32.totalorder %s262, %s264
      %p271 = scmp.eq.s32.totalorder %s33, 9
      %p272 = por %p270, %p271
      %p273 = scmp.ne.s32.totalorder %s264, %s265
      %p274 = scmp.eq.s32.totalorder %s33, 0
      %p275 = por %p273, %p274
      %p276 = scmp.ne.s32.totalorder %s264, %s265
      %p277 = scmp.eq.s32.totalorder %s34, 9
      %p278 = por %p276, %p277
      %p280 = scmp.ne.s32.totalorder %s265, %s279
      %p281 = scmp.eq.s32.totalorder %s34, 0
      %p282 = por %p280, %p281
      %s284 = sadd.s32 %s283, 1
      %p287 = scmp.eq.s32.totalorder %s28, 9
      %p288 = scmp.ne.s32.totalorder %s283, %s285
      %p289 = scmp.eq.s32.totalorder %s28, 0
      %p290 = por %p288, %p289
      %p291 = scmp.ne.s32.totalorder %s283, %s285
      %p292 = scmp.eq.s32.totalorder %s33, 9
      %p293 = por %p291, %p292
      %p294 = scmp.ne.s32.totalorder %s285, %s286
      %p295 = scmp.eq.s32.totalorder %s33, 0
      %p296 = por %p294, %p295
      %p297 = scmp.ne.s32.totalorder %s285, %s286
      %p298 = scmp.eq.s32.totalorder %s34, 9
      %p299 = por %p297, %p298
      %p301 = scmp.ne.s32.totalorder %s286, %s300
      %p302 = scmp.eq.s32.totalorder %s34, 0
      %p303 = por %p301, %p302
      %s305 = sadd.s32 %s304, 1
      %p308 = scmp.eq.s32.totalorder %s28, 9
      %p309 = scmp.ne.s32.totalorder %s304, %s306
      %p310 = scmp.eq.s32.totalorder %s28, 0
      %p311 = por %p309, %p310
      %p312 = scmp.ne.s32.totalorder %s304, %s306
      %p313 = scmp.eq.s32.totalorder %s33, 9
      %p314 = por %p312, %p313
      %p315 = scmp.ne.s32.totalorder %s306, %s307
      %p316 = scmp.eq.s32.totalorder %s33, 0
      %p317 = por %p315, %p316
      %p318 = scmp.ne.s32.totalorder %s306, %s307
      %p319 = scmp.eq.s32.totalorder %s34, 9
      %p320 = por %p318, %p319
      %p322 = scmp.ne.s32.totalorder %s307, %s321
      %p323 = scmp.eq.s32.totalorder %s34, 0
      %p324 = por %p322, %p323
      %s326 = sadd.s32 %s325, 1
      %p329 = scmp.eq.s32.totalorder %s28, 9
      %p330 = scmp.ne.s32.totalorder %s325, %s327
      %p331 = scmp.eq.s32.totalorder %s28, 0
      %p332 = por %p330, %p331
      %p333 = scmp.ne.s32.totalorder %s325, %s327
      %p334 = scmp.eq.s32.totalorder %s33, 9
      %p335 = por %p333, %p334
      %p336 = scmp.ne.s32.totalorder %s327, %s328
      %p337 = scmp.eq.s32.totalorder %s33, 0
      %p338 = por %p336, %p337
      %p339 = scmp.ne.s32.totalorder %s327, %s328
      %p340 = scmp.eq.s32.totalorder %s34, 9
      %p341 = por %p339, %p340
      %p343 = scmp.ne.s32.totalorder %s328, %s342
      %p344 = scmp.eq.s32.totalorder %s34, 0
      %p345 = por %p343, %p344
      %s347 = sadd.s32 %s346, 1
      %p350 = scmp.eq.s32.totalorder %s28, 9
      %p351 = scmp.ne.s32.totalorder %s346, %s348
      %p352 = scmp.eq.s32.totalorder %s28, 0
      %p353 = por %p351, %p352
      %p354 = scmp.ne.s32.totalorder %s346, %s348
      %p355 = scmp.eq.s32.totalorder %s33, 9
      %p356 = por %p354, %p355
      %p357 = scmp.ne.s32.totalorder %s348, %s349
      %p358 = scmp.eq.s32.totalorder %s33, 0
      %p359 = por %p357, %p358
      %p360 = scmp.ne.s32.totalorder %s348, %s349
      %p361 = scmp.eq.s32.totalorder %s34, 9
      %p362 = por %p360, %p361
      %p364 = scmp.ne.s32.totalorder %s349, %s363
      %p365 = scmp.eq.s32.totalorder %s34, 0
      %p366 = por %p364, %p365
      %s368 = sadd.s32 %s367, 1
      %p371 = scmp.eq.s32.totalorder %s28, 9
      %p372 = scmp.ne.s32.totalorder %s367, %s369
      %p373 = scmp.eq.s32.totalorder %s28, 0
      %p374 = por %p372, %p373
      %p375 = scmp.ne.s32.totalorder %s367, %s369
      %p376 = scmp.eq.s32.totalorder %s33, 9
      %p377 = por %p375, %p376
      %p378 = scmp.ne.s32.totalorder %s369, %s370
      %p379 = scmp.eq.s32.totalorder %s33, 0
      %p380 = por %p378, %p379
      %p381 = scmp.ne.s32.totalorder %s369, %s370
      %p382 = scmp.eq.s32.totalorder %s34, 9
      %p383 = por %p381, %p382
      %p385 = scmp.ne.s32.totalorder %s370, %s384
      %p386 = scmp.eq.s32.totalorder %s34, 0
      %p387 = por %p385, %p386
      %s388 = ssub.s32 %s35, %s47
      %p389 = scmp.eq.s32.totalorder %s388, 0
      %s391 = sadd.s32 %s390, 1
      %s392 = scalar_select %p389, %s390, %s391
      %p395 = pneg %p389
      %p396 = scmp.eq.s32.totalorder %s28, 9
      %p397 = por %p395, %p396
      %p398 = scmp.ne.s32.totalorder %s390, %s393
      %p399 = scmp.eq.s32.totalorder %s28, 0
      %p400 = por %p398, %p399
      %p401 = scmp.ne.s32.totalorder %s390, %s393
      %p402 = scmp.eq.s32.totalorder %s33, 9
      %p403 = por %p401, %p402
      %p404 = scmp.ne.s32.totalorder %s393, %s394
      %p405 = scmp.eq.s32.totalorder %s33, 0
      %p406 = por %p404, %p405
      %p407 = scmp.ne.s32.totalorder %s393, %s394
      %p408 = scmp.eq.s32.totalorder %s34, 9
      %p409 = por %p407, %p408
      %p411 = scmp.ne.s32.totalorder %s394, %s410
      %p412 = scmp.eq.s32.totalorder %s34, 0
      %p413 = por %p411, %p412
      %p414 = scmp.le.s32.totalorder 1, %s28
      %p415 = scmp.lt.s32.totalorder %s28, 11
      %p416 = pnand %p414, %p415
      %p417 = pneg %p416
      // Predicated region
      $region9: #{tpu_custom_call.1} parent=5 // pred_check
        _
      $region10: #{tpu_custom_call.1} parent=5 // pred_check_branch
        %419 = sbr.rel (%p416) target = $region12
      $region11: #{tpu_custom_call.1} parent=5 // pred_region
        %s420 = ssub.s32 %s28, 1
        // Predicated region
        $region13: #{tpu_custom_call.1} parent=11 // pred_check
          %p421 = pneg %p87
        $region14: #{tpu_custom_call.1} parent=11 // pred_check_branch
          %423 = sbr.rel (%p421) target = $region16
        $region15: #{tpu_custom_call.1} parent=11 // pred_region
          _
        $region16: #{tpu_custom_call.1} parent=11 // pred_fallthru
          _
        // Predicated region
        $region17: #{tpu_custom_call.1} parent=11 // pred_check
          %p424 = pneg %p108
        $region18: #{tpu_custom_call.1} parent=11 // pred_check_branch
          %426 = sbr.rel (%p424) target = $region20
        $region19: #{tpu_custom_call.1} parent=11 // pred_region
          _
        $region20: #{tpu_custom_call.1} parent=11 // pred_fallthru
          _
        // Predicated region
        $region21: #{tpu_custom_call.1} parent=11 // pred_check
          %p427 = pneg %p129
        $region22: #{tpu_custom_call.1} parent=11 // pred_check_branch
          %429 = sbr.rel (%p427) target = $region24
        $region23: #{tpu_custom_call.1} parent=11 // pred_region
          _
        $region24: #{tpu_custom_call.1} parent=11 // pred_fallthru
          _
        // Predicated region
        $region25: #{tpu_custom_call.1} parent=11 // pred_check
          %p430 = pneg %p150
        $region26: #{tpu_custom_call.1} parent=11 // pred_check_branch
          %432 = sbr.rel (%p430) target = $region28
        $region27: #{tpu_custom_call.1} parent=11 // pred_region
          %s434 = ssub.s32 16, 16
          %435 = vsyncadd [#allocation5], %s434
          %s437 = sshll.u32 [#allocation4], 4
          %s438 = int_to_ptr.vmem [resolvable:$true] %s437
          %440 = dma.hbm_to_vmem [thread:$0]  %s4, 16, %s438, [#allocation5]
        $region28: #{tpu_custom_call.1} parent=11 // pred_fallthru
          _
        // Predicated region
        $region29: #{tpu_custom_call.1} parent=11 // pred_check
          %p441 = pneg %p275
        $region30: #{tpu_custom_call.1} parent=11 // pred_check_branch
          %443 = sbr.rel (%p441) target = $region32
        $region31: #{tpu_custom_call.1} parent=11 // pred_region
          _
        $region32: #{tpu_custom_call.1} parent=11 // pred_fallthru
          _
        // Predicated region
        $region33: #{tpu_custom_call.1} parent=11 // pred_check
          %p444 = pneg %p296
        $region34: #{tpu_custom_call.1} parent=11 // pred_check_branch
          %446 = sbr.rel (%p444) target = $region36
        $region35: #{tpu_custom_call.1} parent=11 // pred_region
          _
        $region36: #{tpu_custom_call.1} parent=11 // pred_fallthru
          _
        // Predicated region
        $region37: #{tpu_custom_call.1} parent=11 // pred_check
          %p447 = pneg %p317
        $region38: #{tpu_custom_call.1} parent=11 // pred_check_branch
          %449 = sbr.rel (%p447) target = $region40
        $region39: #{tpu_custom_call.1} parent=11 // pred_region
          _
        $region40: #{tpu_custom_call.1} parent=11 // pred_fallthru
          _
        // Predicated region
        $region41: #{tpu_custom_call.1} parent=11 // pred_check
          %p450 = pneg %p338
        $region42: #{tpu_custom_call.1} parent=11 // pred_check_branch
          %452 = sbr.rel (%p450) target = $region44
        $region43: #{tpu_custom_call.1} parent=11 // pred_region
          _
        $region44: #{tpu_custom_call.1} parent=11 // pred_fallthru
          _
        // Predicated region
        $region45: #{tpu_custom_call.1} parent=11 // pred_check
          %p453 = pneg %p359
        $region46: #{tpu_custom_call.1} parent=11 // pred_check_branch
          %455 = sbr.rel (%p453) target = $region48
        $region47: #{tpu_custom_call.1} parent=11 // pred_region
          %s457 = ssub.s32 512, 512
          %458 = vsyncadd [#allocation10], %s457
          %s459 = sshll.u32 [#allocation11], 4
          %s460 = int_to_ptr.vmem [resolvable:$true] %s459
          %465 = dma.hbm_to_vmem [thread:$0]  %s13, 512, %s460, [#allocation10], 128, 128, 8
        $region48: #{tpu_custom_call.1} parent=11 // pred_fallthru
          _
        // Predicated region
        $region49: #{tpu_custom_call.1} parent=11 // pred_check
          %p466 = pneg %p380
        $region50: #{tpu_custom_call.1} parent=11 // pred_check_branch
          %468 = sbr.rel (%p466) target = $region52
        $region51: #{tpu_custom_call.1} parent=11 // pred_region
          _
        $region52: #{tpu_custom_call.1} parent=11 // pred_fallthru
          _
      $region12: #{tpu_custom_call.1} parent=5 // pred_fallthru
        _
      %p469 = scmp.lt.s32.totalorder %s28, 10
      // Predicated region
      $region53: #{tpu_custom_call.1} parent=5 // pred_check
        %p470 = pneg %p469
      $region54: #{tpu_custom_call.1} parent=5 // pred_check_branch
        %472 = sbr.rel (%p470) target = $region56
      $region55: #{tpu_custom_call.1} parent=5 // pred_region
        // Predicated region
        $region57: #{tpu_custom_call.1} parent=55 // pred_check
          %p473 = pneg %p60
        $region58: #{tpu_custom_call.1} parent=55 // pred_check_branch
          %475 = sbr.rel (%p473) target = $region60
        $region59: #{tpu_custom_call.1} parent=55 // pred_region
          %p476 = scmp.lt.s32.totalorder %s35, 1
          %s477 = scalar_select %p476, %s35, 1
          %s478 = smul.addr %s477, 3
          %s479 = smul.addr %s478, 8
          %s480 = scalar_lea.vmem %s0, %s479
        $region60: #{tpu_custom_call.1} parent=55 // pred_fallthru
          _
        // Predicated region
        $region61: #{tpu_custom_call.1} parent=55 // pred_check
          %p481 = pneg %p170
        $region62: #{tpu_custom_call.1} parent=55 // pred_check_branch
          %483 = sbr.rel (%p481) target = $region64
        $region63: #{tpu_custom_call.1} parent=55 // pred_region
          %s484 = sand.u32 %s28, 1
          %s485 = scalar_lea.sflag [#allocation7], %s484
          %s486 = sand.u32 %s160, 1
          %s487 = smul.addr %s486, 32
          %s488 = scalar_lea.vmem [#allocation6], %s487
          %s490 = ssub.s32 512, 512
          %491 = vsyncadd %s485, %s490
          %s492 = smul.addr %s36, 4
          %s493 = smul.addr %s492, 128
          %s494 = scalar_lea.hbm %s5, %s493
          %s495 = sshll.u32 %s488, 4
          %s496 = int_to_ptr.vmem [resolvable:$true] %s495
          %501 = dma.hbm_to_vmem [thread:$0]  %s494, 512, %s496, %s485, 128, 128, 8
        $region64: #{tpu_custom_call.1} parent=55 // pred_fallthru
          _
        // Predicated region
        $region65: #{tpu_custom_call.1} parent=55 // pred_check
          %p502 = pneg %p196
        $region66: #{tpu_custom_call.1} parent=55 // pred_check_branch
          %504 = sbr.rel (%p502) target = $region68
        $region67: #{tpu_custom_call.1} parent=55 // pred_region
          %s505 = sand.u32 %s28, 1
          %s506 = scalar_lea.sflag [#allocation7], %s505
          %s507 = sand.u32 %s186, 1
          %s508 = scalar_lea.vmem [#allocation8], %s507
          %s510 = ssub.s32 16, 16
          %511 = vsyncadd %s506, %s510
          %s512 = smul.addr %s36, 16
          %s513 = scalar_lea.hbm %s6, %s512
          %s515 = sshll.u32 %s508, 4
          %s516 = int_to_ptr.vmem [resolvable:$true] %s515
          %518 = dma.hbm_to_vmem [thread:$0]  %s513, 16, %s516, %s506
        $region68: #{tpu_custom_call.1} parent=55 // pred_fallthru
          _
        // Predicated region
        $region69: #{tpu_custom_call.1} parent=55 // pred_check
          %p519 = pneg %p222
        $region70: #{tpu_custom_call.1} parent=55 // pred_check_branch
          %521 = sbr.rel (%p519) target = $region72
        $region71: #{tpu_custom_call.1} parent=55 // pred_region
          %s522 = sand.u32 %s28, 1
          %s523 = scalar_lea.sflag [#allocation10], %s522
          %s524 = sand.u32 %s212, 1
          %s525 = smul.addr %s524, 32
          %s526 = scalar_lea.vmem [#allocation9], %s525
          %s528 = ssub.s32 512, 512
          %529 = vsyncadd %s523, %s528
          %s530 = smul.addr %s36, 4
          %s531 = smul.addr %s530, 128
          %s532 = scalar_lea.hbm %s7, %s531
          %s533 = sshll.u32 %s526, 4
          %s534 = int_to_ptr.vmem [resolvable:$true] %s533
          %539 = dma.hbm_to_vmem [thread:$0]  %s532, 512, %s534, %s523, 128, 128, 8
        $region72: #{tpu_custom_call.1} parent=55 // pred_fallthru
          _
        // Predicated region
        $region73: #{tpu_custom_call.1} parent=55 // pred_check
          %p540 = pneg %p248
        $region74: #{tpu_custom_call.1} parent=55 // pred_check_branch
          %542 = sbr.rel (%p540) target = $region76
        $region75: #{tpu_custom_call.1} parent=55 // pred_region
          %p543 = scmp.lt.s32.totalorder %s36, 4
          %s544 = scalar_select %p543, %s36, 4
          %s545 = scalar_lea.vmem %s8, %s544
        $region76: #{tpu_custom_call.1} parent=55 // pred_fallthru
          _
      $region56: #{tpu_custom_call.1} parent=5 // pred_fallthru
        _
      %p546 = scmp.le.s32.totalorder 1, %s28
      %p547 = scmp.lt.s32.totalorder %s28, 11
      %p548 = pnand %p546, %p547
      %p549 = pneg %p548
      // Predicated region
      $region77: #{tpu_custom_call.1} parent=5 // pred_check
        _
      $region78: #{tpu_custom_call.1} parent=5 // pred_check_branch
        %551 = sbr.rel (%p548) target = $region80
      $region79: #{tpu_custom_call.1} parent=5 // pred_region
        %s552 = ssub.s32 %s28, 1
        // Predicated region
        $region81: #{tpu_custom_call.1} parent=79 // pred_check
          %p553 = pneg %p150
        $region82: #{tpu_custom_call.1} parent=79 // pred_check_branch
          %555 = sbr.rel (%p553) target = $region84
        $region83: #{tpu_custom_call.1} parent=79 // pred_region
          %556 = dma.done [#allocation5], 16
        $region84: #{tpu_custom_call.1} parent=79 // pred_fallthru
          _
        %s557 = sand.u32 %s33, 1
        %s558 = scalar_lea.sflag [#allocation7], %s557
        %s559 = sand.u32 %s163, 1
        %s560 = smul.addr %s559, 32
        %s561 = scalar_lea.vmem [#allocation6], %s560
        // Predicated region
        $region85: #{tpu_custom_call.1} parent=79 // pred_check
          %p562 = pneg %p176
        $region86: #{tpu_custom_call.1} parent=79 // pred_check_branch
          %564 = sbr.rel (%p562) target = $region88
        $region87: #{tpu_custom_call.1} parent=79 // pred_region
          %565 = dma.done %s558, 512
        $region88: #{tpu_custom_call.1} parent=79 // pred_fallthru
          _
        %s566 = sand.u32 %s33, 1
        %s567 = scalar_lea.sflag [#allocation7], %s566
        %s568 = sand.u32 %s189, 1
        %s569 = scalar_lea.vmem [#allocation8], %s568
        // Predicated region
        $region89: #{tpu_custom_call.1} parent=79 // pred_check
          %p570 = pneg %p202
        $region90: #{tpu_custom_call.1} parent=79 // pred_check_branch
          %572 = sbr.rel (%p570) target = $region92
        $region91: #{tpu_custom_call.1} parent=79 // pred_region
          %573 = dma.done %s567, 16
        $region92: #{tpu_custom_call.1} parent=79 // pred_fallthru
          _
        %s574 = sand.u32 %s33, 1
        %s575 = scalar_lea.sflag [#allocation10], %s574
        %s576 = sand.u32 %s215, 1
        %s577 = smul.addr %s576, 32
        %s578 = scalar_lea.vmem [#allocation9], %s577
        // Predicated region
        $region93: #{tpu_custom_call.1} parent=79 // pred_check
          %p579 = pneg %p228
        $region94: #{tpu_custom_call.1} parent=79 // pred_check_branch
          %581 = sbr.rel (%p579) target = $region96
        $region95: #{tpu_custom_call.1} parent=79 // pred_region
          %582 = dma.done %s575, 512
        $region96: #{tpu_custom_call.1} parent=79 // pred_fallthru
          _
        // Predicated region
        $region97: #{tpu_custom_call.1} parent=79 // pred_check
          %p583 = pneg %p359
        $region98: #{tpu_custom_call.1} parent=79 // pred_check_branch
          %585 = sbr.rel (%p583) target = $region100
        $region99: #{tpu_custom_call.1} parent=79 // pred_region
          %586 = dma.done [#allocation10], 512
        $region100: #{tpu_custom_call.1} parent=79 // pred_fallthru
          _
        %p587 = scmp.lt.s32.totalorder %s37, 1
        %s588 = scalar_select %p587, %s37, 1
        %s589 = smul.addr %s588, 3
        %s590 = smul.addr %s589, 8
        %s591 = scalar_lea.vmem %s0, %s590
        %p592 = pneg %p66
        %p593 = pneg %p63
        %p594 = pneg %p87
        %p595 = pneg %p84
        %p596 = pneg %p108
        %p597 = pneg %p105
        %p598 = pneg %p129
        %p599 = pneg %p126
        %p600 = pneg %p150
        %p601 = pneg %p147
        %s602 = sand.u32 %s33, 1
        %s603 = scalar_lea.sflag [#allocation7], %s602
        %s604 = sand.u32 %s163, 1
        %s605 = smul.addr %s604, 32
        %s606 = scalar_lea.vmem [#allocation6], %s605
        %p607 = pneg %p176
        %p608 = pneg %p173
        %s609 = sand.u32 %s33, 1
        %s610 = scalar_lea.sflag [#allocation7], %s609
        %s611 = sand.u32 %s189, 1
        %s612 = scalar_lea.vmem [#allocation8], %s611
        %p613 = pneg %p202
        %p614 = pneg %p199
        %s615 = sand.u32 %s33, 1
        %s616 = scalar_lea.sflag [#allocation10], %s615
        %s617 = sand.u32 %s215, 1
        %s618 = smul.addr %s617, 32
        %s619 = scalar_lea.vmem [#allocation9], %s618
        %p620 = pneg %p228
        %p621 = pneg %p225
        %p622 = scmp.lt.s32.totalorder %s38, 4
        %s623 = scalar_select %p622, %s38, 4
        %s624 = scalar_lea.vmem %s8, %s623
        %p625 = pneg %p254
        %p626 = pneg %p251
        %p627 = pneg %p275
        %p628 = pneg %p272
        %p629 = pneg %p296
        %p630 = pneg %p293
        %p631 = pneg %p317
        %p632 = pneg %p314
        %p633 = pneg %p338
        %p634 = pneg %p335
        %p635 = pneg %p359
        %p636 = pneg %p356
        %p637 = pneg %p380
        %p638 = pneg %p377
        %p639 = pneg %p406
        %p640 = pneg %p403
        %p641 = scmp.lt.s32.totalorder %s37, 1
        %s642 = scalar_select %p641, %s37, 1
        %s643 = smul.addr %s642, 3
        %s644 = smul.addr %s643, 8
        %s645 = scalar_lea.vmem %s15, %s644
        %p646 = scmp.lt.s32.totalorder %s37, 1
        %s647 = scalar_select %p646, %s37, 1
        %s648 = smul.addr %s647, 3
        %s649 = smul.addr %s648, 8
        %s650 = scalar_lea.vmem %s0, %s649
        %p651 = scmp.lt.s32.totalorder %s38, 4
        %s652 = scalar_select %p651, %s38, 4
        %s653 = scalar_lea.vmem %s8, %s652
        %p654 = scmp.lt.s32.totalorder %s37, 1
        %s655 = scalar_select %p654, %s37, 1
        %s656 = smul.addr %s655, 3
        %s657 = smul.addr %s656, 8
        %s658 = scalar_lea.vmem %s15, %s657
        %v659 = vld [vmem:[%s9] sm:$0xff]
        %v660 = vld [vmem:[%s9 + $0x8] sm:$0xff]
        %v661 = vld [vmem:[%s9 + $0x10] sm:$0xff]
        %v662 = vld [vmem:[%s9 + $0x18] sm:$0xff]
        %v663 = vld [vmem:[%s10] sm:$0x1]
        %p664 = scmp.eq.s32.totalorder %s38, 0
        // Predicated region
        $region101: #{tpu_custom_call.1} parent=79 // pred_check
          %p665 = pneg %p664
        $region102: #{tpu_custom_call.1} parent=79 // pred_check_branch
          %667 = sbr.rel (%p665) target = $region104
        $region103: #{tpu_custom_call.1} parent=79 // pred_region
          %v668 = vld [vmem:[%s650] sm:$0xff]
          %v669 = vld [vmem:[%s650 + $0x8] sm:$0xff]
          %v670 = vld [vmem:[%s650 + $0x10] sm:$0xf]
          %v671 = vlaneseq
          %v672 = vand.u32 %v671, 127
          %vm673 = vcmp.lt.s32.totalorder %v672, 18
          %v674 = vsel %vm673, 0.0, -1e+30
          %v675 = vld [vmem:[%s1] sm:$0xff]
          %v676 = vld [vmem:[%s1 + $0x8] sm:$0xff]
          %v677 = vld [vmem:[%s1 + $0x10] sm:$0xff]
          %v678 = vld [vmem:[%s1 + $0x18] sm:$0xff]
          %v679 = vld [vmem:[%s2] sm:$0x1]
          %v680 = vld [vmem:[%s3] sm:$0xff]
          %v681 = vld [vmem:[%s3 + $0x8] sm:$0xff]
          %v682 = vld [vmem:[%s3 + $0x10] sm:$0xff]
          %v683 = vld [vmem:[%s3 + $0x18] sm:$0xff]
          %v684 = vld [vmem:[#allocation4] sm:$0x1]
          %v686 = vlaneseq
          %v687 = vshrl.u32 %v686, 7
          %v688 = vsub.s32 0, %v687
          %v689 = vrot.slane %v679, %v688
          %vm691 = vcmask 261120
          %v693 = vsel %vm691, %v668, 0
          %v696 = vsel %vm691, %v669, 0
          %v699 = vsel %vm691, %v670, 0
          %701 = vmatprep.subr.mxu0 0.0
          %702 = vmatpush1.msra.mxu0 0.0
          %703 = vmatprep.subr.mxu0 0.0
          %704 = vmatpush1.msra.mxu0 0.0
          %705 = vmatprep.subr.mxu0 0.0
          %706 = vmatpush1.msra.mxu0 0.0
          %707 = vmatprep.subr.mxu0 0.0
          %708 = vmatpush1.msra.mxu0 0.0
          %709 = vmatprep.subr.mxu0 0.0
          %710 = vmatpush1.msra.mxu0 0.0
          %711 = vmatprep.subr.mxu0 0.0
          %712 = vmatpush1.msra.mxu0 0.0
          %713 = vmatprep.subr.mxu0 0.0
          %714 = vmatpush1.msra.mxu0 0.0
          %715 = vmatprep.subr.mxu0 0.0
          %716 = vmatpush1.msra.mxu0 0.0
          %717 = vmatprep.subr.mxu0 0.0
          %718 = vmatpush1.msra.mxu0 0.0
          %719 = vmatprep.subr.mxu0 0.0
          %720 = vmatpush1.msra.mxu0 0.0
          %721 = vmatprep.subr.mxu0 0.0
          %722 = vmatpush1.msra.mxu0 0.0
          %723 = vmatprep.subr.mxu0 0.0
          %724 = vmatpush1.msra.mxu0 0.0
          %725 = vmatprep.subr.mxu0 0.0
          %726 = vmatpush1.msra.mxu0 %v678
          %727 = vmatprep.subr.mxu0 0.0
          %728 = vmatpush1.msra.mxu0 %v677
          %729 = vmatprep.subr.mxu0 0.0
          %730 = vmatpush1.msra.mxu0 %v676
          %731 = vmatprep.subr.mxu0 0.0
          %732 = vmatpush1.msra.mxu0 %v675
          %733 = vmatprep.subr.mxu0 0.0
          %734 = vmatpush2.msra.mxu0 0.0
          %735 = vmatprep.subr.mxu0 0.0
          %736 = vmatpush2.msra.mxu0 0.0
          %737 = vmatprep.subr.mxu0 0.0
          %738 = vmatpush2.msra.mxu0 0.0
          %739 = vmatprep.subr.mxu0 0.0
          %740 = vmatpush2.msra.mxu0 0.0
          %741 = vmatprep.subr.mxu0 0.0
          %742 = vmatpush2.msra.mxu0 0.0
          %743 = vmatprep.subr.mxu0 0.0
          %744 = vmatpush2.msra.mxu0 0.0
          %745 = vmatprep.subr.mxu0 0.0
          %746 = vmatpush2.msra.mxu0 0.0
          %747 = vmatprep.subr.mxu0 0.0
          %748 = vmatpush2.msra.mxu0 0.0
          %749 = vmatprep.subr.mxu0 0.0
          %750 = vmatpush2.msra.mxu0 0.0
          %751 = vmatprep.subr.mxu0 0.0
          %752 = vmatpush2.msra.mxu0 0.0
          %753 = vmatprep.subr.mxu0 0.0
          %754 = vmatpush2.msra.mxu0 0.0
          %755 = vmatprep.subr.mxu0 0.0
          %756 = vmatpush2.msra.mxu0 0.0
          %757 = vmatprep.subr.mxu0 0.0
          %758 = vmatpush2.msra.mxu0 0.0
          %759 = vmatprep.subr.mxu0 0.0
          %760 = vmatpush2.msra.mxu0 0.0
          %761 = vmatprep.subr.mxu0 0.0
          %762 = vmatpush2.msra.mxu0 0.0
          %763 = vmatprep.subr.mxu0 0.0
          %764 = vmatpush2.msra.mxu0 0.0
          %765 = vmatprep.mubr.f32.mxu0 0.0
          %766 = vmatmul.mubr.f32.gmra.mxu0 %v693
          %v767 = vpop.f32.mrf.mxu0
          %v768 = vadd.f32 %v689, %v767
          %v769 = vpop.f32.mrf.mxu0
          %770 = vmatprep.mubr.f32.mxu0 0.0
          %771 = vmatmul.mubr.f32.gmra.mxu0 %v696
          %v772 = vpop.f32.mrf.mxu0
          %v773 = vadd.f32 %v689, %v772
          %v774 = vpop.f32.mrf.mxu0
          %775 = vmatprep.mubr.f32.mxu0 0.0
          %776 = vmatmul.mubr.f32.gmra.mxu0 %v699
          %v777 = vpop.f32.mrf.mxu0
          %v778 = vadd.f32 %v689, %v777
          %v779 = vpop.f32.mrf.mxu0
          %780 = vdwg.mxu0
          %784 = vrot.lane.b32.xlu0 %v768, 124
          %v785 = vpop.permute.xlu0 %784
          %786 = vrot.lane.b32.xlu0 %v773, 124
          %v787 = vpop.permute.xlu0 %786
          %788 = vrot.lane.b32.xlu0 %v778, 124
          %v789 = vpop.permute.xlu0 %788
          %790 = vrot.lane.b32.xlu0 %v768, 120
          %v791 = vpop.permute.xlu0 %790
          %792 = vrot.lane.b32.xlu0 %v773, 120
          %v793 = vpop.permute.xlu0 %792
          %794 = vrot.lane.b32.xlu0 %v778, 120
          %v795 = vpop.permute.xlu0 %794
          %796 = vrot.lane.b32.xlu0 %v768, 116
          %v797 = vpop.permute.xlu0 %796
          %798 = vrot.lane.b32.xlu0 %v773, 116
          %v799 = vpop.permute.xlu0 %798
          %800 = vrot.lane.b32.xlu0 %v778, 116
          %v801 = vpop.permute.xlu0 %800
          %802 = vrot.lane.b32.xlu0 %v768, 112
          %v803 = vpop.permute.xlu0 %802
          %804 = vrot.lane.b32.xlu0 %v773, 112
          %v805 = vpop.permute.xlu0 %804
          %806 = vrot.lane.b32.xlu0 %v778, 112
          %v807 = vpop.permute.xlu0 %806
          %808 = vrot.lane.b32.xlu0 %v768, 108
          %v809 = vpop.permute.xlu0 %808
          %810 = vrot.lane.b32.xlu0 %v773, 108
          %v811 = vpop.permute.xlu0 %810
          %812 = vrot.lane.b32.xlu0 %v778, 108
          %v813 = vpop.permute.xlu0 %812
          %814 = vrot.lane.b32.xlu0 %v768, 104
          %v815 = vpop.permute.xlu0 %814
          %816 = vrot.lane.b32.xlu0 %v773, 104
          %v817 = vpop.permute.xlu0 %816
          %818 = vrot.lane.b32.xlu0 %v778, 104
          %v819 = vpop.permute.xlu0 %818
          %820 = vrot.lane.b32.xlu0 %v768, 100
          %v821 = vpop.permute.xlu0 %820
          %822 = vrot.lane.b32.xlu0 %v773, 100
          %v823 = vpop.permute.xlu0 %822
          %824 = vrot.lane.b32.xlu0 %v778, 100
          %v825 = vpop.permute.xlu0 %824
          %826 = vrot.lane.b32.xlu0 %v768, 96
          %v827 = vpop.permute.xlu0 %826
          %828 = vrot.lane.b32.xlu0 %v773, 96
          %v829 = vpop.permute.xlu0 %828
          %830 = vrot.lane.b32.xlu0 %v778, 96
          %v831 = vpop.permute.xlu0 %830
          %vm832 = vcmask 31744
          %v833 = vsel %vm832, %v768, 0
          %v835 = vsel %vm832, %v773, 0
          %v837 = vsel %vm832, %v778, 0
          %v839 = vsel %vm832, %v827, 0
          %v841 = vsel %vm832, %v829, 0
          %v843 = vsel %vm832, %v831, 0
          %845 = vmatprep.subr.mxu0 0.0
          %846 = vmatpush1.xpose.msra.mxu0 0.0
          %847 = vmatprep.subr.mxu0 0.0
          %848 = vmatpush1.xpose.msra.mxu0 0.0
          %849 = vmatprep.subr.mxu0 0.0
          %850 = vmatpush1.xpose.msra.mxu0 0.0
          %851 = vmatprep.subr.mxu0 0.0
          %852 = vmatpush1.xpose.msra.mxu0 0.0
          %853 = vmatprep.subr.mxu0 0.0
          %854 = vmatpush1.xpose.msra.mxu0 0.0
          %855 = vmatprep.subr.mxu0 0.0
          %856 = vmatpush1.xpose.msra.mxu0 0.0
          %857 = vmatprep.subr.mxu0 0.0
          %858 = vmatpush1.xpose.msra.mxu0 0.0
          %859 = vmatprep.subr.mxu0 0.0
          %860 = vmatpush1.xpose.msra.mxu0 0.0
          %861 = vmatprep.subr.mxu0 0.0
          %862 = vmatpush1.xpose.msra.mxu0 0.0
          %863 = vmatprep.subr.mxu0 0.0
          %864 = vmatpush1.xpose.msra.mxu0 0.0
          %865 = vmatprep.subr.mxu0 0.0
          %866 = vmatpush1.xpose.msra.mxu0 0.0
          %867 = vmatprep.subr.mxu0 0.0
          %868 = vmatpush1.xpose.msra.mxu0 0.0
          %869 = vmatprep.subr.mxu0 0.0
          %870 = vmatpush1.xpose.msra.mxu0 0.0
          %871 = vmatprep.subr.mxu0 0.0
          %872 = vmatpush1.xpose.msra.mxu0 %v843
          %873 = vmatprep.subr.mxu0 0.0
          %874 = vmatpush1.xpose.msra.mxu0 %v841
          %875 = vmatprep.subr.mxu0 0.0
          %876 = vmatpush1.xpose.msra.mxu0 %v839
          %877 = vmatprep.subr.mxu0 0.0
          %878 = vmatpush2.xpose.msra.mxu0 0.0
          %879 = vmatprep.subr.mxu0 0.0
          %880 = vmatpush2.xpose.msra.mxu0 0.0
          %881 = vmatprep.subr.mxu0 0.0
          %882 = vmatpush2.xpose.msra.mxu0 0.0
          %883 = vmatprep.subr.mxu0 0.0
          %884 = vmatpush2.xpose.msra.mxu0 0.0
          %885 = vmatprep.subr.mxu0 0.0
          %886 = vmatpush2.xpose.msra.mxu0 0.0
          %887 = vmatprep.subr.mxu0 0.0
          %888 = vmatpush2.xpose.msra.mxu0 0.0
          %889 = vmatprep.subr.mxu0 0.0
          %890 = vmatpush2.xpose.msra.mxu0 0.0
          %891 = vmatprep.subr.mxu0 0.0
          %892 = vmatpush2.xpose.msra.mxu0 0.0
          %893 = vmatprep.subr.mxu0 0.0
          %894 = vmatpush2.xpose.msra.mxu0 0.0
          %895 = vmatprep.subr.mxu0 0.0
          %896 = vmatpush2.xpose.msra.mxu0 0.0
          %897 = vmatprep.subr.mxu0 0.0
          %898 = vmatpush2.xpose.msra.mxu0 0.0
          %899 = vmatprep.subr.mxu0 0.0
          %900 = vmatpush2.xpose.msra.mxu0 0.0
          %901 = vmatprep.subr.mxu0 0.0
          %902 = vmatpush2.xpose.msra.mxu0 0.0
          %903 = vmatprep.subr.mxu0 0.0
          %904 = vmatpush2.xpose.msra.mxu0 0.0
          %905 = vmatprep.subr.mxu0 0.0
          %906 = vmatpush2.xpose.msra.mxu0 0.0
          %907 = vmatprep.subr.mxu0 0.0
          %908 = vmatpush2.xpose.msra.mxu0 0.0
          %909 = vmatprep.mubr.f32.mxu0 0.0
          %910 = vmatmul.mubr.f32.gmra.mxu0 %v833
          %v911 = vpop.f32.mrf.mxu0
          %v912 = vadd.f32 0.0, %v911
          %v913 = vpop.f32.mrf.mxu0
          %914 = vmatprep.mubr.f32.mxu0 0.0
          %915 = vmatmul.mubr.f32.gmra.mxu0 %v835
          %v916 = vpop.f32.mrf.mxu0
          %v917 = vadd.f32 0.0, %v916
          %v918 = vpop.f32.mrf.mxu0
          %919 = vmatprep.mubr.f32.mxu0 0.0
          %920 = vmatmul.mubr.f32.gmra.mxu0 %v837
          %v921 = vpop.f32.mrf.mxu0
          %v922 = vadd.f32 0.0, %v921
          %v923 = vpop.f32.mrf.mxu0
          %924 = vdwg.mxu0
          %925 = vrot.lane.b32.xlu0 %v785, 96
          %v926 = vpop.permute.xlu0 %925
          %927 = vrot.lane.b32.xlu0 %v787, 96
          %v928 = vpop.permute.xlu0 %927
          %929 = vrot.lane.b32.xlu0 %v789, 96
          %v930 = vpop.permute.xlu0 %929
          %v931 = vsel %vm832, %v785, 0
          %v933 = vsel %vm832, %v787, 0
          %v935 = vsel %vm832, %v789, 0
          %v937 = vsel %vm832, %v926, 0
          %v939 = vsel %vm832, %v928, 0
          %v941 = vsel %vm832, %v930, 0
          %943 = vmatprep.subr.mxu0 0.0
          %944 = vmatpush1.xpose.msra.mxu0 0.0
          %945 = vmatprep.subr.mxu0 0.0
          %946 = vmatpush1.xpose.msra.mxu0 0.0
          %947 = vmatprep.subr.mxu0 0.0
          %948 = vmatpush1.xpose.msra.mxu0 0.0
          %949 = vmatprep.subr.mxu0 0.0
          %950 = vmatpush1.xpose.msra.mxu0 0.0
          %951 = vmatprep.subr.mxu0 0.0
          %952 = vmatpush1.xpose.msra.mxu0 0.0
          %953 = vmatprep.subr.mxu0 0.0
          %954 = vmatpush1.xpose.msra.mxu0 0.0
          %955 = vmatprep.subr.mxu0 0.0
          %956 = vmatpush1.xpose.msra.mxu0 0.0
          %957 = vmatprep.subr.mxu0 0.0
          %958 = vmatpush1.xpose.msra.mxu0 0.0
          %959 = vmatprep.subr.mxu0 0.0
          %960 = vmatpush1.xpose.msra.mxu0 0.0
          %961 = vmatprep.subr.mxu0 0.0
          %962 = vmatpush1.xpose.msra.mxu0 0.0
          %963 = vmatprep.subr.mxu0 0.0
          %964 = vmatpush1.xpose.msra.mxu0 0.0
          %965 = vmatprep.subr.mxu0 0.0
          %966 = vmatpush1.xpose.msra.mxu0 0.0
          %967 = vmatprep.subr.mxu0 0.0
          %968 = vmatpush1.xpose.msra.mxu0 0.0
          %969 = vmatprep.subr.mxu0 0.0
          %970 = vmatpush1.xpose.msra.mxu0 %v941
          %971 = vmatprep.subr.mxu0 0.0
          %972 = vmatpush1.xpose.msra.mxu0 %v939
          %973 = vmatprep.subr.mxu0 0.0
          %974 = vmatpush1.xpose.msra.mxu0 %v937
          %975 = vmatprep.subr.mxu0 0.0
          %976 = vmatpush2.xpose.msra.mxu0 0.0
          %977 = vmatprep.subr.mxu0 0.0
          %978 = vmatpush2.xpose.msra.mxu0 0.0
          %979 = vmatprep.subr.mxu0 0.0
          %980 = vmatpush2.xpose.msra.mxu0 0.0
          %981 = vmatprep.subr.mxu0 0.0
          %982 = vmatpush2.xpose.msra.mxu0 0.0
          %983 = vmatprep.subr.mxu0 0.0
          %984 = vmatpush2.xpose.msra.mxu0 0.0
          %985 = vmatprep.subr.mxu0 0.0
          %986 = vmatpush2.xpose.msra.mxu0 0.0
          %987 = vmatprep.subr.mxu0 0.0
          %988 = vmatpush2.xpose.msra.mxu0 0.0
          %989 = vmatprep.subr.mxu0 0.0
          %990 = vmatpush2.xpose.msra.mxu0 0.0
          %991 = vmatprep.subr.mxu0 0.0
          %992 = vmatpush2.xpose.msra.mxu0 0.0
          %993 = vmatprep.subr.mxu0 0.0
          %994 = vmatpush2.xpose.msra.mxu0 0.0
          %995 = vmatprep.subr.mxu0 0.0
          %996 = vmatpush2.xpose.msra.mxu0 0.0
          %997 = vmatprep.subr.mxu0 0.0
          %998 = vmatpush2.xpose.msra.mxu0 0.0
          %999 = vmatprep.subr.mxu0 0.0
          %1000 = vmatpush2.xpose.msra.mxu0 0.0
          %1001 = vmatprep.subr.mxu0 0.0
          %1002 = vmatpush2.xpose.msra.mxu0 0.0
          %1003 = vmatprep.subr.mxu0 0.0
          %1004 = vmatpush2.xpose.msra.mxu0 0.0
          %1005 = vmatprep.subr.mxu0 0.0
          %1006 = vmatpush2.xpose.msra.mxu0 0.0
          %1007 = vmatprep.mubr.f32.mxu0 0.0
          %1008 = vmatmul.mubr.f32.gmra.mxu0 %v931
          %v1009 = vpop.f32.mrf.mxu0
          %v1010 = vadd.f32 0.0, %v1009
          %v1011 = vpop.f32.mrf.mxu0
          %1012 = vmatprep.mubr.f32.mxu0 0.0
          %1013 = vmatmul.mubr.f32.gmra.mxu0 %v933
          %v1014 = vpop.f32.mrf.mxu0
          %v1015 = vadd.f32 0.0, %v1014
          %v1016 = vpop.f32.mrf.mxu0
          %1017 = vmatprep.mubr.f32.mxu0 0.0
          %1018 = vmatmul.mubr.f32.gmra.mxu0 %v935
          %v1019 = vpop.f32.mrf.mxu0
          %v1020 = vadd.f32 0.0, %v1019
          %v1021 = vpop.f32.mrf.mxu0
          %1022 = vdwg.mxu0
          %1023 = vrot.lane.b32.xlu0 %v791, 96
          %v1024 = vpop.permute.xlu0 %1023
          %1025 = vrot.lane.b32.xlu0 %v793, 96
          %v1026 = vpop.permute.xlu0 %1025
          %1027 = vrot.lane.b32.xlu0 %v795, 96
          %v1028 = vpop.permute.xlu0 %1027
          %v1029 = vsel %vm832, %v791, 0
          %v1031 = vsel %vm832, %v793, 0
          %v1033 = vsel %vm832, %v795, 0
          %v1035 = vsel %vm832, %v1024, 0
          %v1037 = vsel %vm832, %v1026, 0
          %v1039 = vsel %vm832, %v1028, 0
          %1041 = vmatprep.subr.mxu0 0.0
          %1042 = vmatpush1.xpose.msra.mxu0 0.0
          %1043 = vmatprep.subr.mxu0 0.0
          %1044 = vmatpush1.xpose.msra.mxu0 0.0
          %1045 = vmatprep.subr.mxu0 0.0
          %1046 = vmatpush1.xpose.msra.mxu0 0.0
          %1047 = vmatprep.subr.mxu0 0.0
          %1048 = vmatpush1.xpose.msra.mxu0 0.0
          %1049 = vmatprep.subr.mxu0 0.0
          %1050 = vmatpush1.xpose.msra.mxu0 0.0
          %1051 = vmatprep.subr.mxu0 0.0
          %1052 = vmatpush1.xpose.msra.mxu0 0.0
          %1053 = vmatprep.subr.mxu0 0.0
          %1054 = vmatpush1.xpose.msra.mxu0 0.0
          %1055 = vmatprep.subr.mxu0 0.0
          %1056 = vmatpush1.xpose.msra.mxu0 0.0
          %1057 = vmatprep.subr.mxu0 0.0
          %1058 = vmatpush1.xpose.msra.mxu0 0.0
          %1059 = vmatprep.subr.mxu0 0.0
          %1060 = vmatpush1.xpose.msra.mxu0 0.0
          %1061 = vmatprep.subr.mxu0 0.0
          %1062 = vmatpush1.xpose.msra.mxu0 0.0
          %1063 = vmatprep.subr.mxu0 0.0
          %1064 = vmatpush1.xpose.msra.mxu0 0.0
          %1065 = vmatprep.subr.mxu0 0.0
          %1066 = vmatpush1.xpose.msra.mxu0 0.0
          %1067 = vmatprep.subr.mxu0 0.0
          %1068 = vmatpush1.xpose.msra.mxu0 %v1039
          %1069 = vmatprep.subr.mxu0 0.0
          %1070 = vmatpush1.xpose.msra.mxu0 %v1037
          %1071 = vmatprep.subr.mxu0 0.0
          %1072 = vmatpush1.xpose.msra.mxu0 %v1035
          %1073 = vmatprep.subr.mxu0 0.0
          %1074 = vmatpush2.xpose.msra.mxu0 0.0
          %1075 = vmatprep.subr.mxu0 0.0
          %1076 = vmatpush2.xpose.msra.mxu0 0.0
          %1077 = vmatprep.subr.mxu0 0.0
          %1078 = vmatpush2.xpose.msra.mxu0 0.0
          %1079 = vmatprep.subr.mxu0 0.0
          %1080 = vmatpush2.xpose.msra.mxu0 0.0
          %1081 = vmatprep.subr.mxu0 0.0
          %1082 = vmatpush2.xpose.msra.mxu0 0.0
          %1083 = vmatprep.subr.mxu0 0.0
          %1084 = vmatpush2.xpose.msra.mxu0 0.0
          %1085 = vmatprep.subr.mxu0 0.0
          %1086 = vmatpush2.xpose.msra.mxu0 0.0
          %1087 = vmatprep.subr.mxu0 0.0
          %1088 = vmatpush2.xpose.msra.mxu0 0.0
          %1089 = vmatprep.subr.mxu0 0.0
          %1090 = vmatpush2.xpose.msra.mxu0 0.0
          %1091 = vmatprep.subr.mxu0 0.0
          %1092 = vmatpush2.xpose.msra.mxu0 0.0
          %1093 = vmatprep.subr.mxu0 0.0
          %1094 = vmatpush2.xpose.msra.mxu0 0.0
          %1095 = vmatprep.subr.mxu0 0.0
          %1096 = vmatpush2.xpose.msra.mxu0 0.0
          %1097 = vmatprep.subr.mxu0 0.0
          %1098 = vmatpush2.xpose.msra.mxu0 0.0
          %1099 = vmatprep.subr.mxu0 0.0
          %1100 = vmatpush2.xpose.msra.mxu0 0.0
          %1101 = vmatprep.subr.mxu0 0.0
          %1102 = vmatpush2.xpose.msra.mxu0 0.0
          %1103 = vmatprep.subr.mxu0 0.0
          %1104 = vmatpush2.xpose.msra.mxu0 0.0
          %1105 = vmatprep.mubr.f32.mxu0 0.0
          %1106 = vmatmul.mubr.f32.gmra.mxu0 %v1029
          %v1107 = vpop.f32.mrf.mxu0
          %v1108 = vadd.f32 0.0, %v1107
          %v1109 = vpop.f32.mrf.mxu0
          %1110 = vmatprep.mubr.f32.mxu0 0.0
          %1111 = vmatmul.mubr.f32.gmra.mxu0 %v1031
          %v1112 = vpop.f32.mrf.mxu0
          %v1113 = vadd.f32 0.0, %v1112
          %v1114 = vpop.f32.mrf.mxu0
          %1115 = vmatprep.mubr.f32.mxu0 0.0
          %1116 = vmatmul.mubr.f32.gmra.mxu0 %v1033
          %v1117 = vpop.f32.mrf.mxu0
          %v1118 = vadd.f32 0.0, %v1117
          %v1119 = vpop.f32.mrf.mxu0
          %1120 = vdwg.mxu0
          %1121 = vrot.lane.b32.xlu0 %v797, 96
          %v1122 = vpop.permute.xlu0 %1121
          %1123 = vrot.lane.b32.xlu0 %v799, 96
          %v1124 = vpop.permute.xlu0 %1123
          %1125 = vrot.lane.b32.xlu0 %v801, 96
          %v1126 = vpop.permute.xlu0 %1125
          %v1127 = vsel %vm832, %v797, 0
          %v1129 = vsel %vm832, %v799, 0
          %v1131 = vsel %vm832, %v801, 0
          %v1133 = vsel %vm832, %v1122, 0
          %v1135 = vsel %vm832, %v1124, 0
          %v1137 = vsel %vm832, %v1126, 0
          %1139 = vmatprep.subr.mxu0 0.0
          %1140 = vmatpush1.xpose.msra.mxu0 0.0
          %1141 = vmatprep.subr.mxu0 0.0
          %1142 = vmatpush1.xpose.msra.mxu0 0.0
          %1143 = vmatprep.subr.mxu0 0.0
          %1144 = vmatpush1.xpose.msra.mxu0 0.0
          %1145 = vmatprep.subr.mxu0 0.0
          %1146 = vmatpush1.xpose.msra.mxu0 0.0
          %1147 = vmatprep.subr.mxu0 0.0
          %1148 = vmatpush1.xpose.msra.mxu0 0.0
          %1149 = vmatprep.subr.mxu0 0.0
          %1150 = vmatpush1.xpose.msra.mxu0 0.0
          %1151 = vmatprep.subr.mxu0 0.0
          %1152 = vmatpush1.xpose.msra.mxu0 0.0
          %1153 = vmatprep.subr.mxu0 0.0
          %1154 = vmatpush1.xpose.msra.mxu0 0.0
          %1155 = vmatprep.subr.mxu0 0.0
          %1156 = vmatpush1.xpose.msra.mxu0 0.0
          %1157 = vmatprep.subr.mxu0 0.0
          %1158 = vmatpush1.xpose.msra.mxu0 0.0
          %1159 = vmatprep.subr.mxu0 0.0
          %1160 = vmatpush1.xpose.msra.mxu0 0.0
          %1161 = vmatprep.subr.mxu0 0.0
          %1162 = vmatpush1.xpose.msra.mxu0 0.0
          %1163 = vmatprep.subr.mxu0 0.0
          %1164 = vmatpush1.xpose.msra.mxu0 0.0
          %1165 = vmatprep.subr.mxu0 0.0
          %1166 = vmatpush1.xpose.msra.mxu0 %v1137
          %1167 = vmatprep.subr.mxu0 0.0
          %1168 = vmatpush1.xpose.msra.mxu0 %v1135
          %1169 = vmatprep.subr.mxu0 0.0
          %1170 = vmatpush1.xpose.msra.mxu0 %v1133
          %1171 = vmatprep.subr.mxu0 0.0
          %1172 = vmatpush2.xpose.msra.mxu0 0.0
          %1173 = vmatprep.subr.mxu0 0.0
          %1174 = vmatpush2.xpose.msra.mxu0 0.0
          %1175 = vmatprep.subr.mxu0 0.0
          %1176 = vmatpush2.xpose.msra.mxu0 0.0
          %1177 = vmatprep.subr.mxu0 0.0
          %1178 = vmatpush2.xpose.msra.mxu0 0.0
          %1179 = vmatprep.subr.mxu0 0.0
          %1180 = vmatpush2.xpose.msra.mxu0 0.0
          %1181 = vmatprep.subr.mxu0 0.0
          %1182 = vmatpush2.xpose.msra.mxu0 0.0
          %1183 = vmatprep.subr.mxu0 0.0
          %1184 = vmatpush2.xpose.msra.mxu0 0.0
          %1185 = vmatprep.subr.mxu0 0.0
          %1186 = vmatpush2.xpose.msra.mxu0 0.0
          %1187 = vmatprep.subr.mxu0 0.0
          %1188 = vmatpush2.xpose.msra.mxu0 0.0
          %1189 = vmatprep.subr.mxu0 0.0
          %1190 = vmatpush2.xpose.msra.mxu0 0.0
          %1191 = vmatprep.subr.mxu0 0.0
          %1192 = vmatpush2.xpose.msra.mxu0 0.0
          %1193 = vmatprep.subr.mxu0 0.0
          %1194 = vmatpush2.xpose.msra.mxu0 0.0
          %1195 = vmatprep.subr.mxu0 0.0
          %1196 = vmatpush2.xpose.msra.mxu0 0.0
          %1197 = vmatprep.subr.mxu0 0.0
          %1198 = vmatpush2.xpose.msra.mxu0 0.0
          %1199 = vmatprep.subr.mxu0 0.0
          %1200 = vmatpush2.xpose.msra.mxu0 0.0
          %1201 = vmatprep.subr.mxu0 0.0
          %1202 = vmatpush2.xpose.msra.mxu0 0.0
          %1203 = vmatprep.mubr.f32.mxu0 0.0
          %1204 = vmatmul.mubr.f32.gmra.mxu0 %v1127
          %v1205 = vpop.f32.mrf.mxu0
          %v1206 = vadd.f32 0.0, %v1205
          %v1207 = vpop.f32.mrf.mxu0
          %1208 = vmatprep.mubr.f32.mxu0 0.0
          %1209 = vmatmul.mubr.f32.gmra.mxu0 %v1129
          %v1210 = vpop.f32.mrf.mxu0
          %v1211 = vadd.f32 0.0, %v1210
          %v1212 = vpop.f32.mrf.mxu0
          %1213 = vmatprep.mubr.f32.mxu0 0.0
          %1214 = vmatmul.mubr.f32.gmra.mxu0 %v1131
          %v1215 = vpop.f32.mrf.mxu0
          %v1216 = vadd.f32 0.0, %v1215
          %v1217 = vpop.f32.mrf.mxu0
          %1218 = vdwg.mxu0
          %1219 = vrot.lane.b32.xlu0 %v803, 96
          %v1220 = vpop.permute.xlu0 %1219
          %1221 = vrot.lane.b32.xlu0 %v805, 96
          %v1222 = vpop.permute.xlu0 %1221
          %1223 = vrot.lane.b32.xlu0 %v807, 96
          %v1224 = vpop.permute.xlu0 %1223
          %v1225 = vsel %vm832, %v803, 0
          %v1227 = vsel %vm832, %v805, 0
          %v1229 = vsel %vm832, %v807, 0
          %v1231 = vsel %vm832, %v1220, 0
          %v1233 = vsel %vm832, %v1222, 0
          %v1235 = vsel %vm832, %v1224, 0
          %1237 = vmatprep.subr.mxu0 0.0
          %1238 = vmatpush1.xpose.msra.mxu0 0.0
          %1239 = vmatprep.subr.mxu0 0.0
          %1240 = vmatpush1.xpose.msra.mxu0 0.0
          %1241 = vmatprep.subr.mxu0 0.0
          %1242 = vmatpush1.xpose.msra.mxu0 0.0
          %1243 = vmatprep.subr.mxu0 0.0
          %1244 = vmatpush1.xpose.msra.mxu0 0.0
          %1245 = vmatprep.subr.mxu0 0.0
          %1246 = vmatpush1.xpose.msra.mxu0 0.0
          %1247 = vmatprep.subr.mxu0 0.0
          %1248 = vmatpush1.xpose.msra.mxu0 0.0
          %1249 = vmatprep.subr.mxu0 0.0
          %1250 = vmatpush1.xpose.msra.mxu0 0.0
          %1251 = vmatprep.subr.mxu0 0.0
          %1252 = vmatpush1.xpose.msra.mxu0 0.0
          %1253 = vmatprep.subr.mxu0 0.0
          %1254 = vmatpush1.xpose.msra.mxu0 0.0
          %1255 = vmatprep.subr.mxu0 0.0
          %1256 = vmatpush1.xpose.msra.mxu0 0.0
          %1257 = vmatprep.subr.mxu0 0.0
          %1258 = vmatpush1.xpose.msra.mxu0 0.0
          %1259 = vmatprep.subr.mxu0 0.0
          %1260 = vmatpush1.xpose.msra.mxu0 0.0
          %1261 = vmatprep.subr.mxu0 0.0
          %1262 = vmatpush1.xpose.msra.mxu0 0.0
          %1263 = vmatprep.subr.mxu0 0.0
          %1264 = vmatpush1.xpose.msra.mxu0 %v1235
          %1265 = vmatprep.subr.mxu0 0.0
          %1266 = vmatpush1.xpose.msra.mxu0 %v1233
          %1267 = vmatprep.subr.mxu0 0.0
          %1268 = vmatpush1.xpose.msra.mxu0 %v1231
          %1269 = vmatprep.subr.mxu0 0.0
          %1270 = vmatpush2.xpose.msra.mxu0 0.0
          %1271 = vmatprep.subr.mxu0 0.0
          %1272 = vmatpush2.xpose.msra.mxu0 0.0
          %1273 = vmatprep.subr.mxu0 0.0
          %1274 = vmatpush2.xpose.msra.mxu0 0.0
          %1275 = vmatprep.subr.mxu0 0.0
          %1276 = vmatpush2.xpose.msra.mxu0 0.0
          %1277 = vmatprep.subr.mxu0 0.0
          %1278 = vmatpush2.xpose.msra.mxu0 0.0
          %1279 = vmatprep.subr.mxu0 0.0
          %1280 = vmatpush2.xpose.msra.mxu0 0.0
          %1281 = vmatprep.subr.mxu0 0.0
          %1282 = vmatpush2.xpose.msra.mxu0 0.0
          %1283 = vmatprep.subr.mxu0 0.0
          %1284 = vmatpush2.xpose.msra.mxu0 0.0
          %1285 = vmatprep.subr.mxu0 0.0
          %1286 = vmatpush2.xpose.msra.mxu0 0.0
          %1287 = vmatprep.subr.mxu0 0.0
          %1288 = vmatpush2.xpose.msra.mxu0 0.0
          %1289 = vmatprep.subr.mxu0 0.0
          %1290 = vmatpush2.xpose.msra.mxu0 0.0
          %1291 = vmatprep.subr.mxu0 0.0
          %1292 = vmatpush2.xpose.msra.mxu0 0.0
          %1293 = vmatprep.subr.mxu0 0.0
          %1294 = vmatpush2.xpose.msra.mxu0 0.0
          %1295 = vmatprep.subr.mxu0 0.0
          %1296 = vmatpush2.xpose.msra.mxu0 0.0
          %1297 = vmatprep.subr.mxu0 0.0
          %1298 = vmatpush2.xpose.msra.mxu0 0.0
          %1299 = vmatprep.subr.mxu0 0.0
          %1300 = vmatpush2.xpose.msra.mxu0 0.0
          %1301 = vmatprep.mubr.f32.mxu0 0.0
          %1302 = vmatmul.mubr.f32.gmra.mxu0 %v1225
          %v1303 = vpop.f32.mrf.mxu0
          %v1304 = vadd.f32 0.0, %v1303
          %v1305 = vpop.f32.mrf.mxu0
          %1306 = vmatprep.mubr.f32.mxu0 0.0
          %1307 = vmatmul.mubr.f32.gmra.mxu0 %v1227
          %v1308 = vpop.f32.mrf.mxu0
          %v1309 = vadd.f32 0.0, %v1308
          %v1310 = vpop.f32.mrf.mxu0
          %1311 = vmatprep.mubr.f32.mxu0 0.0
          %1312 = vmatmul.mubr.f32.gmra.mxu0 %v1229
          %v1313 = vpop.f32.mrf.mxu0
          %v1314 = vadd.f32 0.0, %v1313
          %v1315 = vpop.f32.mrf.mxu0
          %1316 = vdwg.mxu0
          %1317 = vrot.lane.b32.xlu0 %v809, 96
          %v1318 = vpop.permute.xlu0 %1317
          %1319 = vrot.lane.b32.xlu0 %v811, 96
          %v1320 = vpop.permute.xlu0 %1319
          %1321 = vrot.lane.b32.xlu0 %v813, 96
          %v1322 = vpop.permute.xlu0 %1321
          %v1323 = vsel %vm832, %v809, 0
          %v1325 = vsel %vm832, %v811, 0
          %v1327 = vsel %vm832, %v813, 0
          %v1329 = vsel %vm832, %v1318, 0
          %v1331 = vsel %vm832, %v1320, 0
          %v1333 = vsel %vm832, %v1322, 0
          %1335 = vmatprep.subr.mxu0 0.0
          %1336 = vmatpush1.xpose.msra.mxu0 0.0
          %1337 = vmatprep.subr.mxu0 0.0
          %1338 = vmatpush1.xpose.msra.mxu0 0.0
          %1339 = vmatprep.subr.mxu0 0.0
          %1340 = vmatpush1.xpose.msra.mxu0 0.0
          %1341 = vmatprep.subr.mxu0 0.0
          %1342 = vmatpush1.xpose.msra.mxu0 0.0
          %1343 = vmatprep.subr.mxu0 0.0
          %1344 = vmatpush1.xpose.msra.mxu0 0.0
          %1345 = vmatprep.subr.mxu0 0.0
          %1346 = vmatpush1.xpose.msra.mxu0 0.0
          %1347 = vmatprep.subr.mxu0 0.0
          %1348 = vmatpush1.xpose.msra.mxu0 0.0
          %1349 = vmatprep.subr.mxu0 0.0
          %1350 = vmatpush1.xpose.msra.mxu0 0.0
          %1351 = vmatprep.subr.mxu0 0.0
          %1352 = vmatpush1.xpose.msra.mxu0 0.0
          %1353 = vmatprep.subr.mxu0 0.0
          %1354 = vmatpush1.xpose.msra.mxu0 0.0
          %1355 = vmatprep.subr.mxu0 0.0
          %1356 = vmatpush1.xpose.msra.mxu0 0.0
          %1357 = vmatprep.subr.mxu0 0.0
          %1358 = vmatpush1.xpose.msra.mxu0 0.0
          %1359 = vmatprep.subr.mxu0 0.0
          %1360 = vmatpush1.xpose.msra.mxu0 0.0
          %1361 = vmatprep.subr.mxu0 0.0
          %1362 = vmatpush1.xpose.msra.mxu0 %v1333
          %1363 = vmatprep.subr.mxu0 0.0
          %1364 = vmatpush1.xpose.msra.mxu0 %v1331
          %1365 = vmatprep.subr.mxu0 0.0
          %1366 = vmatpush1.xpose.msra.mxu0 %v1329
          %1367 = vmatprep.subr.mxu0 0.0
          %1368 = vmatpush2.xpose.msra.mxu0 0.0
          %1369 = vmatprep.subr.mxu0 0.0
          %1370 = vmatpush2.xpose.msra.mxu0 0.0
          %1371 = vmatprep.subr.mxu0 0.0
          %1372 = vmatpush2.xpose.msra.mxu0 0.0
          %1373 = vmatprep.subr.mxu0 0.0
          %1374 = vmatpush2.xpose.msra.mxu0 0.0
          %1375 = vmatprep.subr.mxu0 0.0
          %1376 = vmatpush2.xpose.msra.mxu0 0.0
          %1377 = vmatprep.subr.mxu0 0.0
          %1378 = vmatpush2.xpose.msra.mxu0 0.0
          %1379 = vmatprep.subr.mxu0 0.0
          %1380 = vmatpush2.xpose.msra.mxu0 0.0
          %1381 = vmatprep.subr.mxu0 0.0
          %1382 = vmatpush2.xpose.msra.mxu0 0.0
          %1383 = vmatprep.subr.mxu0 0.0
          %1384 = vmatpush2.xpose.msra.mxu0 0.0
          %1385 = vmatprep.subr.mxu0 0.0
          %1386 = vmatpush2.xpose.msra.mxu0 0.0
          %1387 = vmatprep.subr.mxu0 0.0
          %1388 = vmatpush2.xpose.msra.mxu0 0.0
          %1389 = vmatprep.subr.mxu0 0.0
          %1390 = vmatpush2.xpose.msra.mxu0 0.0
          %1391 = vmatprep.subr.mxu0 0.0
          %1392 = vmatpush2.xpose.msra.mxu0 0.0
          %1393 = vmatprep.subr.mxu0 0.0
          %1394 = vmatpush2.xpose.msra.mxu0 0.0
          %1395 = vmatprep.subr.mxu0 0.0
          %1396 = vmatpush2.xpose.msra.mxu0 0.0
          %1397 = vmatprep.subr.mxu0 0.0
          %1398 = vmatpush2.xpose.msra.mxu0 0.0
          %1399 = vmatprep.mubr.f32.mxu0 0.0
          %1400 = vmatmul.mubr.f32.gmra.mxu0 %v1323
          %v1401 = vpop.f32.mrf.mxu0
          %v1402 = vadd.f32 0.0, %v1401
          %v1403 = vpop.f32.mrf.mxu0
          %1404 = vmatprep.mubr.f32.mxu0 0.0
          %1405 = vmatmul.mubr.f32.gmra.mxu0 %v1325
          %v1406 = vpop.f32.mrf.mxu0
          %v1407 = vadd.f32 0.0, %v1406
          %v1408 = vpop.f32.mrf.mxu0
          %1409 = vmatprep.mubr.f32.mxu0 0.0
          %1410 = vmatmul.mubr.f32.gmra.mxu0 %v1327
          %v1411 = vpop.f32.mrf.mxu0
          %v1412 = vadd.f32 0.0, %v1411
          %v1413 = vpop.f32.mrf.mxu0
          %1414 = vdwg.mxu0
          %1415 = vrot.lane.b32.xlu0 %v815, 96
          %v1416 = vpop.permute.xlu0 %1415
          %1417 = vrot.lane.b32.xlu0 %v817, 96
          %v1418 = vpop.permute.xlu0 %1417
          %1419 = vrot.lane.b32.xlu0 %v819, 96
          %v1420 = vpop.permute.xlu0 %1419
          %v1421 = vsel %vm832, %v815, 0
          %v1423 = vsel %vm832, %v817, 0
          %v1425 = vsel %vm832, %v819, 0
          %v1427 = vsel %vm832, %v1416, 0
          %v1429 = vsel %vm832, %v1418, 0
          %v1431 = vsel %vm832, %v1420, 0
          %1433 = vmatprep.subr.mxu0 0.0
          %1434 = vmatpush1.xpose.msra.mxu0 0.0
          %1435 = vmatprep.subr.mxu0 0.0
          %1436 = vmatpush1.xpose.msra.mxu0 0.0
          %1437 = vmatprep.subr.mxu0 0.0
          %1438 = vmatpush1.xpose.msra.mxu0 0.0
          %1439 = vmatprep.subr.mxu0 0.0
          %1440 = vmatpush1.xpose.msra.mxu0 0.0
          %1441 = vmatprep.subr.mxu0 0.0
          %1442 = vmatpush1.xpose.msra.mxu0 0.0
          %1443 = vmatprep.subr.mxu0 0.0
          %1444 = vmatpush1.xpose.msra.mxu0 0.0
          %1445 = vmatprep.subr.mxu0 0.0
          %1446 = vmatpush1.xpose.msra.mxu0 0.0
          %1447 = vmatprep.subr.mxu0 0.0
          %1448 = vmatpush1.xpose.msra.mxu0 0.0
          %1449 = vmatprep.subr.mxu0 0.0
          %1450 = vmatpush1.xpose.msra.mxu0 0.0
          %1451 = vmatprep.subr.mxu0 0.0
          %1452 = vmatpush1.xpose.msra.mxu0 0.0
          %1453 = vmatprep.subr.mxu0 0.0
          %1454 = vmatpush1.xpose.msra.mxu0 0.0
          %1455 = vmatprep.subr.mxu0 0.0
          %1456 = vmatpush1.xpose.msra.mxu0 0.0
          %1457 = vmatprep.subr.mxu0 0.0
          %1458 = vmatpush1.xpose.msra.mxu0 0.0
          %1459 = vmatprep.subr.mxu0 0.0
          %1460 = vmatpush1.xpose.msra.mxu0 %v1431
          %1461 = vmatprep.subr.mxu0 0.0
          %1462 = vmatpush1.xpose.msra.mxu0 %v1429
          %1463 = vmatprep.subr.mxu0 0.0
          %1464 = vmatpush1.xpose.msra.mxu0 %v1427
          %1465 = vmatprep.subr.mxu0 0.0
          %1466 = vmatpush2.xpose.msra.mxu0 0.0
          %1467 = vmatprep.subr.mxu0 0.0
          %1468 = vmatpush2.xpose.msra.mxu0 0.0
          %1469 = vmatprep.subr.mxu0 0.0
          %1470 = vmatpush2.xpose.msra.mxu0 0.0
          %1471 = vmatprep.subr.mxu0 0.0
          %1472 = vmatpush2.xpose.msra.mxu0 0.0
          %1473 = vmatprep.subr.mxu0 0.0
          %1474 = vmatpush2.xpose.msra.mxu0 0.0
          %1475 = vmatprep.subr.mxu0 0.0
          %1476 = vmatpush2.xpose.msra.mxu0 0.0
          %1477 = vmatprep.subr.mxu0 0.0
          %1478 = vmatpush2.xpose.msra.mxu0 0.0
          %1479 = vmatprep.subr.mxu0 0.0
          %1480 = vmatpush2.xpose.msra.mxu0 0.0
          %1481 = vmatprep.subr.mxu0 0.0
          %1482 = vmatpush2.xpose.msra.mxu0 0.0
          %1483 = vmatprep.subr.mxu0 0.0
          %1484 = vmatpush2.xpose.msra.mxu0 0.0
          %1485 = vmatprep.subr.mxu0 0.0
          %1486 = vmatpush2.xpose.msra.mxu0 0.0
          %1487 = vmatprep.subr.mxu0 0.0
          %1488 = vmatpush2.xpose.msra.mxu0 0.0
          %1489 = vmatprep.subr.mxu0 0.0
          %1490 = vmatpush2.xpose.msra.mxu0 0.0
          %1491 = vmatprep.subr.mxu0 0.0
          %1492 = vmatpush2.xpose.msra.mxu0 0.0
          %1493 = vmatprep.subr.mxu0 0.0
          %1494 = vmatpush2.xpose.msra.mxu0 0.0
          %1495 = vmatprep.subr.mxu0 0.0
          %1496 = vmatpush2.xpose.msra.mxu0 0.0
          %1497 = vmatprep.mubr.f32.mxu0 0.0
          %1498 = vmatmul.mubr.f32.gmra.mxu0 %v1421
          %v1499 = vpop.f32.mrf.mxu0
          %v1500 = vadd.f32 0.0, %v1499
          %v1501 = vpop.f32.mrf.mxu0
          %1502 = vmatprep.mubr.f32.mxu0 0.0
          %1503 = vmatmul.mubr.f32.gmra.mxu0 %v1423
          %v1504 = vpop.f32.mrf.mxu0
          %v1505 = vadd.f32 0.0, %v1504
          %v1506 = vpop.f32.mrf.mxu0
          %1507 = vmatprep.mubr.f32.mxu0 0.0
          %1508 = vmatmul.mubr.f32.gmra.mxu0 %v1425
          %v1509 = vpop.f32.mrf.mxu0
          %v1510 = vadd.f32 0.0, %v1509
          %v1511 = vpop.f32.mrf.mxu0
          %1512 = vdwg.mxu0
          %1513 = vrot.lane.b32.xlu0 %v821, 96
          %v1514 = vpop.permute.xlu0 %1513
          %1515 = vrot.lane.b32.xlu0 %v823, 96
          %v1516 = vpop.permute.xlu0 %1515
          %1517 = vrot.lane.b32.xlu0 %v825, 96
          %v1518 = vpop.permute.xlu0 %1517
          %v1519 = vsel %vm832, %v821, 0
          %v1521 = vsel %vm832, %v823, 0
          %v1523 = vsel %vm832, %v825, 0
          %v1525 = vsel %vm832, %v1514, 0
          %v1527 = vsel %vm832, %v1516, 0
          %v1529 = vsel %vm832, %v1518, 0
          %1531 = vmatprep.subr.mxu0 0.0
          %1532 = vmatpush1.xpose.msra.mxu0 0.0
          %1533 = vmatprep.subr.mxu0 0.0
          %1534 = vmatpush1.xpose.msra.mxu0 0.0
          %1535 = vmatprep.subr.mxu0 0.0
          %1536 = vmatpush1.xpose.msra.mxu0 0.0
          %1537 = vmatprep.subr.mxu0 0.0
          %1538 = vmatpush1.xpose.msra.mxu0 0.0
          %1539 = vmatprep.subr.mxu0 0.0
          %1540 = vmatpush1.xpose.msra.mxu0 0.0
          %1541 = vmatprep.subr.mxu0 0.0
          %1542 = vmatpush1.xpose.msra.mxu0 0.0
          %1543 = vmatprep.subr.mxu0 0.0
          %1544 = vmatpush1.xpose.msra.mxu0 0.0
          %1545 = vmatprep.subr.mxu0 0.0
          %1546 = vmatpush1.xpose.msra.mxu0 0.0
          %1547 = vmatprep.subr.mxu0 0.0
          %1548 = vmatpush1.xpose.msra.mxu0 0.0
          %1549 = vmatprep.subr.mxu0 0.0
          %1550 = vmatpush1.xpose.msra.mxu0 0.0
          %1551 = vmatprep.subr.mxu0 0.0
          %1552 = vmatpush1.xpose.msra.mxu0 0.0
          %1553 = vmatprep.subr.mxu0 0.0
          %1554 = vmatpush1.xpose.msra.mxu0 0.0
          %1555 = vmatprep.subr.mxu0 0.0
          %1556 = vmatpush1.xpose.msra.mxu0 0.0
          %1557 = vmatprep.subr.mxu0 0.0
          %1558 = vmatpush1.xpose.msra.mxu0 %v1529
          %1559 = vmatprep.subr.mxu0 0.0
          %1560 = vmatpush1.xpose.msra.mxu0 %v1527
          %1561 = vmatprep.subr.mxu0 0.0
          %1562 = vmatpush1.xpose.msra.mxu0 %v1525
          %1563 = vmatprep.subr.mxu0 0.0
          %1564 = vmatpush2.xpose.msra.mxu0 0.0
          %1565 = vmatprep.subr.mxu0 0.0
          %1566 = vmatpush2.xpose.msra.mxu0 0.0
          %1567 = vmatprep.subr.mxu0 0.0
          %1568 = vmatpush2.xpose.msra.mxu0 0.0
          %1569 = vmatprep.subr.mxu0 0.0
          %1570 = vmatpush2.xpose.msra.mxu0 0.0
          %1571 = vmatprep.subr.mxu0 0.0
          %1572 = vmatpush2.xpose.msra.mxu0 0.0
          %1573 = vmatprep.subr.mxu0 0.0
          %1574 = vmatpush2.xpose.msra.mxu0 0.0
          %1575 = vmatprep.subr.mxu0 0.0
          %1576 = vmatpush2.xpose.msra.mxu0 0.0
          %1577 = vmatprep.subr.mxu0 0.0
          %1578 = vmatpush2.xpose.msra.mxu0 0.0
          %1579 = vmatprep.subr.mxu0 0.0
          %1580 = vmatpush2.xpose.msra.mxu0 0.0
          %1581 = vmatprep.subr.mxu0 0.0
          %1582 = vmatpush2.xpose.msra.mxu0 0.0
          %1583 = vmatprep.subr.mxu0 0.0
          %1584 = vmatpush2.xpose.msra.mxu0 0.0
          %1585 = vmatprep.subr.mxu0 0.0
          %1586 = vmatpush2.xpose.msra.mxu0 0.0
          %1587 = vmatprep.subr.mxu0 0.0
          %1588 = vmatpush2.xpose.msra.mxu0 0.0
          %1589 = vmatprep.subr.mxu0 0.0
          %1590 = vmatpush2.xpose.msra.mxu0 0.0
          %1591 = vmatprep.subr.mxu0 0.0
          %1592 = vmatpush2.xpose.msra.mxu0 0.0
          %1593 = vmatprep.subr.mxu0 0.0
          %1594 = vmatpush2.xpose.msra.mxu0 0.0
          %1595 = vmatprep.mubr.f32.mxu0 0.0
          %1596 = vmatmul.mubr.f32.gmra.mxu0 %v1519
          %v1597 = vpop.f32.mrf.mxu0
          %v1598 = vadd.f32 0.0, %v1597
          %v1599 = vpop.f32.mrf.mxu0
          %1600 = vmatprep.mubr.f32.mxu0 0.0
          %1601 = vmatmul.mubr.f32.gmra.mxu0 %v1521
          %v1602 = vpop.f32.mrf.mxu0
          %v1603 = vadd.f32 0.0, %v1602
          %v1604 = vpop.f32.mrf.mxu0
          %1605 = vmatprep.mubr.f32.mxu0 0.0
          %1606 = vmatmul.mubr.f32.gmra.mxu0 %v1523
          %v1607 = vpop.f32.mrf.mxu0
          %v1608 = vadd.f32 0.0, %v1607
          %v1609 = vpop.f32.mrf.mxu0
          %1610 = vdwg.mxu0
          %v1611 = vmul.f32 %v912, 0.5
          %v1612 = vmul.f32 %v917, 0.5
          %v1613 = vmul.f32 %v922, 0.5
          %v1614 = vmul.f32 %v1010, 0.5
          %v1615 = vmul.f32 %v1015, 0.5
          %v1616 = vmul.f32 %v1020, 0.5
          %v1617 = vmul.f32 %v1108, 0.5
          %v1618 = vmul.f32 %v1113, 0.5
          %v1619 = vmul.f32 %v1118, 0.5
          %v1620 = vmul.f32 %v1206, 0.5
          %v1621 = vmul.f32 %v1211, 0.5
          %v1622 = vmul.f32 %v1216, 0.5
          %v1623 = vmul.f32 %v1304, 0.5
          %v1624 = vmul.f32 %v1309, 0.5
          %v1625 = vmul.f32 %v1314, 0.5
          %v1626 = vmul.f32 %v1402, 0.5
          %v1627 = vmul.f32 %v1407, 0.5
          %v1628 = vmul.f32 %v1412, 0.5
          %v1629 = vmul.f32 %v1500, 0.5
          %v1630 = vmul.f32 %v1505, 0.5
          %v1631 = vmul.f32 %v1510, 0.5
          %v1632 = vmul.f32 %v1598, 0.5
          %v1633 = vmul.f32 %v1603, 0.5
          %v1634 = vmul.f32 %v1608, 0.5
          %v1635 = vadd.f32 %v1611, %v674
          %v1636 = vadd.f32 %v1612, %v674
          %v1637 = vadd.f32 %v1613, %v674
          %v1638 = vadd.f32 %v1614, %v674
          %v1639 = vadd.f32 %v1615, %v674
          %v1640 = vadd.f32 %v1616, %v674
          %v1641 = vadd.f32 %v1617, %v674
          %v1642 = vadd.f32 %v1618, %v674
          %v1643 = vadd.f32 %v1619, %v674
          %v1644 = vadd.f32 %v1620, %v674
          %v1645 = vadd.f32 %v1621, %v674
          %v1646 = vadd.f32 %v1622, %v674
          %v1647 = vadd.f32 %v1623, %v674
          %v1648 = vadd.f32 %v1624, %v674
          %v1649 = vadd.f32 %v1625, %v674
          %v1650 = vadd.f32 %v1626, %v674
          %v1651 = vadd.f32 %v1627, %v674
          %v1652 = vadd.f32 %v1628, %v674
          %v1653 = vadd.f32 %v1629, %v674
          %v1654 = vadd.f32 %v1630, %v674
          %v1655 = vadd.f32 %v1631, %v674
          %v1656 = vadd.f32 %v1632, %v674
          %v1657 = vadd.f32 %v1633, %v674
          %v1658 = vadd.f32 %v1634, %v674
          %vm1659 = vcmask 162816
          %v1660 = vsel %vm1659, %v1635, -inf
          %1661 = vmax.xlane.f32.xlu0 %v1660
          %v1662 = vpop.xlane.xlu0 %1661
          %v1663 = vsel %vm1659, %v1636, -inf
          %1664 = vmax.xlane.f32.xlu0 %v1663
          %v1665 = vpop.xlane.xlu0 %1664
          %vm1666 = vcmask 158720
          %v1667 = vsel %vm1666, %v1637, -inf
          %1668 = vmax.xlane.f32.xlu0 %v1667
          %v1669 = vpop.xlane.xlu0 %1668
          %v1670 = vsel %vm1659, %v1638, -inf
          %1671 = vmax.xlane.f32.xlu0 %v1670
          %v1672 = vpop.xlane.xlu0 %1671
          %v1673 = vsel %vm1659, %v1639, -inf
          %1674 = vmax.xlane.f32.xlu0 %v1673
          %v1675 = vpop.xlane.xlu0 %1674
          %v1676 = vsel %vm1666, %v1640, -inf
          %1677 = vmax.xlane.f32.xlu0 %v1676
          %v1678 = vpop.xlane.xlu0 %1677
          %v1679 = vsel %vm1659, %v1641, -inf
          %1680 = vmax.xlane.f32.xlu0 %v1679
          %v1681 = vpop.xlane.xlu0 %1680
          %v1682 = vsel %vm1659, %v1642, -inf
          %1683 = vmax.xlane.f32.xlu0 %v1682
          %v1684 = vpop.xlane.xlu0 %1683
          %v1685 = vsel %vm1666, %v1643, -inf
          %1686 = vmax.xlane.f32.xlu0 %v1685
          %v1687 = vpop.xlane.xlu0 %1686
          %v1688 = vsel %vm1659, %v1644, -inf
          %1689 = vmax.xlane.f32.xlu0 %v1688
          %v1690 = vpop.xlane.xlu0 %1689
          %v1691 = vsel %vm1659, %v1645, -inf
          %1692 = vmax.xlane.f32.xlu0 %v1691
          %v1693 = vpop.xlane.xlu0 %1692
          %v1694 = vsel %vm1666, %v1646, -inf
          %1695 = vmax.xlane.f32.xlu0 %v1694
          %v1696 = vpop.xlane.xlu0 %1695
          %v1697 = vsel %vm1659, %v1647, -inf
          %1698 = vmax.xlane.f32.xlu0 %v1697
          %v1699 = vpop.xlane.xlu0 %1698
          %v1700 = vsel %vm1659, %v1648, -inf
          %1701 = vmax.xlane.f32.xlu0 %v1700
          %v1702 = vpop.xlane.xlu0 %1701
          %v1703 = vsel %vm1666, %v1649, -inf
          %1704 = vmax.xlane.f32.xlu0 %v1703
          %v1705 = vpop.xlane.xlu0 %1704
          %v1706 = vsel %vm1659, %v1650, -inf
          %1707 = vmax.xlane.f32.xlu0 %v1706
          %v1708 = vpop.xlane.xlu0 %1707
          %v1709 = vsel %vm1659, %v1651, -inf
          %1710 = vmax.xlane.f32.xlu0 %v1709
          %v1711 = vpop.xlane.xlu0 %1710
          %v1712 = vsel %vm1666, %v1652, -inf
          %1713 = vmax.xlane.f32.xlu0 %v1712
          %v1714 = vpop.xlane.xlu0 %1713
          %v1715 = vsel %vm1659, %v1653, -inf
          %1716 = vmax.xlane.f32.xlu0 %v1715
          %v1717 = vpop.xlane.xlu0 %1716
          %v1718 = vsel %vm1659, %v1654, -inf
          %1719 = vmax.xlane.f32.xlu0 %v1718
          %v1720 = vpop.xlane.xlu0 %1719
          %v1721 = vsel %vm1666, %v1655, -inf
          %1722 = vmax.xlane.f32.xlu0 %v1721
          %v1723 = vpop.xlane.xlu0 %1722
          %v1724 = vsel %vm1659, %v1656, -inf
          %1725 = vmax.xlane.f32.xlu0 %v1724
          %v1726 = vpop.xlane.xlu0 %1725
          %v1727 = vsel %vm1659, %v1657, -inf
          %1728 = vmax.xlane.f32.xlu0 %v1727
          %v1729 = vpop.xlane.xlu0 %1728
          %v1730 = vsel %vm1666, %v1658, -inf
          %1731 = vmax.xlane.f32.xlu0 %v1730
          %v1732 = vpop.xlane.xlu0 %1731
          %v1733 = vsub.f32 %v1635, %v1662
          %v1734 = vsub.f32 %v1636, %v1665
          %v1735 = vsub.f32 %v1637, %v1669
          %v1736 = vsub.f32 %v1638, %v1672
          %v1737 = vsub.f32 %v1639, %v1675
          %v1738 = vsub.f32 %v1640, %v1678
          %v1739 = vsub.f32 %v1641, %v1681
          %v1740 = vsub.f32 %v1642, %v1684
          %v1741 = vsub.f32 %v1643, %v1687
          %v1742 = vsub.f32 %v1644, %v1690
          %v1743 = vsub.f32 %v1645, %v1693
          %v1744 = vsub.f32 %v1646, %v1696
          %v1745 = vsub.f32 %v1647, %v1699
          %v1746 = vsub.f32 %v1648, %v1702
          %v1747 = vsub.f32 %v1649, %v1705
          %v1748 = vsub.f32 %v1650, %v1708
          %v1749 = vsub.f32 %v1651, %v1711
          %v1750 = vsub.f32 %v1652, %v1714
          %v1751 = vsub.f32 %v1653, %v1717
          %v1752 = vsub.f32 %v1654, %v1720
          %v1753 = vsub.f32 %v1655, %v1723
          %v1754 = vsub.f32 %v1656, %v1726
          %v1755 = vsub.f32 %v1657, %v1729
          %v1756 = vsub.f32 %v1658, %v1732
          %v1757 = vmul.f32 %v1733, 1.442695
          %v1758 = vpow.pop %v1757
          %v1759 = vmul.f32 %v1734, 1.442695
          %v1760 = vpow.pop %v1759
          %v1761 = vmul.f32 %v1735, 1.442695
          %v1762 = vpow.pop %v1761
          %v1763 = vmul.f32 %v1736, 1.442695
          %v1764 = vpow.pop %v1763
          %v1765 = vmul.f32 %v1737, 1.442695
          %v1766 = vpow.pop %v1765
          %v1767 = vmul.f32 %v1738, 1.442695
          %v1768 = vpow.pop %v1767
          %v1769 = vmul.f32 %v1739, 1.442695
          %v1770 = vpow.pop %v1769
          %v1771 = vmul.f32 %v1740, 1.442695
          %v1772 = vpow.pop %v1771
          %v1773 = vmul.f32 %v1741, 1.442695
          %v1774 = vpow.pop %v1773
          %v1775 = vmul.f32 %v1742, 1.442695
          %v1776 = vpow.pop %v1775
          %v1777 = vmul.f32 %v1743, 1.442695
          %v1778 = vpow.pop %v1777
          %v1779 = vmul.f32 %v1744, 1.442695
          %v1780 = vpow.pop %v1779
          %v1781 = vmul.f32 %v1745, 1.442695
          %v1782 = vpow.pop %v1781
          %v1783 = vmul.f32 %v1746, 1.442695
          %v1784 = vpow.pop %v1783
          %v1785 = vmul.f32 %v1747, 1.442695
          %v1786 = vpow.pop %v1785
          %v1787 = vmul.f32 %v1748, 1.442695
          %v1788 = vpow.pop %v1787
          %v1789 = vmul.f32 %v1749, 1.442695
          %v1790 = vpow.pop %v1789
          %v1791 = vmul.f32 %v1750, 1.442695
          %v1792 = vpow.pop %v1791
          %v1793 = vmul.f32 %v1751, 1.442695
          %v1794 = vpow.pop %v1793
          %v1795 = vmul.f32 %v1752, 1.442695
          %v1796 = vpow.pop %v1795
          %v1797 = vmul.f32 %v1753, 1.442695
          %v1798 = vpow.pop %v1797
          %v1799 = vmul.f32 %v1754, 1.442695
          %v1800 = vpow.pop %v1799
          %v1801 = vmul.f32 %v1755, 1.442695
          %v1802 = vpow.pop %v1801
          %v1803 = vmul.f32 %v1756, 1.442695
          %v1804 = vpow.pop %v1803
          %v1805 = vsel %vm1659, %v1758, 0.0
          %1806 = vadd.xlane.f32.xlu0 %v1805
          %v1807 = vpop.xlane.xlu0 %1806
          %v1808 = vsel %vm1659, %v1760, 0.0
          %1809 = vadd.xlane.f32.xlu0 %v1808
          %v1810 = vpop.xlane.xlu0 %1809
          %v1811 = vsel %vm1666, %v1762, 0.0
          %1812 = vadd.xlane.f32.xlu0 %v1811
          %v1813 = vpop.xlane.xlu0 %1812
          %v1814 = vsel %vm1659, %v1764, 0.0
          %1815 = vadd.xlane.f32.xlu0 %v1814
          %v1816 = vpop.xlane.xlu0 %1815
          %v1817 = vsel %vm1659, %v1766, 0.0
          %1818 = vadd.xlane.f32.xlu0 %v1817
          %v1819 = vpop.xlane.xlu0 %1818
          %v1820 = vsel %vm1666, %v1768, 0.0
          %1821 = vadd.xlane.f32.xlu0 %v1820
          %v1822 = vpop.xlane.xlu0 %1821
          %v1823 = vsel %vm1659, %v1770, 0.0
          %1824 = vadd.xlane.f32.xlu0 %v1823
          %v1825 = vpop.xlane.xlu0 %1824
          %v1826 = vsel %vm1659, %v1772, 0.0
          %1827 = vadd.xlane.f32.xlu0 %v1826
          %v1828 = vpop.xlane.xlu0 %1827
          %v1829 = vsel %vm1666, %v1774, 0.0
          %1830 = vadd.xlane.f32.xlu0 %v1829
          %v1831 = vpop.xlane.xlu0 %1830
          %v1832 = vsel %vm1659, %v1776, 0.0
          %1833 = vadd.xlane.f32.xlu0 %v1832
          %v1834 = vpop.xlane.xlu0 %1833
          %v1835 = vsel %vm1659, %v1778, 0.0
          %1836 = vadd.xlane.f32.xlu0 %v1835
          %v1837 = vpop.xlane.xlu0 %1836
          %v1838 = vsel %vm1666, %v1780, 0.0
          %1839 = vadd.xlane.f32.xlu0 %v1838
          %v1840 = vpop.xlane.xlu0 %1839
          %v1841 = vsel %vm1659, %v1782, 0.0
          %1842 = vadd.xlane.f32.xlu0 %v1841
          %v1843 = vpop.xlane.xlu0 %1842
          %v1844 = vsel %vm1659, %v1784, 0.0
          %1845 = vadd.xlane.f32.xlu0 %v1844
          %v1846 = vpop.xlane.xlu0 %1845
          %v1847 = vsel %vm1666, %v1786, 0.0
          %1848 = vadd.xlane.f32.xlu0 %v1847
          %v1849 = vpop.xlane.xlu0 %1848
          %v1850 = vsel %vm1659, %v1788, 0.0
          %1851 = vadd.xlane.f32.xlu0 %v1850
          %v1852 = vpop.xlane.xlu0 %1851
          %v1853 = vsel %vm1659, %v1790, 0.0
          %1854 = vadd.xlane.f32.xlu0 %v1853
          %v1855 = vpop.xlane.xlu0 %1854
          %v1856 = vsel %vm1666, %v1792, 0.0
          %1857 = vadd.xlane.f32.xlu0 %v1856
          %v1858 = vpop.xlane.xlu0 %1857
          %v1859 = vsel %vm1659, %v1794, 0.0
          %1860 = vadd.xlane.f32.xlu0 %v1859
          %v1861 = vpop.xlane.xlu0 %1860
          %v1862 = vsel %vm1659, %v1796, 0.0
          %1863 = vadd.xlane.f32.xlu0 %v1862
          %v1864 = vpop.xlane.xlu0 %1863
          %v1865 = vsel %vm1666, %v1798, 0.0
          %1866 = vadd.xlane.f32.xlu0 %v1865
          %v1867 = vpop.xlane.xlu0 %1866
          %v1868 = vsel %vm1659, %v1800, 0.0
          %1869 = vadd.xlane.f32.xlu0 %v1868
          %v1870 = vpop.xlane.xlu0 %1869
          %v1871 = vsel %vm1659, %v1802, 0.0
          %1872 = vadd.xlane.f32.xlu0 %v1871
          %v1873 = vpop.xlane.xlu0 %1872
          %v1874 = vsel %vm1666, %v1804, 0.0
          %1875 = vadd.xlane.f32.xlu0 %v1874
          %v1876 = vpop.xlane.xlu0 %1875
          %v1877 = vrcp.pop %v1807
          %v1878 = vrcp.pop %v1810
          %v1879 = vrcp.pop %v1813
          %v1880 = vrcp.pop %v1816
          %v1881 = vrcp.pop %v1819
          %v1882 = vrcp.pop %v1822
          %v1883 = vrcp.pop %v1825
          %v1884 = vrcp.pop %v1828
          %v1885 = vrcp.pop %v1831
          %v1886 = vrcp.pop %v1834
          %v1887 = vrcp.pop %v1837
          %v1888 = vrcp.pop %v1840
          %v1889 = vrcp.pop %v1843
          %v1890 = vrcp.pop %v1846
          %v1891 = vrcp.pop %v1849
          %v1892 = vrcp.pop %v1852
          %v1893 = vrcp.pop %v1855
          %v1894 = vrcp.pop %v1858
          %v1895 = vrcp.pop %v1861
          %v1896 = vrcp.pop %v1864
          %v1897 = vrcp.pop %v1867
          %v1898 = vrcp.pop %v1870
          %v1899 = vrcp.pop %v1873
          %v1900 = vrcp.pop %v1876
          %v1901 = vmul.f32 %v1758, %v1877
          %v1902 = vmul.f32 %v1760, %v1878
          %v1903 = vmul.f32 %v1762, %v1879
          %v1904 = vmul.f32 %v1764, %v1880
          %v1905 = vmul.f32 %v1766, %v1881
          %v1906 = vmul.f32 %v1768, %v1882
          %v1907 = vmul.f32 %v1770, %v1883
          %v1908 = vmul.f32 %v1772, %v1884
          %v1909 = vmul.f32 %v1774, %v1885
          %v1910 = vmul.f32 %v1776, %v1886
          %v1911 = vmul.f32 %v1778, %v1887
          %v1912 = vmul.f32 %v1780, %v1888
          %v1913 = vmul.f32 %v1782, %v1889
          %v1914 = vmul.f32 %v1784, %v1890
          %v1915 = vmul.f32 %v1786, %v1891
          %v1916 = vmul.f32 %v1788, %v1892
          %v1917 = vmul.f32 %v1790, %v1893
          %v1918 = vmul.f32 %v1792, %v1894
          %v1919 = vmul.f32 %v1794, %v1895
          %v1920 = vmul.f32 %v1796, %v1896
          %v1921 = vmul.f32 %v1798, %v1897
          %v1922 = vmul.f32 %v1800, %v1898
          %v1923 = vmul.f32 %v1802, %v1899
          %v1924 = vmul.f32 %v1804, %v1900
          %1925 = vrot.lane.b32.xlu0 %v768, 64
          %v1926 = vpop.permute.xlu0 %1925
          %1927 = vrot.lane.b32.xlu0 %v773, 64
          %v1928 = vpop.permute.xlu0 %1927
          %1929 = vrot.lane.b32.xlu0 %v778, 64
          %v1930 = vpop.permute.xlu0 %1929
          %v1934 = vsel %vm1659, %v1901, 0
          %v1937 = vsel %vm1659, %v1902, 0
          %v1940 = vsel %vm1659, %v1903, 0
          %vm1942 = vcmask 1043456
          %v1943 = vsel %vm1942, %v1930, 0
          %1945 = vmatprep.subr.mxu0 0.0
          %1946 = vmatpush1.msra.mxu0 0.0
          %1947 = vmatprep.subr.mxu0 0.0
          %1948 = vmatpush1.msra.mxu0 0.0
          %1949 = vmatprep.subr.mxu0 0.0
          %1950 = vmatpush1.msra.mxu0 0.0
          %1951 = vmatprep.subr.mxu0 0.0
          %1952 = vmatpush1.msra.mxu0 0.0
          %1953 = vmatprep.subr.mxu0 0.0
          %1954 = vmatpush1.msra.mxu0 0.0
          %1955 = vmatprep.subr.mxu0 0.0
          %1956 = vmatpush1.msra.mxu0 0.0
          %1957 = vmatprep.subr.mxu0 0.0
          %1958 = vmatpush1.msra.mxu0 0.0
          %1959 = vmatprep.subr.mxu0 0.0
          %1960 = vmatpush1.msra.mxu0 0.0
          %1961 = vmatprep.subr.mxu0 0.0
          %1962 = vmatpush1.msra.mxu0 0.0
          %1963 = vmatprep.subr.mxu0 0.0
          %1964 = vmatpush1.msra.mxu0 0.0
          %1965 = vmatprep.subr.mxu0 0.0
          %1966 = vmatpush1.msra.mxu0 0.0
          %1967 = vmatprep.subr.mxu0 0.0
          %1968 = vmatpush1.msra.mxu0 0.0
          %1969 = vmatprep.subr.mxu0 0.0
          %1970 = vmatpush1.msra.mxu0 0.0
          %1971 = vmatprep.subr.mxu0 0.0
          %1972 = vmatpush1.msra.mxu0 %v1943
          %1973 = vmatprep.subr.mxu0 0.0
          %1974 = vmatpush1.msra.mxu0 %v1928
          %1975 = vmatprep.subr.mxu0 0.0
          %1976 = vmatpush1.msra.mxu0 %v1926
          %1977 = vmatprep.subr.mxu0 0.0
          %1978 = vmatpush2.msra.mxu0 0.0
          %1979 = vmatprep.subr.mxu0 0.0
          %1980 = vmatpush2.msra.mxu0 0.0
          %1981 = vmatprep.subr.mxu0 0.0
          %1982 = vmatpush2.msra.mxu0 0.0
          %1983 = vmatprep.subr.mxu0 0.0
          %1984 = vmatpush2.msra.mxu0 0.0
          %1985 = vmatprep.subr.mxu0 0.0
          %1986 = vmatpush2.msra.mxu0 0.0
          %1987 = vmatprep.subr.mxu0 0.0
          %1988 = vmatpush2.msra.mxu0 0.0
          %1989 = vmatprep.subr.mxu0 0.0
          %1990 = vmatpush2.msra.mxu0 0.0
          %1991 = vmatprep.subr.mxu0 0.0
          %1992 = vmatpush2.msra.mxu0 0.0
          %1993 = vmatprep.subr.mxu0 0.0
          %1994 = vmatpush2.msra.mxu0 0.0
          %1995 = vmatprep.subr.mxu0 0.0
          %1996 = vmatpush2.msra.mxu0 0.0
          %1997 = vmatprep.subr.mxu0 0.0
          %1998 = vmatpush2.msra.mxu0 0.0
          %1999 = vmatprep.subr.mxu0 0.0
          %2000 = vmatpush2.msra.mxu0 0.0
          %2001 = vmatprep.subr.mxu0 0.0
          %2002 = vmatpush2.msra.mxu0 0.0
          %2003 = vmatprep.subr.mxu0 0.0
          %2004 = vmatpush2.msra.mxu0 0.0
          %2005 = vmatprep.subr.mxu0 0.0
          %2006 = vmatpush2.msra.mxu0 0.0
          %2007 = vmatprep.subr.mxu0 0.0
          %2008 = vmatpush2.msra.mxu0 0.0
          %2009 = vmatprep.mubr.f32.mxu0 0.0
          %2010 = vmatmul.mubr.f32.gmra.mxu0 %v1934
          %v2011 = vpop.f32.mrf.mxu0
          %v2012 = vadd.f32 0.0, %v2011
          %v2013 = vpop.f32.mrf.mxu0
          %2014 = vmatprep.mubr.f32.mxu0 0.0
          %2015 = vmatmul.mubr.f32.gmra.mxu0 %v1937
          %v2016 = vpop.f32.mrf.mxu0
          %v2017 = vadd.f32 0.0, %v2016
          %v2018 = vpop.f32.mrf.mxu0
          %2019 = vmatprep.mubr.f32.mxu0 0.0
          %2020 = vmatmul.mubr.f32.gmra.mxu0 %v1940
          %v2021 = vpop.f32.mrf.mxu0
          %v2022 = vadd.f32 0.0, %v2021
          %v2023 = vpop.f32.mrf.mxu0
          %2024 = vdwg.mxu0
          %2025 = vrot.lane.b32.xlu0 %v785, 64
          %v2026 = vpop.permute.xlu0 %2025
          %2027 = vrot.lane.b32.xlu0 %v787, 64
          %v2028 = vpop.permute.xlu0 %2027
          %2029 = vrot.lane.b32.xlu0 %v789, 64
          %v2030 = vpop.permute.xlu0 %2029
          %v2034 = vsel %vm1659, %v1904, 0
          %v2037 = vsel %vm1659, %v1905, 0
          %v2040 = vsel %vm1659, %v1906, 0
          %v2042 = vsel %vm1942, %v2030, 0
          %2044 = vmatprep.subr.mxu0 0.0
          %2045 = vmatpush1.msra.mxu0 0.0
          %2046 = vmatprep.subr.mxu0 0.0
          %2047 = vmatpush1.msra.mxu0 0.0
          %2048 = vmatprep.subr.mxu0 0.0
          %2049 = vmatpush1.msra.mxu0 0.0
          %2050 = vmatprep.subr.mxu0 0.0
          %2051 = vmatpush1.msra.mxu0 0.0
          %2052 = vmatprep.subr.mxu0 0.0
          %2053 = vmatpush1.msra.mxu0 0.0
          %2054 = vmatprep.subr.mxu0 0.0
          %2055 = vmatpush1.msra.mxu0 0.0
          %2056 = vmatprep.subr.mxu0 0.0
          %2057 = vmatpush1.msra.mxu0 0.0
          %2058 = vmatprep.subr.mxu0 0.0
          %2059 = vmatpush1.msra.mxu0 0.0
          %2060 = vmatprep.subr.mxu0 0.0
          %2061 = vmatpush1.msra.mxu0 0.0
          %2062 = vmatprep.subr.mxu0 0.0
          %2063 = vmatpush1.msra.mxu0 0.0
          %2064 = vmatprep.subr.mxu0 0.0
          %2065 = vmatpush1.msra.mxu0 0.0
          %2066 = vmatprep.subr.mxu0 0.0
          %2067 = vmatpush1.msra.mxu0 0.0
          %2068 = vmatprep.subr.mxu0 0.0
          %2069 = vmatpush1.msra.mxu0 0.0
          %2070 = vmatprep.subr.mxu0 0.0
          %2071 = vmatpush1.msra.mxu0 %v2042
          %2072 = vmatprep.subr.mxu0 0.0
          %2073 = vmatpush1.msra.mxu0 %v2028
          %2074 = vmatprep.subr.mxu0 0.0
          %2075 = vmatpush1.msra.mxu0 %v2026
          %2076 = vmatprep.subr.mxu0 0.0
          %2077 = vmatpush2.msra.mxu0 0.0
          %2078 = vmatprep.subr.mxu0 0.0
          %2079 = vmatpush2.msra.mxu0 0.0
          %2080 = vmatprep.subr.mxu0 0.0
          %2081 = vmatpush2.msra.mxu0 0.0
          %2082 = vmatprep.subr.mxu0 0.0
          %2083 = vmatpush2.msra.mxu0 0.0
          %2084 = vmatprep.subr.mxu0 0.0
          %2085 = vmatpush2.msra.mxu0 0.0
          %2086 = vmatprep.subr.mxu0 0.0
          %2087 = vmatpush2.msra.mxu0 0.0
          %2088 = vmatprep.subr.mxu0 0.0
          %2089 = vmatpush2.msra.mxu0 0.0
          %2090 = vmatprep.subr.mxu0 0.0
          %2091 = vmatpush2.msra.mxu0 0.0
          %2092 = vmatprep.subr.mxu0 0.0
          %2093 = vmatpush2.msra.mxu0 0.0
          %2094 = vmatprep.subr.mxu0 0.0
          %2095 = vmatpush2.msra.mxu0 0.0
          %2096 = vmatprep.subr.mxu0 0.0
          %2097 = vmatpush2.msra.mxu0 0.0
          %2098 = vmatprep.subr.mxu0 0.0
          %2099 = vmatpush2.msra.mxu0 0.0
          %2100 = vmatprep.subr.mxu0 0.0
          %2101 = vmatpush2.msra.mxu0 0.0
          %2102 = vmatprep.subr.mxu0 0.0
          %2103 = vmatpush2.msra.mxu0 0.0
          %2104 = vmatprep.subr.mxu0 0.0
          %2105 = vmatpush2.msra.mxu0 0.0
          %2106 = vmatprep.subr.mxu0 0.0
          %2107 = vmatpush2.msra.mxu0 0.0
          %2108 = vmatprep.mubr.f32.mxu0 0.0
          %2109 = vmatmul.mubr.f32.gmra.mxu0 %v2034
          %v2110 = vpop.f32.mrf.mxu0
          %v2111 = vadd.f32 0.0, %v2110
          %v2112 = vpop.f32.mrf.mxu0
          %2113 = vmatprep.mubr.f32.mxu0 0.0
          %2114 = vmatmul.mubr.f32.gmra.mxu0 %v2037
          %v2115 = vpop.f32.mrf.mxu0
          %v2116 = vadd.f32 0.0, %v2115
          %v2117 = vpop.f32.mrf.mxu0
          %2118 = vmatprep.mubr.f32.mxu0 0.0
          %2119 = vmatmul.mubr.f32.gmra.mxu0 %v2040
          %v2120 = vpop.f32.mrf.mxu0
          %v2121 = vadd.f32 0.0, %v2120
          %v2122 = vpop.f32.mrf.mxu0
          %2123 = vdwg.mxu0
          %2124 = vrot.lane.b32.xlu0 %v791, 64
          %v2125 = vpop.permute.xlu0 %2124
          %2126 = vrot.lane.b32.xlu0 %v793, 64
          %v2127 = vpop.permute.xlu0 %2126
          %2128 = vrot.lane.b32.xlu0 %v795, 64
          %v2129 = vpop.permute.xlu0 %2128
          %v2133 = vsel %vm1659, %v1907, 0
          %v2136 = vsel %vm1659, %v1908, 0
          %v2139 = vsel %vm1659, %v1909, 0
          %v2141 = vsel %vm1942, %v2129, 0
          %2143 = vmatprep.subr.mxu0 0.0
          %2144 = vmatpush1.msra.mxu0 0.0
          %2145 = vmatprep.subr.mxu0 0.0
          %2146 = vmatpush1.msra.mxu0 0.0
          %2147 = vmatprep.subr.mxu0 0.0
          %2148 = vmatpush1.msra.mxu0 0.0
          %2149 = vmatprep.subr.mxu0 0.0
          %2150 = vmatpush1.msra.mxu0 0.0
          %2151 = vmatprep.subr.mxu0 0.0
          %2152 = vmatpush1.msra.mxu0 0.0
          %2153 = vmatprep.subr.mxu0 0.0
          %2154 = vmatpush1.msra.mxu0 0.0
          %2155 = vmatprep.subr.mxu0 0.0
          %2156 = vmatpush1.msra.mxu0 0.0
          %2157 = vmatprep.subr.mxu0 0.0
          %2158 = vmatpush1.msra.mxu0 0.0
          %2159 = vmatprep.subr.mxu0 0.0
          %2160 = vmatpush1.msra.mxu0 0.0
          %2161 = vmatprep.subr.mxu0 0.0
          %2162 = vmatpush1.msra.mxu0 0.0
          %2163 = vmatprep.subr.mxu0 0.0
          %2164 = vmatpush1.msra.mxu0 0.0
          %2165 = vmatprep.subr.mxu0 0.0
          %2166 = vmatpush1.msra.mxu0 0.0
          %2167 = vmatprep.subr.mxu0 0.0
          %2168 = vmatpush1.msra.mxu0 0.0
          %2169 = vmatprep.subr.mxu0 0.0
          %2170 = vmatpush1.msra.mxu0 %v2141
          %2171 = vmatprep.subr.mxu0 0.0
          %2172 = vmatpush1.msra.mxu0 %v2127
          %2173 = vmatprep.subr.mxu0 0.0
          %2174 = vmatpush1.msra.mxu0 %v2125
          %2175 = vmatprep.subr.mxu0 0.0
          %2176 = vmatpush2.msra.mxu0 0.0
          %2177 = vmatprep.subr.mxu0 0.0
          %2178 = vmatpush2.msra.mxu0 0.0
          %2179 = vmatprep.subr.mxu0 0.0
          %2180 = vmatpush2.msra.mxu0 0.0
          %2181 = vmatprep.subr.mxu0 0.0
          %2182 = vmatpush2.msra.mxu0 0.0
          %2183 = vmatprep.subr.mxu0 0.0
          %2184 = vmatpush2.msra.mxu0 0.0
          %2185 = vmatprep.subr.mxu0 0.0
          %2186 = vmatpush2.msra.mxu0 0.0
          %2187 = vmatprep.subr.mxu0 0.0
          %2188 = vmatpush2.msra.mxu0 0.0
          %2189 = vmatprep.subr.mxu0 0.0
          %2190 = vmatpush2.msra.mxu0 0.0
          %2191 = vmatprep.subr.mxu0 0.0
          %2192 = vmatpush2.msra.mxu0 0.0
          %2193 = vmatprep.subr.mxu0 0.0
          %2194 = vmatpush2.msra.mxu0 0.0
          %2195 = vmatprep.subr.mxu0 0.0
          %2196 = vmatpush2.msra.mxu0 0.0
          %2197 = vmatprep.subr.mxu0 0.0
          %2198 = vmatpush2.msra.mxu0 0.0
          %2199 = vmatprep.subr.mxu0 0.0
          %2200 = vmatpush2.msra.mxu0 0.0
          %2201 = vmatprep.subr.mxu0 0.0
          %2202 = vmatpush2.msra.mxu0 0.0
          %2203 = vmatprep.subr.mxu0 0.0
          %2204 = vmatpush2.msra.mxu0 0.0
          %2205 = vmatprep.subr.mxu0 0.0
          %2206 = vmatpush2.msra.mxu0 0.0
          %2207 = vmatprep.mubr.f32.mxu0 0.0
          %2208 = vmatmul.mubr.f32.gmra.mxu0 %v2133
          %v2209 = vpop.f32.mrf.mxu0
          %v2210 = vadd.f32 0.0, %v2209
          %v2211 = vpop.f32.mrf.mxu0
          %2212 = vmatprep.mubr.f32.mxu0 0.0
          %2213 = vmatmul.mubr.f32.gmra.mxu0 %v2136
          %v2214 = vpop.f32.mrf.mxu0
          %v2215 = vadd.f32 0.0, %v2214
          %v2216 = vpop.f32.mrf.mxu0
          %2217 = vmatprep.mubr.f32.mxu0 0.0
          %2218 = vmatmul.mubr.f32.gmra.mxu0 %v2139
          %v2219 = vpop.f32.mrf.mxu0
          %v2220 = vadd.f32 0.0, %v2219
          %v2221 = vpop.f32.mrf.mxu0
          %2222 = vdwg.mxu0
          %2223 = vrot.lane.b32.xlu0 %v797, 64
          %v2224 = vpop.permute.xlu0 %2223
          %2225 = vrot.lane.b32.xlu0 %v799, 64
          %v2226 = vpop.permute.xlu0 %2225
          %2227 = vrot.lane.b32.xlu0 %v801, 64
          %v2228 = vpop.permute.xlu0 %2227
          %v2232 = vsel %vm1659, %v1910, 0
          %v2235 = vsel %vm1659, %v1911, 0
          %v2238 = vsel %vm1659, %v1912, 0
          %v2240 = vsel %vm1942, %v2228, 0
          %2242 = vmatprep.subr.mxu0 0.0
          %2243 = vmatpush1.msra.mxu0 0.0
          %2244 = vmatprep.subr.mxu0 0.0
          %2245 = vmatpush1.msra.mxu0 0.0
          %2246 = vmatprep.subr.mxu0 0.0
          %2247 = vmatpush1.msra.mxu0 0.0
          %2248 = vmatprep.subr.mxu0 0.0
          %2249 = vmatpush1.msra.mxu0 0.0
          %2250 = vmatprep.subr.mxu0 0.0
          %2251 = vmatpush1.msra.mxu0 0.0
          %2252 = vmatprep.subr.mxu0 0.0
          %2253 = vmatpush1.msra.mxu0 0.0
          %2254 = vmatprep.subr.mxu0 0.0
          %2255 = vmatpush1.msra.mxu0 0.0
          %2256 = vmatprep.subr.mxu0 0.0
          %2257 = vmatpush1.msra.mxu0 0.0
          %2258 = vmatprep.subr.mxu0 0.0
          %2259 = vmatpush1.msra.mxu0 0.0
          %2260 = vmatprep.subr.mxu0 0.0
          %2261 = vmatpush1.msra.mxu0 0.0
          %2262 = vmatprep.subr.mxu0 0.0
          %2263 = vmatpush1.msra.mxu0 0.0
          %2264 = vmatprep.subr.mxu0 0.0
          %2265 = vmatpush1.msra.mxu0 0.0
          %2266 = vmatprep.subr.mxu0 0.0
          %2267 = vmatpush1.msra.mxu0 0.0
          %2268 = vmatprep.subr.mxu0 0.0
          %2269 = vmatpush1.msra.mxu0 %v2240
          %2270 = vmatprep.subr.mxu0 0.0
          %2271 = vmatpush1.msra.mxu0 %v2226
          %2272 = vmatprep.subr.mxu0 0.0
          %2273 = vmatpush1.msra.mxu0 %v2224
          %2274 = vmatprep.subr.mxu0 0.0
          %2275 = vmatpush2.msra.mxu0 0.0
          %2276 = vmatprep.subr.mxu0 0.0
          %2277 = vmatpush2.msra.mxu0 0.0
          %2278 = vmatprep.subr.mxu0 0.0
          %2279 = vmatpush2.msra.mxu0 0.0
          %2280 = vmatprep.subr.mxu0 0.0
          %2281 = vmatpush2.msra.mxu0 0.0
          %2282 = vmatprep.subr.mxu0 0.0
          %2283 = vmatpush2.msra.mxu0 0.0
          %2284 = vmatprep.subr.mxu0 0.0
          %2285 = vmatpush2.msra.mxu0 0.0
          %2286 = vmatprep.subr.mxu0 0.0
          %2287 = vmatpush2.msra.mxu0 0.0
          %2288 = vmatprep.subr.mxu0 0.0
          %2289 = vmatpush2.msra.mxu0 0.0
          %2290 = vmatprep.subr.mxu0 0.0
          %2291 = vmatpush2.msra.mxu0 0.0
          %2292 = vmatprep.subr.mxu0 0.0
          %2293 = vmatpush2.msra.mxu0 0.0
          %2294 = vmatprep.subr.mxu0 0.0
          %2295 = vmatpush2.msra.mxu0 0.0
          %2296 = vmatprep.subr.mxu0 0.0
          %2297 = vmatpush2.msra.mxu0 0.0
          %2298 = vmatprep.subr.mxu0 0.0
          %2299 = vmatpush2.msra.mxu0 0.0
          %2300 = vmatprep.subr.mxu0 0.0
          %2301 = vmatpush2.msra.mxu0 0.0
          %2302 = vmatprep.subr.mxu0 0.0
          %2303 = vmatpush2.msra.mxu0 0.0
          %2304 = vmatprep.subr.mxu0 0.0
          %2305 = vmatpush2.msra.mxu0 0.0
          %2306 = vmatprep.mubr.f32.mxu0 0.0
          %2307 = vmatmul.mubr.f32.gmra.mxu0 %v2232
          %v2308 = vpop.f32.mrf.mxu0
          %v2309 = vadd.f32 0.0, %v2308
          %v2310 = vpop.f32.mrf.mxu0
          %2311 = vmatprep.mubr.f32.mxu0 0.0
          %2312 = vmatmul.mubr.f32.gmra.mxu0 %v2235
          %v2313 = vpop.f32.mrf.mxu0
          %v2314 = vadd.f32 0.0, %v2313
          %v2315 = vpop.f32.mrf.mxu0
          %2316 = vmatprep.mubr.f32.mxu0 0.0
          %2317 = vmatmul.mubr.f32.gmra.mxu0 %v2238
          %v2318 = vpop.f32.mrf.mxu0
          %v2319 = vadd.f32 0.0, %v2318
          %v2320 = vpop.f32.mrf.mxu0
          %2321 = vdwg.mxu0
          %2322 = vrot.lane.b32.xlu0 %v803, 64
          %v2323 = vpop.permute.xlu0 %2322
          %2324 = vrot.lane.b32.xlu0 %v805, 64
          %v2325 = vpop.permute.xlu0 %2324
          %2326 = vrot.lane.b32.xlu0 %v807, 64
          %v2327 = vpop.permute.xlu0 %2326
          %v2331 = vsel %vm1659, %v1913, 0
          %v2334 = vsel %vm1659, %v1914, 0
          %v2337 = vsel %vm1659, %v1915, 0
          %v2339 = vsel %vm1942, %v2327, 0
          %2341 = vmatprep.subr.mxu0 0.0
          %2342 = vmatpush1.msra.mxu0 0.0
          %2343 = vmatprep.subr.mxu0 0.0
          %2344 = vmatpush1.msra.mxu0 0.0
          %2345 = vmatprep.subr.mxu0 0.0
          %2346 = vmatpush1.msra.mxu0 0.0
          %2347 = vmatprep.subr.mxu0 0.0
          %2348 = vmatpush1.msra.mxu0 0.0
          %2349 = vmatprep.subr.mxu0 0.0
          %2350 = vmatpush1.msra.mxu0 0.0
          %2351 = vmatprep.subr.mxu0 0.0
          %2352 = vmatpush1.msra.mxu0 0.0
          %2353 = vmatprep.subr.mxu0 0.0
          %2354 = vmatpush1.msra.mxu0 0.0
          %2355 = vmatprep.subr.mxu0 0.0
          %2356 = vmatpush1.msra.mxu0 0.0
          %2357 = vmatprep.subr.mxu0 0.0
          %2358 = vmatpush1.msra.mxu0 0.0
          %2359 = vmatprep.subr.mxu0 0.0
          %2360 = vmatpush1.msra.mxu0 0.0
          %2361 = vmatprep.subr.mxu0 0.0
          %2362 = vmatpush1.msra.mxu0 0.0
          %2363 = vmatprep.subr.mxu0 0.0
          %2364 = vmatpush1.msra.mxu0 0.0
          %2365 = vmatprep.subr.mxu0 0.0
          %2366 = vmatpush1.msra.mxu0 0.0
          %2367 = vmatprep.subr.mxu0 0.0
          %2368 = vmatpush1.msra.mxu0 %v2339
          %2369 = vmatprep.subr.mxu0 0.0
          %2370 = vmatpush1.msra.mxu0 %v2325
          %2371 = vmatprep.subr.mxu0 0.0
          %2372 = vmatpush1.msra.mxu0 %v2323
          %2373 = vmatprep.subr.mxu0 0.0
          %2374 = vmatpush2.msra.mxu0 0.0
          %2375 = vmatprep.subr.mxu0 0.0
          %2376 = vmatpush2.msra.mxu0 0.0
          %2377 = vmatprep.subr.mxu0 0.0
          %2378 = vmatpush2.msra.mxu0 0.0
          %2379 = vmatprep.subr.mxu0 0.0
          %2380 = vmatpush2.msra.mxu0 0.0
          %2381 = vmatprep.subr.mxu0 0.0
          %2382 = vmatpush2.msra.mxu0 0.0
          %2383 = vmatprep.subr.mxu0 0.0
          %2384 = vmatpush2.msra.mxu0 0.0
          %2385 = vmatprep.subr.mxu0 0.0
          %2386 = vmatpush2.msra.mxu0 0.0
          %2387 = vmatprep.subr.mxu0 0.0
          %2388 = vmatpush2.msra.mxu0 0.0
          %2389 = vmatprep.subr.mxu0 0.0
          %2390 = vmatpush2.msra.mxu0 0.0
          %2391 = vmatprep.subr.mxu0 0.0
          %2392 = vmatpush2.msra.mxu0 0.0
          %2393 = vmatprep.subr.mxu0 0.0
          %2394 = vmatpush2.msra.mxu0 0.0
          %2395 = vmatprep.subr.mxu0 0.0
          %2396 = vmatpush2.msra.mxu0 0.0
          %2397 = vmatprep.subr.mxu0 0.0
          %2398 = vmatpush2.msra.mxu0 0.0
          %2399 = vmatprep.subr.mxu0 0.0
          %2400 = vmatpush2.msra.mxu0 0.0
          %2401 = vmatprep.subr.mxu0 0.0
          %2402 = vmatpush2.msra.mxu0 0.0
          %2403 = vmatprep.subr.mxu0 0.0
          %2404 = vmatpush2.msra.mxu0 0.0
          %2405 = vmatprep.mubr.f32.mxu0 0.0
          %2406 = vmatmul.mubr.f32.gmra.mxu0 %v2331
          %v2407 = vpop.f32.mrf.mxu0
          %v2408 = vadd.f32 0.0, %v2407
          %v2409 = vpop.f32.mrf.mxu0
          %2410 = vmatprep.mubr.f32.mxu0 0.0
          %2411 = vmatmul.mubr.f32.gmra.mxu0 %v2334
          %v2412 = vpop.f32.mrf.mxu0
          %v2413 = vadd.f32 0.0, %v2412
          %v2414 = vpop.f32.mrf.mxu0
          %2415 = vmatprep.mubr.f32.mxu0 0.0
          %2416 = vmatmul.mubr.f32.gmra.mxu0 %v2337
          %v2417 = vpop.f32.mrf.mxu0
          %v2418 = vadd.f32 0.0, %v2417
          %v2419 = vpop.f32.mrf.mxu0
          %2420 = vdwg.mxu0
          %2421 = vrot.lane.b32.xlu0 %v809, 64
          %v2422 = vpop.permute.xlu0 %2421
          %2423 = vrot.lane.b32.xlu0 %v811, 64
          %v2424 = vpop.permute.xlu0 %2423
          %2425 = vrot.lane.b32.xlu0 %v813, 64
          %v2426 = vpop.permute.xlu0 %2425
          %v2430 = vsel %vm1659, %v1916, 0
          %v2433 = vsel %vm1659, %v1917, 0
          %v2436 = vsel %vm1659, %v1918, 0
          %v2438 = vsel %vm1942, %v2426, 0
          %2440 = vmatprep.subr.mxu0 0.0
          %2441 = vmatpush1.msra.mxu0 0.0
          %2442 = vmatprep.subr.mxu0 0.0
          %2443 = vmatpush1.msra.mxu0 0.0
          %2444 = vmatprep.subr.mxu0 0.0
          %2445 = vmatpush1.msra.mxu0 0.0
          %2446 = vmatprep.subr.mxu0 0.0
          %2447 = vmatpush1.msra.mxu0 0.0
          %2448 = vmatprep.subr.mxu0 0.0
          %2449 = vmatpush1.msra.mxu0 0.0
          %2450 = vmatprep.subr.mxu0 0.0
          %2451 = vmatpush1.msra.mxu0 0.0
          %2452 = vmatprep.subr.mxu0 0.0
          %2453 = vmatpush1.msra.mxu0 0.0
          %2454 = vmatprep.subr.mxu0 0.0
          %2455 = vmatpush1.msra.mxu0 0.0
          %2456 = vmatprep.subr.mxu0 0.0
          %2457 = vmatpush1.msra.mxu0 0.0
          %2458 = vmatprep.subr.mxu0 0.0
          %2459 = vmatpush1.msra.mxu0 0.0
          %2460 = vmatprep.subr.mxu0 0.0
          %2461 = vmatpush1.msra.mxu0 0.0
          %2462 = vmatprep.subr.mxu0 0.0
          %2463 = vmatpush1.msra.mxu0 0.0
          %2464 = vmatprep.subr.mxu0 0.0
          %2465 = vmatpush1.msra.mxu0 0.0
          %2466 = vmatprep.subr.mxu0 0.0
          %2467 = vmatpush1.msra.mxu0 %v2438
          %2468 = vmatprep.subr.mxu0 0.0
          %2469 = vmatpush1.msra.mxu0 %v2424
          %2470 = vmatprep.subr.mxu0 0.0
          %2471 = vmatpush1.msra.mxu0 %v2422
          %2472 = vmatprep.subr.mxu0 0.0
          %2473 = vmatpush2.msra.mxu0 0.0
          %2474 = vmatprep.subr.mxu0 0.0
          %2475 = vmatpush2.msra.mxu0 0.0
          %2476 = vmatprep.subr.mxu0 0.0
          %2477 = vmatpush2.msra.mxu0 0.0
          %2478 = vmatprep.subr.mxu0 0.0
          %2479 = vmatpush2.msra.mxu0 0.0
          %2480 = vmatprep.subr.mxu0 0.0
          %2481 = vmatpush2.msra.mxu0 0.0
          %2482 = vmatprep.subr.mxu0 0.0
          %2483 = vmatpush2.msra.mxu0 0.0
          %2484 = vmatprep.subr.mxu0 0.0
          %2485 = vmatpush2.msra.mxu0 0.0
          %2486 = vmatprep.subr.mxu0 0.0
          %2487 = vmatpush2.msra.mxu0 0.0
          %2488 = vmatprep.subr.mxu0 0.0
          %2489 = vmatpush2.msra.mxu0 0.0
          %2490 = vmatprep.subr.mxu0 0.0
          %2491 = vmatpush2.msra.mxu0 0.0
          %2492 = vmatprep.subr.mxu0 0.0
          %2493 = vmatpush2.msra.mxu0 0.0
          %2494 = vmatprep.subr.mxu0 0.0
          %2495 = vmatpush2.msra.mxu0 0.0
          %2496 = vmatprep.subr.mxu0 0.0
          %2497 = vmatpush2.msra.mxu0 0.0
          %2498 = vmatprep.subr.mxu0 0.0
          %2499 = vmatpush2.msra.mxu0 0.0
          %2500 = vmatprep.subr.mxu0 0.0
          %2501 = vmatpush2.msra.mxu0 0.0
          %2502 = vmatprep.subr.mxu0 0.0
          %2503 = vmatpush2.msra.mxu0 0.0
          %2504 = vmatprep.mubr.f32.mxu0 0.0
          %2505 = vmatmul.mubr.f32.gmra.mxu0 %v2430
          %v2506 = vpop.f32.mrf.mxu0
          %v2507 = vadd.f32 0.0, %v2506
          %v2508 = vpop.f32.mrf.mxu0
          %2509 = vmatprep.mubr.f32.mxu0 0.0
          %2510 = vmatmul.mubr.f32.gmra.mxu0 %v2433
          %v2511 = vpop.f32.mrf.mxu0
          %v2512 = vadd.f32 0.0, %v2511
          %v2513 = vpop.f32.mrf.mxu0
          %2514 = vmatprep.mubr.f32.mxu0 0.0
          %2515 = vmatmul.mubr.f32.gmra.mxu0 %v2436
          %v2516 = vpop.f32.mrf.mxu0
          %v2517 = vadd.f32 0.0, %v2516
          %v2518 = vpop.f32.mrf.mxu0
          %2519 = vdwg.mxu0
          %2520 = vrot.lane.b32.xlu0 %v815, 64
          %v2521 = vpop.permute.xlu0 %2520
          %2522 = vrot.lane.b32.xlu0 %v817, 64
          %v2523 = vpop.permute.xlu0 %2522
          %2524 = vrot.lane.b32.xlu0 %v819, 64
          %v2525 = vpop.permute.xlu0 %2524
          %v2529 = vsel %vm1659, %v1919, 0
          %v2532 = vsel %vm1659, %v1920, 0
          %v2535 = vsel %vm1659, %v1921, 0
          %v2537 = vsel %vm1942, %v2525, 0
          %2539 = vmatprep.subr.mxu0 0.0
          %2540 = vmatpush1.msra.mxu0 0.0
          %2541 = vmatprep.subr.mxu0 0.0
          %2542 = vmatpush1.msra.mxu0 0.0
          %2543 = vmatprep.subr.mxu0 0.0
          %2544 = vmatpush1.msra.mxu0 0.0
          %2545 = vmatprep.subr.mxu0 0.0
          %2546 = vmatpush1.msra.mxu0 0.0
          %2547 = vmatprep.subr.mxu0 0.0
          %2548 = vmatpush1.msra.mxu0 0.0
          %2549 = vmatprep.subr.mxu0 0.0
          %2550 = vmatpush1.msra.mxu0 0.0
          %2551 = vmatprep.subr.mxu0 0.0
          %2552 = vmatpush1.msra.mxu0 0.0
          %2553 = vmatprep.subr.mxu0 0.0
          %2554 = vmatpush1.msra.mxu0 0.0
          %2555 = vmatprep.subr.mxu0 0.0
          %2556 = vmatpush1.msra.mxu0 0.0
          %2557 = vmatprep.subr.mxu0 0.0
          %2558 = vmatpush1.msra.mxu0 0.0
          %2559 = vmatprep.subr.mxu0 0.0
          %2560 = vmatpush1.msra.mxu0 0.0
          %2561 = vmatprep.subr.mxu0 0.0
          %2562 = vmatpush1.msra.mxu0 0.0
          %2563 = vmatprep.subr.mxu0 0.0
          %2564 = vmatpush1.msra.mxu0 0.0
          %2565 = vmatprep.subr.mxu0 0.0
          %2566 = vmatpush1.msra.mxu0 %v2537
          %2567 = vmatprep.subr.mxu0 0.0
          %2568 = vmatpush1.msra.mxu0 %v2523
          %2569 = vmatprep.subr.mxu0 0.0
          %2570 = vmatpush1.msra.mxu0 %v2521
          %2571 = vmatprep.subr.mxu0 0.0
          %2572 = vmatpush2.msra.mxu0 0.0
          %2573 = vmatprep.subr.mxu0 0.0
          %2574 = vmatpush2.msra.mxu0 0.0
          %2575 = vmatprep.subr.mxu0 0.0
          %2576 = vmatpush2.msra.mxu0 0.0
          %2577 = vmatprep.subr.mxu0 0.0
          %2578 = vmatpush2.msra.mxu0 0.0
          %2579 = vmatprep.subr.mxu0 0.0
          %2580 = vmatpush2.msra.mxu0 0.0
          %2581 = vmatprep.subr.mxu0 0.0
          %2582 = vmatpush2.msra.mxu0 0.0
          %2583 = vmatprep.subr.mxu0 0.0
          %2584 = vmatpush2.msra.mxu0 0.0
          %2585 = vmatprep.subr.mxu0 0.0
          %2586 = vmatpush2.msra.mxu0 0.0
          %2587 = vmatprep.subr.mxu0 0.0
          %2588 = vmatpush2.msra.mxu0 0.0
          %2589 = vmatprep.subr.mxu0 0.0
          %2590 = vmatpush2.msra.mxu0 0.0
          %2591 = vmatprep.subr.mxu0 0.0
          %2592 = vmatpush2.msra.mxu0 0.0
          %2593 = vmatprep.subr.mxu0 0.0
          %2594 = vmatpush2.msra.mxu0 0.0
          %2595 = vmatprep.subr.mxu0 0.0
          %2596 = vmatpush2.msra.mxu0 0.0
          %2597 = vmatprep.subr.mxu0 0.0
          %2598 = vmatpush2.msra.mxu0 0.0
          %2599 = vmatprep.subr.mxu0 0.0
          %2600 = vmatpush2.msra.mxu0 0.0
          %2601 = vmatprep.subr.mxu0 0.0
          %2602 = vmatpush2.msra.mxu0 0.0
          %2603 = vmatprep.mubr.f32.mxu0 0.0
          %2604 = vmatmul.mubr.f32.gmra.mxu0 %v2529
          %v2605 = vpop.f32.mrf.mxu0
          %v2606 = vadd.f32 0.0, %v2605
          %v2607 = vpop.f32.mrf.mxu0
          %2608 = vmatprep.mubr.f32.mxu0 0.0
          %2609 = vmatmul.mubr.f32.gmra.mxu0 %v2532
          %v2610 = vpop.f32.mrf.mxu0
          %v2611 = vadd.f32 0.0, %v2610
          %v2612 = vpop.f32.mrf.mxu0
          %2613 = vmatprep.mubr.f32.mxu0 0.0
          %2614 = vmatmul.mubr.f32.gmra.mxu0 %v2535
          %v2615 = vpop.f32.mrf.mxu0
          %v2616 = vadd.f32 0.0, %v2615
          %v2617 = vpop.f32.mrf.mxu0
          %2618 = vdwg.mxu0
          %2619 = vrot.lane.b32.xlu0 %v821, 64
          %v2620 = vpop.permute.xlu0 %2619
          %2621 = vrot.lane.b32.xlu0 %v823, 64
          %v2622 = vpop.permute.xlu0 %2621
          %2623 = vrot.lane.b32.xlu0 %v825, 64
          %v2624 = vpop.permute.xlu0 %2623
          %v2628 = vsel %vm1659, %v1922, 0
          %v2631 = vsel %vm1659, %v1923, 0
          %v2634 = vsel %vm1659, %v1924, 0
          %v2636 = vsel %vm1942, %v2624, 0
          %2638 = vmatprep.subr.mxu0 0.0
          %2639 = vmatpush1.msra.mxu0 0.0
          %2640 = vmatprep.subr.mxu0 0.0
          %2641 = vmatpush1.msra.mxu0 0.0
          %2642 = vmatprep.subr.mxu0 0.0
          %2643 = vmatpush1.msra.mxu0 0.0
          %2644 = vmatprep.subr.mxu0 0.0
          %2645 = vmatpush1.msra.mxu0 0.0
          %2646 = vmatprep.subr.mxu0 0.0
          %2647 = vmatpush1.msra.mxu0 0.0
          %2648 = vmatprep.subr.mxu0 0.0
          %2649 = vmatpush1.msra.mxu0 0.0
          %2650 = vmatprep.subr.mxu0 0.0
          %2651 = vmatpush1.msra.mxu0 0.0
          %2652 = vmatprep.subr.mxu0 0.0
          %2653 = vmatpush1.msra.mxu0 0.0
          %2654 = vmatprep.subr.mxu0 0.0
          %2655 = vmatpush1.msra.mxu0 0.0
          %2656 = vmatprep.subr.mxu0 0.0
          %2657 = vmatpush1.msra.mxu0 0.0
          %2658 = vmatprep.subr.mxu0 0.0
          %2659 = vmatpush1.msra.mxu0 0.0
          %2660 = vmatprep.subr.mxu0 0.0
          %2661 = vmatpush1.msra.mxu0 0.0
          %2662 = vmatprep.subr.mxu0 0.0
          %2663 = vmatpush1.msra.mxu0 0.0
          %2664 = vmatprep.subr.mxu0 0.0
          %2665 = vmatpush1.msra.mxu0 %v2636
          %2666 = vmatprep.subr.mxu0 0.0
          %2667 = vmatpush1.msra.mxu0 %v2622
          %2668 = vmatprep.subr.mxu0 0.0
          %2669 = vmatpush1.msra.mxu0 %v2620
          %2670 = vmatprep.subr.mxu0 0.0
          %2671 = vmatpush2.msra.mxu0 0.0
          %2672 = vmatprep.subr.mxu0 0.0
          %2673 = vmatpush2.msra.mxu0 0.0
          %2674 = vmatprep.subr.mxu0 0.0
          %2675 = vmatpush2.msra.mxu0 0.0
          %2676 = vmatprep.subr.mxu0 0.0
          %2677 = vmatpush2.msra.mxu0 0.0
          %2678 = vmatprep.subr.mxu0 0.0
          %2679 = vmatpush2.msra.mxu0 0.0
          %2680 = vmatprep.subr.mxu0 0.0
          %2681 = vmatpush2.msra.mxu0 0.0
          %2682 = vmatprep.subr.mxu0 0.0
          %2683 = vmatpush2.msra.mxu0 0.0
          %2684 = vmatprep.subr.mxu0 0.0
          %2685 = vmatpush2.msra.mxu0 0.0
          %2686 = vmatprep.subr.mxu0 0.0
          %2687 = vmatpush2.msra.mxu0 0.0
          %2688 = vmatprep.subr.mxu0 0.0
          %2689 = vmatpush2.msra.mxu0 0.0
          %2690 = vmatprep.subr.mxu0 0.0
          %2691 = vmatpush2.msra.mxu0 0.0
          %2692 = vmatprep.subr.mxu0 0.0
          %2693 = vmatpush2.msra.mxu0 0.0
          %2694 = vmatprep.subr.mxu0 0.0
          %2695 = vmatpush2.msra.mxu0 0.0
          %2696 = vmatprep.subr.mxu0 0.0
          %2697 = vmatpush2.msra.mxu0 0.0
          %2698 = vmatprep.subr.mxu0 0.0
          %2699 = vmatpush2.msra.mxu0 0.0
          %2700 = vmatprep.subr.mxu0 0.0
          %2701 = vmatpush2.msra.mxu0 0.0
          %2702 = vmatprep.mubr.f32.mxu0 0.0
          %2703 = vmatmul.mubr.f32.gmra.mxu0 %v2628
          %v2704 = vpop.f32.mrf.mxu0
          %v2705 = vadd.f32 0.0, %v2704
          %v2706 = vpop.f32.mrf.mxu0
          %2707 = vmatprep.mubr.f32.mxu0 0.0
          %2708 = vmatmul.mubr.f32.gmra.mxu0 %v2631
          %v2709 = vpop.f32.mrf.mxu0
          %v2710 = vadd.f32 0.0, %v2709
          %v2711 = vpop.f32.mrf.mxu0
          %2712 = vmatprep.mubr.f32.mxu0 0.0
          %2713 = vmatmul.mubr.f32.gmra.mxu0 %v2634
          %v2714 = vpop.f32.mrf.mxu0
          %v2715 = vadd.f32 0.0, %v2714
          %v2716 = vpop.f32.mrf.mxu0
          %2717 = vdwg.mxu0
          %2721 = vrot.lane.b32.xlu0 %v2111, 4
          %v2722 = vpop.permute.xlu0 %2721
          %2723 = vrot.lane.b32.xlu0 %v2116, 4
          %v2724 = vpop.permute.xlu0 %2723
          %2725 = vrot.lane.b32.xlu0 %v2121, 4
          %v2726 = vpop.permute.xlu0 %2725
          %2733 = vrot.lane.b32.xlu0 %v2210, 8
          %v2734 = vpop.permute.xlu0 %2733
          %2735 = vrot.lane.b32.xlu0 %v2215, 8
          %v2736 = vpop.permute.xlu0 %2735
          %2737 = vrot.lane.b32.xlu0 %v2220, 8
          %v2738 = vpop.permute.xlu0 %2737
          %2745 = vrot.lane.b32.xlu0 %v2309, 12
          %v2746 = vpop.permute.xlu0 %2745
          %2747 = vrot.lane.b32.xlu0 %v2314, 12
          %v2748 = vpop.permute.xlu0 %2747
          %2749 = vrot.lane.b32.xlu0 %v2319, 12
          %v2750 = vpop.permute.xlu0 %2749
          %2757 = vrot.lane.b32.xlu0 %v2408, 16
          %v2758 = vpop.permute.xlu0 %2757
          %2759 = vrot.lane.b32.xlu0 %v2413, 16
          %v2760 = vpop.permute.xlu0 %2759
          %2761 = vrot.lane.b32.xlu0 %v2418, 16
          %v2762 = vpop.permute.xlu0 %2761
          %2769 = vrot.lane.b32.xlu0 %v2507, 20
          %v2770 = vpop.permute.xlu0 %2769
          %2771 = vrot.lane.b32.xlu0 %v2512, 20
          %v2772 = vpop.permute.xlu0 %2771
          %2773 = vrot.lane.b32.xlu0 %v2517, 20
          %v2774 = vpop.permute.xlu0 %2773
          %2781 = vrot.lane.b32.xlu0 %v2606, 24
          %v2782 = vpop.permute.xlu0 %2781
          %2783 = vrot.lane.b32.xlu0 %v2611, 24
          %v2784 = vpop.permute.xlu0 %2783
          %2785 = vrot.lane.b32.xlu0 %v2616, 24
          %v2786 = vpop.permute.xlu0 %2785
          %2793 = vrot.lane.b32.xlu0 %v2705, 28
          %v2794 = vpop.permute.xlu0 %2793
          %2795 = vrot.lane.b32.xlu0 %v2710, 28
          %v2796 = vpop.permute.xlu0 %2795
          %2797 = vrot.lane.b32.xlu0 %v2715, 28
          %v2798 = vpop.permute.xlu0 %2797
          %v2802 = vsel %vm832, %v2012, %v2722
          %v2803 = vsel %vm832, %v2017, %v2724
          %v2804 = vsel %vm832, %v2022, %v2726
          %vm2805 = vcmask 64512
          %v2806 = vsel %vm2805, %v2802, %v2734
          %v2807 = vsel %vm2805, %v2803, %v2736
          %v2808 = vsel %vm2805, %v2804, %v2738
          %vm2809 = vcmask 97280
          %v2810 = vsel %vm2809, %v2806, %v2746
          %v2811 = vsel %vm2809, %v2807, %v2748
          %v2812 = vsel %vm2809, %v2808, %v2750
          %vm2813 = vcmask 130048
          %v2814 = vsel %vm2813, %v2810, %v2758
          %v2815 = vsel %vm2813, %v2811, %v2760
          %v2816 = vsel %vm2813, %v2812, %v2762
          %v2817 = vsel %vm1659, %v2814, %v2770
          %v2818 = vsel %vm1659, %v2815, %v2772
          %v2819 = vsel %vm1659, %v2816, %v2774
          %vm2820 = vcmask 195584
          %v2821 = vsel %vm2820, %v2817, %v2782
          %v2822 = vsel %vm2820, %v2818, %v2784
          %v2823 = vsel %vm2820, %v2819, %v2786
          %vm2824 = vcmask 228352
          %v2825 = vsel %vm2824, %v2821, %v2794
          %v2826 = vsel %vm2824, %v2822, %v2796
          %v2827 = vsel %vm2824, %v2823, %v2798
          %v2829 = vlaneseq
          %v2830 = vshrl.u32 %v2829, 7
          %v2831 = vsub.s32 0, %v2830
          %v2832 = vrot.slane %v684, %v2831
          %v2835 = vsel %vm691, %v2825, 0
          %v2838 = vsel %vm691, %v2826, 0
          %v2841 = vsel %vm691, %v2827, 0
          %2843 = vmatprep.subr.mxu0 0.0
          %2844 = vmatpush1.msra.mxu0 0.0
          %2845 = vmatprep.subr.mxu0 0.0
          %2846 = vmatpush1.msra.mxu0 0.0
          %2847 = vmatprep.subr.mxu0 0.0
          %2848 = vmatpush1.msra.mxu0 0.0
          %2849 = vmatprep.subr.mxu0 0.0
          %2850 = vmatpush1.msra.mxu0 0.0
          %2851 = vmatprep.subr.mxu0 0.0
          %2852 = vmatpush1.msra.mxu0 0.0
          %2853 = vmatprep.subr.mxu0 0.0
          %2854 = vmatpush1.msra.mxu0 0.0
          %2855 = vmatprep.subr.mxu0 0.0
          %2856 = vmatpush1.msra.mxu0 0.0
          %2857 = vmatprep.subr.mxu0 0.0
          %2858 = vmatpush1.msra.mxu0 0.0
          %2859 = vmatprep.subr.mxu0 0.0
          %2860 = vmatpush1.msra.mxu0 0.0
          %2861 = vmatprep.subr.mxu0 0.0
          %2862 = vmatpush1.msra.mxu0 0.0
          %2863 = vmatprep.subr.mxu0 0.0
          %2864 = vmatpush1.msra.mxu0 0.0
          %2865 = vmatprep.subr.mxu0 0.0
          %2866 = vmatpush1.msra.mxu0 0.0
          %2867 = vmatprep.subr.mxu0 0.0
          %2868 = vmatpush1.msra.mxu0 %v683
          %2869 = vmatprep.subr.mxu0 0.0
          %2870 = vmatpush1.msra.mxu0 %v682
          %2871 = vmatprep.subr.mxu0 0.0
          %2872 = vmatpush1.msra.mxu0 %v681
          %2873 = vmatprep.subr.mxu0 0.0
          %2874 = vmatpush1.msra.mxu0 %v680
          %2875 = vmatprep.subr.mxu0 0.0
          %2876 = vmatpush2.msra.mxu0 0.0
          %2877 = vmatprep.subr.mxu0 0.0
          %2878 = vmatpush2.msra.mxu0 0.0
          %2879 = vmatprep.subr.mxu0 0.0
          %2880 = vmatpush2.msra.mxu0 0.0
          %2881 = vmatprep.subr.mxu0 0.0
          %2882 = vmatpush2.msra.mxu0 0.0
          %2883 = vmatprep.subr.mxu0 0.0
          %2884 = vmatpush2.msra.mxu0 0.0
          %2885 = vmatprep.subr.mxu0 0.0
          %2886 = vmatpush2.msra.mxu0 0.0
          %2887 = vmatprep.subr.mxu0 0.0
          %2888 = vmatpush2.msra.mxu0 0.0
          %2889 = vmatprep.subr.mxu0 0.0
          %2890 = vmatpush2.msra.mxu0 0.0
          %2891 = vmatprep.subr.mxu0 0.0
          %2892 = vmatpush2.msra.mxu0 0.0
          %2893 = vmatprep.subr.mxu0 0.0
          %2894 = vmatpush2.msra.mxu0 0.0
          %2895 = vmatprep.subr.mxu0 0.0
          %2896 = vmatpush2.msra.mxu0 0.0
          %2897 = vmatprep.subr.mxu0 0.0
          %2898 = vmatpush2.msra.mxu0 0.0
          %2899 = vmatprep.subr.mxu0 0.0
          %2900 = vmatpush2.msra.mxu0 0.0
          %2901 = vmatprep.subr.mxu0 0.0
          %2902 = vmatpush2.msra.mxu0 0.0
          %2903 = vmatprep.subr.mxu0 0.0
          %2904 = vmatpush2.msra.mxu0 0.0
          %2905 = vmatprep.subr.mxu0 0.0
          %2906 = vmatpush2.msra.mxu0 0.0
          %2907 = vmatprep.mubr.f32.mxu0 0.0
          %2908 = vmatmul.mubr.f32.gmra.mxu0 %v2835
          %v2909 = vpop.f32.mrf.mxu0
          %v2910 = vadd.f32 %v2832, %v2909
          %v2911 = vpop.f32.mrf.mxu0
          %2912 = vmatprep.mubr.f32.mxu0 0.0
          %2913 = vmatmul.mubr.f32.gmra.mxu0 %v2838
          %v2914 = vpop.f32.mrf.mxu0
          %v2915 = vadd.f32 %v2832, %v2914
          %v2916 = vpop.f32.mrf.mxu0
          %2917 = vmatprep.mubr.f32.mxu0 0.0
          %2918 = vmatmul.mubr.f32.gmra.mxu0 %v2841
          %v2919 = vpop.f32.mrf.mxu0
          %v2920 = vadd.f32 %v2832, %v2919
          %v2921 = vpop.f32.mrf.mxu0
          %2922 = vdwg.mxu0
          %v2924 = vlaneseq
          %v2925 = vshrl.u32 %v2924, 7
          %v2926 = vsub.s32 0, %v2925
          %v2927 = vrot.slane %v663, %v2926
          %v2930 = vsel %vm691, %v2910, 0
          %v2933 = vsel %vm691, %v2915, 0
          %v2936 = vsel %vm691, %v2920, 0
          %2938 = vmatprep.subr.mxu0 0.0
          %2939 = vmatpush1.msra.mxu0 0.0
          %2940 = vmatprep.subr.mxu0 0.0
          %2941 = vmatpush1.msra.mxu0 0.0
          %2942 = vmatprep.subr.mxu0 0.0
          %2943 = vmatpush1.msra.mxu0 0.0
          %2944 = vmatprep.subr.mxu0 0.0
          %2945 = vmatpush1.msra.mxu0 0.0
          %2946 = vmatprep.subr.mxu0 0.0
          %2947 = vmatpush1.msra.mxu0 0.0
          %2948 = vmatprep.subr.mxu0 0.0
          %2949 = vmatpush1.msra.mxu0 0.0
          %2950 = vmatprep.subr.mxu0 0.0
          %2951 = vmatpush1.msra.mxu0 0.0
          %2952 = vmatprep.subr.mxu0 0.0
          %2953 = vmatpush1.msra.mxu0 0.0
          %2954 = vmatprep.subr.mxu0 0.0
          %2955 = vmatpush1.msra.mxu0 0.0
          %2956 = vmatprep.subr.mxu0 0.0
          %2957 = vmatpush1.msra.mxu0 0.0
          %2958 = vmatprep.subr.mxu0 0.0
          %2959 = vmatpush1.msra.mxu0 0.0
          %2960 = vmatprep.subr.mxu0 0.0
          %2961 = vmatpush1.msra.mxu0 0.0
          %2962 = vmatprep.subr.mxu0 0.0
          %2963 = vmatpush1.msra.mxu0 %v662
          %2964 = vmatprep.subr.mxu0 0.0
          %2965 = vmatpush1.msra.mxu0 %v661
          %2966 = vmatprep.subr.mxu0 0.0
          %2967 = vmatpush1.msra.mxu0 %v660
          %2968 = vmatprep.subr.mxu0 0.0
          %2969 = vmatpush1.msra.mxu0 %v659
          %2970 = vmatprep.subr.mxu0 0.0
          %2971 = vmatpush2.msra.mxu0 0.0
          %2972 = vmatprep.subr.mxu0 0.0
          %2973 = vmatpush2.msra.mxu0 0.0
          %2974 = vmatprep.subr.mxu0 0.0
          %2975 = vmatpush2.msra.mxu0 0.0
          %2976 = vmatprep.subr.mxu0 0.0
          %2977 = vmatpush2.msra.mxu0 0.0
          %2978 = vmatprep.subr.mxu0 0.0
          %2979 = vmatpush2.msra.mxu0 0.0
          %2980 = vmatprep.subr.mxu0 0.0
          %2981 = vmatpush2.msra.mxu0 0.0
          %2982 = vmatprep.subr.mxu0 0.0
          %2983 = vmatpush2.msra.mxu0 0.0
          %2984 = vmatprep.subr.mxu0 0.0
          %2985 = vmatpush2.msra.mxu0 0.0
          %2986 = vmatprep.subr.mxu0 0.0
          %2987 = vmatpush2.msra.mxu0 0.0
          %2988 = vmatprep.subr.mxu0 0.0
          %2989 = vmatpush2.msra.mxu0 0.0
          %2990 = vmatprep.subr.mxu0 0.0
          %2991 = vmatpush2.msra.mxu0 0.0
          %2992 = vmatprep.subr.mxu0 0.0
          %2993 = vmatpush2.msra.mxu0 0.0
          %2994 = vmatprep.subr.mxu0 0.0
          %2995 = vmatpush2.msra.mxu0 0.0
          %2996 = vmatprep.subr.mxu0 0.0
          %2997 = vmatpush2.msra.mxu0 0.0
          %2998 = vmatprep.subr.mxu0 0.0
          %2999 = vmatpush2.msra.mxu0 0.0
          %3000 = vmatprep.subr.mxu0 0.0
          %3001 = vmatpush2.msra.mxu0 0.0
          %3002 = vmatprep.mubr.f32.mxu0 0.0
          %3003 = vmatmul.mubr.f32.gmra.mxu0 %v2930
          %v3004 = vpop.f32.mrf.mxu0
          %v3005 = vadd.f32 %v2927, %v3004
          %v3006 = vpop.f32.mrf.mxu0
          %3007 = vmatprep.mubr.f32.mxu0 0.0
          %3008 = vmatmul.mubr.f32.gmra.mxu0 %v2933
          %v3009 = vpop.f32.mrf.mxu0
          %v3010 = vadd.f32 %v2927, %v3009
          %v3011 = vpop.f32.mrf.mxu0
          %3012 = vmatprep.mubr.f32.mxu0 0.0
          %3013 = vmatmul.mubr.f32.gmra.mxu0 %v2936
          %v3014 = vpop.f32.mrf.mxu0
          %v3015 = vadd.f32 %v2927, %v3014
          %v3016 = vpop.f32.mrf.mxu0
          %3017 = vdwg.mxu0
          %v3018 = vmax.f32 %v3005, 0.0
          %v3019 = vmax.f32 %v3010, 0.0
          %v3020 = vmax.f32 %v3015, 0.0
          %3021 = vst.msk [vmem:[#allocation2] sm:$0xff] %vm691, %v3018
          %3022 = vst.msk [vmem:[#allocation2 + $0x8] sm:$0xff] %vm691, %v3019
          %vm3023 = vcmask 257024
          %3024 = vst.msk [vmem:[#allocation2 + $0x10] sm:$0xf] %vm3023, %v3020
        $region104: #{tpu_custom_call.1} parent=79 // pred_fallthru
          _
        %s3025 = smul.u32 %s38, 4
        %s3026 = scalar_lea.vmem %s650, %s3025
        %v3027 = vld [vmem:[%s3026] sm:$0xf]
        %v3028 = vlaneseq
        %v3029 = vand.u32 %v3028, 127
        %v3030 = vstv %s3025
        %v3031 = vadd.s32 %v3030, %v3029
        %vm3032 = vcmp.lt.s32.totalorder %v3031, 18
        %v3033 = vsel %vm3032, 0.0, -1e+30
        %v3034 = vld [vmem:[%s561] sm:$0xff]
        %v3035 = vld [vmem:[%s561 + $0x8] sm:$0xff]
        %v3036 = vld [vmem:[%s561 + $0x10] sm:$0xff]
        %v3037 = vld [vmem:[%s561 + $0x18] sm:$0xff]
        %v3038 = vld [vmem:[%s569] sm:$0x1]
        %v3039 = vld [vmem:[%s578] sm:$0xff]
        %v3040 = vld [vmem:[%s578 + $0x8] sm:$0xff]
        %v3041 = vld [vmem:[%s578 + $0x10] sm:$0xff]
        %v3042 = vld [vmem:[%s578 + $0x18] sm:$0xff]
        %v3043 = vld [vmem:[%s653] sm:$0x1]
        %v3045 = vlaneseq
        %v3046 = vshrl.u32 %v3045, 7
        %v3047 = vsub.s32 0, %v3046
        %v3048 = vrot.slane %v3038, %v3047
        %vm3050 = vcmask 261120
        %v3052 = vsel %vm3050, %v3027, 0
        %3054 = vmatprep.subr.mxu0 0.0
        %3055 = vmatpush1.msra.mxu0 0.0
        %3056 = vmatprep.subr.mxu0 0.0
        %3057 = vmatpush1.msra.mxu0 0.0
        %3058 = vmatprep.subr.mxu0 0.0
        %3059 = vmatpush1.msra.mxu0 0.0
        %3060 = vmatprep.subr.mxu0 0.0
        %3061 = vmatpush1.msra.mxu0 0.0
        %3062 = vmatprep.subr.mxu0 0.0
        %3063 = vmatpush1.msra.mxu0 0.0
        %3064 = vmatprep.subr.mxu0 0.0
        %3065 = vmatpush1.msra.mxu0 0.0
        %3066 = vmatprep.subr.mxu0 0.0
        %3067 = vmatpush1.msra.mxu0 0.0
        %3068 = vmatprep.subr.mxu0 0.0
        %3069 = vmatpush1.msra.mxu0 0.0
        %3070 = vmatprep.subr.mxu0 0.0
        %3071 = vmatpush1.msra.mxu0 0.0
        %3072 = vmatprep.subr.mxu0 0.0
        %3073 = vmatpush1.msra.mxu0 0.0
        %3074 = vmatprep.subr.mxu0 0.0
        %3075 = vmatpush1.msra.mxu0 0.0
        %3076 = vmatprep.subr.mxu0 0.0
        %3077 = vmatpush1.msra.mxu0 0.0
        %3078 = vmatprep.subr.mxu0 0.0
        %3079 = vmatpush1.msra.mxu0 %v3037
        %3080 = vmatprep.subr.mxu0 0.0
        %3081 = vmatpush1.msra.mxu0 %v3036
        %3082 = vmatprep.subr.mxu0 0.0
        %3083 = vmatpush1.msra.mxu0 %v3035
        %3084 = vmatprep.subr.mxu0 0.0
        %3085 = vmatpush1.msra.mxu0 %v3034
        %3086 = vmatprep.subr.mxu0 0.0
        %3087 = vmatpush2.msra.mxu0 0.0
        %3088 = vmatprep.subr.mxu0 0.0
        %3089 = vmatpush2.msra.mxu0 0.0
        %3090 = vmatprep.subr.mxu0 0.0
        %3091 = vmatpush2.msra.mxu0 0.0
        %3092 = vmatprep.subr.mxu0 0.0
        %3093 = vmatpush2.msra.mxu0 0.0
        %3094 = vmatprep.subr.mxu0 0.0
        %3095 = vmatpush2.msra.mxu0 0.0
        %3096 = vmatprep.subr.mxu0 0.0
        %3097 = vmatpush2.msra.mxu0 0.0
        %3098 = vmatprep.subr.mxu0 0.0
        %3099 = vmatpush2.msra.mxu0 0.0
        %3100 = vmatprep.subr.mxu0 0.0
        %3101 = vmatpush2.msra.mxu0 0.0
        %3102 = vmatprep.subr.mxu0 0.0
        %3103 = vmatpush2.msra.mxu0 0.0
        %3104 = vmatprep.subr.mxu0 0.0
        %3105 = vmatpush2.msra.mxu0 0.0
        %3106 = vmatprep.subr.mxu0 0.0
        %3107 = vmatpush2.msra.mxu0 0.0
        %3108 = vmatprep.subr.mxu0 0.0
        %3109 = vmatpush2.msra.mxu0 0.0
        %3110 = vmatprep.subr.mxu0 0.0
        %3111 = vmatpush2.msra.mxu0 0.0
        %3112 = vmatprep.subr.mxu0 0.0
        %3113 = vmatpush2.msra.mxu0 0.0
        %3114 = vmatprep.subr.mxu0 0.0
        %3115 = vmatpush2.msra.mxu0 0.0
        %3116 = vmatprep.subr.mxu0 0.0
        %3117 = vmatpush2.msra.mxu0 0.0
        %3118 = vmatprep.mubr.f32.mxu0 0.0
        %3119 = vmatmul.mubr.f32.gmra.mxu0 %v3052
        %v3120 = vpop.f32.mrf.mxu0
        %v3121 = vadd.f32 %v3048, %v3120
        %v3122 = vpop.f32.mrf.mxu0
        %3123 = vdwg.mxu0
        %3125 = vrot.lane.b32.xlu0 %v3121, 120
        %v3126 = vpop.permute.xlu0 %3125
        %3127 = vrot.lane.b32.xlu0 %v3121, 112
        %v3128 = vpop.permute.xlu0 %3127
        %3129 = vrot.lane.b32.xlu0 %v3121, 104
        %v3130 = vpop.permute.xlu0 %3129
        %3131 = vrot.lane.b32.xlu0 %v3121, 96
        %v3132 = vpop.permute.xlu0 %3131
        %vm3133 = vcmask 64512
        %v3134 = vsel %vm3133, %v3121, 0
        %v3136 = vsel %vm3133, %v3132, 0
        %3138 = vmatprep.subr.mxu0 0.0
        %3139 = vmatpush1.xpose.msra.mxu0 0.0
        %3140 = vmatprep.subr.mxu0 0.0
        %3141 = vmatpush1.xpose.msra.mxu0 0.0
        %3142 = vmatprep.subr.mxu0 0.0
        %3143 = vmatpush1.xpose.msra.mxu0 0.0
        %3144 = vmatprep.subr.mxu0 0.0
        %3145 = vmatpush1.xpose.msra.mxu0 0.0
        %3146 = vmatprep.subr.mxu0 0.0
        %3147 = vmatpush1.xpose.msra.mxu0 0.0
        %3148 = vmatprep.subr.mxu0 0.0
        %3149 = vmatpush1.xpose.msra.mxu0 0.0
        %3150 = vmatprep.subr.mxu0 0.0
        %3151 = vmatpush1.xpose.msra.mxu0 0.0
        %3152 = vmatprep.subr.mxu0 0.0
        %3153 = vmatpush1.xpose.msra.mxu0 0.0
        %3154 = vmatprep.subr.mxu0 0.0
        %3155 = vmatpush1.xpose.msra.mxu0 0.0
        %3156 = vmatprep.subr.mxu0 0.0
        %3157 = vmatpush1.xpose.msra.mxu0 0.0
        %3158 = vmatprep.subr.mxu0 0.0
        %3159 = vmatpush1.xpose.msra.mxu0 0.0
        %3160 = vmatprep.subr.mxu0 0.0
        %3161 = vmatpush1.xpose.msra.mxu0 0.0
        %3162 = vmatprep.subr.mxu0 0.0
        %3163 = vmatpush1.xpose.msra.mxu0 0.0
        %3164 = vmatprep.subr.mxu0 0.0
        %3165 = vmatpush1.xpose.msra.mxu0 0.0
        %3166 = vmatprep.subr.mxu0 0.0
        %3167 = vmatpush1.xpose.msra.mxu0 0.0
        %3168 = vmatprep.subr.mxu0 0.0
        %3169 = vmatpush1.xpose.msra.mxu0 %v3136
        %3170 = vmatprep.subr.mxu0 0.0
        %3171 = vmatpush2.xpose.msra.mxu0 0.0
        %3172 = vmatprep.subr.mxu0 0.0
        %3173 = vmatpush2.xpose.msra.mxu0 0.0
        %3174 = vmatprep.subr.mxu0 0.0
        %3175 = vmatpush2.xpose.msra.mxu0 0.0
        %3176 = vmatprep.subr.mxu0 0.0
        %3177 = vmatpush2.xpose.msra.mxu0 0.0
        %3178 = vmatprep.subr.mxu0 0.0
        %3179 = vmatpush2.xpose.msra.mxu0 0.0
        %3180 = vmatprep.subr.mxu0 0.0
        %3181 = vmatpush2.xpose.msra.mxu0 0.0
        %3182 = vmatprep.subr.mxu0 0.0
        %3183 = vmatpush2.xpose.msra.mxu0 0.0
        %3184 = vmatprep.subr.mxu0 0.0
        %3185 = vmatpush2.xpose.msra.mxu0 0.0
        %3186 = vmatprep.subr.mxu0 0.0
        %3187 = vmatpush2.xpose.msra.mxu0 0.0
        %3188 = vmatprep.subr.mxu0 0.0
        %3189 = vmatpush2.xpose.msra.mxu0 0.0
        %3190 = vmatprep.subr.mxu0 0.0
        %3191 = vmatpush2.xpose.msra.mxu0 0.0
        %3192 = vmatprep.subr.mxu0 0.0
        %3193 = vmatpush2.xpose.msra.mxu0 0.0
        %3194 = vmatprep.subr.mxu0 0.0
        %3195 = vmatpush2.xpose.msra.mxu0 0.0
        %3196 = vmatprep.subr.mxu0 0.0
        %3197 = vmatpush2.xpose.msra.mxu0 0.0
        %3198 = vmatprep.subr.mxu0 0.0
        %3199 = vmatpush2.xpose.msra.mxu0 0.0
        %3200 = vmatprep.subr.mxu0 0.0
        %3201 = vmatpush2.xpose.msra.mxu0 0.0
        %3202 = vmatprep.mubr.f32.mxu0 0.0
        %3203 = vmatmul.mubr.f32.gmra.mxu0 %v3134
        %v3204 = vpop.f32.mrf.mxu0
        %v3205 = vadd.f32 0.0, %v3204
        %v3206 = vpop.f32.mrf.mxu0
        %3207 = vdwg.mxu0
        %3208 = vrot.lane.b32.xlu0 %v3126, 96
        %v3209 = vpop.permute.xlu0 %3208
        %v3210 = vsel %vm3133, %v3126, 0
        %v3212 = vsel %vm3133, %v3209, 0
        %3214 = vmatprep.subr.mxu0 0.0
        %3215 = vmatpush1.xpose.msra.mxu0 0.0
        %3216 = vmatprep.subr.mxu0 0.0
        %3217 = vmatpush1.xpose.msra.mxu0 0.0
        %3218 = vmatprep.subr.mxu0 0.0
        %3219 = vmatpush1.xpose.msra.mxu0 0.0
        %3220 = vmatprep.subr.mxu0 0.0
        %3221 = vmatpush1.xpose.msra.mxu0 0.0
        %3222 = vmatprep.subr.mxu0 0.0
        %3223 = vmatpush1.xpose.msra.mxu0 0.0
        %3224 = vmatprep.subr.mxu0 0.0
        %3225 = vmatpush1.xpose.msra.mxu0 0.0
        %3226 = vmatprep.subr.mxu0 0.0
        %3227 = vmatpush1.xpose.msra.mxu0 0.0
        %3228 = vmatprep.subr.mxu0 0.0
        %3229 = vmatpush1.xpose.msra.mxu0 0.0
        %3230 = vmatprep.subr.mxu0 0.0
        %3231 = vmatpush1.xpose.msra.mxu0 0.0
        %3232 = vmatprep.subr.mxu0 0.0
        %3233 = vmatpush1.xpose.msra.mxu0 0.0
        %3234 = vmatprep.subr.mxu0 0.0
        %3235 = vmatpush1.xpose.msra.mxu0 0.0
        %3236 = vmatprep.subr.mxu0 0.0
        %3237 = vmatpush1.xpose.msra.mxu0 0.0
        %3238 = vmatprep.subr.mxu0 0.0
        %3239 = vmatpush1.xpose.msra.mxu0 0.0
        %3240 = vmatprep.subr.mxu0 0.0
        %3241 = vmatpush1.xpose.msra.mxu0 0.0
        %3242 = vmatprep.subr.mxu0 0.0
        %3243 = vmatpush1.xpose.msra.mxu0 0.0
        %3244 = vmatprep.subr.mxu0 0.0
        %3245 = vmatpush1.xpose.msra.mxu0 %v3212
        %3246 = vmatprep.subr.mxu0 0.0
        %3247 = vmatpush2.xpose.msra.mxu0 0.0
        %3248 = vmatprep.subr.mxu0 0.0
        %3249 = vmatpush2.xpose.msra.mxu0 0.0
        %3250 = vmatprep.subr.mxu0 0.0
        %3251 = vmatpush2.xpose.msra.mxu0 0.0
        %3252 = vmatprep.subr.mxu0 0.0
        %3253 = vmatpush2.xpose.msra.mxu0 0.0
        %3254 = vmatprep.subr.mxu0 0.0
        %3255 = vmatpush2.xpose.msra.mxu0 0.0
        %3256 = vmatprep.subr.mxu0 0.0
        %3257 = vmatpush2.xpose.msra.mxu0 0.0
        %3258 = vmatprep.subr.mxu0 0.0
        %3259 = vmatpush2.xpose.msra.mxu0 0.0
        %3260 = vmatprep.subr.mxu0 0.0
        %3261 = vmatpush2.xpose.msra.mxu0 0.0
        %3262 = vmatprep.subr.mxu0 0.0
        %3263 = vmatpush2.xpose.msra.mxu0 0.0
        %3264 = vmatprep.subr.mxu0 0.0
        %3265 = vmatpush2.xpose.msra.mxu0 0.0
        %3266 = vmatprep.subr.mxu0 0.0
        %3267 = vmatpush2.xpose.msra.mxu0 0.0
        %3268 = vmatprep.subr.mxu0 0.0
        %3269 = vmatpush2.xpose.msra.mxu0 0.0
        %3270 = vmatprep.subr.mxu0 0.0
        %3271 = vmatpush2.xpose.msra.mxu0 0.0
        %3272 = vmatprep.subr.mxu0 0.0
        %3273 = vmatpush2.xpose.msra.mxu0 0.0
        %3274 = vmatprep.subr.mxu0 0.0
        %3275 = vmatpush2.xpose.msra.mxu0 0.0
        %3276 = vmatprep.subr.mxu0 0.0
        %3277 = vmatpush2.xpose.msra.mxu0 0.0
        %3278 = vmatprep.mubr.f32.mxu0 0.0
        %3279 = vmatmul.mubr.f32.gmra.mxu0 %v3210
        %v3280 = vpop.f32.mrf.mxu0
        %v3281 = vadd.f32 0.0, %v3280
        %v3282 = vpop.f32.mrf.mxu0
        %3283 = vdwg.mxu0
        %3284 = vrot.lane.b32.xlu0 %v3128, 96
        %v3285 = vpop.permute.xlu0 %3284
        %v3286 = vsel %vm3133, %v3128, 0
        %v3288 = vsel %vm3133, %v3285, 0
        %3290 = vmatprep.subr.mxu0 0.0
        %3291 = vmatpush1.xpose.msra.mxu0 0.0
        %3292 = vmatprep.subr.mxu0 0.0
        %3293 = vmatpush1.xpose.msra.mxu0 0.0
        %3294 = vmatprep.subr.mxu0 0.0
        %3295 = vmatpush1.xpose.msra.mxu0 0.0
        %3296 = vmatprep.subr.mxu0 0.0
        %3297 = vmatpush1.xpose.msra.mxu0 0.0
        %3298 = vmatprep.subr.mxu0 0.0
        %3299 = vmatpush1.xpose.msra.mxu0 0.0
        %3300 = vmatprep.subr.mxu0 0.0
        %3301 = vmatpush1.xpose.msra.mxu0 0.0
        %3302 = vmatprep.subr.mxu0 0.0
        %3303 = vmatpush1.xpose.msra.mxu0 0.0
        %3304 = vmatprep.subr.mxu0 0.0
        %3305 = vmatpush1.xpose.msra.mxu0 0.0
        %3306 = vmatprep.subr.mxu0 0.0
        %3307 = vmatpush1.xpose.msra.mxu0 0.0
        %3308 = vmatprep.subr.mxu0 0.0
        %3309 = vmatpush1.xpose.msra.mxu0 0.0
        %3310 = vmatprep.subr.mxu0 0.0
        %3311 = vmatpush1.xpose.msra.mxu0 0.0
        %3312 = vmatprep.subr.mxu0 0.0
        %3313 = vmatpush1.xpose.msra.mxu0 0.0
        %3314 = vmatprep.subr.mxu0 0.0
        %3315 = vmatpush1.xpose.msra.mxu0 0.0
        %3316 = vmatprep.subr.mxu0 0.0
        %3317 = vmatpush1.xpose.msra.mxu0 0.0
        %3318 = vmatprep.subr.mxu0 0.0
        %3319 = vmatpush1.xpose.msra.mxu0 0.0
        %3320 = vmatprep.subr.mxu0 0.0
        %3321 = vmatpush1.xpose.msra.mxu0 %v3288
        %3322 = vmatprep.subr.mxu0 0.0
        %3323 = vmatpush2.xpose.msra.mxu0 0.0
        %3324 = vmatprep.subr.mxu0 0.0
        %3325 = vmatpush2.xpose.msra.mxu0 0.0
        %3326 = vmatprep.subr.mxu0 0.0
        %3327 = vmatpush2.xpose.msra.mxu0 0.0
        %3328 = vmatprep.subr.mxu0 0.0
        %3329 = vmatpush2.xpose.msra.mxu0 0.0
        %3330 = vmatprep.subr.mxu0 0.0
        %3331 = vmatpush2.xpose.msra.mxu0 0.0
        %3332 = vmatprep.subr.mxu0 0.0
        %3333 = vmatpush2.xpose.msra.mxu0 0.0
        %3334 = vmatprep.subr.mxu0 0.0
        %3335 = vmatpush2.xpose.msra.mxu0 0.0
        %3336 = vmatprep.subr.mxu0 0.0
        %3337 = vmatpush2.xpose.msra.mxu0 0.0
        %3338 = vmatprep.subr.mxu0 0.0
        %3339 = vmatpush2.xpose.msra.mxu0 0.0
        %3340 = vmatprep.subr.mxu0 0.0
        %3341 = vmatpush2.xpose.msra.mxu0 0.0
        %3342 = vmatprep.subr.mxu0 0.0
        %3343 = vmatpush2.xpose.msra.mxu0 0.0
        %3344 = vmatprep.subr.mxu0 0.0
        %3345 = vmatpush2.xpose.msra.mxu0 0.0
        %3346 = vmatprep.subr.mxu0 0.0
        %3347 = vmatpush2.xpose.msra.mxu0 0.0
        %3348 = vmatprep.subr.mxu0 0.0
        %3349 = vmatpush2.xpose.msra.mxu0 0.0
        %3350 = vmatprep.subr.mxu0 0.0
        %3351 = vmatpush2.xpose.msra.mxu0 0.0
        %3352 = vmatprep.subr.mxu0 0.0
        %3353 = vmatpush2.xpose.msra.mxu0 0.0
        %3354 = vmatprep.mubr.f32.mxu0 0.0
        %3355 = vmatmul.mubr.f32.gmra.mxu0 %v3286
        %v3356 = vpop.f32.mrf.mxu0
        %v3357 = vadd.f32 0.0, %v3356
        %v3358 = vpop.f32.mrf.mxu0
        %3359 = vdwg.mxu0
        %3360 = vrot.lane.b32.xlu0 %v3130, 96
        %v3361 = vpop.permute.xlu0 %3360
        %v3362 = vsel %vm3133, %v3130, 0
        %v3364 = vsel %vm3133, %v3361, 0
        %3366 = vmatprep.subr.mxu0 0.0
        %3367 = vmatpush1.xpose.msra.mxu0 0.0
        %3368 = vmatprep.subr.mxu0 0.0
        %3369 = vmatpush1.xpose.msra.mxu0 0.0
        %3370 = vmatprep.subr.mxu0 0.0
        %3371 = vmatpush1.xpose.msra.mxu0 0.0
        %3372 = vmatprep.subr.mxu0 0.0
        %3373 = vmatpush1.xpose.msra.mxu0 0.0
        %3374 = vmatprep.subr.mxu0 0.0
        %3375 = vmatpush1.xpose.msra.mxu0 0.0
        %3376 = vmatprep.subr.mxu0 0.0
        %3377 = vmatpush1.xpose.msra.mxu0 0.0
        %3378 = vmatprep.subr.mxu0 0.0
        %3379 = vmatpush1.xpose.msra.mxu0 0.0
        %3380 = vmatprep.subr.mxu0 0.0
        %3381 = vmatpush1.xpose.msra.mxu0 0.0
        %3382 = vmatprep.subr.mxu0 0.0
        %3383 = vmatpush1.xpose.msra.mxu0 0.0
        %3384 = vmatprep.subr.mxu0 0.0
        %3385 = vmatpush1.xpose.msra.mxu0 0.0
        %3386 = vmatprep.subr.mxu0 0.0
        %3387 = vmatpush1.xpose.msra.mxu0 0.0
        %3388 = vmatprep.subr.mxu0 0.0
        %3389 = vmatpush1.xpose.msra.mxu0 0.0
        %3390 = vmatprep.subr.mxu0 0.0
        %3391 = vmatpush1.xpose.msra.mxu0 0.0
        %3392 = vmatprep.subr.mxu0 0.0
        %3393 = vmatpush1.xpose.msra.mxu0 0.0
        %3394 = vmatprep.subr.mxu0 0.0
        %3395 = vmatpush1.xpose.msra.mxu0 0.0
        %3396 = vmatprep.subr.mxu0 0.0
        %3397 = vmatpush1.xpose.msra.mxu0 %v3364
        %3398 = vmatprep.subr.mxu0 0.0
        %3399 = vmatpush2.xpose.msra.mxu0 0.0
        %3400 = vmatprep.subr.mxu0 0.0
        %3401 = vmatpush2.xpose.msra.mxu0 0.0
        %3402 = vmatprep.subr.mxu0 0.0
        %3403 = vmatpush2.xpose.msra.mxu0 0.0
        %3404 = vmatprep.subr.mxu0 0.0
        %3405 = vmatpush2.xpose.msra.mxu0 0.0
        %3406 = vmatprep.subr.mxu0 0.0
        %3407 = vmatpush2.xpose.msra.mxu0 0.0
        %3408 = vmatprep.subr.mxu0 0.0
        %3409 = vmatpush2.xpose.msra.mxu0 0.0
        %3410 = vmatprep.subr.mxu0 0.0
        %3411 = vmatpush2.xpose.msra.mxu0 0.0
        %3412 = vmatprep.subr.mxu0 0.0
        %3413 = vmatpush2.xpose.msra.mxu0 0.0
        %3414 = vmatprep.subr.mxu0 0.0
        %3415 = vmatpush2.xpose.msra.mxu0 0.0
        %3416 = vmatprep.subr.mxu0 0.0
        %3417 = vmatpush2.xpose.msra.mxu0 0.0
        %3418 = vmatprep.subr.mxu0 0.0
        %3419 = vmatpush2.xpose.msra.mxu0 0.0
        %3420 = vmatprep.subr.mxu0 0.0
        %3421 = vmatpush2.xpose.msra.mxu0 0.0
        %3422 = vmatprep.subr.mxu0 0.0
        %3423 = vmatpush2.xpose.msra.mxu0 0.0
        %3424 = vmatprep.subr.mxu0 0.0
        %3425 = vmatpush2.xpose.msra.mxu0 0.0
        %3426 = vmatprep.subr.mxu0 0.0
        %3427 = vmatpush2.xpose.msra.mxu0 0.0
        %3428 = vmatprep.subr.mxu0 0.0
        %3429 = vmatpush2.xpose.msra.mxu0 0.0
        %3430 = vmatprep.mubr.f32.mxu0 0.0
        %3431 = vmatmul.mubr.f32.gmra.mxu0 %v3362
        %v3432 = vpop.f32.mrf.mxu0
        %v3433 = vadd.f32 0.0, %v3432
        %v3434 = vpop.f32.mrf.mxu0
        %3435 = vdwg.mxu0
        %v3436 = vmul.f32 %v3205, 0.35355338
        %v3437 = vmul.f32 %v3281, 0.35355338
        %v3438 = vmul.f32 %v3357, 0.35355338
        %v3439 = vmul.f32 %v3433, 0.35355338
        %v3440 = vadd.f32 %v3436, %v3033
        %v3441 = vadd.f32 %v3437, %v3033
        %v3442 = vadd.f32 %v3438, %v3033
        %v3443 = vadd.f32 %v3439, %v3033
        %vm3444 = vcmask 27648
        %v3445 = vsel %vm3444, %v3440, -inf
        %3446 = vmax.xlane.f32.xlu0 %v3445
        %v3447 = vpop.xlane.xlu0 %3446
        %v3448 = vsel %vm3444, %v3441, -inf
        %3449 = vmax.xlane.f32.xlu0 %v3448
        %v3450 = vpop.xlane.xlu0 %3449
        %v3451 = vsel %vm3444, %v3442, -inf
        %3452 = vmax.xlane.f32.xlu0 %v3451
        %v3453 = vpop.xlane.xlu0 %3452
        %v3454 = vsel %vm3444, %v3443, -inf
        %3455 = vmax.xlane.f32.xlu0 %v3454
        %v3456 = vpop.xlane.xlu0 %3455
        %v3457 = vsub.f32 %v3440, %v3447
        %v3458 = vsub.f32 %v3441, %v3450
        %v3459 = vsub.f32 %v3442, %v3453
        %v3460 = vsub.f32 %v3443, %v3456
        %v3461 = vmul.f32 %v3457, 1.442695
        %v3462 = vpow.pop %v3461
        %v3463 = vmul.f32 %v3458, 1.442695
        %v3464 = vpow.pop %v3463
        %v3465 = vmul.f32 %v3459, 1.442695
        %v3466 = vpow.pop %v3465
        %v3467 = vmul.f32 %v3460, 1.442695
        %v3468 = vpow.pop %v3467
        %v3469 = vsel %vm3444, %v3462, 0.0
        %3470 = vadd.xlane.f32.xlu0 %v3469
        %v3471 = vpop.xlane.xlu0 %3470
        %v3472 = vsel %vm3444, %v3464, 0.0
        %3473 = vadd.xlane.f32.xlu0 %v3472
        %v3474 = vpop.xlane.xlu0 %3473
        %v3475 = vsel %vm3444, %v3466, 0.0
        %3476 = vadd.xlane.f32.xlu0 %v3475
        %v3477 = vpop.xlane.xlu0 %3476
        %v3478 = vsel %vm3444, %v3468, 0.0
        %3479 = vadd.xlane.f32.xlu0 %v3478
        %v3480 = vpop.xlane.xlu0 %3479
        %v3481 = vrcp.pop %v3471
        %v3482 = vrcp.pop %v3474
        %v3483 = vrcp.pop %v3477
        %v3484 = vrcp.pop %v3480
        %v3485 = vmul.f32 %v3462, %v3481
        %v3486 = vmul.f32 %v3464, %v3482
        %v3487 = vmul.f32 %v3466, %v3483
        %v3488 = vmul.f32 %v3468, %v3484
        %3489 = vrot.lane.b32.xlu0 %v3121, 64
        %v3490 = vpop.permute.xlu0 %3489
        %vm3491 = vcmask 31744
        %v3493 = vsel %vm3491, %v3485, 0
        %vm3495 = vcmask 1043456
        %v3496 = vsel %vm3495, %v3490, 0
        %3498 = vmatprep.subr.mxu0 0.0
        %3499 = vmatpush1.msra.mxu0 0.0
        %3500 = vmatprep.subr.mxu0 0.0
        %3501 = vmatpush1.msra.mxu0 0.0
        %3502 = vmatprep.subr.mxu0 0.0
        %3503 = vmatpush1.msra.mxu0 0.0
        %3504 = vmatprep.subr.mxu0 0.0
        %3505 = vmatpush1.msra.mxu0 0.0
        %3506 = vmatprep.subr.mxu0 0.0
        %3507 = vmatpush1.msra.mxu0 0.0
        %3508 = vmatprep.subr.mxu0 0.0
        %3509 = vmatpush1.msra.mxu0 0.0
        %3510 = vmatprep.subr.mxu0 0.0
        %3511 = vmatpush1.msra.mxu0 0.0
        %3512 = vmatprep.subr.mxu0 0.0
        %3513 = vmatpush1.msra.mxu0 0.0
        %3514 = vmatprep.subr.mxu0 0.0
        %3515 = vmatpush1.msra.mxu0 0.0
        %3516 = vmatprep.subr.mxu0 0.0
        %3517 = vmatpush1.msra.mxu0 0.0
        %3518 = vmatprep.subr.mxu0 0.0
        %3519 = vmatpush1.msra.mxu0 0.0
        %3520 = vmatprep.subr.mxu0 0.0
        %3521 = vmatpush1.msra.mxu0 0.0
        %3522 = vmatprep.subr.mxu0 0.0
        %3523 = vmatpush1.msra.mxu0 0.0
        %3524 = vmatprep.subr.mxu0 0.0
        %3525 = vmatpush1.msra.mxu0 0.0
        %3526 = vmatprep.subr.mxu0 0.0
        %3527 = vmatpush1.msra.mxu0 0.0
        %3528 = vmatprep.subr.mxu0 0.0
        %3529 = vmatpush1.msra.mxu0 %v3496
        %3530 = vmatprep.subr.mxu0 0.0
        %3531 = vmatpush2.msra.mxu0 0.0
        %3532 = vmatprep.subr.mxu0 0.0
        %3533 = vmatpush2.msra.mxu0 0.0
        %3534 = vmatprep.subr.mxu0 0.0
        %3535 = vmatpush2.msra.mxu0 0.0
        %3536 = vmatprep.subr.mxu0 0.0
        %3537 = vmatpush2.msra.mxu0 0.0
        %3538 = vmatprep.subr.mxu0 0.0
        %3539 = vmatpush2.msra.mxu0 0.0
        %3540 = vmatprep.subr.mxu0 0.0
        %3541 = vmatpush2.msra.mxu0 0.0
        %3542 = vmatprep.subr.mxu0 0.0
        %3543 = vmatpush2.msra.mxu0 0.0
        %3544 = vmatprep.subr.mxu0 0.0
        %3545 = vmatpush2.msra.mxu0 0.0
        %3546 = vmatprep.subr.mxu0 0.0
        %3547 = vmatpush2.msra.mxu0 0.0
        %3548 = vmatprep.subr.mxu0 0.0
        %3549 = vmatpush2.msra.mxu0 0.0
        %3550 = vmatprep.subr.mxu0 0.0
        %3551 = vmatpush2.msra.mxu0 0.0
        %3552 = vmatprep.subr.mxu0 0.0
        %3553 = vmatpush2.msra.mxu0 0.0
        %3554 = vmatprep.subr.mxu0 0.0
        %3555 = vmatpush2.msra.mxu0 0.0
        %3556 = vmatprep.subr.mxu0 0.0
        %3557 = vmatpush2.msra.mxu0 0.0
        %3558 = vmatprep.subr.mxu0 0.0
        %3559 = vmatpush2.msra.mxu0 0.0
        %3560 = vmatprep.subr.mxu0 0.0
        %3561 = vmatpush2.msra.mxu0 0.0
        %3562 = vmatprep.mubr.f32.mxu0 0.0
        %3563 = vmatmul.mubr.f32.gmra.mxu0 %v3493
        %v3564 = vpop.f32.mrf.mxu0
        %v3565 = vadd.f32 0.0, %v3564
        %v3566 = vpop.f32.mrf.mxu0
        %3567 = vdwg.mxu0
        %3568 = vrot.lane.b32.xlu0 %v3126, 64
        %v3569 = vpop.permute.xlu0 %3568
        %v3571 = vsel %vm3491, %v3486, 0
        %v3573 = vsel %vm3495, %v3569, 0
        %3575 = vmatprep.subr.mxu0 0.0
        %3576 = vmatpush1.msra.mxu0 0.0
        %3577 = vmatprep.subr.mxu0 0.0
        %3578 = vmatpush1.msra.mxu0 0.0
        %3579 = vmatprep.subr.mxu0 0.0
        %3580 = vmatpush1.msra.mxu0 0.0
        %3581 = vmatprep.subr.mxu0 0.0
        %3582 = vmatpush1.msra.mxu0 0.0
        %3583 = vmatprep.subr.mxu0 0.0
        %3584 = vmatpush1.msra.mxu0 0.0
        %3585 = vmatprep.subr.mxu0 0.0
        %3586 = vmatpush1.msra.mxu0 0.0
        %3587 = vmatprep.subr.mxu0 0.0
        %3588 = vmatpush1.msra.mxu0 0.0
        %3589 = vmatprep.subr.mxu0 0.0
        %3590 = vmatpush1.msra.mxu0 0.0
        %3591 = vmatprep.subr.mxu0 0.0
        %3592 = vmatpush1.msra.mxu0 0.0
        %3593 = vmatprep.subr.mxu0 0.0
        %3594 = vmatpush1.msra.mxu0 0.0
        %3595 = vmatprep.subr.mxu0 0.0
        %3596 = vmatpush1.msra.mxu0 0.0
        %3597 = vmatprep.subr.mxu0 0.0
        %3598 = vmatpush1.msra.mxu0 0.0
        %3599 = vmatprep.subr.mxu0 0.0
        %3600 = vmatpush1.msra.mxu0 0.0
        %3601 = vmatprep.subr.mxu0 0.0
        %3602 = vmatpush1.msra.mxu0 0.0
        %3603 = vmatprep.subr.mxu0 0.0
        %3604 = vmatpush1.msra.mxu0 0.0
        %3605 = vmatprep.subr.mxu0 0.0
        %3606 = vmatpush1.msra.mxu0 %v3573
        %3607 = vmatprep.subr.mxu0 0.0
        %3608 = vmatpush2.msra.mxu0 0.0
        %3609 = vmatprep.subr.mxu0 0.0
        %3610 = vmatpush2.msra.mxu0 0.0
        %3611 = vmatprep.subr.mxu0 0.0
        %3612 = vmatpush2.msra.mxu0 0.0
        %3613 = vmatprep.subr.mxu0 0.0
        %3614 = vmatpush2.msra.mxu0 0.0
        %3615 = vmatprep.subr.mxu0 0.0
        %3616 = vmatpush2.msra.mxu0 0.0
        %3617 = vmatprep.subr.mxu0 0.0
        %3618 = vmatpush2.msra.mxu0 0.0
        %3619 = vmatprep.subr.mxu0 0.0
        %3620 = vmatpush2.msra.mxu0 0.0
        %3621 = vmatprep.subr.mxu0 0.0
        %3622 = vmatpush2.msra.mxu0 0.0
        %3623 = vmatprep.subr.mxu0 0.0
        %3624 = vmatpush2.msra.mxu0 0.0
        %3625 = vmatprep.subr.mxu0 0.0
        %3626 = vmatpush2.msra.mxu0 0.0
        %3627 = vmatprep.subr.mxu0 0.0
        %3628 = vmatpush2.msra.mxu0 0.0
        %3629 = vmatprep.subr.mxu0 0.0
        %3630 = vmatpush2.msra.mxu0 0.0
        %3631 = vmatprep.subr.mxu0 0.0
        %3632 = vmatpush2.msra.mxu0 0.0
        %3633 = vmatprep.subr.mxu0 0.0
        %3634 = vmatpush2.msra.mxu0 0.0
        %3635 = vmatprep.subr.mxu0 0.0
        %3636 = vmatpush2.msra.mxu0 0.0
        %3637 = vmatprep.subr.mxu0 0.0
        %3638 = vmatpush2.msra.mxu0 0.0
        %3639 = vmatprep.mubr.f32.mxu0 0.0
        %3640 = vmatmul.mubr.f32.gmra.mxu0 %v3571
        %v3641 = vpop.f32.mrf.mxu0
        %v3642 = vadd.f32 0.0, %v3641
        %v3643 = vpop.f32.mrf.mxu0
        %3644 = vdwg.mxu0
        %3645 = vrot.lane.b32.xlu0 %v3128, 64
        %v3646 = vpop.permute.xlu0 %3645
        %v3648 = vsel %vm3491, %v3487, 0
        %v3650 = vsel %vm3495, %v3646, 0
        %3652 = vmatprep.subr.mxu0 0.0
        %3653 = vmatpush1.msra.mxu0 0.0
        %3654 = vmatprep.subr.mxu0 0.0
        %3655 = vmatpush1.msra.mxu0 0.0
        %3656 = vmatprep.subr.mxu0 0.0
        %3657 = vmatpush1.msra.mxu0 0.0
        %3658 = vmatprep.subr.mxu0 0.0
        %3659 = vmatpush1.msra.mxu0 0.0
        %3660 = vmatprep.subr.mxu0 0.0
        %3661 = vmatpush1.msra.mxu0 0.0
        %3662 = vmatprep.subr.mxu0 0.0
        %3663 = vmatpush1.msra.mxu0 0.0
        %3664 = vmatprep.subr.mxu0 0.0
        %3665 = vmatpush1.msra.mxu0 0.0
        %3666 = vmatprep.subr.mxu0 0.0
        %3667 = vmatpush1.msra.mxu0 0.0
        %3668 = vmatprep.subr.mxu0 0.0
        %3669 = vmatpush1.msra.mxu0 0.0
        %3670 = vmatprep.subr.mxu0 0.0
        %3671 = vmatpush1.msra.mxu0 0.0
        %3672 = vmatprep.subr.mxu0 0.0
        %3673 = vmatpush1.msra.mxu0 0.0
        %3674 = vmatprep.subr.mxu0 0.0
        %3675 = vmatpush1.msra.mxu0 0.0
        %3676 = vmatprep.subr.mxu0 0.0
        %3677 = vmatpush1.msra.mxu0 0.0
        %3678 = vmatprep.subr.mxu0 0.0
        %3679 = vmatpush1.msra.mxu0 0.0
        %3680 = vmatprep.subr.mxu0 0.0
        %3681 = vmatpush1.msra.mxu0 0.0
        %3682 = vmatprep.subr.mxu0 0.0
        %3683 = vmatpush1.msra.mxu0 %v3650
        %3684 = vmatprep.subr.mxu0 0.0
        %3685 = vmatpush2.msra.mxu0 0.0
        %3686 = vmatprep.subr.mxu0 0.0
        %3687 = vmatpush2.msra.mxu0 0.0
        %3688 = vmatprep.subr.mxu0 0.0
        %3689 = vmatpush2.msra.mxu0 0.0
        %3690 = vmatprep.subr.mxu0 0.0
        %3691 = vmatpush2.msra.mxu0 0.0
        %3692 = vmatprep.subr.mxu0 0.0
        %3693 = vmatpush2.msra.mxu0 0.0
        %3694 = vmatprep.subr.mxu0 0.0
        %3695 = vmatpush2.msra.mxu0 0.0
        %3696 = vmatprep.subr.mxu0 0.0
        %3697 = vmatpush2.msra.mxu0 0.0
        %3698 = vmatprep.subr.mxu0 0.0
        %3699 = vmatpush2.msra.mxu0 0.0
        %3700 = vmatprep.subr.mxu0 0.0
        %3701 = vmatpush2.msra.mxu0 0.0
        %3702 = vmatprep.subr.mxu0 0.0
        %3703 = vmatpush2.msra.mxu0 0.0
        %3704 = vmatprep.subr.mxu0 0.0
        %3705 = vmatpush2.msra.mxu0 0.0
        %3706 = vmatprep.subr.mxu0 0.0
        %3707 = vmatpush2.msra.mxu0 0.0
        %3708 = vmatprep.subr.mxu0 0.0
        %3709 = vmatpush2.msra.mxu0 0.0
        %3710 = vmatprep.subr.mxu0 0.0
        %3711 = vmatpush2.msra.mxu0 0.0
        %3712 = vmatprep.subr.mxu0 0.0
        %3713 = vmatpush2.msra.mxu0 0.0
        %3714 = vmatprep.subr.mxu0 0.0
        %3715 = vmatpush2.msra.mxu0 0.0
        %3716 = vmatprep.mubr.f32.mxu0 0.0
        %3717 = vmatmul.mubr.f32.gmra.mxu0 %v3648
        %v3718 = vpop.f32.mrf.mxu0
        %v3719 = vadd.f32 0.0, %v3718
        %v3720 = vpop.f32.mrf.mxu0
        %3721 = vdwg.mxu0
        %3722 = vrot.lane.b32.xlu0 %v3130, 64
        %v3723 = vpop.permute.xlu0 %3722
        %v3725 = vsel %vm3491, %v3488, 0
        %v3727 = vsel %vm3495, %v3723, 0
        %3729 = vmatprep.subr.mxu0 0.0
        %3730 = vmatpush1.msra.mxu0 0.0
        %3731 = vmatprep.subr.mxu0 0.0
        %3732 = vmatpush1.msra.mxu0 0.0
        %3733 = vmatprep.subr.mxu0 0.0
        %3734 = vmatpush1.msra.mxu0 0.0
        %3735 = vmatprep.subr.mxu0 0.0
        %3736 = vmatpush1.msra.mxu0 0.0
        %3737 = vmatprep.subr.mxu0 0.0
        %3738 = vmatpush1.msra.mxu0 0.0
        %3739 = vmatprep.subr.mxu0 0.0
        %3740 = vmatpush1.msra.mxu0 0.0
        %3741 = vmatprep.subr.mxu0 0.0
        %3742 = vmatpush1.msra.mxu0 0.0
        %3743 = vmatprep.subr.mxu0 0.0
        %3744 = vmatpush1.msra.mxu0 0.0
        %3745 = vmatprep.subr.mxu0 0.0
        %3746 = vmatpush1.msra.mxu0 0.0
        %3747 = vmatprep.subr.mxu0 0.0
        %3748 = vmatpush1.msra.mxu0 0.0
        %3749 = vmatprep.subr.mxu0 0.0
        %3750 = vmatpush1.msra.mxu0 0.0
        %3751 = vmatprep.subr.mxu0 0.0
        %3752 = vmatpush1.msra.mxu0 0.0
        %3753 = vmatprep.subr.mxu0 0.0
        %3754 = vmatpush1.msra.mxu0 0.0
        %3755 = vmatprep.subr.mxu0 0.0
        %3756 = vmatpush1.msra.mxu0 0.0
        %3757 = vmatprep.subr.mxu0 0.0
        %3758 = vmatpush1.msra.mxu0 0.0
        %3759 = vmatprep.subr.mxu0 0.0
        %3760 = vmatpush1.msra.mxu0 %v3727
        %3761 = vmatprep.subr.mxu0 0.0
        %3762 = vmatpush2.msra.mxu0 0.0
        %3763 = vmatprep.subr.mxu0 0.0
        %3764 = vmatpush2.msra.mxu0 0.0
        %3765 = vmatprep.subr.mxu0 0.0
        %3766 = vmatpush2.msra.mxu0 0.0
        %3767 = vmatprep.subr.mxu0 0.0
        %3768 = vmatpush2.msra.mxu0 0.0
        %3769 = vmatprep.subr.mxu0 0.0
        %3770 = vmatpush2.msra.mxu0 0.0
        %3771 = vmatprep.subr.mxu0 0.0
        %3772 = vmatpush2.msra.mxu0 0.0
        %3773 = vmatprep.subr.mxu0 0.0
        %3774 = vmatpush2.msra.mxu0 0.0
        %3775 = vmatprep.subr.mxu0 0.0
        %3776 = vmatpush2.msra.mxu0 0.0
        %3777 = vmatprep.subr.mxu0 0.0
        %3778 = vmatpush2.msra.mxu0 0.0
        %3779 = vmatprep.subr.mxu0 0.0
        %3780 = vmatpush2.msra.mxu0 0.0
        %3781 = vmatprep.subr.mxu0 0.0
        %3782 = vmatpush2.msra.mxu0 0.0
        %3783 = vmatprep.subr.mxu0 0.0
        %3784 = vmatpush2.msra.mxu0 0.0
        %3785 = vmatprep.subr.mxu0 0.0
        %3786 = vmatpush2.msra.mxu0 0.0
        %3787 = vmatprep.subr.mxu0 0.0
        %3788 = vmatpush2.msra.mxu0 0.0
        %3789 = vmatprep.subr.mxu0 0.0
        %3790 = vmatpush2.msra.mxu0 0.0
        %3791 = vmatprep.subr.mxu0 0.0
        %3792 = vmatpush2.msra.mxu0 0.0
        %3793 = vmatprep.mubr.f32.mxu0 0.0
        %3794 = vmatmul.mubr.f32.gmra.mxu0 %v3725
        %v3795 = vpop.f32.mrf.mxu0
        %v3796 = vadd.f32 0.0, %v3795
        %v3797 = vpop.f32.mrf.mxu0
        %3798 = vdwg.mxu0
        %3800 = vrot.lane.b32.xlu0 %v3642, 8
        %v3801 = vpop.permute.xlu0 %3800
        %3804 = vrot.lane.b32.xlu0 %v3719, 16
        %v3805 = vpop.permute.xlu0 %3804
        %3808 = vrot.lane.b32.xlu0 %v3796, 24
        %v3809 = vpop.permute.xlu0 %3808
        %v3811 = vsel %vm3133, %v3565, %v3801
        %vm3812 = vcmask 130048
        %v3813 = vsel %vm3812, %v3811, %v3805
        %vm3814 = vcmask 195584
        %v3815 = vsel %vm3814, %v3813, %v3809
        %v3817 = vlaneseq
        %v3818 = vshrl.u32 %v3817, 7
        %v3819 = vsub.s32 0, %v3818
        %v3820 = vrot.slane %v3043, %v3819
        %v3823 = vsel %vm3050, %v3815, 0
        %3825 = vmatprep.subr.mxu0 0.0
        %3826 = vmatpush1.msra.mxu0 0.0
        %3827 = vmatprep.subr.mxu0 0.0
        %3828 = vmatpush1.msra.mxu0 0.0
        %3829 = vmatprep.subr.mxu0 0.0
        %3830 = vmatpush1.msra.mxu0 0.0
        %3831 = vmatprep.subr.mxu0 0.0
        %3832 = vmatpush1.msra.mxu0 0.0
        %3833 = vmatprep.subr.mxu0 0.0
        %3834 = vmatpush1.msra.mxu0 0.0
        %3835 = vmatprep.subr.mxu0 0.0
        %3836 = vmatpush1.msra.mxu0 0.0
        %3837 = vmatprep.subr.mxu0 0.0
        %3838 = vmatpush1.msra.mxu0 0.0
        %3839 = vmatprep.subr.mxu0 0.0
        %3840 = vmatpush1.msra.mxu0 0.0
        %3841 = vmatprep.subr.mxu0 0.0
        %3842 = vmatpush1.msra.mxu0 0.0
        %3843 = vmatprep.subr.mxu0 0.0
        %3844 = vmatpush1.msra.mxu0 0.0
        %3845 = vmatprep.subr.mxu0 0.0
        %3846 = vmatpush1.msra.mxu0 0.0
        %3847 = vmatprep.subr.mxu0 0.0
        %3848 = vmatpush1.msra.mxu0 0.0
        %3849 = vmatprep.subr.mxu0 0.0
        %3850 = vmatpush1.msra.mxu0 %v3042
        %3851 = vmatprep.subr.mxu0 0.0
        %3852 = vmatpush1.msra.mxu0 %v3041
        %3853 = vmatprep.subr.mxu0 0.0
        %3854 = vmatpush1.msra.mxu0 %v3040
        %3855 = vmatprep.subr.mxu0 0.0
        %3856 = vmatpush1.msra.mxu0 %v3039
        %3857 = vmatprep.subr.mxu0 0.0
        %3858 = vmatpush2.msra.mxu0 0.0
        %3859 = vmatprep.subr.mxu0 0.0
        %3860 = vmatpush2.msra.mxu0 0.0
        %3861 = vmatprep.subr.mxu0 0.0
        %3862 = vmatpush2.msra.mxu0 0.0
        %3863 = vmatprep.subr.mxu0 0.0
        %3864 = vmatpush2.msra.mxu0 0.0
        %3865 = vmatprep.subr.mxu0 0.0
        %3866 = vmatpush2.msra.mxu0 0.0
        %3867 = vmatprep.subr.mxu0 0.0
        %3868 = vmatpush2.msra.mxu0 0.0
        %3869 = vmatprep.subr.mxu0 0.0
        %3870 = vmatpush2.msra.mxu0 0.0
        %3871 = vmatprep.subr.mxu0 0.0
        %3872 = vmatpush2.msra.mxu0 0.0
        %3873 = vmatprep.subr.mxu0 0.0
        %3874 = vmatpush2.msra.mxu0 0.0
        %3875 = vmatprep.subr.mxu0 0.0
        %3876 = vmatpush2.msra.mxu0 0.0
        %3877 = vmatprep.subr.mxu0 0.0
        %3878 = vmatpush2.msra.mxu0 0.0
        %3879 = vmatprep.subr.mxu0 0.0
        %3880 = vmatpush2.msra.mxu0 0.0
        %3881 = vmatprep.subr.mxu0 0.0
        %3882 = vmatpush2.msra.mxu0 0.0
        %3883 = vmatprep.subr.mxu0 0.0
        %3884 = vmatpush2.msra.mxu0 0.0
        %3885 = vmatprep.subr.mxu0 0.0
        %3886 = vmatpush2.msra.mxu0 0.0
        %3887 = vmatprep.subr.mxu0 0.0
        %3888 = vmatpush2.msra.mxu0 0.0
        %3889 = vmatprep.mubr.f32.mxu0 0.0
        %3890 = vmatmul.mubr.f32.gmra.mxu0 %v3823
        %v3891 = vpop.f32.mrf.mxu0
        %v3892 = vadd.f32 %v3820, %v3891
        %v3893 = vpop.f32.mrf.mxu0
        %3894 = vdwg.mxu0
        %v3896 = vlaneseq
        %v3897 = vshrl.u32 %v3896, 7
        %v3898 = vsub.s32 0, %v3897
        %v3899 = vrot.slane %v663, %v3898
        %v3902 = vsel %vm3050, %v3892, 0
        %3904 = vmatprep.subr.mxu0 0.0
        %3905 = vmatpush1.msra.mxu0 0.0
        %3906 = vmatprep.subr.mxu0 0.0
        %3907 = vmatpush1.msra.mxu0 0.0
        %3908 = vmatprep.subr.mxu0 0.0
        %3909 = vmatpush1.msra.mxu0 0.0
        %3910 = vmatprep.subr.mxu0 0.0
        %3911 = vmatpush1.msra.mxu0 0.0
        %3912 = vmatprep.subr.mxu0 0.0
        %3913 = vmatpush1.msra.mxu0 0.0
        %3914 = vmatprep.subr.mxu0 0.0
        %3915 = vmatpush1.msra.mxu0 0.0
        %3916 = vmatprep.subr.mxu0 0.0
        %3917 = vmatpush1.msra.mxu0 0.0
        %3918 = vmatprep.subr.mxu0 0.0
        %3919 = vmatpush1.msra.mxu0 0.0
        %3920 = vmatprep.subr.mxu0 0.0
        %3921 = vmatpush1.msra.mxu0 0.0
        %3922 = vmatprep.subr.mxu0 0.0
        %3923 = vmatpush1.msra.mxu0 0.0
        %3924 = vmatprep.subr.mxu0 0.0
        %3925 = vmatpush1.msra.mxu0 0.0
        %3926 = vmatprep.subr.mxu0 0.0
        %3927 = vmatpush1.msra.mxu0 0.0
        %3928 = vmatprep.subr.mxu0 0.0
        %3929 = vmatpush1.msra.mxu0 %v662
        %3930 = vmatprep.subr.mxu0 0.0
        %3931 = vmatpush1.msra.mxu0 %v661
        %3932 = vmatprep.subr.mxu0 0.0
        %3933 = vmatpush1.msra.mxu0 %v660
        %3934 = vmatprep.subr.mxu0 0.0
        %3935 = vmatpush1.msra.mxu0 %v659
        %3936 = vmatprep.subr.mxu0 0.0
        %3937 = vmatpush2.msra.mxu0 0.0
        %3938 = vmatprep.subr.mxu0 0.0
        %3939 = vmatpush2.msra.mxu0 0.0
        %3940 = vmatprep.subr.mxu0 0.0
        %3941 = vmatpush2.msra.mxu0 0.0
        %3942 = vmatprep.subr.mxu0 0.0
        %3943 = vmatpush2.msra.mxu0 0.0
        %3944 = vmatprep.subr.mxu0 0.0
        %3945 = vmatpush2.msra.mxu0 0.0
        %3946 = vmatprep.subr.mxu0 0.0
        %3947 = vmatpush2.msra.mxu0 0.0
        %3948 = vmatprep.subr.mxu0 0.0
        %3949 = vmatpush2.msra.mxu0 0.0
        %3950 = vmatprep.subr.mxu0 0.0
        %3951 = vmatpush2.msra.mxu0 0.0
        %3952 = vmatprep.subr.mxu0 0.0
        %3953 = vmatpush2.msra.mxu0 0.0
        %3954 = vmatprep.subr.mxu0 0.0
        %3955 = vmatpush2.msra.mxu0 0.0
        %3956 = vmatprep.subr.mxu0 0.0
        %3957 = vmatpush2.msra.mxu0 0.0
        %3958 = vmatprep.subr.mxu0 0.0
        %3959 = vmatpush2.msra.mxu0 0.0
        %3960 = vmatprep.subr.mxu0 0.0
        %3961 = vmatpush2.msra.mxu0 0.0
        %3962 = vmatprep.subr.mxu0 0.0
        %3963 = vmatpush2.msra.mxu0 0.0
        %3964 = vmatprep.subr.mxu0 0.0
        %3965 = vmatpush2.msra.mxu0 0.0
        %3966 = vmatprep.subr.mxu0 0.0
        %3967 = vmatpush2.msra.mxu0 0.0
        %3968 = vmatprep.mubr.f32.mxu0 0.0
        %3969 = vmatmul.mubr.f32.gmra.mxu0 %v3902
        %v3970 = vpop.f32.mrf.mxu0
        %v3971 = vadd.f32 %v3899, %v3970
        %v3972 = vpop.f32.mrf.mxu0
        %3973 = vdwg.mxu0
        %v3974 = vmax.f32 %v3971, 0.0
        %s3975 = scalar_lea.vmem [#allocation2], %s3025
        %v3976 = vld [vmem:[%s3975] sm:$0xf]
        %v3977 = vmul.f32 %v3976, %v3976
        %vm3978 = vcmask 257024
        %v3979 = vsel %vm3978, %v3977, 0.0
        %3980 = vadd.xlane.f32.xlu0 %v3979
        %v3981 = vpop.xlane.xlu0 %3980
        %v3982 = vmax.f32 %v3981, 1e-24
        %v3983 = vrsqrt.pop %v3982
        %v3984 = vmul.f32 %v3976, %v3983
        %v3985 = vmul.f32 %v3974, %v3974
        %v3986 = vsel %vm3978, %v3985, 0.0
        %3987 = vadd.xlane.f32.xlu0 %v3986
        %v3988 = vpop.xlane.xlu0 %3987
        %v3989 = vmax.f32 %v3988, 1e-24
        %v3990 = vrsqrt.pop %v3989
        %v3991 = vmul.f32 %v3974, %v3990
        %v3992 = vadd.f32 %v3984, %v3991
        %s3993 = scalar_lea.vmem [#allocation3], %s3025
        %3994 = vst.msk [vmem:[%s3993] sm:$0xf] %vm3978, %v3992
        %p3995 = scmp.eq.s32.totalorder %s38, 4
        // Predicated region
        $region105: #{tpu_custom_call.1} parent=79 // pred_check
          %p3996 = pneg %p3995
        $region106: #{tpu_custom_call.1} parent=79 // pred_check_branch
          %3998 = sbr.rel (%p3996) target = $region108
        $region107: #{tpu_custom_call.1} parent=79 // pred_region
          %v3999 = vld [vmem:[#allocation3] sm:$0xff]
          %v4000 = vld [vmem:[#allocation3 + $0x8] sm:$0xff]
          %v4001 = vld [vmem:[#allocation3 + $0x10] sm:$0x3]
          %v4002 = vsel %vm3050, %v3999, 0.0
          %4003 = vadd.xlane.f32.xlu0 %v4002
          %v4004 = vpop.xlane.xlu0 %4003
          %v4005 = vsel %vm3050, %v4000, 0.0
          %4006 = vadd.xlane.f32.xlu0 %v4005
          %v4007 = vpop.xlane.xlu0 %4006
          %vm4008 = vcmask 254976
          %v4009 = vsel %vm4008, %v4001, 0.0
          %4010 = vadd.xlane.f32.xlu0 %v4009
          %v4011 = vpop.xlane.xlu0 %4010
          %v4012 = vrcp.pop 32.0
          %v4013 = vmul.f32 %v4004, %v4012
          %v4014 = vmul.f32 %v4007, %v4012
          %v4015 = vmul.f32 %v4011, %v4012
          %v4016 = vsub.f32 %v3999, %v4013
          %v4017 = vsub.f32 %v4000, %v4014
          %v4018 = vsub.f32 %v4001, %v4015
          %v4019 = vmul.f32 %v4016, %v4016
          %v4020 = vmul.f32 %v4017, %v4017
          %v4021 = vmul.f32 %v4018, %v4018
          %v4022 = vsel %vm3050, %v4019, 0.0
          %4023 = vadd.xlane.f32.xlu0 %v4022
          %v4024 = vpop.xlane.xlu0 %4023
          %v4025 = vsel %vm3050, %v4020, 0.0
          %4026 = vadd.xlane.f32.xlu0 %v4025
          %v4027 = vpop.xlane.xlu0 %4026
          %v4028 = vsel %vm4008, %v4021, 0.0
          %4029 = vadd.xlane.f32.xlu0 %v4028
          %v4030 = vpop.xlane.xlu0 %4029
          %v4031 = vmul.f32 %v4024, %v4012
          %v4032 = vmul.f32 %v4027, %v4012
          %v4033 = vmul.f32 %v4030, %v4012
          %v4034 = vadd.f32 %v4031, 1e-05
          %v4035 = vadd.f32 %v4032, 1e-05
          %v4036 = vadd.f32 %v4033, 1e-05
          %v4037 = vrsqrt.pop %v4034
          %v4038 = vrsqrt.pop %v4035
          %v4039 = vrsqrt.pop %v4036
          %v4040 = vmul.f32 %v4016, %v4037
          %v4041 = vmul.f32 %v4017, %v4038
          %v4042 = vmul.f32 %v4018, %v4039
          %v4043 = vld [vmem:[%s11] sm:$0x1]
          %v4045 = vlaneseq
          %v4046 = vshrl.u32 %v4045, 7
          %v4047 = vsub.s32 0, %v4046
          %v4048 = vrot.slane %v4043, %v4047
          %v4050 = vmul.f32 %v4040, %v4048
          %v4051 = vmul.f32 %v4041, %v4048
          %v4052 = vmul.f32 %v4042, %v4048
          %v4053 = vld [vmem:[%s12] sm:$0x1]
          %v4055 = vlaneseq
          %v4056 = vshrl.u32 %v4055, 7
          %v4057 = vsub.s32 0, %v4056
          %v4058 = vrot.slane %v4053, %v4057
          %v4060 = vadd.f32 %v4050, %v4058
          %v4061 = vadd.f32 %v4051, %v4058
          %v4062 = vadd.f32 %v4052, %v4058
          %v4063 = vld [vmem:[#allocation11] sm:$0xff]
          %v4064 = vld [vmem:[#allocation11 + $0x8] sm:$0xff]
          %v4065 = vld [vmem:[#allocation11 + $0x10] sm:$0xff]
          %v4066 = vld [vmem:[#allocation11 + $0x18] sm:$0xff]
          %v4067 = vld [vmem:[%s14] sm:$0x1]
          %v4069 = vlaneseq
          %v4070 = vshrl.u32 %v4069, 7
          %v4071 = vsub.s32 0, %v4070
          %v4072 = vrot.slane %v4067, %v4071
          %v4075 = vsel %vm3050, %v4060, 0
          %v4078 = vsel %vm3050, %v4061, 0
          %v4081 = vsel %vm3050, %v4062, 0
          %4083 = vmatprep.subr.mxu0 0.0
          %4084 = vmatpush1.msra.mxu0 0.0
          %4085 = vmatprep.subr.mxu0 0.0
          %4086 = vmatpush1.msra.mxu0 0.0
          %4087 = vmatprep.subr.mxu0 0.0
          %4088 = vmatpush1.msra.mxu0 0.0
          %4089 = vmatprep.subr.mxu0 0.0
          %4090 = vmatpush1.msra.mxu0 0.0
          %4091 = vmatprep.subr.mxu0 0.0
          %4092 = vmatpush1.msra.mxu0 0.0
          %4093 = vmatprep.subr.mxu0 0.0
          %4094 = vmatpush1.msra.mxu0 0.0
          %4095 = vmatprep.subr.mxu0 0.0
          %4096 = vmatpush1.msra.mxu0 0.0
          %4097 = vmatprep.subr.mxu0 0.0
          %4098 = vmatpush1.msra.mxu0 0.0
          %4099 = vmatprep.subr.mxu0 0.0
          %4100 = vmatpush1.msra.mxu0 0.0
          %4101 = vmatprep.subr.mxu0 0.0
          %4102 = vmatpush1.msra.mxu0 0.0
          %4103 = vmatprep.subr.mxu0 0.0
          %4104 = vmatpush1.msra.mxu0 0.0
          %4105 = vmatprep.subr.mxu0 0.0
          %4106 = vmatpush1.msra.mxu0 0.0
          %4107 = vmatprep.subr.mxu0 0.0
          %4108 = vmatpush1.msra.mxu0 %v4066
          %4109 = vmatprep.subr.mxu0 0.0
          %4110 = vmatpush1.msra.mxu0 %v4065
          %4111 = vmatprep.subr.mxu0 0.0
          %4112 = vmatpush1.msra.mxu0 %v4064
          %4113 = vmatprep.subr.mxu0 0.0
          %4114 = vmatpush1.msra.mxu0 %v4063
          %4115 = vmatprep.subr.mxu0 0.0
          %4116 = vmatpush2.msra.mxu0 0.0
          %4117 = vmatprep.subr.mxu0 0.0
          %4118 = vmatpush2.msra.mxu0 0.0
          %4119 = vmatprep.subr.mxu0 0.0
          %4120 = vmatpush2.msra.mxu0 0.0
          %4121 = vmatprep.subr.mxu0 0.0
          %4122 = vmatpush2.msra.mxu0 0.0
          %4123 = vmatprep.subr.mxu0 0.0
          %4124 = vmatpush2.msra.mxu0 0.0
          %4125 = vmatprep.subr.mxu0 0.0
          %4126 = vmatpush2.msra.mxu0 0.0
          %4127 = vmatprep.subr.mxu0 0.0
          %4128 = vmatpush2.msra.mxu0 0.0
          %4129 = vmatprep.subr.mxu0 0.0
          %4130 = vmatpush2.msra.mxu0 0.0
          %4131 = vmatprep.subr.mxu0 0.0
          %4132 = vmatpush2.msra.mxu0 0.0
          %4133 = vmatprep.subr.mxu0 0.0
          %4134 = vmatpush2.msra.mxu0 0.0
          %4135 = vmatprep.subr.mxu0 0.0
          %4136 = vmatpush2.msra.mxu0 0.0
          %4137 = vmatprep.subr.mxu0 0.0
          %4138 = vmatpush2.msra.mxu0 0.0
          %4139 = vmatprep.subr.mxu0 0.0
          %4140 = vmatpush2.msra.mxu0 0.0
          %4141 = vmatprep.subr.mxu0 0.0
          %4142 = vmatpush2.msra.mxu0 0.0
          %4143 = vmatprep.subr.mxu0 0.0
          %4144 = vmatpush2.msra.mxu0 0.0
          %4145 = vmatprep.subr.mxu0 0.0
          %4146 = vmatpush2.msra.mxu0 0.0
          %4147 = vmatprep.mubr.f32.mxu0 0.0
          %4148 = vmatmul.mubr.f32.gmra.mxu0 %v4075
          %v4149 = vpop.f32.mrf.mxu0
          %v4150 = vadd.f32 %v4072, %v4149
          %v4151 = vpop.f32.mrf.mxu0
          %4152 = vmatprep.mubr.f32.mxu0 0.0
          %4153 = vmatmul.mubr.f32.gmra.mxu0 %v4078
          %v4154 = vpop.f32.mrf.mxu0
          %v4155 = vadd.f32 %v4072, %v4154
          %v4156 = vpop.f32.mrf.mxu0
          %4157 = vmatprep.mubr.f32.mxu0 0.0
          %4158 = vmatmul.mubr.f32.gmra.mxu0 %v4081
          %v4159 = vpop.f32.mrf.mxu0
          %v4160 = vadd.f32 %v4072, %v4159
          %v4161 = vpop.f32.mrf.mxu0
          %4162 = vdwg.mxu0
          %v4163 = vmax.f32 %v4150, 0.0
          %v4164 = vmax.f32 %v4155, 0.0
          %v4165 = vmax.f32 %v4160, 0.0
          %4166 = vst.msk [vmem:[%s658] sm:$0xff] %vm3050, %v4163
          %4167 = vst.msk [vmem:[%s658 + $0x8] sm:$0xff] %vm3050, %v4164
          %4168 = vst.msk [vmem:[%s658 + $0x10] sm:$0x3] %vm4008, %v4165
        $region108: #{tpu_custom_call.1} parent=79 // pred_fallthru
          _
        %p4169 = scmp.lt.s32.totalorder %s37, 1
        %s4170 = scalar_select %p4169, %s37, 1
        %s4171 = smul.addr %s4170, 3
        %s4172 = smul.addr %s4171, 8
        %s4173 = scalar_lea.vmem %s15, %s4172
        // Predicated region
        $region109: #{tpu_custom_call.1} parent=79 // pred_check
          %p4174 = pneg %p403
        $region110: #{tpu_custom_call.1} parent=79 // pred_check_branch
          %4176 = sbr.rel (%p4174) target = $region112
        $region111: #{tpu_custom_call.1} parent=79 // pred_region
          _
        $region112: #{tpu_custom_call.1} parent=79 // pred_fallthru
          _
      $region80: #{tpu_custom_call.1} parent=5 // pred_fallthru
        _
      %p4177 = scmp.le.s32.totalorder 2, %s28
      // Predicated region
      $region113: #{tpu_custom_call.1} parent=5 // pred_check
        %p4178 = pneg %p4177
      $region114: #{tpu_custom_call.1} parent=5 // pred_check_branch
        %4180 = sbr.rel (%p4178) target = $region116
      $region115: #{tpu_custom_call.1} parent=5 // pred_region
        %s4181 = ssub.s32 %s28, 2
        // Predicated region
        $region117: #{tpu_custom_call.1} parent=115 // pred_check
          %p4182 = pneg %p409
        $region118: #{tpu_custom_call.1} parent=115 // pred_check_branch
          %4184 = sbr.rel (%p4182) target = $region120
        $region119: #{tpu_custom_call.1} parent=115 // pred_region
          %p4185 = scmp.lt.s32.totalorder %s39, 1
          %s4186 = scalar_select %p4185, %s39, 1
          %s4187 = smul.addr %s4186, 3
          %s4188 = smul.addr %s4187, 8
          %s4189 = scalar_lea.vmem %s15, %s4188
        $region120: #{tpu_custom_call.1} parent=115 // pred_fallthru
          _
      $region116: #{tpu_custom_call.1} parent=5 // pred_fallthru
        _
    $region6: #{tpu_custom_call.1} parent=1 // loop_footer
      %s32 = sadd.s32 1, %s28
    $region7: #{tpu_custom_call.1} parent=1 // loop_footer_branch
      %27 = sbr.rel target = $region3
    $region8: #{tpu_custom_call.1} parent=1 // loop_exit
      _
    %4190 = vsyncpa [#allocation5], 1
    %s4191 = scalar_lea.sflag [#allocation5], 1
    %4192 = vsyncpa %s4191, 1
    %4193 = vsyncpa [#allocation7], 1
    %s4194 = scalar_lea.sflag [#allocation7], 1
    %4195 = vsyncpa %s4194, 1
    %4196 = vsyncpa [#allocation10], 1
    %s4197 = scalar_lea.sflag [#allocation10], 1
    %4198 = vsyncpa %s4197, 1

// kernel: tpu_custom_call.1
$region0: #{tpu_custom_call.1}
  #allocation0 [shape = 'u32[]', space=smem, size = 0x4, offset = 0x4, fixed_abs, tag = 'smem constant byte address 0x4 - core index']
  #allocation1 [shape = 'u32[144,128]{1,0:T(1,128)}', space=vmem, size = 0x12000, scoped, tag = 'internal scratch']
  #allocation2 [shape = 'f32[20,32]{1,0:T(8,128)}', space=vmem, size = 0x3000, scoped, tag = 'scratch operand']
  #allocation3 [shape = 'f32[20,32]{1,0:T(8,128)}', space=vmem, size = 0x3000, scoped, tag = 'scratch operand']
  %s0 = inlined_call_operand.vmem [shape: f32[2,20,32], index: 0, kind: input, shape index: {}]
  %s1 = inlined_call_operand.vmem [shape: f32[32,96], index: 1, kind: input, shape index: {}]
  %s2 = inlined_call_operand.vmem [shape: f32[1,96], index: 2, kind: input, shape index: {}]
  %s3 = inlined_call_operand.vmem [shape: f32[32,32], index: 3, kind: input, shape index: {}]
  %s4 = inlined_call_operand.hbm [shape: f32[1,32], index: 4, kind: input, shape index: {}]
  %s5 = inlined_call_operand.hbm [shape: f32[5,32,96], index: 5, kind: input, shape index: {}]
  %s6 = inlined_call_operand.hbm [shape: f32[5,1,96], index: 6, kind: input, shape index: {}]
  %s7 = inlined_call_operand.hbm [shape: f32[5,32,32], index: 7, kind: input, shape index: {}]
  %s8 = inlined_call_operand.vmem [shape: f32[5,1,32], index: 8, kind: input, shape index: {}]
  %s9 = inlined_call_operand.vmem [shape: f32[32,32], index: 9, kind: input, shape index: {}]
  %s10 = inlined_call_operand.vmem [shape: f32[1,32], index: 10, kind: input, shape index: {}]
  %s11 = inlined_call_operand.vmem [shape: f32[1,32], index: 11, kind: input, shape index: {}]
  %s12 = inlined_call_operand.vmem [shape: f32[1,32], index: 12, kind: input, shape index: {}]
  %s13 = inlined_call_operand.hbm [shape: f32[32,32], index: 13, kind: input, shape index: {}]
  %s14 = inlined_call_operand.vmem [shape: f32[1,32], index: 14, kind: input, shape index: {}]
  %s15 = inlined_call_operand.vmem [shape: f32[2,18,32], index: 15, kind: output, shape index: {}]
  %s16 = sld [smem:[#allocation0]]
  $region121: #{tpu_custom_call.1} parent=0
    _
  %s18 = ssub.s32 1, %s16
  %s19 = scalar_select 0, %s18, %s16
  $region1: #{tpu_custom_call.1} parent=0
    #allocation4 [shape = 'u8[512]{0}', space=vmem, size = 0x400, scoped, tag = 'input window, operand 4, single buffered']
    #allocation5 [shape = 's32[2]{0}', space=sflag, size = 0x8, scoped, tag = 'scoped memory for tpu_custom_call.1']
    #allocation6 [shape = 'u8[32768]{0}', space=vmem, size = 0x8000, scoped, tag = 'input window, operand 5']
    #allocation7 [shape = 's32[2]{0}', space=sflag, size = 0x8, scoped, tag = 'scoped memory for tpu_custom_call.1']
    #allocation8 [shape = 'u8[1024]{0}', space=vmem, size = 0x400, scoped, tag = 'input window, operand 6']
    #allocation9 [shape = 'u8[32768]{0}', space=vmem, size = 0x8000, scoped, tag = 'input window, operand 7']
    #allocation10 [shape = 's32[2]{0}', space=sflag, size = 0x8, scoped, tag = 'scoped memory for tpu_custom_call.1']
    #allocation11 [shape = 'u8[16384]{0}', space=vmem, size = 0x4000, scoped, tag = 'input window, operand 13, single buffered']
    %20 = vsyncpa [#allocation5], 0
    %21 = vsyncpa [#allocation7], 0
    %s22 = scalar_lea.sflag [#allocation7], 1
    %23 = vsyncpa %s22, 0
    %24 = vsyncpa [#allocation10], 0
    %s25 = scalar_lea.sflag [#allocation10], 1
    %26 = vsyncpa %s25, 0
    loop: start=0, step=1, limit=12
    $region2: #{tpu_custom_call.1} parent=1 // loop_pre_header
      _
    $region3: #{tpu_custom_call.1} parent=1 // loop_header
      %s28 = sphi 0, %s32
      %p29 = scmp.ge.s32.totalorder %s28, 12
      %s35 = sphi 0, %s47
      %s36 = sphi 0, %s43
      %s37 = sphi 0, %s35
      %s38 = sphi 0, %s36
      %s39 = sphi 0, %s37
      %s40 = sphi 0, %s38
      %s50 = sphi 0, %s52
      %s53 = sphi 0, %s50
      %s54 = sphi 0, %s53
      %s70 = sphi 0, %s54
      %s74 = sphi 0, %s74
      %s76 = sphi 0, %s74
      %s77 = sphi 0, %s76
      %s91 = sphi 0, %s77
      %s95 = sphi 0, %s95
      %s97 = sphi 0, %s95
      %s98 = sphi 0, %s97
      %s112 = sphi 0, %s98
      %s116 = sphi 0, %s116
      %s118 = sphi 0, %s116
      %s119 = sphi 0, %s118
      %s133 = sphi 0, %s119
      %s137 = sphi 0, %s137
      %s139 = sphi 0, %s137
      %s140 = sphi 0, %s139
      %s154 = sphi 0, %s140
      %s160 = sphi 0, %s162
      %s163 = sphi 0, %s160
      %s164 = sphi 0, %s163
      %s180 = sphi 0, %s164
      %s186 = sphi 0, %s188
      %s189 = sphi 0, %s186
      %s190 = sphi 0, %s189
      %s206 = sphi 0, %s190
      %s212 = sphi 0, %s214
      %s215 = sphi 0, %s212
      %s216 = sphi 0, %s215
      %s232 = sphi 0, %s216
      %s238 = sphi 0, %s240
      %s241 = sphi 0, %s238
      %s242 = sphi 0, %s241
      %s258 = sphi 0, %s242
      %s262 = sphi 0, %s262
      %s264 = sphi 0, %s262
      %s265 = sphi 0, %s264
      %s279 = sphi 0, %s265
      %s283 = sphi 0, %s283
      %s285 = sphi 0, %s283
      %s286 = sphi 0, %s285
      %s300 = sphi 0, %s286
      %s304 = sphi 0, %s304
      %s306 = sphi 0, %s304
      %s307 = sphi 0, %s306
      %s321 = sphi 0, %s307
      %s325 = sphi 0, %s325
      %s327 = sphi 0, %s325
      %s328 = sphi 0, %s327
      %s342 = sphi 0, %s328
      %s346 = sphi 0, %s346
      %s348 = sphi 0, %s346
      %s349 = sphi 0, %s348
      %s363 = sphi 0, %s349
      %s367 = sphi 0, %s367
      %s369 = sphi 0, %s367
      %s370 = sphi 0, %s369
      %s384 = sphi 0, %s370
      %s390 = sphi 0, %s392
      %s393 = sphi 0, %s390
      %s394 = sphi 0, %s393
      %s410 = sphi 0, %s394
    $region4: #{tpu_custom_call.1} parent=1 // loop_header_branch
      %31 = sbr.rel (%p29) target = $region8
    $region5: #{tpu_custom_call.1} parent=1 // loop_body
      %s33 = ssub.s32 %s28, 1
      %s34 = ssub.s32 %s28, 2
      %s41 = sadd.s32 1, %s36
      %p42 = scmp.ge.s32.totalorder %s41, 5
      %s43 = scalar_select %p42, 0, %s41
      %s44 = sadd.s32 1, %s35
      %s45 = scalar_select %p42, %s44, %s35
      %p46 = scmp.ge.s32.totalorder %s45, 2
      %s47 = scalar_select %p46, 0, %s45
      %s48 = ssub.s32 %s35, %s47
      %p49 = scmp.eq.s32.totalorder %s48, 0
      %s51 = sadd.s32 %s50, 1
      %s52 = scalar_select %p49, %s50, %s51
      %p55 = pneg %p49
      %p56 = scmp.eq.s32.totalorder %s28, 9
      %p57 = por %p55, %p56
      %p58 = scmp.ne.s32.totalorder %s50, %s53
      %p59 = scmp.eq.s32.totalorder %s28, 0
      %p60 = por %p58, %p59
      %p61 = scmp.ne.s32.totalorder %s50, %s53
      %p62 = scmp.eq.s32.totalorder %s33, 9
      %p63 = por %p61, %p62
      %p64 = scmp.ne.s32.totalorder %s53, %s54
      %p65 = scmp.eq.s32.totalorder %s33, 0
      %p66 = por %p64, %p65
      %p67 = scmp.ne.s32.totalorder %s53, %s54
      %p68 = scmp.eq.s32.totalorder %s34, 9
      %p69 = por %p67, %p68
      %p71 = scmp.ne.s32.totalorder %s54, %s70
      %p72 = scmp.eq.s32.totalorder %s34, 0
      %p73 = por %p71, %p72
      %s75 = sadd.s32 %s74, 1
      %p78 = scmp.eq.s32.totalorder %s28, 9
      %p79 = scmp.ne.s32.totalorder %s74, %s76
      %p80 = scmp.eq.s32.totalorder %s28, 0
      %p81 = por %p79, %p80
      %p82 = scmp.ne.s32.totalorder %s74, %s76
      %p83 = scmp.eq.s32.totalorder %s33, 9
      %p84 = por %p82, %p83
      %p85 = scmp.ne.s32.totalorder %s76, %s77
      %p86 = scmp.eq.s32.totalorder %s33, 0
      %p87 = por %p85, %p86
      %p88 = scmp.ne.s32.totalorder %s76, %s77
      %p89 = scmp.eq.s32.totalorder %s34, 9
      %p90 = por %p88, %p89
      %p92 = scmp.ne.s32.totalorder %s77, %s91
      %p93 = scmp.eq.s32.totalorder %s34, 0
      %p94 = por %p92, %p93
      %s96 = sadd.s32 %s95, 1
      %p99 = scmp.eq.s32.totalorder %s28, 9
      %p100 = scmp.ne.s32.totalorder %s95, %s97
      %p101 = scmp.eq.s32.totalorder %s28, 0
      %p102 = por %p100, %p101
      %p103 = scmp.ne.s32.totalorder %s95, %s97
      %p104 = scmp.eq.s32.totalorder %s33, 9
      %p105 = por %p103, %p104
      %p106 = scmp.ne.s32.totalorder %s97, %s98
      %p107 = scmp.eq.s32.totalorder %s33, 0
      %p108 = por %p106, %p107
      %p109 = scmp.ne.s32.totalorder %s97, %s98
      %p110 = scmp.eq.s32.totalorder %s34, 9
      %p111 = por %p109, %p110
      %p113 = scmp.ne.s32.totalorder %s98, %s112
      %p114 = scmp.eq.s32.totalorder %s34, 0
      %p115 = por %p113, %p114
      %s117 = sadd.s32 %s116, 1
      %p120 = scmp.eq.s32.totalorder %s28, 9
      %p121 = scmp.ne.s32.totalorder %s116, %s118
      %p122 = scmp.eq.s32.totalorder %s28, 0
      %p123 = por %p121, %p122
      %p124 = scmp.ne.s32.totalorder %s116, %s118
      %p125 = scmp.eq.s32.totalorder %s33, 9
      %p126 = por %p124, %p125
      %p127 = scmp.ne.s32.totalorder %s118, %s119
      %p128 = scmp.eq.s32.totalorder %s33, 0
      %p129 = por %p127, %p128
      %p130 = scmp.ne.s32.totalorder %s118, %s119
      %p131 = scmp.eq.s32.totalorder %s34, 9
      %p132 = por %p130, %p131
      %p134 = scmp.ne.s32.totalorder %s119, %s133
      %p135 = scmp.eq.s32.totalorder %s34, 0
      %p136 = por %p134, %p135
      %s138 = sadd.s32 %s137, 1
      %p141 = scmp.eq.s32.totalorder %s28, 9
      %p142 = scmp.ne.s32.totalorder %s137, %s139
      %p143 = scmp.eq.s32.totalorder %s28, 0
      %p144 = por %p142, %p143
      %p145 = scmp.ne.s32.totalorder %s137, %s139
      %p146 = scmp.eq.s32.totalorder %s33, 9
      %p147 = por %p145, %p146
      %p148 = scmp.ne.s32.totalorder %s139, %s140
      %p149 = scmp.eq.s32.totalorder %s33, 0
      %p150 = por %p148, %p149
      %p151 = scmp.ne.s32.totalorder %s139, %s140
      %p152 = scmp.eq.s32.totalorder %s34, 9
      %p153 = por %p151, %p152
      %p155 = scmp.ne.s32.totalorder %s140, %s154
      %p156 = scmp.eq.s32.totalorder %s34, 0
      %p157 = por %p155, %p156
      %s158 = ssub.s32 %s36, %s43
      %p159 = scmp.eq.s32.totalorder %s158, 0
      %s161 = sadd.s32 %s160, 1
      %s162 = scalar_select %p159, %s160, %s161
      %p165 = pneg %p159
      %p166 = scmp.eq.s32.totalorder %s28, 9
      %p167 = por %p165, %p166
      %p168 = scmp.ne.s32.totalorder %s160, %s163
      %p169 = scmp.eq.s32.totalorder %s28, 0
      %p170 = por %p168, %p169
      %p171 = scmp.ne.s32.totalorder %s160, %s163
      %p172 = scmp.eq.s32.totalorder %s33, 9
      %p173 = por %p171, %p172
      %p174 = scmp.ne.s32.totalorder %s163, %s164
      %p175 = scmp.eq.s32.totalorder %s33, 0
      %p176 = por %p174, %p175
      %p177 = scmp.ne.s32.totalorder %s163, %s164
      %p178 = scmp.eq.s32.totalorder %s34, 9
      %p179 = por %p177, %p178
      %p181 = scmp.ne.s32.totalorder %s164, %s180
      %p182 = scmp.eq.s32.totalorder %s34, 0
      %p183 = por %p181, %p182
      %s184 = ssub.s32 %s36, %s43
      %p185 = scmp.eq.s32.totalorder %s184, 0
      %s187 = sadd.s32 %s186, 1
      %s188 = scalar_select %p185, %s186, %s187
      %p191 = pneg %p185
      %p192 = scmp.eq.s32.totalorder %s28, 9
      %p193 = por %p191, %p192
      %p194 = scmp.ne.s32.totalorder %s186, %s189
      %p195 = scmp.eq.s32.totalorder %s28, 0
      %p196 = por %p194, %p195
      %p197 = scmp.ne.s32.totalorder %s186, %s189
      %p198 = scmp.eq.s32.totalorder %s33, 9
      %p199 = por %p197, %p198
      %p200 = scmp.ne.s32.totalorder %s189, %s190
      %p201 = scmp.eq.s32.totalorder %s33, 0
      %p202 = por %p200, %p201
      %p203 = scmp.ne.s32.totalorder %s189, %s190
      %p204 = scmp.eq.s32.totalorder %s34, 9
      %p205 = por %p203, %p204
      %p207 = scmp.ne.s32.totalorder %s190, %s206
      %p208 = scmp.eq.s32.totalorder %s34, 0
      %p209 = por %p207, %p208
      %s210 = ssub.s32 %s36, %s43
      %p211 = scmp.eq.s32.totalorder %s210, 0
      %s213 = sadd.s32 %s212, 1
      %s214 = scalar_select %p211, %s212, %s213
      %p217 = pneg %p211
      %p218 = scmp.eq.s32.totalorder %s28, 9
      %p219 = por %p217, %p218
      %p220 = scmp.ne.s32.totalorder %s212, %s215
      %p221 = scmp.eq.s32.totalorder %s28, 0
      %p222 = por %p220, %p221
      %p223 = scmp.ne.s32.totalorder %s212, %s215
      %p224 = scmp.eq.s32.totalorder %s33, 9
      %p225 = por %p223, %p224
      %p226 = scmp.ne.s32.totalorder %s215, %s216
      %p227 = scmp.eq.s32.totalorder %s33, 0
      %p228 = por %p226, %p227
      %p229 = scmp.ne.s32.totalorder %s215, %s216
      %p230 = scmp.eq.s32.totalorder %s34, 9
      %p231 = por %p229, %p230
      %p233 = scmp.ne.s32.totalorder %s216, %s232
      %p234 = scmp.eq.s32.totalorder %s34, 0
      %p235 = por %p233, %p234
      %s236 = ssub.s32 %s36, %s43
      %p237 = scmp.eq.s32.totalorder %s236, 0
      %s239 = sadd.s32 %s238, 1
      %s240 = scalar_select %p237, %s238, %s239
      %p243 = pneg %p237
      %p244 = scmp.eq.s32.totalorder %s28, 9
      %p245 = por %p243, %p244
      %p246 = scmp.ne.s32.totalorder %s238, %s241
      %p247 = scmp.eq.s32.totalorder %s28, 0
      %p248 = por %p246, %p247
      %p249 = scmp.ne.s32.totalorder %s238, %s241
      %p250 = scmp.eq.s32.totalorder %s33, 9
      %p251 = por %p249, %p250
      %p252 = scmp.ne.s32.totalorder %s241, %s242
      %p253 = scmp.eq.s32.totalorder %s33, 0
      %p254 = por %p252, %p253
      %p255 = scmp.ne.s32.totalorder %s241, %s242
      %p256 = scmp.eq.s32.totalorder %s34, 9
      %p257 = por %p255, %p256
      %p259 = scmp.ne.s32.totalorder %s242, %s258
      %p260 = scmp.eq.s32.totalorder %s34, 0
      %p261 = por %p259, %p260
      %s263 = sadd.s32 %s262, 1
      %p266 = scmp.eq.s32.totalorder %s28, 9
      %p267 = scmp.ne.s32.totalorder %s262, %s264
      %p268 = scmp.eq.s32.totalorder %s28, 0
      %p269 = por %p267, %p268
      %p270 = scmp.ne.s32.totalorder %s262, %s264
      %p271 = scmp.eq.s32.totalorder %s33, 9
      %p272 = por %p270, %p271
      %p273 = scmp.ne.s32.totalorder %s264, %s265
      %p274 = scmp.eq.s32.totalorder %s33, 0
      %p275 = por %p273, %p274
      %p276 = scmp.ne.s32.totalorder %s264, %s265
      %p277 = scmp.eq.s32.totalorder %s34, 9
      %p278 = por %p276, %p277
      %p280 = scmp.ne.s32.totalorder %s265, %s279
      %p281 = scmp.eq.s32.totalorder %s34, 0
      %p282 = por %p280, %p281
      %s284 = sadd.s32 %s283, 1
      %p287 = scmp.eq.s32.totalorder %s28, 9
      %p288 = scmp.ne.s32.totalorder %s283, %s285
      %p289 = scmp.eq.s32.totalorder %s28, 0
      %p290 = por %p288, %p289
      %p291 = scmp.ne.s32.totalorder %s283, %s285
      %p292 = scmp.eq.s32.totalorder %s33, 9
      %p293 = por %p291, %p292
      %p294 = scmp.ne.s32.totalorder %s285, %s286
      %p295 = scmp.eq.s32.totalorder %s33, 0
      %p296 = por %p294, %p295
      %p297 = scmp.ne.s32.totalorder %s285, %s286
      %p298 = scmp.eq.s32.totalorder %s34, 9
      %p299 = por %p297, %p298
      %p301 = scmp.ne.s32.totalorder %s286, %s300
      %p302 = scmp.eq.s32.totalorder %s34, 0
      %p303 = por %p301, %p302
      %s305 = sadd.s32 %s304, 1
      %p308 = scmp.eq.s32.totalorder %s28, 9
      %p309 = scmp.ne.s32.totalorder %s304, %s306
      %p310 = scmp.eq.s32.totalorder %s28, 0
      %p311 = por %p309, %p310
      %p312 = scmp.ne.s32.totalorder %s304, %s306
      %p313 = scmp.eq.s32.totalorder %s33, 9
      %p314 = por %p312, %p313
      %p315 = scmp.ne.s32.totalorder %s306, %s307
      %p316 = scmp.eq.s32.totalorder %s33, 0
      %p317 = por %p315, %p316
      %p318 = scmp.ne.s32.totalorder %s306, %s307
      %p319 = scmp.eq.s32.totalorder %s34, 9
      %p320 = por %p318, %p319
      %p322 = scmp.ne.s32.totalorder %s307, %s321
      %p323 = scmp.eq.s32.totalorder %s34, 0
      %p324 = por %p322, %p323
      %s326 = sadd.s32 %s325, 1
      %p329 = scmp.eq.s32.totalorder %s28, 9
      %p330 = scmp.ne.s32.totalorder %s325, %s327
      %p331 = scmp.eq.s32.totalorder %s28, 0
      %p332 = por %p330, %p331
      %p333 = scmp.ne.s32.totalorder %s325, %s327
      %p334 = scmp.eq.s32.totalorder %s33, 9
      %p335 = por %p333, %p334
      %p336 = scmp.ne.s32.totalorder %s327, %s328
      %p337 = scmp.eq.s32.totalorder %s33, 0
      %p338 = por %p336, %p337
      %p339 = scmp.ne.s32.totalorder %s327, %s328
      %p340 = scmp.eq.s32.totalorder %s34, 9
      %p341 = por %p339, %p340
      %p343 = scmp.ne.s32.totalorder %s328, %s342
      %p344 = scmp.eq.s32.totalorder %s34, 0
      %p345 = por %p343, %p344
      %s347 = sadd.s32 %s346, 1
      %p350 = scmp.eq.s32.totalorder %s28, 9
      %p351 = scmp.ne.s32.totalorder %s346, %s348
      %p352 = scmp.eq.s32.totalorder %s28, 0
      %p353 = por %p351, %p352
      %p354 = scmp.ne.s32.totalorder %s346, %s348
      %p355 = scmp.eq.s32.totalorder %s33, 9
      %p356 = por %p354, %p355
      %p357 = scmp.ne.s32.totalorder %s348, %s349
      %p358 = scmp.eq.s32.totalorder %s33, 0
      %p359 = por %p357, %p358
      %p360 = scmp.ne.s32.totalorder %s348, %s349
      %p361 = scmp.eq.s32.totalorder %s34, 9
      %p362 = por %p360, %p361
      %p364 = scmp.ne.s32.totalorder %s349, %s363
      %p365 = scmp.eq.s32.totalorder %s34, 0
      %p366 = por %p364, %p365
      %s368 = sadd.s32 %s367, 1
      %p371 = scmp.eq.s32.totalorder %s28, 9
      %p372 = scmp.ne.s32.totalorder %s367, %s369
      %p373 = scmp.eq.s32.totalorder %s28, 0
      %p374 = por %p372, %p373
      %p375 = scmp.ne.s32.totalorder %s367, %s369
      %p376 = scmp.eq.s32.totalorder %s33, 9
      %p377 = por %p375, %p376
      %p378 = scmp.ne.s32.totalorder %s369, %s370
      %p379 = scmp.eq.s32.totalorder %s33, 0
      %p380 = por %p378, %p379
      %p381 = scmp.ne.s32.totalorder %s369, %s370
      %p382 = scmp.eq.s32.totalorder %s34, 9
      %p383 = por %p381, %p382
      %p385 = scmp.ne.s32.totalorder %s370, %s384
      %p386 = scmp.eq.s32.totalorder %s34, 0
      %p387 = por %p385, %p386
      %s388 = ssub.s32 %s35, %s47
      %p389 = scmp.eq.s32.totalorder %s388, 0
      %s391 = sadd.s32 %s390, 1
      %s392 = scalar_select %p389, %s390, %s391
      %p395 = pneg %p389
      %p396 = scmp.eq.s32.totalorder %s28, 9
      %p397 = por %p395, %p396
      %p398 = scmp.ne.s32.totalorder %s390, %s393
      %p399 = scmp.eq.s32.totalorder %s28, 0
      %p400 = por %p398, %p399
      %p401 = scmp.ne.s32.totalorder %s390, %s393
      %p402 = scmp.eq.s32.totalorder %s33, 9
      %p403 = por %p401, %p402
      %p404 = scmp.ne.s32.totalorder %s393, %s394
      %p405 = scmp.eq.s32.totalorder %s33, 0
      %p406 = por %p404, %p405
      %p407 = scmp.ne.s32.totalorder %s393, %s394
      %p408 = scmp.eq.s32.totalorder %s34, 9
      %p409 = por %p407, %p408
      %p411 = scmp.ne.s32.totalorder %s394, %s410
      %p412 = scmp.eq.s32.totalorder %s34, 0
      %p413 = por %p411, %p412
      %p414 = scmp.le.s32.totalorder 1, %s28
      %p415 = scmp.lt.s32.totalorder %s28, 11
      %p416 = pnand %p414, %p415
      %p417 = pneg %p416
      // Predicated region
      $region9: #{tpu_custom_call.1} parent=5 // pred_check
        _
      $region10: #{tpu_custom_call.1} parent=5 // pred_check_branch
        %419 = sbr.rel (%p416) target = $region12
      $region11: #{tpu_custom_call.1} parent=5 // pred_region
        %s420 = ssub.s32 %s28, 1
        // Predicated region
        $region13: #{tpu_custom_call.1} parent=11 // pred_check
          %p421 = pneg %p87
        $region14: #{tpu_custom_call.1} parent=11 // pred_check_branch
          %423 = sbr.rel (%p421) target = $region16
        $region15: #{tpu_custom_call.1} parent=11 // pred_region
          _
        $region16: #{tpu_custom_call.1} parent=11 // pred_fallthru
          _
        // Predicated region
        $region17: #{tpu_custom_call.1} parent=11 // pred_check
          %p424 = pneg %p108
        $region18: #{tpu_custom_call.1} parent=11 // pred_check_branch
          %426 = sbr.rel (%p424) target = $region20
        $region19: #{tpu_custom_call.1} parent=11 // pred_region
          _
        $region20: #{tpu_custom_call.1} parent=11 // pred_fallthru
          _
        // Predicated region
        $region21: #{tpu_custom_call.1} parent=11 // pred_check
          %p427 = pneg %p129
        $region22: #{tpu_custom_call.1} parent=11 // pred_check_branch
          %429 = sbr.rel (%p427) target = $region24
        $region23: #{tpu_custom_call.1} parent=11 // pred_region
          _
        $region24: #{tpu_custom_call.1} parent=11 // pred_fallthru
          _
        // Predicated region
        $region25: #{tpu_custom_call.1} parent=11 // pred_check
          %p430 = pneg %p150
        $region26: #{tpu_custom_call.1} parent=11 // pred_check_branch
          %432 = sbr.rel (%p430) target = $region28
        $region27: #{tpu_custom_call.1} parent=11 // pred_region
          %s434 = ssub.s32 16, 16
          %435 = vsyncadd [#allocation5], %s434
          %s437 = sshll.u32 [#allocation4], 4
          %s438 = int_to_ptr.vmem [resolvable:$true] %s437
          %440 = dma.hbm_to_vmem [thread:$0]  %s4, 16, %s438, [#allocation5]
        $region28: #{tpu_custom_call.1} parent=11 // pred_fallthru
          _
        // Predicated region
        $region29: #{tpu_custom_call.1} parent=11 // pred_check
          %p441 = pneg %p275
        $region30: #{tpu_custom_call.1} parent=11 // pred_check_branch
          %443 = sbr.rel (%p441) target = $region32
        $region31: #{tpu_custom_call.1} parent=11 // pred_region
          _
        $region32: #{tpu_custom_call.1} parent=11 // pred_fallthru
          _
        // Predicated region
        $region33: #{tpu_custom_call.1} parent=11 // pred_check
          %p444 = pneg %p296
        $region34: #{tpu_custom_call.1} parent=11 // pred_check_branch
          %446 = sbr.rel (%p444) target = $region36
        $region35: #{tpu_custom_call.1} parent=11 // pred_region
          _
        $region36: #{tpu_custom_call.1} parent=11 // pred_fallthru
          _
        // Predicated region
        $region37: #{tpu_custom_call.1} parent=11 // pred_check
          %p447 = pneg %p317
        $region38: #{tpu_custom_call.1} parent=11 // pred_check_branch
          %449 = sbr.rel (%p447) target = $region40
        $region39: #{tpu_custom_call.1} parent=11 // pred_region
          _
        $region40: #{tpu_custom_call.1} parent=11 // pred_fallthru
          _
        // Predicated region
        $region41: #{tpu_custom_call.1} parent=11 // pred_check
          %p450 = pneg %p338
        $region42: #{tpu_custom_call.1} parent=11 // pred_check_branch
          %452 = sbr.rel (%p450) target = $region44
        $region43: #{tpu_custom_call.1} parent=11 // pred_region
          _
        $region44: #{tpu_custom_call.1} parent=11 // pred_fallthru
          _
        // Predicated region
        $region45: #{tpu_custom_call.1} parent=11 // pred_check
          %p453 = pneg %p359
        $region46: #{tpu_custom_call.1} parent=11 // pred_check_branch
          %455 = sbr.rel (%p453) target = $region48
        $region47: #{tpu_custom_call.1} parent=11 // pred_region
          %s457 = ssub.s32 512, 512
          %458 = vsyncadd [#allocation10], %s457
          %s459 = sshll.u32 [#allocation11], 4
          %s460 = int_to_ptr.vmem [resolvable:$true] %s459
          %465 = dma.hbm_to_vmem [thread:$0]  %s13, 512, %s460, [#allocation10], 128, 128, 8
        $region48: #{tpu_custom_call.1} parent=11 // pred_fallthru
          _
        // Predicated region
        $region49: #{tpu_custom_call.1} parent=11 // pred_check
          %p466 = pneg %p380
        $region50: #{tpu_custom_call.1} parent=11 // pred_check_branch
          %468 = sbr.rel (%p466) target = $region52
        $region51: #{tpu_custom_call.1} parent=11 // pred_region
          _
        $region52: #{tpu_custom_call.1} parent=11 // pred_fallthru
          _
      $region12: #{tpu_custom_call.1} parent=5 // pred_fallthru
        _
      %p469 = scmp.lt.s32.totalorder %s28, 10
      // Predicated region
      $region53: #{tpu_custom_call.1} parent=5 // pred_check
        %p470 = pneg %p469
      $region54: #{tpu_custom_call.1} parent=5 // pred_check_branch
        %472 = sbr.rel (%p470) target = $region56
      $region55: #{tpu_custom_call.1} parent=5 // pred_region
        // Predicated region
        $region57: #{tpu_custom_call.1} parent=55 // pred_check
          %p473 = pneg %p60
        $region58: #{tpu_custom_call.1} parent=55 // pred_check_branch
          %475 = sbr.rel (%p473) target = $region60
        $region59: #{tpu_custom_call.1} parent=55 // pred_region
          %p476 = scmp.lt.s32.totalorder %s35, 1
          %s477 = scalar_select %p476, %s35, 1
          %s478 = smul.addr %s477, 3
          %s479 = smul.addr %s478, 8
          %s480 = scalar_lea.vmem %s0, %s479
        $region60: #{tpu_custom_call.1} parent=55 // pred_fallthru
          _
        // Predicated region
        $region61: #{tpu_custom_call.1} parent=55 // pred_check
          %p481 = pneg %p170
        $region62: #{tpu_custom_call.1} parent=55 // pred_check_branch
          %483 = sbr.rel (%p481) target = $region64
        $region63: #{tpu_custom_call.1} parent=55 // pred_region
          %s484 = sand.u32 %s28, 1
          %s485 = scalar_lea.sflag [#allocation7], %s484
          %s486 = sand.u32 %s160, 1
          %s487 = smul.addr %s486, 32
          %s488 = scalar_lea.vmem [#allocation6], %s487
          %s490 = ssub.s32 512, 512
          %491 = vsyncadd %s485, %s490
          %s492 = smul.addr %s36, 4
          %s493 = smul.addr %s492, 128
          %s494 = scalar_lea.hbm %s5, %s493
          %s495 = sshll.u32 %s488, 4
          %s496 = int_to_ptr.vmem [resolvable:$true] %s495
          %501 = dma.hbm_to_vmem [thread:$0]  %s494, 512, %s496, %s485, 128, 128, 8
        $region64: #{tpu_custom_call.1} parent=55 // pred_fallthru
          _
        // Predicated region
        $region65: #{tpu_custom_call.1} parent=55 // pred_check
          %p502 = pneg %p196
        $region66: #{tpu_custom_call.1} parent=55 // pred_check_branch
          %504 = sbr.rel (%p502) target = $region68
        $region67: #{tpu_custom_call.1} parent=55 // pred_region
          %s505 = sand.u32 %s28, 1
          %s506 = scalar_lea.sflag [#allocation7], %s505
          %s507 = sand.u32 %s186, 1
          %s508 = scalar_lea.vmem [#allocation8], %s507
          %s510 = ssub.s32 16, 16
          %511 = vsyncadd %s506, %s510
          %s512 = smul.addr %s36, 16
          %s513 = scalar_lea.hbm %s6, %s512
          %s515 = sshll.u32 %s508, 4
          %s516 = int_to_ptr.vmem [resolvable:$true] %s515
          %518 = dma.hbm_to_vmem [thread:$0]  %s513, 16, %s516, %s506
        $region68: #{tpu_custom_call.1} parent=55 // pred_fallthru
          _
        // Predicated region
        $region69: #{tpu_custom_call.1} parent=55 // pred_check
          %p519 = pneg %p222
        $region70: #{tpu_custom_call.1} parent=55 // pred_check_branch
          %521 = sbr.rel (%p519) target = $region72
        $region71: #{tpu_custom_call.1} parent=55 // pred_region
          %s522 = sand.u32 %s28, 1
          %s523 = scalar_lea.sflag [#allocation10], %s522
          %s524 = sand.u32 %s212, 1
          %s525 = smul.addr %s524, 32
          %s526 = scalar_lea.vmem [#allocation9], %s525
          %s528 = ssub.s32 512, 512
          %529 = vsyncadd %s523, %s528
          %s530 = smul.addr %s36, 4
          %s531 = smul.addr %s530, 128
          %s532 = scalar_lea.hbm %s7, %s531
          %s533 = sshll.u32 %s526, 4
          %s534 = int_to_ptr.vmem [resolvable:$true] %s533
          %539 = dma.hbm_to_vmem [thread:$0]  %s532, 512, %s534, %s523, 128, 128, 8
        $region72: #{tpu_custom_call.1} parent=55 // pred_fallthru
          _
        // Predicated region
        $region73: #{tpu_custom_call.1} parent=55 // pred_check
          %p540 = pneg %p248
        $region74: #{tpu_custom_call.1} parent=55 // pred_check_branch
          %542 = sbr.rel (%p540) target = $region76
        $region75: #{tpu_custom_call.1} parent=55 // pred_region
          %p543 = scmp.lt.s32.totalorder %s36, 4
          %s544 = scalar_select %p543, %s36, 4
          %s545 = scalar_lea.vmem %s8, %s544
        $region76: #{tpu_custom_call.1} parent=55 // pred_fallthru
          _
      $region56: #{tpu_custom_call.1} parent=5 // pred_fallthru
        _
      %p546 = scmp.le.s32.totalorder 1, %s28
      %p547 = scmp.lt.s32.totalorder %s28, 11
      %p548 = pnand %p546, %p547
      %p549 = pneg %p548
      // Predicated region
      $region77: #{tpu_custom_call.1} parent=5 // pred_check
        _
      $region78: #{tpu_custom_call.1} parent=5 // pred_check_branch
        %551 = sbr.rel (%p548) target = $region80
      $region79: #{tpu_custom_call.1} parent=5 // pred_region
        %s552 = ssub.s32 %s28, 1
        // Predicated region
        $region81: #{tpu_custom_call.1} parent=79 // pred_check
          %p553 = pneg %p150
        $region82: #{tpu_custom_call.1} parent=79 // pred_check_branch
          %555 = sbr.rel (%p553) target = $region84
        $region83: #{tpu_custom_call.1} parent=79 // pred_region
          %556 = dma.done [#allocation5], 16
        $region84: #{tpu_custom_call.1} parent=79 // pred_fallthru
          _
        %s557 = sand.u32 %s33, 1
        %s558 = scalar_lea.sflag [#allocation7], %s557
        %s559 = sand.u32 %s163, 1
        %s560 = smul.addr %s559, 32
        %s561 = scalar_lea.vmem [#allocation6], %s560
        // Predicated region
        $region85: #{tpu_custom_call.1} parent=79 // pred_check
          %p562 = pneg %p176
        $region86: #{tpu_custom_call.1} parent=79 // pred_check_branch
          %564 = sbr.rel (%p562) target = $region88
        $region87: #{tpu_custom_call.1} parent=79 // pred_region
          %565 = dma.done %s558, 512
        $region88: #{tpu_custom_call.1} parent=79 // pred_fallthru
          _
        %s566 = sand.u32 %s33, 1
        %s567 = scalar_lea.sflag [#allocation7], %s566
        %s568 = sand.u32 %s189, 1
        %s569 = scalar_lea.vmem [#allocation8], %s568
        // Predicated region
        $region89: #{tpu_custom_call.1} parent=79 // pred_check
          %p570 = pneg %p202
        $region90: #{tpu_custom_call.1} parent=79 // pred_check_branch
          %572 = sbr.rel (%p570) target = $region92
        $region91: #{tpu_custom_call.1} parent=79 // pred_region
          %573 = dma.done %s567, 16
        $region92: #{tpu_custom_call.1} parent=79 // pred_fallthru
          _
        %s574 = sand.u32 %s33, 1
        %s575 = scalar_lea.sflag [#allocation10], %s574
        %s576 = sand.u32 %s215, 1
        %s577 = smul.addr %s576, 32
        %s578 = scalar_lea.vmem [#allocation9], %s577
        // Predicated region
        $region93: #{tpu_custom_call.1} parent=79 // pred_check
          %p579 = pneg %p228
        $region94: #{tpu_custom_call.1} parent=79 // pred_check_branch
          %581 = sbr.rel (%p579) target = $region96
        $region95: #{tpu_custom_call.1} parent=79 // pred_region
          %582 = dma.done %s575, 512
        $region96: #{tpu_custom_call.1} parent=79 // pred_fallthru
          _
        // Predicated region
        $region97: #{tpu_custom_call.1} parent=79 // pred_check
          %p583 = pneg %p359
        $region98: #{tpu_custom_call.1} parent=79 // pred_check_branch
          %585 = sbr.rel (%p583) target = $region100
        $region99: #{tpu_custom_call.1} parent=79 // pred_region
          %586 = dma.done [#allocation10], 512
        $region100: #{tpu_custom_call.1} parent=79 // pred_fallthru
          _
        %p587 = scmp.lt.s32.totalorder %s37, 1
        %s588 = scalar_select %p587, %s37, 1
        %s589 = smul.addr %s588, 3
        %s590 = smul.addr %s589, 8
        %s591 = scalar_lea.vmem %s0, %s590
        %p592 = pneg %p66
        %p593 = pneg %p63
        %p594 = pneg %p87
        %p595 = pneg %p84
        %p596 = pneg %p108
        %p597 = pneg %p105
        %p598 = pneg %p129
        %p599 = pneg %p126
        %p600 = pneg %p150
        %p601 = pneg %p147
        %s602 = sand.u32 %s33, 1
        %s603 = scalar_lea.sflag [#allocation7], %s602
        %s604 = sand.u32 %s163, 1
        %s605 = smul.addr %s604, 32
        %s606 = scalar_lea.vmem [#allocation6], %s605
        %p607 = pneg %p176
        %p608 = pneg %p173
        %s609 = sand.u32 %s33, 1
        %s610 = scalar_lea.sflag [#allocation7], %s609
        %s611 = sand.u32 %s189, 1
        %s612 = scalar_lea.vmem [#allocation8], %s611
        %p613 = pneg %p202
        %p614 = pneg %p199
        %s615 = sand.u32 %s33, 1
        %s616 = scalar_lea.sflag [#allocation10], %s615
        %s617 = sand.u32 %s215, 1
        %s618 = smul.addr %s617, 32
        %s619 = scalar_lea.vmem [#allocation9], %s618
        %p620 = pneg %p228
        %p621 = pneg %p225
        %p622 = scmp.lt.s32.totalorder %s38, 4
        %s623 = scalar_select %p622, %s38, 4
        %s624 = scalar_lea.vmem %s8, %s623
        %p625 = pneg %p254
        %p626 = pneg %p251
        %p627 = pneg %p275
        %p628 = pneg %p272
        %p629 = pneg %p296
        %p630 = pneg %p293
        %p631 = pneg %p317
        %p632 = pneg %p314
        %p633 = pneg %p338
        %p634 = pneg %p335
        %p635 = pneg %p359
        %p636 = pneg %p356
        %p637 = pneg %p380
        %p638 = pneg %p377
        %p639 = pneg %p406
        %p640 = pneg %p403
        %p641 = scmp.lt.s32.totalorder %s37, 1
        %s642 = scalar_select %p641, %s37, 1
        %s643 = smul.addr %s642, 3
        %s644 = smul.addr %s643, 8
        %s645 = scalar_lea.vmem %s15, %s644
        %p646 = scmp.lt.s32.totalorder %s37, 1
        %s647 = scalar_select %p646, %s37, 1
        %s648 = smul.addr %s647, 3
        %s649 = smul.addr %s648, 8
        %s650 = scalar_lea.vmem %s0, %s649
        %p651 = scmp.lt.s32.totalorder %s38, 4
        %s652 = scalar_select %p651, %s38, 4
        %s653 = scalar_lea.vmem %s8, %s652
        %p654 = scmp.lt.s32.totalorder %s37, 1
        %s655 = scalar_select %p654, %s37, 1
        %s656 = smul.addr %s655, 3
        %s657 = smul.addr %s656, 8
        %s658 = scalar_lea.vmem %s15, %s657
        %v659 = vld [vmem:[%s9] sm:$0xff]
        %v660 = vld [vmem:[%s9 + $0x8] sm:$0xff]
        %v661 = vld [vmem:[%s9 + $0x10] sm:$0xff]
        %v662 = vld [vmem:[%s9 + $0x18] sm:$0xff]
        %v663 = vld [vmem:[%s10] sm:$0x1]
        %p664 = scmp.eq.s32.totalorder %s38, 0
        // Predicated region
        $region101: #{tpu_custom_call.1} parent=79 // pred_check
          %p665 = pneg %p664
        $region102: #{tpu_custom_call.1} parent=79 // pred_check_branch
          %667 = sbr.rel (%p665) target = $region104
        $region103: #{tpu_custom_call.1} parent=79 // pred_region
          %v668 = vld [vmem:[%s650] sm:$0xff]
          %v669 = vld [vmem:[%s650 + $0x8] sm:$0xff]
          %v670 = vld [vmem:[%s650 + $0x10] sm:$0xf]
          %v671 = vlaneseq
          %v672 = vand.u32 %v671, 127
          %vm673 = vcmp.lt.s32.totalorder %v672, 18
          %v674 = vsel %vm673, 0.0, -1e+30
          %v675 = vld [vmem:[%s1] sm:$0xff]
          %v676 = vld [vmem:[%s1 + $0x8] sm:$0xff]
          %v677 = vld [vmem:[%s1 + $0x10] sm:$0xff]
          %v678 = vld [vmem:[%s1 + $0x18] sm:$0xff]
          %v679 = vld [vmem:[%s2] sm:$0x1]
          %v680 = vld [vmem:[%s3] sm:$0xff]
          %v681 = vld [vmem:[%s3 + $0x8] sm:$0xff]
          %v682 = vld [vmem:[%s3 + $0x10] sm:$0xff]
          %v683 = vld [vmem:[%s3 + $0x18] sm:$0xff]
          %v684 = vld [vmem:[#allocation4] sm:$0x1]
          %v686 = vlaneseq
          %v687 = vshrl.u32 %v686, 7
          %v688 = vsub.s32 0, %v687
          %v689 = vrot.slane %v679, %v688
          %vm691 = vcmask 261120
          %v693 = vsel %vm691, %v668, 0
          %v696 = vsel %vm691, %v669, 0
          %v699 = vsel %vm691, %v670, 0
          %701 = vmatprep.subr.mxu0 0.0
          %702 = vmatpush1.msra.mxu0 0.0
          %703 = vmatprep.subr.mxu0 0.0
          %704 = vmatpush1.msra.mxu0 0.0
          %705 = vmatprep.subr.mxu0 0.0
          %706 = vmatpush1.msra.mxu0 0.0
          %707 = vmatprep.subr.mxu0 0.0
          %708 = vmatpush1.msra.mxu0 0.0
          %709 = vmatprep.subr.mxu0 0.0
          %710 = vmatpush1.msra.mxu0 0.0
          %711 = vmatprep.subr.mxu0 0.0
          %712 = vmatpush1.msra.mxu0 0.0
          %713 = vmatprep.subr.mxu0 0.0
          %714 = vmatpush1.msra.mxu0 0.0
          %715 = vmatprep.subr.mxu0 0.0
          %716 = vmatpush1.msra.mxu0 0.0
          %717 = vmatprep.subr.mxu0 0.0
          %718 = vmatpush1.msra.mxu0 0.0
          %719 = vmatprep.subr.mxu0 0.0
          %720 = vmatpush1.msra.mxu0 0.0
          %721 = vmatprep.subr.mxu0 0.0
          %722 = vmatpush1.msra.mxu0 0.0
          %723 = vmatprep.subr.mxu0 0.0
          %724 = vmatpush1.msra.mxu0 0.0
          %725 = vmatprep.subr.mxu0 0.0
          %726 = vmatpush1.msra.mxu0 %v678
          %727 = vmatprep.subr.mxu0 0.0
          %728 = vmatpush1.msra.mxu0 %v677
          %729 = vmatprep.subr.mxu0 0.0
          %730 = vmatpush1.msra.mxu0 %v676
          %731 = vmatprep.subr.mxu0 0.0
          %732 = vmatpush1.msra.mxu0 %v675
          %733 = vmatprep.subr.mxu0 0.0
          %734 = vmatpush2.msra.mxu0 0.0
          %735 = vmatprep.subr.mxu0 0.0
          %736 = vmatpush2.msra.mxu0 0.0
          %737 = vmatprep.subr.mxu0 0.0
          %738 = vmatpush2.msra.mxu0 0.0
          %739 = vmatprep.subr.mxu0 0.0
          %740 = vmatpush2.msra.mxu0 0.0
          %741 = vmatprep.subr.mxu0 0.0
          %742 = vmatpush2.msra.mxu0 0.0
          %743 = vmatprep.subr.mxu0 0.0
          %744 = vmatpush2.msra.mxu0 0.0
          %745 = vmatprep.subr.mxu0 0.0
          %746 = vmatpush2.msra.mxu0 0.0
          %747 = vmatprep.subr.mxu0 0.0
          %748 = vmatpush2.msra.mxu0 0.0
          %749 = vmatprep.subr.mxu0 0.0
          %750 = vmatpush2.msra.mxu0 0.0
          %751 = vmatprep.subr.mxu0 0.0
          %752 = vmatpush2.msra.mxu0 0.0
          %753 = vmatprep.subr.mxu0 0.0
          %754 = vmatpush2.msra.mxu0 0.0
          %755 = vmatprep.subr.mxu0 0.0
          %756 = vmatpush2.msra.mxu0 0.0
          %757 = vmatprep.subr.mxu0 0.0
          %758 = vmatpush2.msra.mxu0 0.0
          %759 = vmatprep.subr.mxu0 0.0
          %760 = vmatpush2.msra.mxu0 0.0
          %761 = vmatprep.subr.mxu0 0.0
          %762 = vmatpush2.msra.mxu0 0.0
          %763 = vmatprep.subr.mxu0 0.0
          %764 = vmatpush2.msra.mxu0 0.0
          %765 = vmatprep.mubr.f32.mxu0 0.0
          %766 = vmatmul.mubr.f32.gmra.mxu0 %v693
          %v767 = vpop.f32.mrf.mxu0
          %v768 = vadd.f32 %v689, %v767
          %v769 = vpop.f32.mrf.mxu0
          %770 = vmatprep.mubr.f32.mxu0 0.0
          %771 = vmatmul.mubr.f32.gmra.mxu0 %v696
          %v772 = vpop.f32.mrf.mxu0
          %v773 = vadd.f32 %v689, %v772
          %v774 = vpop.f32.mrf.mxu0
          %775 = vmatprep.mubr.f32.mxu0 0.0
          %776 = vmatmul.mubr.f32.gmra.mxu0 %v699
          %v777 = vpop.f32.mrf.mxu0
          %v778 = vadd.f32 %v689, %v777
          %v779 = vpop.f32.mrf.mxu0
          %780 = vdwg.mxu0
          %784 = vrot.lane.b32.xlu0 %v768, 124
          %v785 = vpop.permute.xlu0 %784
          %786 = vrot.lane.b32.xlu0 %v773, 124
          %v787 = vpop.permute.xlu0 %786
          %788 = vrot.lane.b32.xlu0 %v778, 124
          %v789 = vpop.permute.xlu0 %788
          %790 = vrot.lane.b32.xlu0 %v768, 120
          %v791 = vpop.permute.xlu0 %790
          %792 = vrot.lane.b32.xlu0 %v773, 120
          %v793 = vpop.permute.xlu0 %792
          %794 = vrot.lane.b32.xlu0 %v778, 120
          %v795 = vpop.permute.xlu0 %794
          %796 = vrot.lane.b32.xlu0 %v768, 116
          %v797 = vpop.permute.xlu0 %796
          %798 = vrot.lane.b32.xlu0 %v773, 116
          %v799 = vpop.permute.xlu0 %798
          %800 = vrot.lane.b32.xlu0 %v778, 116
          %v801 = vpop.permute.xlu0 %800
          %802 = vrot.lane.b32.xlu0 %v768, 112
          %v803 = vpop.permute.xlu0 %802
          %804 = vrot.lane.b32.xlu0 %v773, 112
          %v805 = vpop.permute.xlu0 %804
          %806 = vrot.lane.b32.xlu0 %v778, 112
          %v807 = vpop.permute.xlu0 %806
          %808 = vrot.lane.b32.xlu0 %v768, 108
          %v809 = vpop.permute.xlu0 %808
          %810 = vrot.lane.b32.xlu0 %v773, 108
          %v811 = vpop.permute.xlu0 %810
          %812 = vrot.lane.b32.xlu0 %v778, 108
          %v813 = vpop.permute.xlu0 %812
          %814 = vrot.lane.b32.xlu0 %v768, 104
          %v815 = vpop.permute.xlu0 %814
          %816 = vrot.lane.b32.xlu0 %v773, 104
          %v817 = vpop.permute.xlu0 %816
          %818 = vrot.lane.b32.xlu0 %v778, 104
          %v819 = vpop.permute.xlu0 %818
          %820 = vrot.lane.b32.xlu0 %v768, 100
          %v821 = vpop.permute.xlu0 %820
          %822 = vrot.lane.b32.xlu0 %v773, 100
          %v823 = vpop.permute.xlu0 %822
          %824 = vrot.lane.b32.xlu0 %v778, 100
          %v825 = vpop.permute.xlu0 %824
          %826 = vrot.lane.b32.xlu0 %v768, 96
          %v827 = vpop.permute.xlu0 %826
          %828 = vrot.lane.b32.xlu0 %v773, 96
          %v829 = vpop.permute.xlu0 %828
          %830 = vrot.lane.b32.xlu0 %v778, 96
          %v831 = vpop.permute.xlu0 %830
          %vm832 = vcmask 31744
          %v833 = vsel %vm832, %v768, 0
          %v835 = vsel %vm832, %v773, 0
          %v837 = vsel %vm832, %v778, 0
          %v839 = vsel %vm832, %v827, 0
          %v841 = vsel %vm832, %v829, 0
          %v843 = vsel %vm832, %v831, 0
          %845 = vmatprep.subr.mxu0 0.0
          %846 = vmatpush1.xpose.msra.mxu0 0.0
          %847 = vmatprep.subr.mxu0 0.0
          %848 = vmatpush1.xpose.msra.mxu0 0.0
          %849 = vmatprep.subr.mxu0 0.0
          %850 = vmatpush1.xpose.msra.mxu0 0.0
          %851 = vmatprep.subr.mxu0 0.0
          %852 = vmatpush1.xpose.msra.mxu0 0.0
          %853 = vmatprep.subr.mxu0 0.0
          %854 = vmatpush1.xpose.msra.mxu0 0.0
          %855 = vmatprep.subr.mxu0 0.0
          %856 = vmatpush1.xpose.msra.mxu0 0.0
          %857 = vmatprep.subr.mxu0 0.0
          %858 = vmatpush1.xpose.msra.mxu0 0.0
          %859 = vmatprep.subr.mxu0 0.0
          %860 = vmatpush1.xpose.msra.mxu0 0.0
          %861 = vmatprep.subr.mxu0 0.0
          %862 = vmatpush1.xpose.msra.mxu0 0.0
          %863 = vmatprep.subr.mxu0 0.0
          %864 = vmatpush1.xpose.msra.mxu0 0.0
          %865 = vmatprep.subr.mxu0 0.0
          %866 = vmatpush1.xpose.msra.mxu0 0.0
          %867 = vmatprep.subr.mxu0 0.0
          %868 = vmatpush1.xpose.msra.mxu0 0.0
          %869 = vmatprep.subr.mxu0 0.0
          %870 = vmatpush1.xpose.msra.mxu0 0.0
          %871 = vmatprep.subr.mxu0 0.0
          %872 = vmatpush1.xpose.msra.mxu0 %v843
          %873 = vmatprep.subr.mxu0 0.0
          %874 = vmatpush1.xpose.msra.mxu0 %v841
          %875 = vmatprep.subr.mxu0 0.0
          %876 = vmatpush1.xpose.msra.mxu0 %v839
          %877 = vmatprep.subr.mxu0 0.0
          %878 = vmatpush2.xpose.msra.mxu0 0.0
          %879 = vmatprep.subr.mxu0 0.0
          %880 = vmatpush2.xpose.msra.mxu0 0.0
          %881 = vmatprep.subr.mxu0 0.0
          %882 = vmatpush2.xpose.msra.mxu0 0.0
          %883 = vmatprep.subr.mxu0 0.0
          %884 = vmatpush2.xpose.msra.mxu0 0.0
          %885 = vmatprep.subr.mxu0 0.0
          %886 = vmatpush2.xpose.msra.mxu0 0.0
          %887 = vmatprep.subr.mxu0 0.0
          %888 = vmatpush2.xpose.msra.mxu0 0.0
          %889 = vmatprep.subr.mxu0 0.0
          %890 = vmatpush2.xpose.msra.mxu0 0.0
          %891 = vmatprep.subr.mxu0 0.0
          %892 = vmatpush2.xpose.msra.mxu0 0.0
          %893 = vmatprep.subr.mxu0 0.0
          %894 = vmatpush2.xpose.msra.mxu0 0.0
          %895 = vmatprep.subr.mxu0 0.0
          %896 = vmatpush2.xpose.msra.mxu0 0.0
          %897 = vmatprep.subr.mxu0 0.0
          %898 = vmatpush2.xpose.msra.mxu0 0.0
          %899 = vmatprep.subr.mxu0 0.0
          %900 = vmatpush2.xpose.msra.mxu0 0.0
          %901 = vmatprep.subr.mxu0 0.0
          %902 = vmatpush2.xpose.msra.mxu0 0.0
          %903 = vmatprep.subr.mxu0 0.0
          %904 = vmatpush2.xpose.msra.mxu0 0.0
          %905 = vmatprep.subr.mxu0 0.0
          %906 = vmatpush2.xpose.msra.mxu0 0.0
          %907 = vmatprep.subr.mxu0 0.0
          %908 = vmatpush2.xpose.msra.mxu0 0.0
          %909 = vmatprep.mubr.f32.mxu0 0.0
          %910 = vmatmul.mubr.f32.gmra.mxu0 %v833
          %v911 = vpop.f32.mrf.mxu0
          %v912 = vadd.f32 0.0, %v911
          %v913 = vpop.f32.mrf.mxu0
          %914 = vmatprep.mubr.f32.mxu0 0.0
          %915 = vmatmul.mubr.f32.gmra.mxu0 %v835
          %v916 = vpop.f32.mrf.mxu0
          %v917 = vadd.f32 0.0, %v916
          %v918 = vpop.f32.mrf.mxu0
          %919 = vmatprep.mubr.f32.mxu0 0.0
          %920 = vmatmul.mubr.f32.gmra.mxu0 %v837
          %v921 = vpop.f32.mrf.mxu0
          %v922 = vadd.f32 0.0, %v921
          %v923 = vpop.f32.mrf.mxu0
          %924 = vdwg.mxu0
          %925 = vrot.lane.b32.xlu0 %v785, 96
          %v926 = vpop.permute.xlu0 %925
          %927 = vrot.lane.b32.xlu0 %v787, 96
          %v928 = vpop.permute.xlu0 %927
          %929 = vrot.lane.b32.xlu0 %v789, 96
          %v930 = vpop.permute.xlu0 %929
          %v931 = vsel %vm832, %v785, 0
          %v933 = vsel %vm832, %v787, 0
          %v935 = vsel %vm832, %v789, 0
          %v937 = vsel %vm832, %v926, 0
          %v939 = vsel %vm832, %v928, 0
          %v941 = vsel %vm832, %v930, 0
          %943 = vmatprep.subr.mxu0 0.0
          %944 = vmatpush1.xpose.msra.mxu0 0.0
          %945 = vmatprep.subr.mxu0 0.0
          %946 = vmatpush1.xpose.msra.mxu0 0.0
          %947 = vmatprep.subr.mxu0 0.0
          %948 = vmatpush1.xpose.msra.mxu0 0.0
          %949 = vmatprep.subr.mxu0 0.0
          %950 = vmatpush1.xpose.msra.mxu0 0.0
          %951 = vmatprep.subr.mxu0 0.0
          %952 = vmatpush1.xpose.msra.mxu0 0.0
          %953 = vmatprep.subr.mxu0 0.0
          %954 = vmatpush1.xpose.msra.mxu0 0.0
          %955 = vmatprep.subr.mxu0 0.0
          %956 = vmatpush1.xpose.msra.mxu0 0.0
          %957 = vmatprep.subr.mxu0 0.0
          %958 = vmatpush1.xpose.msra.mxu0 0.0
          %959 = vmatprep.subr.mxu0 0.0
          %960 = vmatpush1.xpose.msra.mxu0 0.0
          %961 = vmatprep.subr.mxu0 0.0
          %962 = vmatpush1.xpose.msra.mxu0 0.0
          %963 = vmatprep.subr.mxu0 0.0
          %964 = vmatpush1.xpose.msra.mxu0 0.0
          %965 = vmatprep.subr.mxu0 0.0
          %966 = vmatpush1.xpose.msra.mxu0 0.0
          %967 = vmatprep.subr.mxu0 0.0
          %968 = vmatpush1.xpose.msra.mxu0 0.0
          %969 = vmatprep.subr.mxu0 0.0
          %970 = vmatpush1.xpose.msra.mxu0 %v941
          %971 = vmatprep.subr.mxu0 0.0
          %972 = vmatpush1.xpose.msra.mxu0 %v939
          %973 = vmatprep.subr.mxu0 0.0
          %974 = vmatpush1.xpose.msra.mxu0 %v937
          %975 = vmatprep.subr.mxu0 0.0
          %976 = vmatpush2.xpose.msra.mxu0 0.0
          %977 = vmatprep.subr.mxu0 0.0
          %978 = vmatpush2.xpose.msra.mxu0 0.0
          %979 = vmatprep.subr.mxu0 0.0
          %980 = vmatpush2.xpose.msra.mxu0 0.0
          %981 = vmatprep.subr.mxu0 0.0
          %982 = vmatpush2.xpose.msra.mxu0 0.0
          %983 = vmatprep.subr.mxu0 0.0
          %984 = vmatpush2.xpose.msra.mxu0 0.0
          %985 = vmatprep.subr.mxu0 0.0
          %986 = vmatpush2.xpose.msra.mxu0 0.0
          %987 = vmatprep.subr.mxu0 0.0
          %988 = vmatpush2.xpose.msra.mxu0 0.0
          %989 = vmatprep.subr.mxu0 0.0
          %990 = vmatpush2.xpose.msra.mxu0 0.0
          %991 = vmatprep.subr.mxu0 0.0
          %992 = vmatpush2.xpose.msra.mxu0 0.0
          %993 = vmatprep.subr.mxu0 0.0
          %994 = vmatpush2.xpose.msra.mxu0 0.0
          %995 = vmatprep.subr.mxu0 0.0
          %996 = vmatpush2.xpose.msra.mxu0 0.0
          %997 = vmatprep.subr.mxu0 0.0
          %998 = vmatpush2.xpose.msra.mxu0 0.0
          %999 = vmatprep.subr.mxu0 0.0
          %1000 = vmatpush2.xpose.msra.mxu0 0.0
          %1001 = vmatprep.subr.mxu0 0.0
          %1002 = vmatpush2.xpose.msra.mxu0 0.0
          %1003 = vmatprep.subr.mxu0 0.0
          %1004 = vmatpush2.xpose.msra.mxu0 0.0
          %1005 = vmatprep.subr.mxu0 0.0
          %1006 = vmatpush2.xpose.msra.mxu0 0.0
          %1007 = vmatprep.mubr.f32.mxu0 0.0
          %1008 = vmatmul.mubr.f32.gmra.mxu0 %v931
          %v1009 = vpop.f32.mrf.mxu0
          %v1010 = vadd.f32 0.0, %v1009
          %v1011 = vpop.f32.mrf.mxu0
          %1012 = vmatprep.mubr.f32.mxu0 0.0
          %1013 = vmatmul.mubr.f32.gmra.mxu0 %v933
          %v1014 = vpop.f32.mrf.mxu0
          %v1015 = vadd.f32 0.0, %v1014
          %v1016 = vpop.f32.mrf.mxu0
          %1017 = vmatprep.mubr.f32.mxu0 0.0
          %1018 = vmatmul.mubr.f32.gmra.mxu0 %v935
          %v1019 = vpop.f32.mrf.mxu0
          %v1020 = vadd.f32 0.0, %v1019
          %v1021 = vpop.f32.mrf.mxu0
          %1022 = vdwg.mxu0
          %1023 = vrot.lane.b32.xlu0 %v791, 96
          %v1024 = vpop.permute.xlu0 %1023
          %1025 = vrot.lane.b32.xlu0 %v793, 96
          %v1026 = vpop.permute.xlu0 %1025
          %1027 = vrot.lane.b32.xlu0 %v795, 96
          %v1028 = vpop.permute.xlu0 %1027
          %v1029 = vsel %vm832, %v791, 0
          %v1031 = vsel %vm832, %v793, 0
          %v1033 = vsel %vm832, %v795, 0
          %v1035 = vsel %vm832, %v1024, 0
          %v1037 = vsel %vm832, %v1026, 0
          %v1039 = vsel %vm832, %v1028, 0
          %1041 = vmatprep.subr.mxu0 0.0
          %1042 = vmatpush1.xpose.msra.mxu0 0.0
          %1043 = vmatprep.subr.mxu0 0.0
          %1044 = vmatpush1.xpose.msra.mxu0 0.0
          %1045 = vmatprep.subr.mxu0 0.0
          %1046 = vmatpush1.xpose.msra.mxu0 0.0
          %1047 = vmatprep.subr.mxu0 0.0
          %1048 = vmatpush1.xpose.msra.mxu0 0.0
          %1049 = vmatprep.subr.mxu0 0.0
          %1050 = vmatpush1.xpose.msra.mxu0 0.0
          %1051 = vmatprep.subr.mxu0 0.0
          %1052 = vmatpush1.xpose.msra.mxu0 0.0
          %1053 = vmatprep.subr.mxu0 0.0
          %1054 = vmatpush1.xpose.msra.mxu0 0.0
          %1055 = vmatprep.subr.mxu0 0.0
          %1056 = vmatpush1.xpose.msra.mxu0 0.0
          %1057 = vmatprep.subr.mxu0 0.0
          %1058 = vmatpush1.xpose.msra.mxu0 0.0
          %1059 = vmatprep.subr.mxu0 0.0
          %1060 = vmatpush1.xpose.msra.mxu0 0.0
          %1061 = vmatprep.subr.mxu0 0.0
          %1062 = vmatpush1.xpose.msra.mxu0 0.0
          %1063 = vmatprep.subr.mxu0 0.0
          %1064 = vmatpush1.xpose.msra.mxu0 0.0
          %1065 = vmatprep.subr.mxu0 0.0
          %1066 = vmatpush1.xpose.msra.mxu0 0.0
          %1067 = vmatprep.subr.mxu0 0.0
          %1068 = vmatpush1.xpose.msra.mxu0 %v1039
          %1069 = vmatprep.subr.mxu0 0.0
          %1070 = vmatpush1.xpose.msra.mxu0 %v1037
          %1071 = vmatprep.subr.mxu0 0.0
          %1072 = vmatpush1.xpose.msra.mxu0 %v1035
          %1073 = vmatprep.subr.mxu0 0.0
          %1074 = vmatpush2.xpose.msra.mxu0 0.0
          %1075 = vmatprep.subr.mxu0 0.0
          %1076 = vmatpush2.xpose.msra.mxu0 0.0
          %1077 = vmatprep.subr.mxu0 0.0
          %1078 = vmatpush2.xpose.msra.mxu0 0.0
          %1079 = vmatprep.subr.mxu0 0.0
          %1080 = vmatpush2.xpose.msra.mxu0 0.0
          %1081 = vmatprep.subr.mxu0 0.0
          %1082 = vmatpush2.xpose.msra.mxu0 0.0
          %1083 = vmatprep.subr.mxu0 0.0
          %1084 = vmatpush2.xpose.msra.mxu0 0.0
          %1085 = vmatprep.subr.mxu0 0.0
          %1086 = vmatpush2.xpose.msra.mxu0 0.0
          %1087 = vmatprep.subr.mxu0 0.0
          %1088 = vmatpush2.xpose.msra.mxu0 0.0
          %1089 = vmatprep.subr.mxu0 0.0
          %1090 = vmatpush2.xpose.msra.mxu0 0.0
          %1091 = vmatprep.subr.mxu0 0.0
          %1092 = vmatpush2.xpose.msra.mxu0 0.0
          %1093 = vmatprep.subr.mxu0 0.0
          %1094 = vmatpush2.xpose.msra.mxu0 0.0
          %1095 = vmatprep.subr.mxu0 0.0
          %1096 = vmatpush2.xpose.msra.mxu0 0.0
          %1097 = vmatprep.subr.mxu0 0.0
          %1098 = vmatpush2.xpose.msra.mxu0 0.0
          %1099 = vmatprep.subr.mxu0 0.0
          %1100 = vmatpush2.xpose.msra.mxu0 0.0
          %1101 = vmatprep.subr.mxu0 0.0
          %1102 = vmatpush2.xpose.msra.mxu0 0.0
          %1103 = vmatprep.subr.mxu0 0.0
          %1104 = vmatpush2.xpose.msra.mxu0 0.0
          %1105 = vmatprep.mubr.f32.mxu0 0.0
          %1106 = vmatmul.mubr.f32.gmra.mxu0 %v1029
          %v1107 = vpop.f32.mrf.mxu0
          %v1108 = vadd.f32 0.0, %v1107
          %v1109 = vpop.f32.mrf.mxu0
          %1110 = vmatprep.mubr.f32.mxu0 0.0
          %1111 = vmatmul.mubr.f32.gmra.mxu0 %v1031
          %v1112 = vpop.f32.mrf.mxu0
          %v1113 = vadd.f32 0.0, %v1112
          %v1114 = vpop.f32.mrf.mxu0
          %1115 = vmatprep.mubr.f32.mxu0 0.0
          %1116 = vmatmul.mubr.f32.gmra.mxu0 %v1033
          %v1117 = vpop.f32.mrf.mxu0
          %v1118 = vadd.f32 0.0, %v1117
          %v1119 = vpop.f32.mrf.mxu0
          %1120 = vdwg.mxu0
          %1121 = vrot.lane.b32.xlu0 %v797, 96
          %v1122 = vpop.permute.xlu0 %1121
          %1123 = vrot.lane.b32.xlu0 %v799, 96
          %v1124 = vpop.permute.xlu0 %1123
          %1125 = vrot.lane.b32.xlu0 %v801, 96
          %v1126 = vpop.permute.xlu0 %1125
          %v1127 = vsel %vm832, %v797, 0
          %v1129 = vsel %vm832, %v799, 0
          %v1131 = vsel %vm832, %v801, 0
          %v1133 = vsel %vm832, %v1122, 0
          %v1135 = vsel %vm832, %v1124, 0
          %v1137 = vsel %vm832, %v1126, 0
          %1139 = vmatprep.subr.mxu0 0.0
          %1140 = vmatpush1.xpose.msra.mxu0 0.0
          %1141 = vmatprep.subr.mxu0 0.0
          %1142 = vmatpush1.xpose.msra.mxu0 0.0
          %1143 = vmatprep.subr.mxu0 0.0
          %1144 = vmatpush1.xpose.msra.mxu0 0.0
          %1145 = vmatprep.subr.mxu0 0.0
          %1146 = vmatpush1.xpose.msra.mxu0 0.0
          %1147 = vmatprep.subr.mxu0 0.0
          %1148 = vmatpush1.xpose.msra.mxu0 0.0
          %1149 = vmatprep.subr.mxu0 0.0
          %1150 = vmatpush1.xpose.msra.mxu0 0.0
          %1151 = vmatprep.subr.mxu0 0.0
          %1152 = vmatpush1.xpose.msra.mxu0 0.0
          %1153 = vmatprep.subr.mxu0 0.0
          %1154 = vmatpush1.xpose.msra.mxu0 0.0
          %1155 = vmatprep.subr.mxu0 0.0
          %1156 = vmatpush1.xpose.msra.mxu0 0.0
          %1157 = vmatprep.subr.mxu0 0.0
          %1158 = vmatpush1.xpose.msra.mxu0 0.0
          %1159 = vmatprep.subr.mxu0 0.0
          %1160 = vmatpush1.xpose.msra.mxu0 0.0
          %1161 = vmatprep.subr.mxu0 0.0
          %1162 = vmatpush1.xpose.msra.mxu0 0.0
          %1163 = vmatprep.subr.mxu0 0.0
          %1164 = vmatpush1.xpose.msra.mxu0 0.0
          %1165 = vmatprep.subr.mxu0 0.0
          %1166 = vmatpush1.xpose.msra.mxu0 %v1137
          %1167 = vmatprep.subr.mxu0 0.0
          %1168 = vmatpush1.xpose.msra.mxu0 %v1135
          %1169 = vmatprep.subr.mxu0 0.0
          %1170 = vmatpush1.xpose.msra.mxu0 %v1133
          %1171 = vmatprep.subr.mxu0 0.0
          %1172 = vmatpush2.xpose.msra.mxu0 0.0
          %1173 = vmatprep.subr.mxu0 0.0
          %1174 = vmatpush2.xpose.msra.mxu0 0.0
          %1175 = vmatprep.subr.mxu0 0.0
          %1176 = vmatpush2.xpose.msra.mxu0 0.0
          %1177 = vmatprep.subr.mxu0 0.0
          %1178 = vmatpush2.xpose.msra.mxu0 0.0
          %1179 = vmatprep.subr.mxu0 0.0
          %1180 = vmatpush2.xpose.msra.mxu0 0.0
          %1181 = vmatprep.subr.mxu0 0.0
          %1182 = vmatpush2.xpose.msra.mxu0 0.0
          %1183 = vmatprep.subr.mxu0 0.0
          %1184 = vmatpush2.xpose.msra.mxu0 0.0
          %1185 = vmatprep.subr.mxu0 0.0
          %1186 = vmatpush2.xpose.msra.mxu0 0.0
          %1187 = vmatprep.subr.mxu0 0.0
          %1188 = vmatpush2.xpose.msra.mxu0 0.0
          %1189 = vmatprep.subr.mxu0 0.0
          %1190 = vmatpush2.xpose.msra.mxu0 0.0
          %1191 = vmatprep.subr.mxu0 0.0
          %1192 = vmatpush2.xpose.msra.mxu0 0.0
          %1193 = vmatprep.subr.mxu0 0.0
          %1194 = vmatpush2.xpose.msra.mxu0 0.0
          %1195 = vmatprep.subr.mxu0 0.0
          %1196 = vmatpush2.xpose.msra.mxu0 0.0
          %1197 = vmatprep.subr.mxu0 0.0
          %1198 = vmatpush2.xpose.msra.mxu0 0.0
          %1199 = vmatprep.subr.mxu0 0.0
          %1200 = vmatpush2.xpose.msra.mxu0 0.0
          %1201 = vmatprep.subr.mxu0 0.0
          %1202 = vmatpush2.xpose.msra.mxu0 0.0
          %1203 = vmatprep.mubr.f32.mxu0 0.0
          %1204 = vmatmul.mubr.f32.gmra.mxu0 %v1127
          %v1205 = vpop.f32.mrf.mxu0
          %v1206 = vadd.f32 0.0, %v1205
          %v1207 = vpop.f32.mrf.mxu0
          %1208 = vmatprep.mubr.f32.mxu0 0.0
          %1209 = vmatmul.mubr.f32.gmra.mxu0 %v1129
          %v1210 = vpop.f32.mrf.mxu0
          %v1211 = vadd.f32 0.0, %v1210
          %v1212 = vpop.f32.mrf.mxu0
          %1213 = vmatprep.mubr.f32.mxu0 0.0
          %1214 = vmatmul.mubr.f32.gmra.mxu0 %v1131
          %v1215 = vpop.f32.mrf.mxu0
          %v1216 = vadd.f32 0.0, %v1215
          %v1217 = vpop.f32.mrf.mxu0
          %1218 = vdwg.mxu0
          %1219 = vrot.lane.b32.xlu0 %v803, 96
          %v1220 = vpop.permute.xlu0 %1219
          %1221 = vrot.lane.b32.xlu0 %v805, 96
          %v1222 = vpop.permute.xlu0 %1221
          %1223 = vrot.lane.b32.xlu0 %v807, 96
          %v1224 = vpop.permute.xlu0 %1223
          %v1225 = vsel %vm832, %v803, 0
          %v1227 = vsel %vm832, %v805, 0
          %v1229 = vsel %vm832, %v807, 0
          %v1231 = vsel %vm832, %v1220, 0
          %v1233 = vsel %vm832, %v1222, 0
          %v1235 = vsel %vm832, %v1224, 0
          %1237 = vmatprep.subr.mxu0 0.0
          %1238 = vmatpush1.xpose.msra.mxu0 0.0
          %1239 = vmatprep.subr.mxu0 0.0
          %1240 = vmatpush1.xpose.msra.mxu0 0.0
          %1241 = vmatprep.subr.mxu0 0.0
          %1242 = vmatpush1.xpose.msra.mxu0 0.0
          %1243 = vmatprep.subr.mxu0 0.0
          %1244 = vmatpush1.xpose.msra.mxu0 0.0
          %1245 = vmatprep.subr.mxu0 0.0
          %1246 = vmatpush1.xpose.msra.mxu0 0.0
          %1247 = vmatprep.subr.mxu0 0.0
          %1248 = vmatpush1.xpose.msra.mxu0 0.0
          %1249 = vmatprep.subr.mxu0 0.0
          %1250 = vmatpush1.xpose.msra.mxu0 0.0
          %1251 = vmatprep.subr.mxu0 0.0
          %1252 = vmatpush1.xpose.msra.mxu0 0.0
          %1253 = vmatprep.subr.mxu0 0.0
          %1254 = vmatpush1.xpose.msra.mxu0 0.0
          %1255 = vmatprep.subr.mxu0 0.0
          %1256 = vmatpush1.xpose.msra.mxu0 0.0
          %1257 = vmatprep.subr.mxu0 0.0
          %1258 = vmatpush1.xpose.msra.mxu0 0.0
          %1259 = vmatprep.subr.mxu0 0.0
          %1260 = vmatpush1.xpose.msra.mxu0 0.0
          %1261 = vmatprep.subr.mxu0 0.0
          %1262 = vmatpush1.xpose.msra.mxu0 0.0
          %1263 = vmatprep.subr.mxu0 0.0
          %1264 = vmatpush1.xpose.msra.mxu0 %v1235
          %1265 = vmatprep.subr.mxu0 0.0
          %1266 = vmatpush1.xpose.msra.mxu0 %v1233
          %1267 = vmatprep.subr.mxu0 0.0
          %1268 = vmatpush1.xpose.msra.mxu0 %v1231
          %1269 = vmatprep.subr.mxu0 0.0
          %1270 = vmatpush2.xpose.msra.mxu0 0.0
          %1271 = vmatprep.subr.mxu0 0.0
          %1272 = vmatpush2.xpose.msra.mxu0 0.0
          %1273 = vmatprep.subr.mxu0 0.0
          %1274 = vmatpush2.xpose.msra.mxu0 0.0
          %1275 = vmatprep.subr.mxu0 0.0
          %1276 = vmatpush2.xpose.msra.mxu0 0.0
          %1277 = vmatprep.subr.mxu0 0.0
          %1278 = vmatpush2.xpose.msra.mxu0 0.0
          %1279 = vmatprep.subr.mxu0 0.0
          %1280 = vmatpush2.xpose.msra.mxu0 0.0
          %1281 = vmatprep.subr.mxu0 0.0
          %1282 = vmatpush2.xpose.msra.mxu0 0.0
          %1283 = vmatprep.subr.mxu0 0.0
          %1284 = vmatpush2.xpose.msra.mxu0 0.0
          %1285 = vmatprep.subr.mxu0 0.0
          %1286 = vmatpush2.xpose.msra.mxu0 0.0
          %1287 = vmatprep.subr.mxu0 0.0
          %1288 = vmatpush2.xpose.msra.mxu0 0.0
          %1289 = vmatprep.subr.mxu0 0.0
          %1290 = vmatpush2.xpose.msra.mxu0 0.0
          %1291 = vmatprep.subr.mxu0 0.0
          %1292 = vmatpush2.xpose.msra.mxu0 0.0
          %1293 = vmatprep.subr.mxu0 0.0
          %1294 = vmatpush2.xpose.msra.mxu0 0.0
          %1295 = vmatprep.subr.mxu0 0.0
          %1296 = vmatpush2.xpose.msra.mxu0 0.0
          %1297 = vmatprep.subr.mxu0 0.0
          %1298 = vmatpush2.xpose.msra.mxu0 0.0
          %1299 = vmatprep.subr.mxu0 0.0
          %1300 = vmatpush2.xpose.msra.mxu0 0.0
          %1301 = vmatprep.mubr.f32.mxu0 0.0
          %1302 = vmatmul.mubr.f32.gmra.mxu0 %v1225
          %v1303 = vpop.f32.mrf.mxu0
          %v1304 = vadd.f32 0.0, %v1303
          %v1305 = vpop.f32.mrf.mxu0
          %1306 = vmatprep.mubr.f32.mxu0 0.0
          %1307 = vmatmul.mubr.f32.gmra.mxu0 %v1227
          %v1308 = vpop.f32.mrf.mxu0
          %v1309 = vadd.f32 0.0, %v1308
          %v1310 = vpop.f32.mrf.mxu0
          %1311 = vmatprep.mubr.f32.mxu0 0.0
          %1312 = vmatmul.mubr.f32.gmra.mxu0 %v1229
          %v1313 = vpop.f32.mrf.mxu0
          %v1314 = vadd.f32 0.0, %v1313
          %v1315 = vpop.f32.mrf.mxu0
          %1316 = vdwg.mxu0
          %1317 = vrot.lane.b32.xlu0 %v809, 96
          %v1318 = vpop.permute.xlu0 %1317
          %1319 = vrot.lane.b32.xlu0 %v811, 96
          %v1320 = vpop.permute.xlu0 %1319
          %1321 = vrot.lane.b32.xlu0 %v813, 96
          %v1322 = vpop.permute.xlu0 %1321
          %v1323 = vsel %vm832, %v809, 0
          %v1325 = vsel %vm832, %v811, 0
          %v1327 = vsel %vm832, %v813, 0
          %v1329 = vsel %vm832, %v1318, 0
          %v1331 = vsel %vm832, %v1320, 0
          %v1333 = vsel %vm832, %v1322, 0
          %1335 = vmatprep.subr.mxu0 0.0
          %1336 = vmatpush1.xpose.msra.mxu0 0.0
          %1337 = vmatprep.subr.mxu0 0.0
          %1338 = vmatpush1.xpose.msra.mxu0 0.0
          %1339 = vmatprep.subr.mxu0 0.0
          %1340 = vmatpush1.xpose.msra.mxu0 0.0
          %1341 = vmatprep.subr.mxu0 0.0
          %1342 = vmatpush1.xpose.msra.mxu0 0.0
          %1343 = vmatprep.subr.mxu0 0.0
          %1344 = vmatpush1.xpose.msra.mxu0 0.0
          %1345 = vmatprep.subr.mxu0 0.0
          %1346 = vmatpush1.xpose.msra.mxu0 0.0
          %1347 = vmatprep.subr.mxu0 0.0
          %1348 = vmatpush1.xpose.msra.mxu0 0.0
          %1349 = vmatprep.subr.mxu0 0.0
          %1350 = vmatpush1.xpose.msra.mxu0 0.0
          %1351 = vmatprep.subr.mxu0 0.0
          %1352 = vmatpush1.xpose.msra.mxu0 0.0
          %1353 = vmatprep.subr.mxu0 0.0
          %1354 = vmatpush1.xpose.msra.mxu0 0.0
          %1355 = vmatprep.subr.mxu0 0.0
          %1356 = vmatpush1.xpose.msra.mxu0 0.0
          %1357 = vmatprep.subr.mxu0 0.0
          %1358 = vmatpush1.xpose.msra.mxu0 0.0
          %1359 = vmatprep.subr.mxu0 0.0
          %1360 = vmatpush1.xpose.msra.mxu0 0.0
          %1361 = vmatprep.subr.mxu0 0.0
          %1362 = vmatpush1.xpose.msra.mxu0 %v1333
          %1363 = vmatprep.subr.mxu0 0.0
          %1364 = vmatpush1.xpose.msra.mxu0 %v1331
          %1365 = vmatprep.subr.mxu0 0.0
          %1366 = vmatpush1.xpose.msra.mxu0 %v1329
          %1367 = vmatprep.subr.mxu0 0.0
          %1368 = vmatpush2.xpose.msra.mxu0 0.0
          %1369 = vmatprep.subr.mxu0 0.0
          %1370 = vmatpush2.xpose.msra.mxu0 0.0
          %1371 = vmatprep.subr.mxu0 0.0
          %1372 = vmatpush2.xpose.msra.mxu0 0.0
          %1373 = vmatprep.subr.mxu0 0.0
          %1374 = vmatpush2.xpose.msra.mxu0 0.0
          %1375 = vmatprep.subr.mxu0 0.0
          %1376 = vmatpush2.xpose.msra.mxu0 0.0
          %1377 = vmatprep.subr.mxu0 0.0
          %1378 = vmatpush2.xpose.msra.mxu0 0.0
          %1379 = vmatprep.subr.mxu0 0.0
          %1380 = vmatpush2.xpose.msra.mxu0 0.0
          %1381 = vmatprep.subr.mxu0 0.0
          %1382 = vmatpush2.xpose.msra.mxu0 0.0
          %1383 = vmatprep.subr.mxu0 0.0
          %1384 = vmatpush2.xpose.msra.mxu0 0.0
          %1385 = vmatprep.subr.mxu0 0.0
          %1386 = vmatpush2.xpose.msra.mxu0 0.0
          %1387 = vmatprep.subr.mxu0 0.0
          %1388 = vmatpush2.xpose.msra.mxu0 0.0
          %1389 = vmatprep.subr.mxu0 0.0
          %1390 = vmatpush2.xpose.msra.mxu0 0.0
          %1391 = vmatprep.subr.mxu0 0.0
          %1392 = vmatpush2.xpose.msra.mxu0 0.0
          %1393 = vmatprep.subr.mxu0 0.0
          %1394 = vmatpush2.xpose.msra.mxu0 0.0
          %1395 = vmatprep.subr.mxu0 0.0
          %1396 = vmatpush2.xpose.msra.mxu0 0.0
          %1397 = vmatprep.subr.mxu0 0.0
          %1398 = vmatpush2.xpose.msra.mxu0 0.0
          %1399 = vmatprep.mubr.f32.mxu0 0.0
          %1400 = vmatmul.mubr.f32.gmra.mxu0 %v1323
          %v1401 = vpop.f32.mrf.mxu0
          %v1402 = vadd.f32 0.0, %v1401
          %v1403 = vpop.f32.mrf.mxu0
          %1404 = vmatprep.mubr.f32.mxu0 0.0
          %1405 = vmatmul.mubr.f32.gmra.mxu0 %v1325
          %v1406 = vpop.f32.mrf.mxu0
          %v1407 = vadd.f32 0.0, %v1406
          %v1408 = vpop.f32.mrf.mxu0
          %1409 = vmatprep.mubr.f32.mxu0 0.0
          %1410 = vmatmul.mubr.f32.gmra.mxu0 %v1327
          %v1411 = vpop.f32.mrf.mxu0
          %v1412 = vadd.f32 0.0, %v1411
          %v1413 = vpop.f32.mrf.mxu0
          %1414 = vdwg.mxu0
          %1415 = vrot.lane.b32.xlu0 %v815, 96
          %v1416 = vpop.permute.xlu0 %1415
          %1417 = vrot.lane.b32.xlu0 %v817, 96
          %v1418 = vpop.permute.xlu0 %1417
          %1419 = vrot.lane.b32.xlu0 %v819, 96
          %v1420 = vpop.permute.xlu0 %1419
          %v1421 = vsel %vm832, %v815, 0
          %v1423 = vsel %vm832, %v817, 0
          %v1425 = vsel %vm832, %v819, 0
          %v1427 = vsel %vm832, %v1416, 0
          %v1429 = vsel %vm832, %v1418, 0
          %v1431 = vsel %vm832, %v1420, 0
          %1433 = vmatprep.subr.mxu0 0.0
          %1434 = vmatpush1.xpose.msra.mxu0 0.0
          %1435 = vmatprep.subr.mxu0 0.0
          %1436 = vmatpush1.xpose.msra.mxu0 0.0
          %1437 = vmatprep.subr.mxu0 0.0
          %1438 = vmatpush1.xpose.msra.mxu0 0.0
          %1439 = vmatprep.subr.mxu0 0.0
          %1440 = vmatpush1.xpose.msra.mxu0 0.0
          %1441 = vmatprep.subr.mxu0 0.0
          %1442 = vmatpush1.xpose.msra.mxu0 0.0
          %1443 = vmatprep.subr.mxu0 0.0
          %1444 = vmatpush1.xpose.msra.mxu0 0.0
          %1445 = vmatprep.subr.mxu0 0.0
          %1446 = vmatpush1.xpose.msra.mxu0 0.0
          %1447 = vmatprep.subr.mxu0 0.0
          %1448 = vmatpush1.xpose.msra.mxu0 0.0
          %1449 = vmatprep.subr.mxu0 0.0
          %1450 = vmatpush1.xpose.msra.mxu0 0.0
          %1451 = vmatprep.subr.mxu0 0.0
          %1452 = vmatpush1.xpose.msra.mxu0 0.0
          %1453 = vmatprep.subr.mxu0 0.0
          %1454 = vmatpush1.xpose.msra.mxu0 0.0
          %1455 = vmatprep.subr.mxu0 0.0
          %1456 = vmatpush1.xpose.msra.mxu0 0.0
          %1457 = vmatprep.subr.mxu0 0.0
          %1458 = vmatpush1.xpose.msra.mxu0 0.0
          %1459 = vmatprep.subr.mxu0 0.0
          %1460 = vmatpush1.xpose.msra.mxu0 %v1431
          %1461 = vmatprep.subr.mxu0 0.0
          %1462 = vmatpush1.xpose.msra.mxu0 %v1429
          %1463 = vmatprep.subr.mxu0 0.0
          %1464 = vmatpush1.xpose.msra.mxu0 %v1427
          %1465 = vmatprep.subr.mxu0 0.0
          %1466 = vmatpush2.xpose.msra.mxu0 0.0
          %1467 = vmatprep.subr.mxu0 0.0
          %1468 = vmatpush2.xpose.msra.mxu0 0.0
          %1469 = vmatprep.subr.mxu0 0.0
          %1470 = vmatpush2.xpose.msra.mxu0 0.0
          %1471 = vmatprep.subr.mxu0 0.0
          %1472 = vmatpush2.xpose.msra.mxu0 0.0
          %1473 = vmatprep.subr.mxu0 0.0
          %1474 = vmatpush2.xpose.msra.mxu0 0.0
          %1475 = vmatprep.subr.mxu0 0.0
          %1476 = vmatpush2.xpose.msra.mxu0 0.0
          %1477 = vmatprep.subr.mxu0 0.0
          %1478 = vmatpush2.xpose.msra.mxu0 0.0
          %1479 = vmatprep.subr.mxu0 0.0
          %1480 = vmatpush2.xpose.msra.mxu0 0.0
          %1481 = vmatprep.subr.mxu0 0.0
          %1482 = vmatpush2.xpose.msra.mxu0 0.0
          %1483 = vmatprep.subr.mxu0 0.0
          %1484 = vmatpush2.xpose.msra.mxu0 0.0
          %1485 = vmatprep.subr.mxu0 0.0
          %1486 = vmatpush2.xpose.msra.mxu0 0.0
          %1487 = vmatprep.subr.mxu0 0.0
          %1488 = vmatpush2.xpose.msra.mxu0 0.0
          %1489 = vmatprep.subr.mxu0 0.0
          %1490 = vmatpush2.xpose.msra.mxu0 0.0
          %1491 = vmatprep.subr.mxu0 0.0
          %1492 = vmatpush2.xpose.msra.mxu0 0.0
          %1493 = vmatprep.subr.mxu0 0.0
          %1494 = vmatpush2.xpose.msra.mxu0 0.0
          %1495 = vmatprep.subr.mxu0 0.0
          %1496 = vmatpush2.xpose.msra.mxu0 0.0
          %1497 = vmatprep.mubr.f32.mxu0 0.0
          %1498 = vmatmul.mubr.f32.gmra.mxu0 %v1421
          %v1499 = vpop.f32.mrf.mxu0
          %v1500 = vadd.f32 0.0, %v1499
          %v1501 = vpop.f32.mrf.mxu0
          %1502 = vmatprep.mubr.f32.mxu0 0.0
          %1503 = vmatmul.mubr.f32.gmra.mxu0 %v1423
          %v1504 = vpop.f32.mrf.mxu0
          %v1505 = vadd.f32 0.0, %v1504
          %v1506 = vpop.f32.mrf.mxu0
          %1507 = vmatprep.mubr.f32.mxu0 0.0
          %1508 = vmatmul.mubr.f32.gmra.mxu0 %v1425
          %v1509 = vpop.f32.mrf.mxu0
          %v1510 = vadd.f32 0.0, %v1509
          %v1511 = vpop.f32.mrf.mxu0
          %1512 = vdwg.mxu0
          %1513 = vrot.lane.b32.xlu0 %v821, 96
          %v1514 = vpop.permute.xlu0 %1513
          %1515 = vrot.lane.b32.xlu0 %v823, 96
          %v1516 = vpop.permute.xlu0 %1515
          %1517 = vrot.lane.b32.xlu0 %v825, 96
          %v1518 = vpop.permute.xlu0 %1517
          %v1519 = vsel %vm832, %v821, 0
          %v1521 = vsel %vm832, %v823, 0
          %v1523 = vsel %vm832, %v825, 0
          %v1525 = vsel %vm832, %v1514, 0
          %v1527 = vsel %vm832, %v1516, 0
          %v1529 = vsel %vm832, %v1518, 0
          %1531 = vmatprep.subr.mxu0 0.0
          %1532 = vmatpush1.xpose.msra.mxu0 0.0
          %1533 = vmatprep.subr.mxu0 0.0
          %1534 = vmatpush1.xpose.msra.mxu0 0.0
          %1535 = vmatprep.subr.mxu0 0.0
          %1536 = vmatpush1.xpose.msra.mxu0 0.0
          %1537 = vmatprep.subr.mxu0 0.0
          %1538 = vmatpush1.xpose.msra.mxu0 0.0
          %1539 = vmatprep.subr.mxu0 0.0
          %1540 = vmatpush1.xpose.msra.mxu0 0.0
          %1541 = vmatprep.subr.mxu0 0.0
          %1542 = vmatpush1.xpose.msra.mxu0 0.0
          %1543 = vmatprep.subr.mxu0 0.0
          %1544 = vmatpush1.xpose.msra.mxu0 0.0
          %1545 = vmatprep.subr.mxu0 0.0
          %1546 = vmatpush1.xpose.msra.mxu0 0.0
          %1547 = vmatprep.subr.mxu0 0.0
          %1548 = vmatpush1.xpose.msra.mxu0 0.0
          %1549 = vmatprep.subr.mxu0 0.0
          %1550 = vmatpush1.xpose.msra.mxu0 0.0
          %1551 = vmatprep.subr.mxu0 0.0
          %1552 = vmatpush1.xpose.msra.mxu0 0.0
          %1553 = vmatprep.subr.mxu0 0.0
          %1554 = vmatpush1.xpose.msra.mxu0 0.0
          %1555 = vmatprep.subr.mxu0 0.0
          %1556 = vmatpush1.xpose.msra.mxu0 0.0
          %1557 = vmatprep.subr.mxu0 0.0
          %1558 = vmatpush1.xpose.msra.mxu0 %v1529
          %1559 = vmatprep.subr.mxu0 0.0
          %1560 = vmatpush1.xpose.msra.mxu0 %v1527
          %1561 = vmatprep.subr.mxu0 0.0
          %1562 = vmatpush1.xpose.msra.mxu0 %v1525
          %1563 = vmatprep.subr.mxu0 0.0
          %1564 = vmatpush2.xpose.msra.mxu0 0.0
          %1565 = vmatprep.subr.mxu0 0.0
          %1566 = vmatpush2.xpose.msra.mxu0 0.0
          %1567 = vmatprep.subr.mxu0 0.0
          %1568 = vmatpush2.xpose.msra.mxu0 0.0
          %1569 = vmatprep.subr.mxu0 0.0
          %1570 = vmatpush2.xpose.msra.mxu0 0.0
          %1571 = vmatprep.subr.mxu0 0.0
          %1572 = vmatpush2.xpose.msra.mxu0 0.0
          %1573 = vmatprep.subr.mxu0 0.0
          %1574 = vmatpush2.xpose.msra.mxu0 0.0
          %1575 = vmatprep.subr.mxu0 0.0
          %1576 = vmatpush2.xpose.msra.mxu0 0.0
          %1577 = vmatprep.subr.mxu0 0.0
          %1578 = vmatpush2.xpose.msra.mxu0 0.0
          %1579 = vmatprep.subr.mxu0 0.0
          %1580 = vmatpush2.xpose.msra.mxu0 0.0
          %1581 = vmatprep.subr.mxu0 0.0
          %1582 = vmatpush2.xpose.msra.mxu0 0.0
          %1583 = vmatprep.subr.mxu0 0.0
          %1584 = vmatpush2.xpose.msra.mxu0 0.0
          %1585 = vmatprep.subr.mxu0 0.0
          %1586 = vmatpush2.xpose.msra.mxu0 0.0
          %1587 = vmatprep.subr.mxu0 0.0
          %1588 = vmatpush2.xpose.msra.mxu0 0.0
          %1589 = vmatprep.subr.mxu0 0.0
          %1590 = vmatpush2.xpose.msra.mxu0 0.0
          %1591 = vmatprep.subr.mxu0 0.0
          %1592 = vmatpush2.xpose.msra.mxu0 0.0
          %1593 = vmatprep.subr.mxu0 0.0
          %1594 = vmatpush2.xpose.msra.mxu0 0.0
          %1595 = vmatprep.mubr.f32.mxu0 0.0
          %1596 = vmatmul.mubr.f32.gmra.mxu0 %v1519
          %v1597 = vpop.f32.mrf.mxu0
          %v1598 = vadd.f32 0.0, %v1597
          %v1599 = vpop.f32.mrf.mxu0
          %1600 = vmatprep.mubr.f32.mxu0 0.0
          %1601 = vmatmul.mubr.f32.gmra.mxu0 %v1521
          %v1602 = vpop.f32.mrf.mxu0
          %v1603 = vadd.f32 0.0, %v1602
          %v1604 = vpop.f32.mrf.mxu0
          %1605 = vmatprep.mubr.f32.mxu0 0.0
          %1606 = vmatmul.mubr.f32.gmra.mxu0 %v1523
          %v1607 = vpop.f32.mrf.mxu0
          %v1608 = vadd.f32 0.0, %v1607
          %v1609 = vpop.f32.mrf.mxu0
          %1610 = vdwg.mxu0
          %v1611 = vmul.f32 %v912, 0.5
          %v1612 = vmul.f32 %v917, 0.5
          %v1613 = vmul.f32 %v922, 0.5
          %v1614 = vmul.f32 %v1010, 0.5
          %v1615 = vmul.f32 %v1015, 0.5
          %v1616 = vmul.f32 %v1020, 0.5
          %v1617 = vmul.f32 %v1108, 0.5
          %v1618 = vmul.f32 %v1113, 0.5
          %v1619 = vmul.f32 %v1118, 0.5
          %v1620 = vmul.f32 %v1206, 0.5
          %v1621 = vmul.f32 %v1211, 0.5
          %v1622 = vmul.f32 %v1216, 0.5
          %v1623 = vmul.f32 %v1304, 0.5
          %v1624 = vmul.f32 %v1309, 0.5
          %v1625 = vmul.f32 %v1314, 0.5
          %v1626 = vmul.f32 %v1402, 0.5
          %v1627 = vmul.f32 %v1407, 0.5
          %v1628 = vmul.f32 %v1412, 0.5
          %v1629 = vmul.f32 %v1500, 0.5
          %v1630 = vmul.f32 %v1505, 0.5
          %v1631 = vmul.f32 %v1510, 0.5
          %v1632 = vmul.f32 %v1598, 0.5
          %v1633 = vmul.f32 %v1603, 0.5
          %v1634 = vmul.f32 %v1608, 0.5
          %v1635 = vadd.f32 %v1611, %v674
          %v1636 = vadd.f32 %v1612, %v674
          %v1637 = vadd.f32 %v1613, %v674
          %v1638 = vadd.f32 %v1614, %v674
          %v1639 = vadd.f32 %v1615, %v674
          %v1640 = vadd.f32 %v1616, %v674
          %v1641 = vadd.f32 %v1617, %v674
          %v1642 = vadd.f32 %v1618, %v674
          %v1643 = vadd.f32 %v1619, %v674
          %v1644 = vadd.f32 %v1620, %v674
          %v1645 = vadd.f32 %v1621, %v674
          %v1646 = vadd.f32 %v1622, %v674
          %v1647 = vadd.f32 %v1623, %v674
          %v1648 = vadd.f32 %v1624, %v674
          %v1649 = vadd.f32 %v1625, %v674
          %v1650 = vadd.f32 %v1626, %v674
          %v1651 = vadd.f32 %v1627, %v674
          %v1652 = vadd.f32 %v1628, %v674
          %v1653 = vadd.f32 %v1629, %v674
          %v1654 = vadd.f32 %v1630, %v674
          %v1655 = vadd.f32 %v1631, %v674
          %v1656 = vadd.f32 %v1632, %v674
          %v1657 = vadd.f32 %v1633, %v674
          %v1658 = vadd.f32 %v1634, %v674
          %vm1659 = vcmask 162816
          %v1660 = vsel %vm1659, %v1635, -inf
          %1661 = vmax.xlane.f32.xlu0 %v1660
          %v1662 = vpop.xlane.xlu0 %1661
          %v1663 = vsel %vm1659, %v1636, -inf
          %1664 = vmax.xlane.f32.xlu0 %v1663
          %v1665 = vpop.xlane.xlu0 %1664
          %vm1666 = vcmask 158720
          %v1667 = vsel %vm1666, %v1637, -inf
          %1668 = vmax.xlane.f32.xlu0 %v1667
          %v1669 = vpop.xlane.xlu0 %1668
          %v1670 = vsel %vm1659, %v1638, -inf
          %1671 = vmax.xlane.f32.xlu0 %v1670
          %v1672 = vpop.xlane.xlu0 %1671
          %v1673 = vsel %vm1659, %v1639, -inf
          %1674 = vmax.xlane.f32.xlu0 %v1673
          %v1675 = vpop.xlane.xlu0 %1674
          %v1676 = vsel %vm1666, %v1640, -inf
          %1677 = vmax.xlane.f32.xlu0 %v1676
          %v1678 = vpop.xlane.xlu0 %1677
          %v1679 = vsel %vm1659, %v1641, -inf
          %1680 = vmax.xlane.f32.xlu0 %v1679
          %v1681 = vpop.xlane.xlu0 %1680
          %v1682 = vsel %vm1659, %v1642, -inf
          %1683 = vmax.xlane.f32.xlu0 %v1682
          %v1684 = vpop.xlane.xlu0 %1683
          %v1685 = vsel %vm1666, %v1643, -inf
          %1686 = vmax.xlane.f32.xlu0 %v1685
          %v1687 = vpop.xlane.xlu0 %1686
          %v1688 = vsel %vm1659, %v1644, -inf
          %1689 = vmax.xlane.f32.xlu0 %v1688
          %v1690 = vpop.xlane.xlu0 %1689
          %v1691 = vsel %vm1659, %v1645, -inf
          %1692 = vmax.xlane.f32.xlu0 %v1691
          %v1693 = vpop.xlane.xlu0 %1692
          %v1694 = vsel %vm1666, %v1646, -inf
          %1695 = vmax.xlane.f32.xlu0 %v1694
          %v1696 = vpop.xlane.xlu0 %1695
          %v1697 = vsel %vm1659, %v1647, -inf
          %1698 = vmax.xlane.f32.xlu0 %v1697
          %v1699 = vpop.xlane.xlu0 %1698
          %v1700 = vsel %vm1659, %v1648, -inf
          %1701 = vmax.xlane.f32.xlu0 %v1700
          %v1702 = vpop.xlane.xlu0 %1701
          %v1703 = vsel %vm1666, %v1649, -inf
          %1704 = vmax.xlane.f32.xlu0 %v1703
          %v1705 = vpop.xlane.xlu0 %1704
          %v1706 = vsel %vm1659, %v1650, -inf
          %1707 = vmax.xlane.f32.xlu0 %v1706
          %v1708 = vpop.xlane.xlu0 %1707
          %v1709 = vsel %vm1659, %v1651, -inf
          %1710 = vmax.xlane.f32.xlu0 %v1709
          %v1711 = vpop.xlane.xlu0 %1710
          %v1712 = vsel %vm1666, %v1652, -inf
          %1713 = vmax.xlane.f32.xlu0 %v1712
          %v1714 = vpop.xlane.xlu0 %1713
          %v1715 = vsel %vm1659, %v1653, -inf
          %1716 = vmax.xlane.f32.xlu0 %v1715
          %v1717 = vpop.xlane.xlu0 %1716
          %v1718 = vsel %vm1659, %v1654, -inf
          %1719 = vmax.xlane.f32.xlu0 %v1718
          %v1720 = vpop.xlane.xlu0 %1719
          %v1721 = vsel %vm1666, %v1655, -inf
          %1722 = vmax.xlane.f32.xlu0 %v1721
          %v1723 = vpop.xlane.xlu0 %1722
          %v1724 = vsel %vm1659, %v1656, -inf
          %1725 = vmax.xlane.f32.xlu0 %v1724
          %v1726 = vpop.xlane.xlu0 %1725
          %v1727 = vsel %vm1659, %v1657, -inf
          %1728 = vmax.xlane.f32.xlu0 %v1727
          %v1729 = vpop.xlane.xlu0 %1728
          %v1730 = vsel %vm1666, %v1658, -inf
          %1731 = vmax.xlane.f32.xlu0 %v1730
          %v1732 = vpop.xlane.xlu0 %1731
          %v1733 = vsub.f32 %v1635, %v1662
          %v1734 = vsub.f32 %v1636, %v1665
          %v1735 = vsub.f32 %v1637, %v1669
          %v1736 = vsub.f32 %v1638, %v1672
          %v1737 = vsub.f32 %v1639, %v1675
          %v1738 = vsub.f32 %v1640, %v1678
          %v1739 = vsub.f32 %v1641, %v1681
          %v1740 = vsub.f32 %v1642, %v1684
          %v1741 = vsub.f32 %v1643, %v1687
          %v1742 = vsub.f32 %v1644, %v1690
          %v1743 = vsub.f32 %v1645, %v1693
          %v1744 = vsub.f32 %v1646, %v1696
          %v1745 = vsub.f32 %v1647, %v1699
          %v1746 = vsub.f32 %v1648, %v1702
          %v1747 = vsub.f32 %v1649, %v1705
          %v1748 = vsub.f32 %v1650, %v1708
          %v1749 = vsub.f32 %v1651, %v1711
          %v1750 = vsub.f32 %v1652, %v1714
          %v1751 = vsub.f32 %v1653, %v1717
          %v1752 = vsub.f32 %v1654, %v1720
          %v1753 = vsub.f32 %v1655, %v1723
          %v1754 = vsub.f32 %v1656, %v1726
          %v1755 = vsub.f32 %v1657, %v1729
          %v1756 = vsub.f32 %v1658, %v1732
          %v1757 = vmul.f32 %v1733, 1.442695
          %v1758 = vpow.pop %v1757
          %v1759 = vmul.f32 %v1734, 1.442695
          %v1760 = vpow.pop %v1759
          %v1761 = vmul.f32 %v1735, 1.442695
          %v1762 = vpow.pop %v1761
          %v1763 = vmul.f32 %v1736, 1.442695
          %v1764 = vpow.pop %v1763
          %v1765 = vmul.f32 %v1737, 1.442695
          %v1766 = vpow.pop %v1765
          %v1767 = vmul.f32 %v1738, 1.442695
          %v1768 = vpow.pop %v1767
          %v1769 = vmul.f32 %v1739, 1.442695
          %v1770 = vpow.pop %v1769
          %v1771 = vmul.f32 %v1740, 1.442695
          %v1772 = vpow.pop %v1771
          %v1773 = vmul.f32 %v1741, 1.442695
          %v1774 = vpow.pop %v1773
          %v1775 = vmul.f32 %v1742, 1.442695
          %v1776 = vpow.pop %v1775
          %v1777 = vmul.f32 %v1743, 1.442695
          %v1778 = vpow.pop %v1777
          %v1779 = vmul.f32 %v1744, 1.442695
          %v1780 = vpow.pop %v1779
          %v1781 = vmul.f32 %v1745, 1.442695
          %v1782 = vpow.pop %v1781
          %v1783 = vmul.f32 %v1746, 1.442695
          %v1784 = vpow.pop %v1783
          %v1785 = vmul.f32 %v1747, 1.442695
          %v1786 = vpow.pop %v1785
          %v1787 = vmul.f32 %v1748, 1.442695
          %v1788 = vpow.pop %v1787
          %v1789 = vmul.f32 %v1749, 1.442695
          %v1790 = vpow.pop %v1789
          %v1791 = vmul.f32 %v1750, 1.442695
          %v1792 = vpow.pop %v1791
          %v1793 = vmul.f32 %v1751, 1.442695
          %v1794 = vpow.pop %v1793
          %v1795 = vmul.f32 %v1752, 1.442695
          %v1796 = vpow.pop %v1795
          %v1797 = vmul.f32 %v1753, 1.442695
          %v1798 = vpow.pop %v1797
          %v1799 = vmul.f32 %v1754, 1.442695
          %v1800 = vpow.pop %v1799
          %v1801 = vmul.f32 %v1755, 1.442695
          %v1802 = vpow.pop %v1801
          %v1803 = vmul.f32 %v1756, 1.442695
          %v1804 = vpow.pop %v1803
          %v1805 = vsel %vm1659, %v1758, 0.0
          %1806 = vadd.xlane.f32.xlu0 %v1805
          %v1807 = vpop.xlane.xlu0 %1806
          %v1808 = vsel %vm1659, %v1760, 0.0
          %1809 = vadd.xlane.f32.xlu0 %v1808
          %v1810 = vpop.xlane.xlu0 %1809
          %v1811 = vsel %vm1666, %v1762, 0.0
          %1812 = vadd.xlane.f32.xlu0 %v1811
          %v1813 = vpop.xlane.xlu0 %1812
          %v1814 = vsel %vm1659, %v1764, 0.0
          %1815 = vadd.xlane.f32.xlu0 %v1814
          %v1816 = vpop.xlane.xlu0 %1815
          %v1817 = vsel %vm1659, %v1766, 0.0
          %1818 = vadd.xlane.f32.xlu0 %v1817
          %v1819 = vpop.xlane.xlu0 %1818
          %v1820 = vsel %vm1666, %v1768, 0.0
          %1821 = vadd.xlane.f32.xlu0 %v1820
          %v1822 = vpop.xlane.xlu0 %1821
          %v1823 = vsel %vm1659, %v1770, 0.0
          %1824 = vadd.xlane.f32.xlu0 %v1823
          %v1825 = vpop.xlane.xlu0 %1824
          %v1826 = vsel %vm1659, %v1772, 0.0
          %1827 = vadd.xlane.f32.xlu0 %v1826
          %v1828 = vpop.xlane.xlu0 %1827
          %v1829 = vsel %vm1666, %v1774, 0.0
          %1830 = vadd.xlane.f32.xlu0 %v1829
          %v1831 = vpop.xlane.xlu0 %1830
          %v1832 = vsel %vm1659, %v1776, 0.0
          %1833 = vadd.xlane.f32.xlu0 %v1832
          %v1834 = vpop.xlane.xlu0 %1833
          %v1835 = vsel %vm1659, %v1778, 0.0
          %1836 = vadd.xlane.f32.xlu0 %v1835
          %v1837 = vpop.xlane.xlu0 %1836
          %v1838 = vsel %vm1666, %v1780, 0.0
          %1839 = vadd.xlane.f32.xlu0 %v1838
          %v1840 = vpop.xlane.xlu0 %1839
          %v1841 = vsel %vm1659, %v1782, 0.0
          %1842 = vadd.xlane.f32.xlu0 %v1841
          %v1843 = vpop.xlane.xlu0 %1842
          %v1844 = vsel %vm1659, %v1784, 0.0
          %1845 = vadd.xlane.f32.xlu0 %v1844
          %v1846 = vpop.xlane.xlu0 %1845
          %v1847 = vsel %vm1666, %v1786, 0.0
          %1848 = vadd.xlane.f32.xlu0 %v1847
          %v1849 = vpop.xlane.xlu0 %1848
          %v1850 = vsel %vm1659, %v1788, 0.0
          %1851 = vadd.xlane.f32.xlu0 %v1850
          %v1852 = vpop.xlane.xlu0 %1851
          %v1853 = vsel %vm1659, %v1790, 0.0
          %1854 = vadd.xlane.f32.xlu0 %v1853
          %v1855 = vpop.xlane.xlu0 %1854
          %v1856 = vsel %vm1666, %v1792, 0.0
          %1857 = vadd.xlane.f32.xlu0 %v1856
          %v1858 = vpop.xlane.xlu0 %1857
          %v1859 = vsel %vm1659, %v1794, 0.0
          %1860 = vadd.xlane.f32.xlu0 %v1859
          %v1861 = vpop.xlane.xlu0 %1860
          %v1862 = vsel %vm1659, %v1796, 0.0
          %1863 = vadd.xlane.f32.xlu0 %v1862
          %v1864 = vpop.xlane.xlu0 %1863
          %v1865 = vsel %vm1666, %v1798, 0.0
          %1866 = vadd.xlane.f32.xlu0 %v1865
          %v1867 = vpop.xlane.xlu0 %1866
          %v1868 = vsel %vm1659, %v1800, 0.0
          %1869 = vadd.xlane.f32.xlu0 %v1868
          %v1870 = vpop.xlane.xlu0 %1869
          %v1871 = vsel %vm1659, %v1802, 0.0
          %1872 = vadd.xlane.f32.xlu0 %v1871
          %v1873 = vpop.xlane.xlu0 %1872
          %v1874 = vsel %vm1666, %v1804, 0.0
          %1875 = vadd.xlane.f32.xlu0 %v1874
          %v1876 = vpop.xlane.xlu0 %1875
          %v1877 = vrcp.pop %v1807
          %v1878 = vrcp.pop %v1810
          %v1879 = vrcp.pop %v1813
          %v1880 = vrcp.pop %v1816
          %v1881 = vrcp.pop %v1819
          %v1882 = vrcp.pop %v1822
          %v1883 = vrcp.pop %v1825
          %v1884 = vrcp.pop %v1828
          %v1885 = vrcp.pop %v1831
          %v1886 = vrcp.pop %v1834
          %v1887 = vrcp.pop %v1837
          %v1888 = vrcp.pop %v1840
          %v1889 = vrcp.pop %v1843
          %v1890 = vrcp.pop %v1846
          %v1891 = vrcp.pop %v1849
          %v1892 = vrcp.pop %v1852
          %v1893 = vrcp.pop %v1855
          %v1894 = vrcp.pop %v1858
          %v1895 = vrcp.pop %v1861
          %v1896 = vrcp.pop %v1864
          %v1897 = vrcp.pop %v1867
          %v1898 = vrcp.pop %v1870
          %v1899 = vrcp.pop %v1873
          %v1900 = vrcp.pop %v1876
          %v1901 = vmul.f32 %v1758, %v1877
          %v1902 = vmul.f32 %v1760, %v1878
          %v1903 = vmul.f32 %v1762, %v1879
          %v1904 = vmul.f32 %v1764, %v1880
          %v1905 = vmul.f32 %v1766, %v1881
          %v1906 = vmul.f32 %v1768, %v1882
          %v1907 = vmul.f32 %v1770, %v1883
          %v1908 = vmul.f32 %v1772, %v1884
          %v1909 = vmul.f32 %v1774, %v1885
          %v1910 = vmul.f32 %v1776, %v1886
          %v1911 = vmul.f32 %v1778, %v1887
          %v1912 = vmul.f32 %v1780, %v1888
          %v1913 = vmul.f32 %v1782, %v1889
          %v1914 = vmul.f32 %v1784, %v1890
          %v1915 = vmul.f32 %v1786, %v1891
          %v1916 = vmul.f32 %v1788, %v1892
          %v1917 = vmul.f32 %v1790, %v1893
          %v1918 = vmul.f32 %v1792, %v1894
          %v1919 = vmul.f32 %v1794, %v1895
          %v1920 = vmul.f32 %v1796, %v1896
          %v1921 = vmul.f32 %v1798, %v1897
          %v1922 = vmul.f32 %v1800, %v1898
          %v1923 = vmul.f32 %v1802, %v1899
          %v1924 = vmul.f32 %v1804, %v1900
          %1925 = vrot.lane.b32.xlu0 %v768, 64
          %v1926 = vpop.permute.xlu0 %1925
          %1927 = vrot.lane.b32.xlu0 %v773, 64
          %v1928 = vpop.permute.xlu0 %1927
          %1929 = vrot.lane.b32.xlu0 %v778, 64
          %v1930 = vpop.permute.xlu0 %1929
          %v1934 = vsel %vm1659, %v1901, 0
          %v1937 = vsel %vm1659, %v1902, 0
          %v1940 = vsel %vm1659, %v1903, 0
          %vm1942 = vcmask 1043456
          %v1943 = vsel %vm1942, %v1930, 0
          %1945 = vmatprep.subr.mxu0 0.0
          %1946 = vmatpush1.msra.mxu0 0.0
          %1947 = vmatprep.subr.mxu0 0.0
          %1948 = vmatpush1.msra.mxu0 0.0
          %1949 = vmatprep.subr.mxu0 0.0
          %1950 = vmatpush1.msra.mxu0 0.0
          %1951 = vmatprep.subr.mxu0 0.0
          %1952 = vmatpush1.msra.mxu0 0.0
          %1953 = vmatprep.subr.mxu0 0.0
          %1954 = vmatpush1.msra.mxu0 0.0
          %1955 = vmatprep.subr.mxu0 0.0
          %1956 = vmatpush1.msra.mxu0 0.0
          %1957 = vmatprep.subr.mxu0 0.0
          %1958 = vmatpush1.msra.mxu0 0.0
          %1959 = vmatprep.subr.mxu0 0.0
          %1960 = vmatpush1.msra.mxu0 0.0
          %1961 = vmatprep.subr.mxu0 0.0
          %1962 = vmatpush1.msra.mxu0 0.0
          %1963 = vmatprep.subr.mxu0 0.0
          %1964 = vmatpush1.msra.mxu0 0.0
          %1965 = vmatprep.subr.mxu0 0.0
          %1966 = vmatpush1.msra.mxu0 0.0
          %1967 = vmatprep.subr.mxu0 0.0
          %1968 = vmatpush1.msra.mxu0 0.0
          %1969 = vmatprep.subr.mxu0 0.0
          %1970 = vmatpush1.msra.mxu0 0.0
          %1971 = vmatprep.subr.mxu0 0.0
          %1972 = vmatpush1.msra.mxu0 %v1943
          %1973 = vmatprep.subr.mxu0 0.0
          %1974 = vmatpush1.msra.mxu0 %v1928
          %1975 = vmatprep.subr.mxu0 0.0
          %1976 = vmatpush1.msra.mxu0 %v1926
          %1977 = vmatprep.subr.mxu0 0.0
          %1978 = vmatpush2.msra.mxu0 0.0
          %1979 = vmatprep.subr.mxu0 0.0
          %1980 = vmatpush2.msra.mxu0 0.0
          %1981 = vmatprep.subr.mxu0 0.0
          %1982 = vmatpush2.msra.mxu0 0.0
          %1983 = vmatprep.subr.mxu0 0.0
          %1984 = vmatpush2.msra.mxu0 0.0
          %1985 = vmatprep.subr.mxu0 0.0
          %1986 = vmatpush2.msra.mxu0 0.0
          %1987 = vmatprep.subr.mxu0 0.0
          %1988 = vmatpush2.msra.mxu0 0.0
          %1989 = vmatprep.subr.mxu0 0.0
          %1990 = vmatpush2.msra.mxu0 0.0
          %1991 = vmatprep.subr.mxu0 0.0
          %1992 = vmatpush2.msra.mxu0 0.0
          %1993 = vmatprep.subr.mxu0 0.0
          %1994 = vmatpush2.msra.mxu0 0.0
          %1995 = vmatprep.subr.mxu0 0.0
          %1996 = vmatpush2.msra.mxu0 0.0
          %1997 = vmatprep.subr.mxu0 0.0
          %1998 = vmatpush2.msra.mxu0 0.0
          %1999 = vmatprep.subr.mxu0 0.0
          %2000 = vmatpush2.msra.mxu0 0.0
          %2001 = vmatprep.subr.mxu0 0.0
          %2002 = vmatpush2.msra.mxu0 0.0
          %2003 = vmatprep.subr.mxu0 0.0
          %2004 = vmatpush2.msra.mxu0 0.0
          %2005 = vmatprep.subr.mxu0 0.0
          %2006 = vmatpush2.msra.mxu0 0.0
          %2007 = vmatprep.subr.mxu0 0.0
          %2008 = vmatpush2.msra.mxu0 0.0
          %2009 = vmatprep.mubr.f32.mxu0 0.0
          %2010 = vmatmul.mubr.f32.gmra.mxu0 %v1934
          %v2011 = vpop.f32.mrf.mxu0
          %v2012 = vadd.f32 0.0, %v2011
          %v2013 = vpop.f32.mrf.mxu0
          %2014 = vmatprep.mubr.f32.mxu0 0.0
          %2015 = vmatmul.mubr.f32.gmra.mxu0 %v1937
          %v2016 = vpop.f32.mrf.mxu0
          %v2017 = vadd.f32 0.0, %v2016
          %v2018 = vpop.f32.mrf.mxu0
          %2019 = vmatprep.mubr.f32.mxu0 0.0
          %2020 = vmatmul.mubr.f32.gmra.mxu0 %v1940
          %v2021 = vpop.f32.mrf.mxu0
          %v2022 = vadd.f32 0.0, %v2021
          %v2023 = vpop.f32.mrf.mxu0
          %2024 = vdwg.mxu0
          %2025 = vrot.lane.b32.xlu0 %v785, 64
          %v2026 = vpop.permute.xlu0 %2025
          %2027 = vrot.lane.b32.xlu0 %v787, 64
          %v2028 = vpop.permute.xlu0 %2027
          %2029 = vrot.lane.b32.xlu0 %v789, 64
          %v2030 = vpop.permute.xlu0 %2029
          %v2034 = vsel %vm1659, %v1904, 0
          %v2037 = vsel %vm1659, %v1905, 0
          %v2040 = vsel %vm1659, %v1906, 0
          %v2042 = vsel %vm1942, %v2030, 0
          %2044 = vmatprep.subr.mxu0 0.0
          %2045 = vmatpush1.msra.mxu0 0.0
          %2046 = vmatprep.subr.mxu0 0.0
          %2047 = vmatpush1.msra.mxu0 0.0
          %2048 = vmatprep.subr.mxu0 0.0
          %2049 = vmatpush1.msra.mxu0 0.0
          %2050 = vmatprep.subr.mxu0 0.0
          %2051 = vmatpush1.msra.mxu0 0.0
          %2052 = vmatprep.subr.mxu0 0.0
          %2053 = vmatpush1.msra.mxu0 0.0
          %2054 = vmatprep.subr.mxu0 0.0
          %2055 = vmatpush1.msra.mxu0 0.0
          %2056 = vmatprep.subr.mxu0 0.0
          %2057 = vmatpush1.msra.mxu0 0.0
          %2058 = vmatprep.subr.mxu0 0.0
          %2059 = vmatpush1.msra.mxu0 0.0
          %2060 = vmatprep.subr.mxu0 0.0
          %2061 = vmatpush1.msra.mxu0 0.0
          %2062 = vmatprep.subr.mxu0 0.0
          %2063 = vmatpush1.msra.mxu0 0.0
          %2064 = vmatprep.subr.mxu0 0.0
          %2065 = vmatpush1.msra.mxu0 0.0
          %2066 = vmatprep.subr.mxu0 0.0
          %2067 = vmatpush1.msra.mxu0 0.0
          %2068 = vmatprep.subr.mxu0 0.0
          %2069 = vmatpush1.msra.mxu0 0.0
          %2070 = vmatprep.subr.mxu0 0.0
          %2071 = vmatpush1.msra.mxu0 %v2042
          %2072 = vmatprep.subr.mxu0 0.0
          %2073 = vmatpush1.msra.mxu0 %v2028
          %2074 = vmatprep.subr.mxu0 0.0
          %2075 = vmatpush1.msra.mxu0 %v2026
          %2076 = vmatprep.subr.mxu0 0.0
          %2077 = vmatpush2.msra.mxu0 0.0
          %2078 = vmatprep.subr.mxu0 0.0
          %2079 = vmatpush2.msra.mxu0 0.0
          %2080 = vmatprep.subr.mxu0 0.0
          %2081 = vmatpush2.msra.mxu0 0.0
          %2082 = vmatprep.subr.mxu0 0.0
          %2083 = vmatpush2.msra.mxu0 0.0
          %2084 = vmatprep.subr.mxu0 0.0
          %2085 = vmatpush2.msra.mxu0 0.0
          %2086 = vmatprep.subr.mxu0 0.0
          %2087 = vmatpush2.msra.mxu0 0.0
          %2088 = vmatprep.subr.mxu0 0.0
          %2089 = vmatpush2.msra.mxu0 0.0
          %2090 = vmatprep.subr.mxu0 0.0
          %2091 = vmatpush2.msra.mxu0 0.0
          %2092 = vmatprep.subr.mxu0 0.0
          %2093 = vmatpush2.msra.mxu0 0.0
          %2094 = vmatprep.subr.mxu0 0.0
          %2095 = vmatpush2.msra.mxu0 0.0
          %2096 = vmatprep.subr.mxu0 0.0
          %2097 = vmatpush2.msra.mxu0 0.0
          %2098 = vmatprep.subr.mxu0 0.0
          %2099 = vmatpush2.msra.mxu0 0.0
          %2100 = vmatprep.subr.mxu0 0.0
          %2101 = vmatpush2.msra.mxu0 0.0
          %2102 = vmatprep.subr.mxu0 0.0
          %2103 = vmatpush2.msra.mxu0 0.0
          %2104 = vmatprep.subr.mxu0 0.0
          %2105 = vmatpush2.msra.mxu0 0.0
          %2106 = vmatprep.subr.mxu0 0.0
          %2107 = vmatpush2.msra.mxu0 0.0
          %2108 = vmatprep.mubr.f32.mxu0 0.0
          %2109 = vmatmul.mubr.f32.gmra.mxu0 %v2034
          %v2110 = vpop.f32.mrf.mxu0
          %v2111 = vadd.f32 0.0, %v2110
          %v2112 = vpop.f32.mrf.mxu0
          %2113 = vmatprep.mubr.f32.mxu0 0.0
          %2114 = vmatmul.mubr.f32.gmra.mxu0 %v2037
          %v2115 = vpop.f32.mrf.mxu0
          %v2116 = vadd.f32 0.0, %v2115
          %v2117 = vpop.f32.mrf.mxu0
          %2118 = vmatprep.mubr.f32.mxu0 0.0
          %2119 = vmatmul.mubr.f32.gmra.mxu0 %v2040
          %v2120 = vpop.f32.mrf.mxu0
          %v2121 = vadd.f32 0.0, %v2120
          %v2122 = vpop.f32.mrf.mxu0
          %2123 = vdwg.mxu0
          %2124 = vrot.lane.b32.xlu0 %v791, 64
          %v2125 = vpop.permute.xlu0 %2124
          %2126 = vrot.lane.b32.xlu0 %v793, 64
          %v2127 = vpop.permute.xlu0 %2126
          %2128 = vrot.lane.b32.xlu0 %v795, 64
          %v2129 = vpop.permute.xlu0 %2128
          %v2133 = vsel %vm1659, %v1907, 0
          %v2136 = vsel %vm1659, %v1908, 0
          %v2139 = vsel %vm1659, %v1909, 0
          %v2141 = vsel %vm1942, %v2129, 0
          %2143 = vmatprep.subr.mxu0 0.0
          %2144 = vmatpush1.msra.mxu0 0.0
          %2145 = vmatprep.subr.mxu0 0.0
          %2146 = vmatpush1.msra.mxu0 0.0
          %2147 = vmatprep.subr.mxu0 0.0
          %2148 = vmatpush1.msra.mxu0 0.0
          %2149 = vmatprep.subr.mxu0 0.0
          %2150 = vmatpush1.msra.mxu0 0.0
          %2151 = vmatprep.subr.mxu0 0.0
          %2152 = vmatpush1.msra.mxu0 0.0
          %2153 = vmatprep.subr.mxu0 0.0
          %2154 = vmatpush1.msra.mxu0 0.0
          %2155 = vmatprep.subr.mxu0 0.0
          %2156 = vmatpush1.msra.mxu0 0.0
          %2157 = vmatprep.subr.mxu0 0.0
          %2158 = vmatpush1.msra.mxu0 0.0
          %2159 = vmatprep.subr.mxu0 0.0
          %2160 = vmatpush1.msra.mxu0 0.0
          %2161 = vmatprep.subr.mxu0 0.0
          %2162 = vmatpush1.msra.mxu0 0.0
          %2163 = vmatprep.subr.mxu0 0.0
          %2164 = vmatpush1.msra.mxu0 0.0
          %2165 = vmatprep.subr.mxu0 0.0
          %2166 = vmatpush1.msra.mxu0 0.0
          %2167 = vmatprep.subr.mxu0 0.0
          %2168 = vmatpush1.msra.mxu0 0.0
          %2169 = vmatprep.subr.mxu0 0.0
          %2170 = vmatpush1.msra.mxu0 %v2141
          %2171 = vmatprep.subr.mxu0 0.0
          %2172 = vmatpush1.msra.mxu0 %v2127
          %2173 = vmatprep.subr.mxu0 0.0
          %2174 = vmatpush1.msra.mxu0 %v2125
          %2175 = vmatprep.subr.mxu0 0.0
          %2176 = vmatpush2.msra.mxu0 0.0
          %2177 = vmatprep.subr.mxu0 0.0
          %2178 = vmatpush2.msra.mxu0 0.0
          %2179 = vmatprep.subr.mxu0 0.0
          %2180 = vmatpush2.msra.mxu0 0.0
          %2181 = vmatprep.subr.mxu0 0.0
          %2182 = vmatpush2.msra.mxu0 0.0
          %2183 = vmatprep.subr.mxu0 0.0
          %2184 = vmatpush2.msra.mxu0 0.0
          %2185 = vmatprep.subr.mxu0 0.0
          %2186 = vmatpush2.msra.mxu0 0.0
          %2187 = vmatprep.subr.mxu0 0.0
          %2188 = vmatpush2.msra.mxu0 0.0
          %2189 = vmatprep.subr.mxu0 0.0
          %2190 = vmatpush2.msra.mxu0 0.0
          %2191 = vmatprep.subr.mxu0 0.0
          %2192 = vmatpush2.msra.mxu0 0.0
          %2193 = vmatprep.subr.mxu0 0.0
          %2194 = vmatpush2.msra.mxu0 0.0
          %2195 = vmatprep.subr.mxu0 0.0
          %2196 = vmatpush2.msra.mxu0 0.0
          %2197 = vmatprep.subr.mxu0 0.0
          %2198 = vmatpush2.msra.mxu0 0.0
          %2199 = vmatprep.subr.mxu0 0.0
          %2200 = vmatpush2.msra.mxu0 0.0
          %2201 = vmatprep.subr.mxu0 0.0
          %2202 = vmatpush2.msra.mxu0 0.0
          %2203 = vmatprep.subr.mxu0 0.0
          %2204 = vmatpush2.msra.mxu0 0.0
          %2205 = vmatprep.subr.mxu0 0.0
          %2206 = vmatpush2.msra.mxu0 0.0
          %2207 = vmatprep.mubr.f32.mxu0 0.0
          %2208 = vmatmul.mubr.f32.gmra.mxu0 %v2133
          %v2209 = vpop.f32.mrf.mxu0
          %v2210 = vadd.f32 0.0, %v2209
          %v2211 = vpop.f32.mrf.mxu0
          %2212 = vmatprep.mubr.f32.mxu0 0.0
          %2213 = vmatmul.mubr.f32.gmra.mxu0 %v2136
          %v2214 = vpop.f32.mrf.mxu0
          %v2215 = vadd.f32 0.0, %v2214
          %v2216 = vpop.f32.mrf.mxu0
          %2217 = vmatprep.mubr.f32.mxu0 0.0
          %2218 = vmatmul.mubr.f32.gmra.mxu0 %v2139
          %v2219 = vpop.f32.mrf.mxu0
          %v2220 = vadd.f32 0.0, %v2219
          %v2221 = vpop.f32.mrf.mxu0
          %2222 = vdwg.mxu0
          %2223 = vrot.lane.b32.xlu0 %v797, 64
          %v2224 = vpop.permute.xlu0 %2223
          %2225 = vrot.lane.b32.xlu0 %v799, 64
          %v2226 = vpop.permute.xlu0 %2225
          %2227 = vrot.lane.b32.xlu0 %v801, 64
          %v2228 = vpop.permute.xlu0 %2227
          %v2232 = vsel %vm1659, %v1910, 0
          %v2235 = vsel %vm1659, %v1911, 0
          %v2238 = vsel %vm1659, %v1912, 0
          %v2240 = vsel %vm1942, %v2228, 0
          %2242 = vmatprep.subr.mxu0 0.0
          %2243 = vmatpush1.msra.mxu0 0.0
          %2244 = vmatprep.subr.mxu0 0.0
          %2245 = vmatpush1.msra.mxu0 0.0
          %2246 = vmatprep.subr.mxu0 0.0
          %2247 = vmatpush1.msra.mxu0 0.0
          %2248 = vmatprep.subr.mxu0 0.0
          %2249 = vmatpush1.msra.mxu0 0.0
          %2250 = vmatprep.subr.mxu0 0.0
          %2251 = vmatpush1.msra.mxu0 0.0
          %2252 = vmatprep.subr.mxu0 0.0
          %2253 = vmatpush1.msra.mxu0 0.0
          %2254 = vmatprep.subr.mxu0 0.0
          %2255 = vmatpush1.msra.mxu0 0.0
          %2256 = vmatprep.subr.mxu0 0.0
          %2257 = vmatpush1.msra.mxu0 0.0
          %2258 = vmatprep.subr.mxu0 0.0
          %2259 = vmatpush1.msra.mxu0 0.0
          %2260 = vmatprep.subr.mxu0 0.0
          %2261 = vmatpush1.msra.mxu0 0.0
          %2262 = vmatprep.subr.mxu0 0.0
          %2263 = vmatpush1.msra.mxu0 0.0
          %2264 = vmatprep.subr.mxu0 0.0
          %2265 = vmatpush1.msra.mxu0 0.0
          %2266 = vmatprep.subr.mxu0 0.0
          %2267 = vmatpush1.msra.mxu0 0.0
          %2268 = vmatprep.subr.mxu0 0.0
          %2269 = vmatpush1.msra.mxu0 %v2240
          %2270 = vmatprep.subr.mxu0 0.0
          %2271 = vmatpush1.msra.mxu0 %v2226
          %2272 = vmatprep.subr.mxu0 0.0
          %2273 = vmatpush1.msra.mxu0 %v2224
          %2274 = vmatprep.subr.mxu0 0.0
          %2275 = vmatpush2.msra.mxu0 0.0
          %2276 = vmatprep.subr.mxu0 0.0
          %2277 = vmatpush2.msra.mxu0 0.0
          %2278 = vmatprep.subr.mxu0 0.0
          %2279 = vmatpush2.msra.mxu0 0.0
          %2280 = vmatprep.subr.mxu0 0.0
          %2281 = vmatpush2.msra.mxu0 0.0
          %2282 = vmatprep.subr.mxu0 0.0
          %2283 = vmatpush2.msra.mxu0 0.0
          %2284 = vmatprep.subr.mxu0 0.0
          %2285 = vmatpush2.msra.mxu0 0.0
          %2286 = vmatprep.subr.mxu0 0.0
          %2287 = vmatpush2.msra.mxu0 0.0
          %2288 = vmatprep.subr.mxu0 0.0
          %2289 = vmatpush2.msra.mxu0 0.0
          %2290 = vmatprep.subr.mxu0 0.0
          %2291 = vmatpush2.msra.mxu0 0.0
          %2292 = vmatprep.subr.mxu0 0.0
          %2293 = vmatpush2.msra.mxu0 0.0
          %2294 = vmatprep.subr.mxu0 0.0
          %2295 = vmatpush2.msra.mxu0 0.0
          %2296 = vmatprep.subr.mxu0 0.0
          %2297 = vmatpush2.msra.mxu0 0.0
          %2298 = vmatprep.subr.mxu0 0.0
          %2299 = vmatpush2.msra.mxu0 0.0
          %2300 = vmatprep.subr.mxu0 0.0
          %2301 = vmatpush2.msra.mxu0 0.0
          %2302 = vmatprep.subr.mxu0 0.0
          %2303 = vmatpush2.msra.mxu0 0.0
          %2304 = vmatprep.subr.mxu0 0.0
          %2305 = vmatpush2.msra.mxu0 0.0
          %2306 = vmatprep.mubr.f32.mxu0 0.0
          %2307 = vmatmul.mubr.f32.gmra.mxu0 %v2232
          %v2308 = vpop.f32.mrf.mxu0
          %v2309 = vadd.f32 0.0, %v2308
          %v2310 = vpop.f32.mrf.mxu0
          %2311 = vmatprep.mubr.f32.mxu0 0.0
          %2312 = vmatmul.mubr.f32.gmra.mxu0 %v2235
          %v2313 = vpop.f32.mrf.mxu0
          %v2314 = vadd.f32 0.0, %v2313
          %v2315 = vpop.f32.mrf.mxu0
          %2316 = vmatprep.mubr.f32.mxu0 0.0
          %2317 = vmatmul.mubr.f32.gmra.mxu0 %v2238
          %v2318 = vpop.f32.mrf.mxu0
          %v2319 = vadd.f32 0.0, %v2318
          %v2320 = vpop.f32.mrf.mxu0
          %2321 = vdwg.mxu0
          %2322 = vrot.lane.b32.xlu0 %v803, 64
          %v2323 = vpop.permute.xlu0 %2322
          %2324 = vrot.lane.b32.xlu0 %v805, 64
          %v2325 = vpop.permute.xlu0 %2324
          %2326 = vrot.lane.b32.xlu0 %v807, 64
          %v2327 = vpop.permute.xlu0 %2326
          %v2331 = vsel %vm1659, %v1913, 0
          %v2334 = vsel %vm1659, %v1914, 0
          %v2337 = vsel %vm1659, %v1915, 0
          %v2339 = vsel %vm1942, %v2327, 0
          %2341 = vmatprep.subr.mxu0 0.0
          %2342 = vmatpush1.msra.mxu0 0.0
          %2343 = vmatprep.subr.mxu0 0.0
          %2344 = vmatpush1.msra.mxu0 0.0
          %2345 = vmatprep.subr.mxu0 0.0
          %2346 = vmatpush1.msra.mxu0 0.0
          %2347 = vmatprep.subr.mxu0 0.0
          %2348 = vmatpush1.msra.mxu0 0.0
          %2349 = vmatprep.subr.mxu0 0.0
          %2350 = vmatpush1.msra.mxu0 0.0
          %2351 = vmatprep.subr.mxu0 0.0
          %2352 = vmatpush1.msra.mxu0 0.0
          %2353 = vmatprep.subr.mxu0 0.0
          %2354 = vmatpush1.msra.mxu0 0.0
          %2355 = vmatprep.subr.mxu0 0.0
          %2356 = vmatpush1.msra.mxu0 0.0
          %2357 = vmatprep.subr.mxu0 0.0
          %2358 = vmatpush1.msra.mxu0 0.0
          %2359 = vmatprep.subr.mxu0 0.0
          %2360 = vmatpush1.msra.mxu0 0.0
          %2361 = vmatprep.subr.mxu0 0.0
          %2362 = vmatpush1.msra.mxu0 0.0
          %2363 = vmatprep.subr.mxu0 0.0
          %2364 = vmatpush1.msra.mxu0 0.0
          %2365 = vmatprep.subr.mxu0 0.0
          %2366 = vmatpush1.msra.mxu0 0.0
          %2367 = vmatprep.subr.mxu0 0.0
          %2368 = vmatpush1.msra.mxu0 %v2339
          %2369 = vmatprep.subr.mxu0 0.0
          %2370 = vmatpush1.msra.mxu0 %v2325
          %2371 = vmatprep.subr.mxu0 0.0
          %2372 = vmatpush1.msra.mxu0 %v2323
          %2373 = vmatprep.subr.mxu0 0.0
          %2374 = vmatpush2.msra.mxu0 0.0
          %2375 = vmatprep.subr.mxu0 0.0
          %2376 = vmatpush2.msra.mxu0 0.0
          %2377 = vmatprep.subr.mxu0 0.0
          %2378 = vmatpush2.msra.mxu0 0.0
          %2379 = vmatprep.subr.mxu0 0.0
          %2380 = vmatpush2.msra.mxu0 0.0
          %2381 = vmatprep.subr.mxu0 0.0
          %2382 = vmatpush2.msra.mxu0 0.0
          %2383 = vmatprep.subr.mxu0 0.0
          %2384 = vmatpush2.msra.mxu0 0.0
          %2385 = vmatprep.subr.mxu0 0.0
          %2386 = vmatpush2.msra.mxu0 0.0
          %2387 = vmatprep.subr.mxu0 0.0
          %2388 = vmatpush2.msra.mxu0 0.0
          %2389 = vmatprep.subr.mxu0 0.0
          %2390 = vmatpush2.msra.mxu0 0.0
          %2391 = vmatprep.subr.mxu0 0.0
          %2392 = vmatpush2.msra.mxu0 0.0
          %2393 = vmatprep.subr.mxu0 0.0
          %2394 = vmatpush2.msra.mxu0 0.0
          %2395 = vmatprep.subr.mxu0 0.0
          %2396 = vmatpush2.msra.mxu0 0.0
          %2397 = vmatprep.subr.mxu0 0.0
          %2398 = vmatpush2.msra.mxu0 0.0
          %2399 = vmatprep.subr.mxu0 0.0
          %2400 = vmatpush2.msra.mxu0 0.0
          %2401 = vmatprep.subr.mxu0 0.0
          %2402 = vmatpush2.msra.mxu0 0.0
          %2403 = vmatprep.subr.mxu0 0.0
          %2404 = vmatpush2.msra.mxu0 0.0
          %2405 = vmatprep.mubr.f32.mxu0 0.0
          %2406 = vmatmul.mubr.f32.gmra.mxu0 %v2331
          %v2407 = vpop.f32.mrf.mxu0
          %v2408 = vadd.f32 0.0, %v2407
          %v2409 = vpop.f32.mrf.mxu0
          %2410 = vmatprep.mubr.f32.mxu0 0.0
          %2411 = vmatmul.mubr.f32.gmra.mxu0 %v2334
          %v2412 = vpop.f32.mrf.mxu0
          %v2413 = vadd.f32 0.0, %v2412
          %v2414 = vpop.f32.mrf.mxu0
          %2415 = vmatprep.mubr.f32.mxu0 0.0
          %2416 = vmatmul.mubr.f32.gmra.mxu0 %v2337
          %v2417 = vpop.f32.mrf.mxu0
          %v2418 = vadd.f32 0.0, %v2417
          %v2419 = vpop.f32.mrf.mxu0
          %2420 = vdwg.mxu0
          %2421 = vrot.lane.b32.xlu0 %v809, 64
          %v2422 = vpop.permute.xlu0 %2421
          %2423 = vrot.lane.b32.xlu0 %v811, 64
          %v2424 = vpop.permute.xlu0 %2423
          %2425 = vrot.lane.b32.xlu0 %v813, 64
          %v2426 = vpop.permute.xlu0 %2425
          %v2430 = vsel %vm1659, %v1916, 0
          %v2433 = vsel %vm1659, %v1917, 0
          %v2436 = vsel %vm1659, %v1918, 0
          %v2438 = vsel %vm1942, %v2426, 0
          %2440 = vmatprep.subr.mxu0 0.0
          %2441 = vmatpush1.msra.mxu0 0.0
          %2442 = vmatprep.subr.mxu0 0.0
          %2443 = vmatpush1.msra.mxu0 0.0
          %2444 = vmatprep.subr.mxu0 0.0
          %2445 = vmatpush1.msra.mxu0 0.0
          %2446 = vmatprep.subr.mxu0 0.0
          %2447 = vmatpush1.msra.mxu0 0.0
          %2448 = vmatprep.subr.mxu0 0.0
          %2449 = vmatpush1.msra.mxu0 0.0
          %2450 = vmatprep.subr.mxu0 0.0
          %2451 = vmatpush1.msra.mxu0 0.0
          %2452 = vmatprep.subr.mxu0 0.0
          %2453 = vmatpush1.msra.mxu0 0.0
          %2454 = vmatprep.subr.mxu0 0.0
          %2455 = vmatpush1.msra.mxu0 0.0
          %2456 = vmatprep.subr.mxu0 0.0
          %2457 = vmatpush1.msra.mxu0 0.0
          %2458 = vmatprep.subr.mxu0 0.0
          %2459 = vmatpush1.msra.mxu0 0.0
          %2460 = vmatprep.subr.mxu0 0.0
          %2461 = vmatpush1.msra.mxu0 0.0
          %2462 = vmatprep.subr.mxu0 0.0
          %2463 = vmatpush1.msra.mxu0 0.0
          %2464 = vmatprep.subr.mxu0 0.0
          %2465 = vmatpush1.msra.mxu0 0.0
          %2466 = vmatprep.subr.mxu0 0.0
          %2467 = vmatpush1.msra.mxu0 %v2438
          %2468 = vmatprep.subr.mxu0 0.0
          %2469 = vmatpush1.msra.mxu0 %v2424
          %2470 = vmatprep.subr.mxu0 0.0
          %2471 = vmatpush1.msra.mxu0 %v2422
          %2472 = vmatprep.subr.mxu0 0.0
          %2473 = vmatpush2.msra.mxu0 0.0
          %2474 = vmatprep.subr.mxu0 0.0
          %2475 = vmatpush2.msra.mxu0 0.0
          %2476 = vmatprep.subr.mxu0 0.0
          %2477 = vmatpush2.msra.mxu0 0.0
          %2478 = vmatprep.subr.mxu0 0.0
          %2479 = vmatpush2.msra.mxu0 0.0
          %2480 = vmatprep.subr.mxu0 0.0
          %2481 = vmatpush2.msra.mxu0 0.0
          %2482 = vmatprep.subr.mxu0 0.0
          %2483 = vmatpush2.msra.mxu0 0.0
          %2484 = vmatprep.subr.mxu0 0.0
          %2485 = vmatpush2.msra.mxu0 0.0
          %2486 = vmatprep.subr.mxu0 0.0
          %2487 = vmatpush2.msra.mxu0 0.0
          %2488 = vmatprep.subr.mxu0 0.0
          %2489 = vmatpush2.msra.mxu0 0.0
          %2490 = vmatprep.subr.mxu0 0.0
          %2491 = vmatpush2.msra.mxu0 0.0
          %2492 = vmatprep.subr.mxu0 0.0
          %2493 = vmatpush2.msra.mxu0 0.0
          %2494 = vmatprep.subr.mxu0 0.0
          %2495 = vmatpush2.msra.mxu0 0.0
          %2496 = vmatprep.subr.mxu0 0.0
          %2497 = vmatpush2.msra.mxu0 0.0
          %2498 = vmatprep.subr.mxu0 0.0
          %2499 = vmatpush2.msra.mxu0 0.0
          %2500 = vmatprep.subr.mxu0 0.0
          %2501 = vmatpush2.msra.mxu0 0.0
          %2502 = vmatprep.subr.mxu0 0.0
          %2503 = vmatpush2.msra.mxu0 0.0
          %2504 = vmatprep.mubr.f32.mxu0 0.0
          %2505 = vmatmul.mubr.f32.gmra.mxu0 %v2430
          %v2506 = vpop.f32.mrf.mxu0
          %v2507 = vadd.f32 0.0, %v2506
          %v2508 = vpop.f32.mrf.mxu0
          %2509 = vmatprep.mubr.f32.mxu0 0.0
          %2510 = vmatmul.mubr.f32.gmra.mxu0 %v2433
          %v2511 = vpop.f32.mrf.mxu0
          %v2512 = vadd.f32 0.0, %v2511
          %v2513 = vpop.f32.mrf.mxu0
          %2514 = vmatprep.mubr.f32.mxu0 0.0
          %2515 = vmatmul.mubr.f32.gmra.mxu0 %v2436
          %v2516 = vpop.f32.mrf.mxu0
          %v2517 = vadd.f32 0.0, %v2516
          %v2518 = vpop.f32.mrf.mxu0
          %2519 = vdwg.mxu0
          %2520 = vrot.lane.b32.xlu0 %v815, 64
          %v2521 = vpop.permute.xlu0 %2520
          %2522 = vrot.lane.b32.xlu0 %v817, 64
          %v2523 = vpop.permute.xlu0 %2522
          %2524 = vrot.lane.b32.xlu0 %v819, 64
          %v2525 = vpop.permute.xlu0 %2524
          %v2529 = vsel %vm1659, %v1919, 0
          %v2532 = vsel %vm1659, %v1920, 0
          %v2535 = vsel %vm1659, %v1921, 0
          %v2537 = vsel %vm1942, %v2525, 0
          %2539 = vmatprep.subr.mxu0 0.0
          %2540 = vmatpush1.msra.mxu0 0.0
          %2541 = vmatprep.subr.mxu0 0.0
          %2542 = vmatpush1.msra.mxu0 0.0
          %2543 = vmatprep.subr.mxu0 0.0
          %2544 = vmatpush1.msra.mxu0 0.0
          %2545 = vmatprep.subr.mxu0 0.0
          %2546 = vmatpush1.msra.mxu0 0.0
          %2547 = vmatprep.subr.mxu0 0.0
          %2548 = vmatpush1.msra.mxu0 0.0
          %2549 = vmatprep.subr.mxu0 0.0
          %2550 = vmatpush1.msra.mxu0 0.0
          %2551 = vmatprep.subr.mxu0 0.0
          %2552 = vmatpush1.msra.mxu0 0.0
          %2553 = vmatprep.subr.mxu0 0.0
          %2554 = vmatpush1.msra.mxu0 0.0
          %2555 = vmatprep.subr.mxu0 0.0
          %2556 = vmatpush1.msra.mxu0 0.0
          %2557 = vmatprep.subr.mxu0 0.0
          %2558 = vmatpush1.msra.mxu0 0.0
          %2559 = vmatprep.subr.mxu0 0.0
          %2560 = vmatpush1.msra.mxu0 0.0
          %2561 = vmatprep.subr.mxu0 0.0
          %2562 = vmatpush1.msra.mxu0 0.0
          %2563 = vmatprep.subr.mxu0 0.0
          %2564 = vmatpush1.msra.mxu0 0.0
          %2565 = vmatprep.subr.mxu0 0.0
          %2566 = vmatpush1.msra.mxu0 %v2537
          %2567 = vmatprep.subr.mxu0 0.0
          %2568 = vmatpush1.msra.mxu0 %v2523
          %2569 = vmatprep.subr.mxu0 0.0
          %2570 = vmatpush1.msra.mxu0 %v2521
          %2571 = vmatprep.subr.mxu0 0.0
          %2572 = vmatpush2.msra.mxu0 0.0
          %2573 = vmatprep.subr.mxu0 0.0
          %2574 = vmatpush2.msra.mxu0 0.0
          %2575 = vmatprep.subr.mxu0 0.0
          %2576 = vmatpush2.msra.mxu0 0.0
          %2577 = vmatprep.subr.mxu0 0.0
          %2578 = vmatpush2.msra.mxu0 0.0
          %2579 = vmatprep.subr.mxu0 0.0
          %2580 = vmatpush2.msra.mxu0 0.0
          %2581 = vmatprep.subr.mxu0 0.0
          %2582 = vmatpush2.msra.mxu0 0.0
          %2583 = vmatprep.subr.mxu0 0.0
          %2584 = vmatpush2.msra.mxu0 0.0
          %2585 = vmatprep.subr.mxu0 0.0
          %2586 = vmatpush2.msra.mxu0 0.0
          %2587 = vmatprep.subr.mxu0 0.0
          %2588 = vmatpush2.msra.mxu0 0.0
          %2589 = vmatprep.subr.mxu0 0.0
          %2590 = vmatpush2.msra.mxu0 0.0
          %2591 = vmatprep.subr.mxu0 0.0
          %2592 = vmatpush2.msra.mxu0 0.0
          %2593 = vmatprep.subr.mxu0 0.0
          %2594 = vmatpush2.msra.mxu0 0.0
          %2595 = vmatprep.subr.mxu0 0.0
          %2596 = vmatpush2.msra.mxu0 0.0
          %2597 = vmatprep.subr.mxu0 0.0
          %2598 = vmatpush2.msra.mxu0 0.0
          %2599 = vmatprep.subr.mxu0 0.0
          %2600 = vmatpush2.msra.mxu0 0.0
          %2601 = vmatprep.subr.mxu0 0.0
          %2602 = vmatpush2.msra.mxu0 0.0
          %2603 = vmatprep.mubr.f32.mxu0 0.0
          %2604 = vmatmul.mubr.f32.gmra.mxu0 %v2529
          %v2605 = vpop.f32.mrf.mxu0
          %v2606 = vadd.f32 0.0, %v2605
          %v2607 = vpop.f32.mrf.mxu0
          %2608 = vmatprep.mubr.f32.mxu0 0.0
          %2609 = vmatmul.mubr.f32.gmra.mxu0 %v2532
          %v2610 = vpop.f32.mrf.mxu0
          %v2611 = vadd.f32 0.0, %v2610
          %v2612 = vpop.f32.mrf.mxu0
          %2613 = vmatprep.mubr.f32.mxu0 0.0
          %2614 = vmatmul.mubr.f32.gmra.mxu0 %v2535
          %v2615 = vpop.f32.mrf.mxu0
          %v2616 = vadd.f32 0.0, %v2615
          %v2617 = vpop.f32.mrf.mxu0
          %2618 = vdwg.mxu0
          %2619 = vrot.lane.b32.xlu0 %v821, 64
          %v2620 = vpop.permute.xlu0 %2619
          %2621 = vrot.lane.b32.xlu0 %v823, 64
          %v2622 = vpop.permute.xlu0 %2621
          %2623 = vrot.lane.b32.xlu0 %v825, 64
          %v2624 = vpop.permute.xlu0 %2623
          %v2628 = vsel %vm1659, %v1922, 0
          %v2631 = vsel %vm1659, %v1923, 0
          %v2634 = vsel %vm1659, %v1924, 0
          %v2636 = vsel %vm1942, %v2624, 0
          %2638 = vmatprep.subr.mxu0 0.0
          %2639 = vmatpush1.msra.mxu0 0.0
          %2640 = vmatprep.subr.mxu0 0.0
          %2641 = vmatpush1.msra.mxu0 0.0
          %2642 = vmatprep.subr.mxu0 0.0
          %2643 = vmatpush1.msra.mxu0 0.0
          %2644 = vmatprep.subr.mxu0 0.0
          %2645 = vmatpush1.msra.mxu0 0.0
          %2646 = vmatprep.subr.mxu0 0.0
          %2647 = vmatpush1.msra.mxu0 0.0
          %2648 = vmatprep.subr.mxu0 0.0
          %2649 = vmatpush1.msra.mxu0 0.0
          %2650 = vmatprep.subr.mxu0 0.0
          %2651 = vmatpush1.msra.mxu0 0.0
          %2652 = vmatprep.subr.mxu0 0.0
          %2653 = vmatpush1.msra.mxu0 0.0
          %2654 = vmatprep.subr.mxu0 0.0
          %2655 = vmatpush1.msra.mxu0 0.0
          %2656 = vmatprep.subr.mxu0 0.0
          %2657 = vmatpush1.msra.mxu0 0.0
          %2658 = vmatprep.subr.mxu0 0.0
          %2659 = vmatpush1.msra.mxu0 0.0
          %2660 = vmatprep.subr.mxu0 0.0
          %2661 = vmatpush1.msra.mxu0 0.0
          %2662 = vmatprep.subr.mxu0 0.0
          %2663 = vmatpush1.msra.mxu0 0.0
          %2664 = vmatprep.subr.mxu0 0.0
          %2665 = vmatpush1.msra.mxu0 %v2636
          %2666 = vmatprep.subr.mxu0 0.0
          %2667 = vmatpush1.msra.mxu0 %v2622
          %2668 = vmatprep.subr.mxu0 0.0
          %2669 = vmatpush1.msra.mxu0 %v2620
          %2670 = vmatprep.subr.mxu0 0.0
          %2671 = vmatpush2.msra.mxu0 0.0
          %2672 = vmatprep.subr.mxu0 0.0
          %2673 = vmatpush2.msra.mxu0 0.0
          %2674 = vmatprep.subr.mxu0 0.0
          %2675 = vmatpush2.msra.mxu0 0.0
          %2676 = vmatprep.subr.mxu0 0.0
          %2677 = vmatpush2.msra.mxu0 0.0
          %2678 = vmatprep.subr.mxu0 0.0
          %2679 = vmatpush2.msra.mxu0 0.0
          %2680 = vmatprep.subr.mxu0 0.0
          %2681 = vmatpush2.msra.mxu0 0.0
          %2682 = vmatprep.subr.mxu0 0.0
          %2683 = vmatpush2.msra.mxu0 0.0
          %2684 = vmatprep.subr.mxu0 0.0
          %2685 = vmatpush2.msra.mxu0 0.0
          %2686 = vmatprep.subr.mxu0 0.0
          %2687 = vmatpush2.msra.mxu0 0.0
          %2688 = vmatprep.subr.mxu0 0.0
          %2689 = vmatpush2.msra.mxu0 0.0
          %2690 = vmatprep.subr.mxu0 0.0
          %2691 = vmatpush2.msra.mxu0 0.0
          %2692 = vmatprep.subr.mxu0 0.0
          %2693 = vmatpush2.msra.mxu0 0.0
          %2694 = vmatprep.subr.mxu0 0.0
          %2695 = vmatpush2.msra.mxu0 0.0
          %2696 = vmatprep.subr.mxu0 0.0
          %2697 = vmatpush2.msra.mxu0 0.0
          %2698 = vmatprep.subr.mxu0 0.0
          %2699 = vmatpush2.msra.mxu0 0.0
          %2700 = vmatprep.subr.mxu0 0.0
          %2701 = vmatpush2.msra.mxu0 0.0
          %2702 = vmatprep.mubr.f32.mxu0 0.0
          %2703 = vmatmul.mubr.f32.gmra.mxu0 %v2628
          %v2704 = vpop.f32.mrf.mxu0
          %v2705 = vadd.f32 0.0, %v2704
          %v2706 = vpop.f32.mrf.mxu0
          %2707 = vmatprep.mubr.f32.mxu0 0.0
          %2708 = vmatmul.mubr.f32.gmra.mxu0 %v2631
          %v2709 = vpop.f32.mrf.mxu0
          %v2710 = vadd.f32 0.0, %v2709
          %v2711 = vpop.f32.mrf.mxu0
          %2712 = vmatprep.mubr.f32.mxu0 0.0
          %2713 = vmatmul.mubr.f32.gmra.mxu0 %v2634
          %v2714 = vpop.f32.mrf.mxu0
          %v2715 = vadd.f32 0.0, %v2714
          %v2716 = vpop.f32.mrf.mxu0
          %2717 = vdwg.mxu0
          %2721 = vrot.lane.b32.xlu0 %v2111, 4
          %v2722 = vpop.permute.xlu0 %2721
          %2723 = vrot.lane.b32.xlu0 %v2116, 4
          %v2724 = vpop.permute.xlu0 %2723
          %2725 = vrot.lane.b32.xlu0 %v2121, 4
          %v2726 = vpop.permute.xlu0 %2725
          %2733 = vrot.lane.b32.xlu0 %v2210, 8
          %v2734 = vpop.permute.xlu0 %2733
          %2735 = vrot.lane.b32.xlu0 %v2215, 8
          %v2736 = vpop.permute.xlu0 %2735
          %2737 = vrot.lane.b32.xlu0 %v2220, 8
          %v2738 = vpop.permute.xlu0 %2737
          %2745 = vrot.lane.b32.xlu0 %v2309, 12
          %v2746 = vpop.permute.xlu0 %2745
          %2747 = vrot.lane.b32.xlu0 %v2314, 12
          %v2748 = vpop.permute.xlu0 %2747
          %2749 = vrot.lane.b32.xlu0 %v2319, 12
          %v2750 = vpop.permute.xlu0 %2749
          %2757 = vrot.lane.b32.xlu0 %v2408, 16
          %v2758 = vpop.permute.xlu0 %2757
          %2759 = vrot.lane.b32.xlu0 %v2413, 16
          %v2760 = vpop.permute.xlu0 %2759
          %2761 = vrot.lane.b32.xlu0 %v2418, 16
          %v2762 = vpop.permute.xlu0 %2761
          %2769 = vrot.lane.b32.xlu0 %v2507, 20
          %v2770 = vpop.permute.xlu0 %2769
          %2771 = vrot.lane.b32.xlu0 %v2512, 20
          %v2772 = vpop.permute.xlu0 %2771
          %2773 = vrot.lane.b32.xlu0 %v2517, 20
          %v2774 = vpop.permute.xlu0 %2773
          %2781 = vrot.lane.b32.xlu0 %v2606, 24
          %v2782 = vpop.permute.xlu0 %2781
          %2783 = vrot.lane.b32.xlu0 %v2611, 24
          %v2784 = vpop.permute.xlu0 %2783
          %2785 = vrot.lane.b32.xlu0 %v2616, 24
          %v2786 = vpop.permute.xlu0 %2785
          %2793 = vrot.lane.b32.xlu0 %v2705, 28
          %v2794 = vpop.permute.xlu0 %2793
          %2795 = vrot.lane.b32.xlu0 %v2710, 28
          %v2796 = vpop.permute.xlu0 %2795
          %2797 = vrot.lane.b32.xlu0 %v2715, 28
          %v2798 = vpop.permute.xlu0 %2797
          %v2802 = vsel %vm832, %v2012, %v2722
          %v2803 = vsel %vm832, %v2017, %v2724
          %v2804 = vsel %vm832, %v2022, %v2726
          %vm2805 = vcmask 64512
          %v2806 = vsel %vm2805, %v2802, %v2734
          %v2807 = vsel %vm2805, %v2803, %v2736
          %v2808 = vsel %vm2805, %v2804, %v2738
          %vm2809 = vcmask 97280
          %v2810 = vsel %vm2809, %v2806, %v2746
          %v2811 = vsel %vm2809, %v2807, %v2748
          %v2812 = vsel %vm2809, %v2808, %v2750
          %vm2813 = vcmask 130048
          %v2814 = vsel %vm2813, %v2810, %v2758
          %v2815 = vsel %vm2813, %v2811, %v2760
          %v2816 = vsel %vm2813, %v2812, %v2762
          %v2817 = vsel %vm1659, %v2814, %v2770
          %v2818 = vsel %vm1659, %v2815, %v2772
          %v2819 = vsel %vm1659, %v2816, %v2774
          %vm2820 = vcmask 195584
          %v2821 = vsel %vm2820, %v2817, %v2782
          %v2822 = vsel %vm2820, %v2818, %v2784
          %v2823 = vsel %vm2820, %v2819, %v2786
          %vm2824 = vcmask 228352
          %v2825 = vsel %vm2824, %v2821, %v2794
          %v2826 = vsel %vm2824, %v2822, %v2796
          %v2827 = vsel %vm2824, %v2823, %v2798
          %v2829 = vlaneseq
          %v2830 = vshrl.u32 %v2829, 7
          %v2831 = vsub.s32 0, %v2830
          %v2832 = vrot.slane %v684, %v2831
          %v2835 = vsel %vm691, %v2825, 0
          %v2838 = vsel %vm691, %v2826, 0
          %v2841 = vsel %vm691, %v2827, 0
          %2843 = vmatprep.subr.mxu0 0.0
          %2844 = vmatpush1.msra.mxu0 0.0
          %2845 = vmatprep.subr.mxu0 0.0
          %2846 = vmatpush1.msra.mxu0 0.0
          %2847 = vmatprep.subr.mxu0 0.0
          %2848 = vmatpush1.msra.mxu0 0.0
          %2849 = vmatprep.subr.mxu0 0.0
          %2850 = vmatpush1.msra.mxu0 0.0
          %2851 = vmatprep.subr.mxu0 0.0
          %2852 = vmatpush1.msra.mxu0 0.0
          %2853 = vmatprep.subr.mxu0 0.0
          %2854 = vmatpush1.msra.mxu0 0.0
          %2855 = vmatprep.subr.mxu0 0.0
          %2856 = vmatpush1.msra.mxu0 0.0
          %2857 = vmatprep.subr.mxu0 0.0
          %2858 = vmatpush1.msra.mxu0 0.0
          %2859 = vmatprep.subr.mxu0 0.0
          %2860 = vmatpush1.msra.mxu0 0.0
          %2861 = vmatprep.subr.mxu0 0.0
          %2862 = vmatpush1.msra.mxu0 0.0
          %2863 = vmatprep.subr.mxu0 0.0
          %2864 = vmatpush1.msra.mxu0 0.0
          %2865 = vmatprep.subr.mxu0 0.0
          %2866 = vmatpush1.msra.mxu0 0.0
          %2867 = vmatprep.subr.mxu0 0.0
          %2868 = vmatpush1.msra.mxu0 %v683
          %2869 = vmatprep.subr.mxu0 0.0
          %2870 = vmatpush1.msra.mxu0 %v682
          %2871 = vmatprep.subr.mxu0 0.0
          %2872 = vmatpush1.msra.mxu0 %v681
          %2873 = vmatprep.subr.mxu0 0.0
          %2874 = vmatpush1.msra.mxu0 %v680
          %2875 = vmatprep.subr.mxu0 0.0
          %2876 = vmatpush2.msra.mxu0 0.0
          %2877 = vmatprep.subr.mxu0 0.0
          %2878 = vmatpush2.msra.mxu0 0.0
          %2879 = vmatprep.subr.mxu0 0.0
          %2880 = vmatpush2.msra.mxu0 0.0
          %2881 = vmatprep.subr.mxu0 0.0
          %2882 = vmatpush2.msra.mxu0 0.0
          %2883 = vmatprep.subr.mxu0 0.0
          %2884 = vmatpush2.msra.mxu0 0.0
          %2885 = vmatprep.subr.mxu0 0.0
          %2886 = vmatpush2.msra.mxu0 0.0
          %2887 = vmatprep.subr.mxu0 0.0
          %2888 = vmatpush2.msra.mxu0 0.0
          %2889 = vmatprep.subr.mxu0 0.0
          %2890 = vmatpush2.msra.mxu0 0.0
          %2891 = vmatprep.subr.mxu0 0.0
          %2892 = vmatpush2.msra.mxu0 0.0
          %2893 = vmatprep.subr.mxu0 0.0
          %2894 = vmatpush2.msra.mxu0 0.0
          %2895 = vmatprep.subr.mxu0 0.0
          %2896 = vmatpush2.msra.mxu0 0.0
          %2897 = vmatprep.subr.mxu0 0.0
          %2898 = vmatpush2.msra.mxu0 0.0
          %2899 = vmatprep.subr.mxu0 0.0
          %2900 = vmatpush2.msra.mxu0 0.0
          %2901 = vmatprep.subr.mxu0 0.0
          %2902 = vmatpush2.msra.mxu0 0.0
          %2903 = vmatprep.subr.mxu0 0.0
          %2904 = vmatpush2.msra.mxu0 0.0
          %2905 = vmatprep.subr.mxu0 0.0
          %2906 = vmatpush2.msra.mxu0 0.0
          %2907 = vmatprep.mubr.f32.mxu0 0.0
          %2908 = vmatmul.mubr.f32.gmra.mxu0 %v2835
          %v2909 = vpop.f32.mrf.mxu0
          %v2910 = vadd.f32 %v2832, %v2909
          %v2911 = vpop.f32.mrf.mxu0
          %2912 = vmatprep.mubr.f32.mxu0 0.0
          %2913 = vmatmul.mubr.f32.gmra.mxu0 %v2838
          %v2914 = vpop.f32.mrf.mxu0
          %v2915 = vadd.f32 %v2832, %v2914
          %v2916 = vpop.f32.mrf.mxu0
          %2917 = vmatprep.mubr.f32.mxu0 0.0
          %2918 = vmatmul.mubr.f32.gmra.mxu0 %v2841
          %v2919 = vpop.f32.mrf.mxu0
          %v2920 = vadd.f32 %v2832, %v2919
          %v2921 = vpop.f32.mrf.mxu0
          %2922 = vdwg.mxu0
          %v2924 = vlaneseq
          %v2925 = vshrl.u32 %v2924, 7
          %v2926 = vsub.s32 0, %v2925
          %v2927 = vrot.slane %v663, %v2926
          %v2930 = vsel %vm691, %v2910, 0
          %v2933 = vsel %vm691, %v2915, 0
          %v2936 = vsel %vm691, %v2920, 0
          %2938 = vmatprep.subr.mxu0 0.0
          %2939 = vmatpush1.msra.mxu0 0.0
          %2940 = vmatprep.subr.mxu0 0.0
          %2941 = vmatpush1.msra.mxu0 0.0
          %2942 = vmatprep.subr.mxu0 0.0
          %2943 = vmatpush1.msra.mxu0 0.0
          %2944 = vmatprep.subr.mxu0 0.0
          %2945 = vmatpush1.msra.mxu0 0.0
          %2946 = vmatprep.subr.mxu0 0.0
          %2947 = vmatpush1.msra.mxu0 0.0
          %2948 = vmatprep.subr.mxu0 0.0
          %2949 = vmatpush1.msra.mxu0 0.0
          %2950 = vmatprep.subr.mxu0 0.0
          %2951 = vmatpush1.msra.mxu0 0.0
          %2952 = vmatprep.subr.mxu0 0.0
          %2953 = vmatpush1.msra.mxu0 0.0
          %2954 = vmatprep.subr.mxu0 0.0
          %2955 = vmatpush1.msra.mxu0 0.0
          %2956 = vmatprep.subr.mxu0 0.0
          %2957 = vmatpush1.msra.mxu0 0.0
          %2958 = vmatprep.subr.mxu0 0.0
          %2959 = vmatpush1.msra.mxu0 0.0
          %2960 = vmatprep.subr.mxu0 0.0
          %2961 = vmatpush1.msra.mxu0 0.0
          %2962 = vmatprep.subr.mxu0 0.0
          %2963 = vmatpush1.msra.mxu0 %v662
          %2964 = vmatprep.subr.mxu0 0.0
          %2965 = vmatpush1.msra.mxu0 %v661
          %2966 = vmatprep.subr.mxu0 0.0
          %2967 = vmatpush1.msra.mxu0 %v660
          %2968 = vmatprep.subr.mxu0 0.0
          %2969 = vmatpush1.msra.mxu0 %v659
          %2970 = vmatprep.subr.mxu0 0.0
          %2971 = vmatpush2.msra.mxu0 0.0
          %2972 = vmatprep.subr.mxu0 0.0
          %2973 = vmatpush2.msra.mxu0 0.0
          %2974 = vmatprep.subr.mxu0 0.0
          %2975 = vmatpush2.msra.mxu0 0.0
          %2976 = vmatprep.subr.mxu0 0.0
          %2977 = vmatpush2.msra.mxu0 0.0
          %2978 = vmatprep.subr.mxu0 0.0
          %2979 = vmatpush2.msra.mxu0 0.0
          %2980 = vmatprep.subr.mxu0 0.0
          %2981 = vmatpush2.msra.mxu0 0.0
          %2982 = vmatprep.subr.mxu0 0.0
          %2983 = vmatpush2.msra.mxu0 0.0
          %2984 = vmatprep.subr.mxu0 0.0
          %2985 = vmatpush2.msra.mxu0 0.0
          %2986 = vmatprep.subr.mxu0 0.0
          %2987 = vmatpush2.msra.mxu0 0.0
          %2988 = vmatprep.subr.mxu0 0.0
          %2989 = vmatpush2.msra.mxu0 0.0
          %2990 = vmatprep.subr.mxu0 0.0
          %2991 = vmatpush2.msra.mxu0 0.0
          %2992 = vmatprep.subr.mxu0 0.0
          %2993 = vmatpush2.msra.mxu0 0.0
          %2994 = vmatprep.subr.mxu0 0.0
          %2995 = vmatpush2.msra.mxu0 0.0
          %2996 = vmatprep.subr.mxu0 0.0
          %2997 = vmatpush2.msra.mxu0 0.0
          %2998 = vmatprep.subr.mxu0 0.0
          %2999 = vmatpush2.msra.mxu0 0.0
          %3000 = vmatprep.subr.mxu0 0.0
          %3001 = vmatpush2.msra.mxu0 0.0
          %3002 = vmatprep.mubr.f32.mxu0 0.0
          %3003 = vmatmul.mubr.f32.gmra.mxu0 %v2930
          %v3004 = vpop.f32.mrf.mxu0
          %v3005 = vadd.f32 %v2927, %v3004
          %v3006 = vpop.f32.mrf.mxu0
          %3007 = vmatprep.mubr.f32.mxu0 0.0
          %3008 = vmatmul.mubr.f32.gmra.mxu0 %v2933
          %v3009 = vpop.f32.mrf.mxu0
          %v3010 = vadd.f32 %v2927, %v3009
          %v3011 = vpop.f32.mrf.mxu0
          %3012 = vmatprep.mubr.f32.mxu0 0.0
          %3013 = vmatmul.mubr.f32.gmra.mxu0 %v2936
          %v3014 = vpop.f32.mrf.mxu0
          %v3015 = vadd.f32 %v2927, %v3014
          %v3016 = vpop.f32.mrf.mxu0
          %3017 = vdwg.mxu0
          %v3018 = vmax.f32 %v3005, 0.0
          %v3019 = vmax.f32 %v3010, 0.0
          %v3020 = vmax.f32 %v3015, 0.0
          %3021 = vst.msk [vmem:[#allocation2] sm:$0xff] %vm691, %v3018
          %3022 = vst.msk [vmem:[#allocation2 + $0x8] sm:$0xff] %vm691, %v3019
          %vm3023 = vcmask 257024
          %3024 = vst.msk [vmem:[#allocation2 + $0x10] sm:$0xf] %vm3023, %v3020
        $region104: #{tpu_custom_call.1} parent=79 // pred_fallthru
          _
        %s3025 = smul.u32 %s38, 4
        %s3026 = scalar_lea.vmem %s650, %s3025
        %v3027 = vld [vmem:[%s3026] sm:$0xf]
        %v3028 = vlaneseq
        %v3029 = vand.u32 %v3028, 127
        %v3030 = vstv %s3025
        %v3031 = vadd.s32 %v3030, %v3029
        %vm3032 = vcmp.lt.s32.totalorder %v3031, 18
        %v3033 = vsel %vm3032, 0.0, -1e+30
        %v3034 = vld [vmem:[%s561] sm:$0xff]
        %v3035 = vld [vmem:[%s561 + $0x8] sm:$0xff]
        %v3036 = vld [vmem:[%s561 + $0x10] sm:$0xff]
        %v3037 = vld [vmem:[%s561 + $0x18] sm:$0xff]
        %v3038 = vld [vmem:[%s569] sm:$0x1]
        %v3039 = vld [vmem:[%s578] sm:$0xff]
        %v3040 = vld [vmem:[%s578 + $0x8] sm:$0xff]
        %v3041 = vld [vmem:[%s578 + $0x10] sm:$0xff]
        %v3042 = vld [vmem:[%s578 + $0x18] sm:$0xff]
        %v3043 = vld [vmem:[%s653] sm:$0x1]
        %v3045 = vlaneseq
        %v3046 = vshrl.u32 %v3045, 7
        %v3047 = vsub.s32 0, %v3046
        %v3048 = vrot.slane %v3038, %v3047
        %vm3050 = vcmask 261120
        %v3052 = vsel %vm3050, %v3027, 0
        %3054 = vmatprep.subr.mxu0 0.0
        %3055 = vmatpush1.msra.mxu0 0.0
        %3056 = vmatprep.subr.mxu0 0.0
        %3057 = vmatpush1.msra.mxu0 0.0
        %3058 = vmatprep.subr.mxu0 0.0
        %3059 = vmatpush1.msra.mxu0 0.0
        %3060 = vmatprep.subr.mxu0 0.0
        %3061 = vmatpush1.msra.mxu0 0.0
        %3062 = vmatprep.subr.mxu0 0.0
        %3063 = vmatpush1.msra.mxu0 0.0
        %3064 = vmatprep.subr.mxu0 0.0
        %3065 = vmatpush1.msra.mxu0 0.0
        %3066 = vmatprep.subr.mxu0 0.0
        %3067 = vmatpush1.msra.mxu0 0.0
        %3068 = vmatprep.subr.mxu0 0.0
        %3069 = vmatpush1.msra.mxu0 0.0
        %3070 = vmatprep.subr.mxu0 0.0
        %3071 = vmatpush1.msra.mxu0 0.0
        %3072 = vmatprep.subr.mxu0 0.0
        %3073 = vmatpush1.msra.mxu0 0.0
        %3074 = vmatprep.subr.mxu0 0.0
        %3075 = vmatpush1.msra.mxu0 0.0
        %3076 = vmatprep.subr.mxu0 0.0
        %3077 = vmatpush1.msra.mxu0 0.0
        %3078 = vmatprep.subr.mxu0 0.0
        %3079 = vmatpush1.msra.mxu0 %v3037
        %3080 = vmatprep.subr.mxu0 0.0
        %3081 = vmatpush1.msra.mxu0 %v3036
        %3082 = vmatprep.subr.mxu0 0.0
        %3083 = vmatpush1.msra.mxu0 %v3035
        %3084 = vmatprep.subr.mxu0 0.0
        %3085 = vmatpush1.msra.mxu0 %v3034
        %3086 = vmatprep.subr.mxu0 0.0
        %3087 = vmatpush2.msra.mxu0 0.0
        %3088 = vmatprep.subr.mxu0 0.0
        %3089 = vmatpush2.msra.mxu0 0.0
        %3090 = vmatprep.subr.mxu0 0.0
        %3091 = vmatpush2.msra.mxu0 0.0
        %3092 = vmatprep.subr.mxu0 0.0
        %3093 = vmatpush2.msra.mxu0 0.0
        %3094 = vmatprep.subr.mxu0 0.0
        %3095 = vmatpush2.msra.mxu0 0.0
        %3096 = vmatprep.subr.mxu0 0.0
        %3097 = vmatpush2.msra.mxu0 0.0
        %3098 = vmatprep.subr.mxu0 0.0
        %3099 = vmatpush2.msra.mxu0 0.0
        %3100 = vmatprep.subr.mxu0 0.0
        %3101 = vmatpush2.msra.mxu0 0.0
        %3102 = vmatprep.subr.mxu0 0.0
        %3103 = vmatpush2.msra.mxu0 0.0
        %3104 = vmatprep.subr.mxu0 0.0
        %3105 = vmatpush2.msra.mxu0 0.0
        %3106 = vmatprep.subr.mxu0 0.0
        %3107 = vmatpush2.msra.mxu0 0.0
        %3108 = vmatprep.subr.mxu0 0.0
        %3109 = vmatpush2.msra.mxu0 0.0
        %3110 = vmatprep.subr.mxu0 0.0
        %3111 = vmatpush2.msra.mxu0 0.0
        %3112 = vmatprep.subr.mxu0 0.0
        %3113 = vmatpush2.msra.mxu0 0.0
        %3114 = vmatprep.subr.mxu0 0.0
        %3115 = vmatpush2.msra.mxu0 0.0
        %3116 = vmatprep.subr.mxu0 0.0
        %3117 = vmatpush2.msra.mxu0 0.0
        %3118 = vmatprep.mubr.f32.mxu0 0.0
        %3119 = vmatmul.mubr.f32.gmra.mxu0 %v3052
        %v3120 = vpop.f32.mrf.mxu0
        %v3121 = vadd.f32 %v3048, %v3120
        %v3122 = vpop.f32.mrf.mxu0
        %3123 = vdwg.mxu0
        %3125 = vrot.lane.b32.xlu0 %v3121, 120
        %v3126 = vpop.permute.xlu0 %3125
        %3127 = vrot.lane.b32.xlu0 %v3121, 112
        %v3128 = vpop.permute.xlu0 %3127
        %3129 = vrot.lane.b32.xlu0 %v3121, 104
        %v3130 = vpop.permute.xlu0 %3129
        %3131 = vrot.lane.b32.xlu0 %v3121, 96
        %v3132 = vpop.permute.xlu0 %3131
        %vm3133 = vcmask 64512
        %v3134 = vsel %vm3133, %v3121, 0
        %v3136 = vsel %vm3133, %v3132, 0
        %3138 = vmatprep.subr.mxu0 0.0
        %3139 = vmatpush1.xpose.msra.mxu0 0.0
        %3140 = vmatprep.subr.mxu0 0.0
        %3141 = vmatpush1.xpose.msra.mxu0 0.0
        %3142 = vmatprep.subr.mxu0 0.0
        %3143 = vmatpush1.xpose.msra.mxu0 0.0
        %3144 = vmatprep.subr.mxu0 0.0
        %3145 = vmatpush1.xpose.msra.mxu0 0.0
        %3146 = vmatprep.subr.mxu0 0.0
        %3147 = vmatpush1.xpose.msra.mxu0 0.0
        %3148 = vmatprep.subr.mxu0 0.0
        %3149 = vmatpush1.xpose.msra.mxu0 0.0
        %3150 = vmatprep.subr.mxu0 0.0
        %3151 = vmatpush1.xpose.msra.mxu0 0.0
        %3152 = vmatprep.subr.mxu0 0.0
        %3153 = vmatpush1.xpose.msra.mxu0 0.0
        %3154 = vmatprep.subr.mxu0 0.0
        %3155 = vmatpush1.xpose.msra.mxu0 0.0
        %3156 = vmatprep.subr.mxu0 0.0
        %3157 = vmatpush1.xpose.msra.mxu0 0.0
        %3158 = vmatprep.subr.mxu0 0.0
        %3159 = vmatpush1.xpose.msra.mxu0 0.0
        %3160 = vmatprep.subr.mxu0 0.0
        %3161 = vmatpush1.xpose.msra.mxu0 0.0
        %3162 = vmatprep.subr.mxu0 0.0
        %3163 = vmatpush1.xpose.msra.mxu0 0.0
        %3164 = vmatprep.subr.mxu0 0.0
        %3165 = vmatpush1.xpose.msra.mxu0 0.0
        %3166 = vmatprep.subr.mxu0 0.0
        %3167 = vmatpush1.xpose.msra.mxu0 0.0
        %3168 = vmatprep.subr.mxu0 0.0
        %3169 = vmatpush1.xpose.msra.mxu0 %v3136
        %3170 = vmatprep.subr.mxu0 0.0
        %3171 = vmatpush2.xpose.msra.mxu0 0.0
        %3172 = vmatprep.subr.mxu0 0.0
        %3173 = vmatpush2.xpose.msra.mxu0 0.0
        %3174 = vmatprep.subr.mxu0 0.0
        %3175 = vmatpush2.xpose.msra.mxu0 0.0
        %3176 = vmatprep.subr.mxu0 0.0
        %3177 = vmatpush2.xpose.msra.mxu0 0.0
        %3178 = vmatprep.subr.mxu0 0.0
        %3179 = vmatpush2.xpose.msra.mxu0 0.0
        %3180 = vmatprep.subr.mxu0 0.0
        %3181 = vmatpush2.xpose.msra.mxu0 0.0
        %3182 = vmatprep.subr.mxu0 0.0
        %3183 = vmatpush2.xpose.msra.mxu0 0.0
        %3184 = vmatprep.subr.mxu0 0.0
        %3185 = vmatpush2.xpose.msra.mxu0 0.0
        %3186 = vmatprep.subr.mxu0 0.0
        %3187 = vmatpush2.xpose.msra.mxu0 0.0
        %3188 = vmatprep.subr.mxu0 0.0
        %3189 = vmatpush2.xpose.msra.mxu0 0.0
        %3190 = vmatprep.subr.mxu0 0.0
        %3191 = vmatpush2.xpose.msra.mxu0 0.0
        %3192 = vmatprep.subr.mxu0 0.0
        %3193 = vmatpush2.xpose.msra.mxu0 0.0
        %3194 = vmatprep.subr.mxu0 0.0
        %3195 = vmatpush2.xpose.msra.mxu0 0.0
        %3196 = vmatprep.subr.mxu0 0.0
        %3197 = vmatpush2.xpose.msra.mxu0 0.0
        %3198 = vmatprep.subr.mxu0 0.0
        %3199 = vmatpush2.xpose.msra.mxu0 0.0
        %3200 = vmatprep.subr.mxu0 0.0
        %3201 = vmatpush2.xpose.msra.mxu0 0.0
        %3202 = vmatprep.mubr.f32.mxu0 0.0
        %3203 = vmatmul.mubr.f32.gmra.mxu0 %v3134
        %v3204 = vpop.f32.mrf.mxu0
        %v3205 = vadd.f32 0.0, %v3204
        %v3206 = vpop.f32.mrf.mxu0
        %3207 = vdwg.mxu0
        %3208 = vrot.lane.b32.xlu0 %v3126, 96
        %v3209 = vpop.permute.xlu0 %3208
        %v3210 = vsel %vm3133, %v3126, 0
        %v3212 = vsel %vm3133, %v3209, 0
        %3214 = vmatprep.subr.mxu0 0.0
        %3215 = vmatpush1.xpose.msra.mxu0 0.0
        %3216 = vmatprep.subr.mxu0 0.0
        %3217 = vmatpush1.xpose.msra.mxu0 0.0
        %3218 = vmatprep.subr.mxu0 0.0
        %3219 = vmatpush1.xpose.msra.mxu0 0.0
        %3220 = vmatprep.subr.mxu0 0.0
        %3221 = vmatpush1.xpose.msra.mxu0 0.0
        %3222 = vmatprep.subr.mxu0 0.0
        %3223 = vmatpush1.xpose.msra.mxu0 0.0
        %3224 = vmatprep.subr.mxu0 0.0
        %3225 = vmatpush1.xpose.msra.mxu0 0.0
        %3226 = vmatprep.subr.mxu0 0.0
        %3227 = vmatpush1.xpose.msra.mxu0 0.0
        %3228 = vmatprep.subr.mxu0 0.0
        %3229 = vmatpush1.xpose.msra.mxu0 0.0
        %3230 = vmatprep.subr.mxu0 0.0
        %3231 = vmatpush1.xpose.msra.mxu0 0.0
        %3232 = vmatprep.subr.mxu0 0.0
        %3233 = vmatpush1.xpose.msra.mxu0 0.0
        %3234 = vmatprep.subr.mxu0 0.0
        %3235 = vmatpush1.xpose.msra.mxu0 0.0
        %3236 = vmatprep.subr.mxu0 0.0
        %3237 = vmatpush1.xpose.msra.mxu0 0.0
        %3238 = vmatprep.subr.mxu0 0.0
        %3239 = vmatpush1.xpose.msra.mxu0 0.0
        %3240 = vmatprep.subr.mxu0 0.0
        %3241 = vmatpush1.xpose.msra.mxu0 0.0
        %3242 = vmatprep.subr.mxu0 0.0
        %3243 = vmatpush1.xpose.msra.mxu0 0.0
        %3244 = vmatprep.subr.mxu0 0.0
        %3245 = vmatpush1.xpose.msra.mxu0 %v3212
        %3246 = vmatprep.subr.mxu0 0.0
        %3247 = vmatpush2.xpose.msra.mxu0 0.0
        %3248 = vmatprep.subr.mxu0 0.0
        %3249 = vmatpush2.xpose.msra.mxu0 0.0
        %3250 = vmatprep.subr.mxu0 0.0
        %3251 = vmatpush2.xpose.msra.mxu0 0.0
        %3252 = vmatprep.subr.mxu0 0.0
        %3253 = vmatpush2.xpose.msra.mxu0 0.0
        %3254 = vmatprep.subr.mxu0 0.0
        %3255 = vmatpush2.xpose.msra.mxu0 0.0
        %3256 = vmatprep.subr.mxu0 0.0
        %3257 = vmatpush2.xpose.msra.mxu0 0.0
        %3258 = vmatprep.subr.mxu0 0.0
        %3259 = vmatpush2.xpose.msra.mxu0 0.0
        %3260 = vmatprep.subr.mxu0 0.0
        %3261 = vmatpush2.xpose.msra.mxu0 0.0
        %3262 = vmatprep.subr.mxu0 0.0
        %3263 = vmatpush2.xpose.msra.mxu0 0.0
        %3264 = vmatprep.subr.mxu0 0.0
        %3265 = vmatpush2.xpose.msra.mxu0 0.0
        %3266 = vmatprep.subr.mxu0 0.0
        %3267 = vmatpush2.xpose.msra.mxu0 0.0
        %3268 = vmatprep.subr.mxu0 0.0
        %3269 = vmatpush2.xpose.msra.mxu0 0.0
        %3270 = vmatprep.subr.mxu0 0.0
        %3271 = vmatpush2.xpose.msra.mxu0 0.0
        %3272 = vmatprep.subr.mxu0 0.0
        %3273 = vmatpush2.xpose.msra.mxu0 0.0
        %3274 = vmatprep.subr.mxu0 0.0
        %3275 = vmatpush2.xpose.msra.mxu0 0.0
        %3276 = vmatprep.subr.mxu0 0.0
        %3277 = vmatpush2.xpose.msra.mxu0 0.0
        %3278 = vmatprep.mubr.f32.mxu0 0.0
        %3279 = vmatmul.mubr.f32.gmra.mxu0 %v3210
        %v3280 = vpop.f32.mrf.mxu0
        %v3281 = vadd.f32 0.0, %v3280
        %v3282 = vpop.f32.mrf.mxu0
        %3283 = vdwg.mxu0
        %3284 = vrot.lane.b32.xlu0 %v3128, 96
        %v3285 = vpop.permute.xlu0 %3284
        %v3286 = vsel %vm3133, %v3128, 0
        %v3288 = vsel %vm3133, %v3285, 0
        %3290 = vmatprep.subr.mxu0 0.0
        %3291 = vmatpush1.xpose.msra.mxu0 0.0
        %3292 = vmatprep.subr.mxu0 0.0
        %3293 = vmatpush1.xpose.msra.mxu0 0.0
        %3294 = vmatprep.subr.mxu0 0.0
        %3295 = vmatpush1.xpose.msra.mxu0 0.0
        %3296 = vmatprep.subr.mxu0 0.0
        %3297 = vmatpush1.xpose.msra.mxu0 0.0
        %3298 = vmatprep.subr.mxu0 0.0
        %3299 = vmatpush1.xpose.msra.mxu0 0.0
        %3300 = vmatprep.subr.mxu0 0.0
        %3301 = vmatpush1.xpose.msra.mxu0 0.0
        %3302 = vmatprep.subr.mxu0 0.0
        %3303 = vmatpush1.xpose.msra.mxu0 0.0
        %3304 = vmatprep.subr.mxu0 0.0
        %3305 = vmatpush1.xpose.msra.mxu0 0.0
        %3306 = vmatprep.subr.mxu0 0.0
        %3307 = vmatpush1.xpose.msra.mxu0 0.0
        %3308 = vmatprep.subr.mxu0 0.0
        %3309 = vmatpush1.xpose.msra.mxu0 0.0
        %3310 = vmatprep.subr.mxu0 0.0
        %3311 = vmatpush1.xpose.msra.mxu0 0.0
        %3312 = vmatprep.subr.mxu0 0.0
        %3313 = vmatpush1.xpose.msra.mxu0 0.0
        %3314 = vmatprep.subr.mxu0 0.0
        %3315 = vmatpush1.xpose.msra.mxu0 0.0
        %3316 = vmatprep.subr.mxu0 0.0
        %3317 = vmatpush1.xpose.msra.mxu0 0.0
        %3318 = vmatprep.subr.mxu0 0.0
        %3319 = vmatpush1.xpose.msra.mxu0 0.0
        %3320 = vmatprep.subr.mxu0 0.0
        %3321 = vmatpush1.xpose.msra.mxu0 %v3288
        %3322 = vmatprep.subr.mxu0 0.0
        %3323 = vmatpush2.xpose.msra.mxu0 0.0
        %3324 = vmatprep.subr.mxu0 0.0
        %3325 = vmatpush2.xpose.msra.mxu0 0.0
        %3326 = vmatprep.subr.mxu0 0.0
        %3327 = vmatpush2.xpose.msra.mxu0 0.0
        %3328 = vmatprep.subr.mxu0 0.0
        %3329 = vmatpush2.xpose.msra.mxu0 0.0
        %3330 = vmatprep.subr.mxu0 0.0
        %3331 = vmatpush2.xpose.msra.mxu0 0.0
        %3332 = vmatprep.subr.mxu0 0.0
        %3333 = vmatpush2.xpose.msra.mxu0 0.0
        %3334 = vmatprep.subr.mxu0 0.0
        %3335 = vmatpush2.xpose.msra.mxu0 0.0
        %3336 = vmatprep.subr.mxu0 0.0
        %3337 = vmatpush2.xpose.msra.mxu0 0.0
        %3338 = vmatprep.subr.mxu0 0.0
        %3339 = vmatpush2.xpose.msra.mxu0 0.0
        %3340 = vmatprep.subr.mxu0 0.0
        %3341 = vmatpush2.xpose.msra.mxu0 0.0
        %3342 = vmatprep.subr.mxu0 0.0
        %3343 = vmatpush2.xpose.msra.mxu0 0.0
        %3344 = vmatprep.subr.mxu0 0.0
        %3345 = vmatpush2.xpose.msra.mxu0 0.0
        %3346 = vmatprep.subr.mxu0 0.0
        %3347 = vmatpush2.xpose.msra.mxu0 0.0
        %3348 = vmatprep.subr.mxu0 0.0
        %3349 = vmatpush2.xpose.msra.mxu0 0.0
        %3350 = vmatprep.subr.mxu0 0.0
        %3351 = vmatpush2.xpose.msra.mxu0 0.0
        %3352 = vmatprep.subr.mxu0 0.0
        %3353 = vmatpush2.xpose.msra.mxu0 0.0
        %3354 = vmatprep.mubr.f32.mxu0 0.0
        %3355 = vmatmul.mubr.f32.gmra.mxu0 %v3286
        %v3356 = vpop.f32.mrf.mxu0
        %v3357 = vadd.f32 0.0, %v3356
        %v3358 = vpop.f32.mrf.mxu0
        %3359 = vdwg.mxu0
        %3360 = vrot.lane.b32.xlu0 %v3130, 96
        %v3361 = vpop.permute.xlu0 %3360
        %v3362 = vsel %vm3133, %v3130, 0
        %v3364 = vsel %vm3133, %v3361, 0
        %3366 = vmatprep.subr.mxu0 0.0
        %3367 = vmatpush1.xpose.msra.mxu0 0.0
        %3368 = vmatprep.subr.mxu0 0.0
        %3369 = vmatpush1.xpose.msra.mxu0 0.0
        %3370 = vmatprep.subr.mxu0 0.0
        %3371 = vmatpush1.xpose.msra.mxu0 0.0
        %3372 = vmatprep.subr.mxu0 0.0
        %3373 = vmatpush1.xpose.msra.mxu0 0.0
        %3374 = vmatprep.subr.mxu0 0.0
        %3375 = vmatpush1.xpose.msra.mxu0 0.0
        %3376 = vmatprep.subr.mxu0 0.0
        %3377 = vmatpush1.xpose.msra.mxu0 0.0
        %3378 = vmatprep.subr.mxu0 0.0
        %3379 = vmatpush1.xpose.msra.mxu0 0.0
        %3380 = vmatprep.subr.mxu0 0.0
        %3381 = vmatpush1.xpose.msra.mxu0 0.0
        %3382 = vmatprep.subr.mxu0 0.0
        %3383 = vmatpush1.xpose.msra.mxu0 0.0
        %3384 = vmatprep.subr.mxu0 0.0
        %3385 = vmatpush1.xpose.msra.mxu0 0.0
        %3386 = vmatprep.subr.mxu0 0.0
        %3387 = vmatpush1.xpose.msra.mxu0 0.0
        %3388 = vmatprep.subr.mxu0 0.0
        %3389 = vmatpush1.xpose.msra.mxu0 0.0
        %3390 = vmatprep.subr.mxu0 0.0
        %3391 = vmatpush1.xpose.msra.mxu0 0.0
        %3392 = vmatprep.subr.mxu0 0.0
        %3393 = vmatpush1.xpose.msra.mxu0 0.0
        %3394 = vmatprep.subr.mxu0 0.0
        %3395 = vmatpush1.xpose.msra.mxu0 0.0
        %3396 = vmatprep.subr.mxu0 0.0
        %3397 = vmatpush1.xpose.msra.mxu0 %v3364
        %3398 = vmatprep.subr.mxu0 0.0
        %3399 = vmatpush2.xpose.msra.mxu0 0.0
        %3400 = vmatprep.subr.mxu0 0.0
        %3401 = vmatpush2.xpose.msra.mxu0 0.0
        %3402 = vmatprep.subr.mxu0 0.0
        %3403 = vmatpush2.xpose.msra.mxu0 0.0
        %3404 = vmatprep.subr.mxu0 0.0
        %3405 = vmatpush2.xpose.msra.mxu0 0.0
        %3406 = vmatprep.subr.mxu0 0.0
        %3407 = vmatpush2.xpose.msra.mxu0 0.0
        %3408 = vmatprep.subr.mxu0 0.0
        %3409 = vmatpush2.xpose.msra.mxu0 0.0
        %3410 = vmatprep.subr.mxu0 0.0
        %3411 = vmatpush2.xpose.msra.mxu0 0.0
        %3412 = vmatprep.subr.mxu0 0.0
        %3413 = vmatpush2.xpose.msra.mxu0 0.0
        %3414 = vmatprep.subr.mxu0 0.0
        %3415 = vmatpush2.xpose.msra.mxu0 0.0
        %3416 = vmatprep.subr.mxu0 0.0
        %3417 = vmatpush2.xpose.msra.mxu0 0.0
        %3418 = vmatprep.subr.mxu0 0.0
        %3419 = vmatpush2.xpose.msra.mxu0 0.0
        %3420 = vmatprep.subr.mxu0 0.0
        %3421 = vmatpush2.xpose.msra.mxu0 0.0
        %3422 = vmatprep.subr.mxu0 0.0
        %3423 = vmatpush2.xpose.msra.mxu0 0.0
        %3424 = vmatprep.subr.mxu0 0.0
        %3425 = vmatpush2.xpose.msra.mxu0 0.0
        %3426 = vmatprep.subr.mxu0 0.0
        %3427 = vmatpush2.xpose.msra.mxu0 0.0
        %3428 = vmatprep.subr.mxu0 0.0
        %3429 = vmatpush2.xpose.msra.mxu0 0.0
        %3430 = vmatprep.mubr.f32.mxu0 0.0
        %3431 = vmatmul.mubr.f32.gmra.mxu0 %v3362
        %v3432 = vpop.f32.mrf.mxu0
        %v3433 = vadd.f32 0.0, %v3432
        %v3434 = vpop.f32.mrf.mxu0
        %3435 = vdwg.mxu0
        %v3436 = vmul.f32 %v3205, 0.35355338
        %v3437 = vmul.f32 %v3281, 0.35355338
        %v3438 = vmul.f32 %v3357, 0.35355338
        %v3439 = vmul.f32 %v3433, 0.35355338
        %v3440 = vadd.f32 %v3436, %v3033
        %v3441 = vadd.f32 %v3437, %v3033
        %v3442 = vadd.f32 %v3438, %v3033
        %v3443 = vadd.f32 %v3439, %v3033
        %vm3444 = vcmask 27648
        %v3445 = vsel %vm3444, %v3440, -inf
        %3446 = vmax.xlane.f32.xlu0 %v3445
        %v3447 = vpop.xlane.xlu0 %3446
        %v3448 = vsel %vm3444, %v3441, -inf
        %3449 = vmax.xlane.f32.xlu0 %v3448
        %v3450 = vpop.xlane.xlu0 %3449
        %v3451 = vsel %vm3444, %v3442, -inf
        %3452 = vmax.xlane.f32.xlu0 %v3451
        %v3453 = vpop.xlane.xlu0 %3452
        %v3454 = vsel %vm3444, %v3443, -inf
        %3455 = vmax.xlane.f32.xlu0 %v3454
        %v3456 = vpop.xlane.xlu0 %3455
        %v3457 = vsub.f32 %v3440, %v3447
        %v3458 = vsub.f32 %v3441, %v3450
        %v3459 = vsub.f32 %v3442, %v3453
        %v3460 = vsub.f32 %v3443, %v3456
        %v3461 = vmul.f32 %v3457, 1.442695
        %v3462 = vpow.pop %v3461
        %v3463 = vmul.f32 %v3458, 1.442695
        %v3464 = vpow.pop %v3463
        %v3465 = vmul.f32 %v3459, 1.442695
        %v3466 = vpow.pop %v3465
        %v3467 = vmul.f32 %v3460, 1.442695
        %v3468 = vpow.pop %v3467
        %v3469 = vsel %vm3444, %v3462, 0.0
        %3470 = vadd.xlane.f32.xlu0 %v3469
        %v3471 = vpop.xlane.xlu0 %3470
        %v3472 = vsel %vm3444, %v3464, 0.0
        %3473 = vadd.xlane.f32.xlu0 %v3472
        %v3474 = vpop.xlane.xlu0 %3473
        %v3475 = vsel %vm3444, %v3466, 0.0
        %3476 = vadd.xlane.f32.xlu0 %v3475
        %v3477 = vpop.xlane.xlu0 %3476
        %v3478 = vsel %vm3444, %v3468, 0.0
        %3479 = vadd.xlane.f32.xlu0 %v3478
        %v3480 = vpop.xlane.xlu0 %3479
        %v3481 = vrcp.pop %v3471
        %v3482 = vrcp.pop %v3474
        %v3483 = vrcp.pop %v3477
        %v3484 = vrcp.pop %v3480
        %v3485 = vmul.f32 %v3462, %v3481
        %v3486 = vmul.f32 %v3464, %v3482
        %v3487 = vmul.f32 %v3466, %v3483
        %v3488 = vmul.f32 %v3468, %v3484
        %3489 = vrot.lane.b32.xlu0 %v3121, 64
        %v3490 = vpop.permute.xlu0 %3489
        %vm3491 = vcmask 31744
        %v3493 = vsel %vm3491, %v3485, 0
        %vm3495 = vcmask 1043456
        %v3496 = vsel %vm3495, %v3490, 0
        %3498 = vmatprep.subr.mxu0 0.0
        %3499 = vmatpush1.msra.mxu0 0.0
        %3500 = vmatprep.subr.mxu0 0.0
        %3501 = vmatpush1.msra.mxu0 0.0
        %3502 = vmatprep.subr.mxu0 0.0
        %3503 = vmatpush1.msra.mxu0 0.0
        %3504 = vmatprep.subr.mxu0 0.0
        %3505 = vmatpush1.msra.mxu0 0.0
        %3506 = vmatprep.subr.mxu0 0.0
        %3507 = vmatpush1.msra.mxu0 0.0
        %3508 = vmatprep.subr.mxu0 0.0
        %3509 = vmatpush1.msra.mxu0 0.0
        %3510 = vmatprep.subr.mxu0 0.0
        %3511 = vmatpush1.msra.mxu0 0.0
        %3512 = vmatprep.subr.mxu0 0.0
        %3513 = vmatpush1.msra.mxu0 0.0
        %3514 = vmatprep.subr.mxu0 0.0
        %3515 = vmatpush1.msra.mxu0 0.0
        %3516 = vmatprep.subr.mxu0 0.0
        %3517 = vmatpush1.msra.mxu0 0.0
        %3518 = vmatprep.subr.mxu0 0.0
        %3519 = vmatpush1.msra.mxu0 0.0
        %3520 = vmatprep.subr.mxu0 0.0
        %3521 = vmatpush1.msra.mxu0 0.0
        %3522 = vmatprep.subr.mxu0 0.0
        %3523 = vmatpush1.msra.mxu0 0.0
        %3524 = vmatprep.subr.mxu0 0.0
        %3525 = vmatpush1.msra.mxu0 0.0
        %3526 = vmatprep.subr.mxu0 0.0
        %3527 = vmatpush1.msra.mxu0 0.0
        %3528 = vmatprep.subr.mxu0 0.0
        %3529 = vmatpush1.msra.mxu0 %v3496
        %3530 = vmatprep.subr.mxu0 0.0
        %3531 = vmatpush2.msra.mxu0 0.0
        %3532 = vmatprep.subr.mxu0 0.0
        %3533 = vmatpush2.msra.mxu0 0.0
        %3534 = vmatprep.subr.mxu0 0.0
        %3535 = vmatpush2.msra.mxu0 0.0
        %3536 = vmatprep.subr.mxu0 0.0
        %3537 = vmatpush2.msra.mxu0 0.0
        %3538 = vmatprep.subr.mxu0 0.0
        %3539 = vmatpush2.msra.mxu0 0.0
        %3540 = vmatprep.subr.mxu0 0.0
        %3541 = vmatpush2.msra.mxu0 0.0
        %3542 = vmatprep.subr.mxu0 0.0
        %3543 = vmatpush2.msra.mxu0 0.0
        %3544 = vmatprep.subr.mxu0 0.0
        %3545 = vmatpush2.msra.mxu0 0.0
        %3546 = vmatprep.subr.mxu0 0.0
        %3547 = vmatpush2.msra.mxu0 0.0
        %3548 = vmatprep.subr.mxu0 0.0
        %3549 = vmatpush2.msra.mxu0 0.0
        %3550 = vmatprep.subr.mxu0 0.0
        %3551 = vmatpush2.msra.mxu0 0.0
        %3552 = vmatprep.subr.mxu0 0.0
        %3553 = vmatpush2.msra.mxu0 0.0
        %3554 = vmatprep.subr.mxu0 0.0
        %3555 = vmatpush2.msra.mxu0 0.0
        %3556 = vmatprep.subr.mxu0 0.0
        %3557 = vmatpush2.msra.mxu0 0.0
        %3558 = vmatprep.subr.mxu0 0.0
        %3559 = vmatpush2.msra.mxu0 0.0
        %3560 = vmatprep.subr.mxu0 0.0
        %3561 = vmatpush2.msra.mxu0 0.0
        %3562 = vmatprep.mubr.f32.mxu0 0.0
        %3563 = vmatmul.mubr.f32.gmra.mxu0 %v3493
        %v3564 = vpop.f32.mrf.mxu0
        %v3565 = vadd.f32 0.0, %v3564
        %v3566 = vpop.f32.mrf.mxu0
        %3567 = vdwg.mxu0
        %3568 = vrot.lane.b32.xlu0 %v3126, 64
        %v3569 = vpop.permute.xlu0 %3568
        %v3571 = vsel %vm3491, %v3486, 0
        %v3573 = vsel %vm3495, %v3569, 0
        %3575 = vmatprep.subr.mxu0 0.0
        %3576 = vmatpush1.msra.mxu0 0.0
        %3577 = vmatprep.subr.mxu0 0.0
        %3578 = vmatpush1.msra.mxu0 0.0
        %3579 = vmatprep.subr.mxu0 0.0
        %3580 = vmatpush1.msra.mxu0 0.0
        %3581 = vmatprep.subr.mxu0 0.0
        %3582 = vmatpush1.msra.mxu0 0.0
        %3583 = vmatprep.subr.mxu0 0.0
        %3584 = vmatpush1.msra.mxu0 0.0
        %3585 = vmatprep.subr.mxu0 0.0
        %3586 = vmatpush1.msra.mxu0 0.0
        %3587 = vmatprep.subr.mxu0 0.0
        %3588 = vmatpush1.msra.mxu0 0.0
        %3589 = vmatprep.subr.mxu0 0.0
        %3590 = vmatpush1.msra.mxu0 0.0
        %3591 = vmatprep.subr.mxu0 0.0
        %3592 = vmatpush1.msra.mxu0 0.0
        %3593 = vmatprep.subr.mxu0 0.0
        %3594 = vmatpush1.msra.mxu0 0.0
        %3595 = vmatprep.subr.mxu0 0.0
        %3596 = vmatpush1.msra.mxu0 0.0
        %3597 = vmatprep.subr.mxu0 0.0
        %3598 = vmatpush1.msra.mxu0 0.0
        %3599 = vmatprep.subr.mxu0 0.0
        %3600 = vmatpush1.msra.mxu0 0.0
        %3601 = vmatprep.subr.mxu0 0.0
        %3602 = vmatpush1.msra.mxu0 0.0
        %3603 = vmatprep.subr.mxu0 0.0
        %3604 = vmatpush1.msra.mxu0 0.0
        %3605 = vmatprep.subr.mxu0 0.0
        %3606 = vmatpush1.msra.mxu0 %v3573
        %3607 = vmatprep.subr.mxu0 0.0
        %3608 = vmatpush2.msra.mxu0 0.0
        %3609 = vmatprep.subr.mxu0 0.0
        %3610 = vmatpush2.msra.mxu0 0.0
        %3611 = vmatprep.subr.mxu0 0.0
        %3612 = vmatpush2.msra.mxu0 0.0
        %3613 = vmatprep.subr.mxu0 0.0
        %3614 = vmatpush2.msra.mxu0 0.0
        %3615 = vmatprep.subr.mxu0 0.0
        %3616 = vmatpush2.msra.mxu0 0.0
        %3617 = vmatprep.subr.mxu0 0.0
        %3618 = vmatpush2.msra.mxu0 0.0
        %3619 = vmatprep.subr.mxu0 0.0
        %3620 = vmatpush2.msra.mxu0 0.0
        %3621 = vmatprep.subr.mxu0 0.0
        %3622 = vmatpush2.msra.mxu0 0.0
        %3623 = vmatprep.subr.mxu0 0.0
        %3624 = vmatpush2.msra.mxu0 0.0
        %3625 = vmatprep.subr.mxu0 0.0
        %3626 = vmatpush2.msra.mxu0 0.0
        %3627 = vmatprep.subr.mxu0 0.0
        %3628 = vmatpush2.msra.mxu0 0.0
        %3629 = vmatprep.subr.mxu0 0.0
        %3630 = vmatpush2.msra.mxu0 0.0
        %3631 = vmatprep.subr.mxu0 0.0
        %3632 = vmatpush2.msra.mxu0 0.0
        %3633 = vmatprep.subr.mxu0 0.0
        %3634 = vmatpush2.msra.mxu0 0.0
        %3635 = vmatprep.subr.mxu0 0.0
        %3636 = vmatpush2.msra.mxu0 0.0
        %3637 = vmatprep.subr.mxu0 0.0
        %3638 = vmatpush2.msra.mxu0 0.0
        %3639 = vmatprep.mubr.f32.mxu0 0.0
        %3640 = vmatmul.mubr.f32.gmra.mxu0 %v3571
        %v3641 = vpop.f32.mrf.mxu0
        %v3642 = vadd.f32 0.0, %v3641
        %v3643 = vpop.f32.mrf.mxu0
        %3644 = vdwg.mxu0
        %3645 = vrot.lane.b32.xlu0 %v3128, 64
        %v3646 = vpop.permute.xlu0 %3645
        %v3648 = vsel %vm3491, %v3487, 0
        %v3650 = vsel %vm3495, %v3646, 0
        %3652 = vmatprep.subr.mxu0 0.0
        %3653 = vmatpush1.msra.mxu0 0.0
        %3654 = vmatprep.subr.mxu0 0.0
        %3655 = vmatpush1.msra.mxu0 0.0
        %3656 = vmatprep.subr.mxu0 0.0
        %3657 = vmatpush1.msra.mxu0 0.0
        %3658 = vmatprep.subr.mxu0 0.0
        %3659 = vmatpush1.msra.mxu0 0.0
        %3660 = vmatprep.subr.mxu0 0.0
        %3661 = vmatpush1.msra.mxu0 0.0
        %3662 = vmatprep.subr.mxu0 0.0
        %3663 = vmatpush1.msra.mxu0 0.0
        %3664 = vmatprep.subr.mxu0 0.0
        %3665 = vmatpush1.msra.mxu0 0.0
        %3666 = vmatprep.subr.mxu0 0.0
        %3667 = vmatpush1.msra.mxu0 0.0
        %3668 = vmatprep.subr.mxu0 0.0
        %3669 = vmatpush1.msra.mxu0 0.0
        %3670 = vmatprep.subr.mxu0 0.0
        %3671 = vmatpush1.msra.mxu0 0.0
        %3672 = vmatprep.subr.mxu0 0.0
        %3673 = vmatpush1.msra.mxu0 0.0
        %3674 = vmatprep.subr.mxu0 0.0
        %3675 = vmatpush1.msra.mxu0 0.0
        %3676 = vmatprep.subr.mxu0 0.0
        %3677 = vmatpush1.msra.mxu0 0.0
        %3678 = vmatprep.subr.mxu0 0.0
        %3679 = vmatpush1.msra.mxu0 0.0
        %3680 = vmatprep.subr.mxu0 0.0
        %3681 = vmatpush1.msra.mxu0 0.0
        %3682 = vmatprep.subr.mxu0 0.0
        %3683 = vmatpush1.msra.mxu0 %v3650
        %3684 = vmatprep.subr.mxu0 0.0
        %3685 = vmatpush2.msra.mxu0 0.0
        %3686 = vmatprep.subr.mxu0 0.0
        %3687 = vmatpush2.msra.mxu0 0.0
        %3688 = vmatprep.subr.mxu0 0.0
        %3689 = vmatpush2.msra.mxu0 0.0
        %3690 = vmatprep.subr.mxu0 0.0
        %3691 = vmatpush2.msra.mxu0 0.0
        %3692 = vmatprep.subr.mxu0 0.0
        %3693 = vmatpush2.msra.mxu0 0.0
        %3694 = vmatprep.subr.mxu0 0.0
        %3695 = vmatpush2.msra.mxu0 0.0
        %3696 = vmatprep.subr.mxu0 0.0
        %3697 = vmatpush2.msra.mxu0 0.0
        %3698 = vmatprep.subr.mxu0 0.0
        %3699 = vmatpush2.msra.mxu0 0.0
        %3700 = vmatprep.subr.mxu0 0.0
        %3701 = vmatpush2.msra.mxu0 0.0
        %3702 = vmatprep.subr.mxu0 0.0
        %3703 = vmatpush2.msra.mxu0 0.0
        %3704 = vmatprep.subr.mxu0 0.0
        %3705 = vmatpush2.msra.mxu0 0.0
        %3706 = vmatprep.subr.mxu0 0.0
        %3707 = vmatpush2.msra.mxu0 0.0
        %3708 = vmatprep.subr.mxu0 0.0
        %3709 = vmatpush2.msra.mxu0 0.0
        %3710 = vmatprep.subr.mxu0 0.0
        %3711 = vmatpush2.msra.mxu0 0.0
        %3712 = vmatprep.subr.mxu0 0.0
        %3713 = vmatpush2.msra.mxu0 0.0
        %3714 = vmatprep.subr.mxu0 0.0
        %3715 = vmatpush2.msra.mxu0 0.0
        %3716 = vmatprep.mubr.f32.mxu0 0.0
        %3717 = vmatmul.mubr.f32.gmra.mxu0 %v3648
        %v3718 = vpop.f32.mrf.mxu0
        %v3719 = vadd.f32 0.0, %v3718
        %v3720 = vpop.f32.mrf.mxu0
        %3721 = vdwg.mxu0
        %3722 = vrot.lane.b32.xlu0 %v3130, 64
        %v3723 = vpop.permute.xlu0 %3722
        %v3725 = vsel %vm3491, %v3488, 0
        %v3727 = vsel %vm3495, %v3723, 0
        %3729 = vmatprep.subr.mxu0 0.0
        %3730 = vmatpush1.msra.mxu0 0.0
        %3731 = vmatprep.subr.mxu0 0.0
        %3732 = vmatpush1.msra.mxu0 0.0
        %3733 = vmatprep.subr.mxu0 0.0
        %3734 = vmatpush1.msra.mxu0 0.0
        %3735 = vmatprep.subr.mxu0 0.0
        %3736 = vmatpush1.msra.mxu0 0.0
        %3737 = vmatprep.subr.mxu0 0.0
        %3738 = vmatpush1.msra.mxu0 0.0
        %3739 = vmatprep.subr.mxu0 0.0
        %3740 = vmatpush1.msra.mxu0 0.0
        %3741 = vmatprep.subr.mxu0 0.0
        %3742 = vmatpush1.msra.mxu0 0.0
        %3743 = vmatprep.subr.mxu0 0.0
        %3744 = vmatpush1.msra.mxu0 0.0
        %3745 = vmatprep.subr.mxu0 0.0
        %3746 = vmatpush1.msra.mxu0 0.0
        %3747 = vmatprep.subr.mxu0 0.0
        %3748 = vmatpush1.msra.mxu0 0.0
        %3749 = vmatprep.subr.mxu0 0.0
        %3750 = vmatpush1.msra.mxu0 0.0
        %3751 = vmatprep.subr.mxu0 0.0
        %3752 = vmatpush1.msra.mxu0 0.0
        %3753 = vmatprep.subr.mxu0 0.0
        %3754 = vmatpush1.msra.mxu0 0.0
        %3755 = vmatprep.subr.mxu0 0.0
        %3756 = vmatpush1.msra.mxu0 0.0
        %3757 = vmatprep.subr.mxu0 0.0
        %3758 = vmatpush1.msra.mxu0 0.0
        %3759 = vmatprep.subr.mxu0 0.0
        %3760 = vmatpush1.msra.mxu0 %v3727
        %3761 = vmatprep.subr.mxu0 0.0
        %3762 = vmatpush2.msra.mxu0 0.0
        %3763 = vmatprep.subr.mxu0 0.0
        %3764 = vmatpush2.msra.mxu0 0.0
        %3765 = vmatprep.subr.mxu0 0.0
        %3766 = vmatpush2.msra.mxu0 0.0
        %3767 = vmatprep.subr.mxu0 0.0
        %3768 = vmatpush2.msra.mxu0 0.0
        %3769 = vmatprep.subr.mxu0 0.0
        %3770 = vmatpush2.msra.mxu0 0.0
        %3771 = vmatprep.subr.mxu0 0.0
        %3772 = vmatpush2.msra.mxu0 0.0
        %3773 = vmatprep.subr.mxu0 0.0
        %3774 = vmatpush2.msra.mxu0 0.0
        %3775 = vmatprep.subr.mxu0 0.0
        %3776 = vmatpush2.msra.mxu0 0.0
        %3777 = vmatprep.subr.mxu0 0.0
        %3778 = vmatpush2.msra.mxu0 0.0
        %3779 = vmatprep.subr.mxu0 0.0
        %3780 = vmatpush2.msra.mxu0 0.0
        %3781 = vmatprep.subr.mxu0 0.0
        %3782 = vmatpush2.msra.mxu0 0.0
        %3783 = vmatprep.subr.mxu0 0.0
        %3784 = vmatpush2.msra.mxu0 0.0
        %3785 = vmatprep.subr.mxu0 0.0
        %3786 = vmatpush2.msra.mxu0 0.0
        %3787 = vmatprep.subr.mxu0 0.0
        %3788 = vmatpush2.msra.mxu0 0.0
        %3789 = vmatprep.subr.mxu0 0.0
        %3790 = vmatpush2.msra.mxu0 0.0
        %3791 = vmatprep.subr.mxu0 0.0
        %3792 = vmatpush2.msra.mxu0 0.0
        %3793 = vmatprep.mubr.f32.mxu0 0.0
        %3794 = vmatmul.mubr.f32.gmra.mxu0 %v3725
        %v3795 = vpop.f32.mrf.mxu0
        %v3796 = vadd.f32 0.0, %v3795
        %v3797 = vpop.f32.mrf.mxu0
        %3798 = vdwg.mxu0
        %3800 = vrot.lane.b32.xlu0 %v3642, 8
        %v3801 = vpop.permute.xlu0 %3800
        %3804 = vrot.lane.b32.xlu0 %v3719, 16
        %v3805 = vpop.permute.xlu0 %3804
        %3808 = vrot.lane.b32.xlu0 %v3796, 24
        %v3809 = vpop.permute.xlu0 %3808
        %v3811 = vsel %vm3133, %v3565, %v3801
        %vm3812 = vcmask 130048
        %v3813 = vsel %vm3812, %v3811, %v3805
        %vm3814 = vcmask 195584
        %v3815 = vsel %vm3814, %v3813, %v3809
        %v3817 = vlaneseq
        %v3818 = vshrl.u32 %v3817, 7
        %v3819 = vsub.s32 0, %v3818
        %v3820 = vrot.slane %v3043, %v3819
        %v3823 = vsel %vm3050, %v3815, 0
        %3825 = vmatprep.subr.mxu0 0.0
        %3826 = vmatpush1.msra.mxu0 0.0
        %3827 = vmatprep.subr.mxu0 0.0
        %3828 = vmatpush1.msra.mxu0 0.0
        %3829 = vmatprep.subr.mxu0 0.0
        %3830 = vmatpush1.msra.mxu0 0.0
        %3831 = vmatprep.subr.mxu0 0.0
        %3832 = vmatpush1.msra.mxu0 0.0
        %3833 = vmatprep.subr.mxu0 0.0
        %3834 = vmatpush1.msra.mxu0 0.0
        %3835 = vmatprep.subr.mxu0 0.0
        %3836 = vmatpush1.msra.mxu0 0.0
        %3837 = vmatprep.subr.mxu0 0.0
        %3838 = vmatpush1.msra.mxu0 0.0
        %3839 = vmatprep.subr.mxu0 0.0
        %3840 = vmatpush1.msra.mxu0 0.0
        %3841 = vmatprep.subr.mxu0 0.0
        %3842 = vmatpush1.msra.mxu0 0.0
        %3843 = vmatprep.subr.mxu0 0.0
        %3844 = vmatpush1.msra.mxu0 0.0
        %3845 = vmatprep.subr.mxu0 0.0
        %3846 = vmatpush1.msra.mxu0 0.0
        %3847 = vmatprep.subr.mxu0 0.0
        %3848 = vmatpush1.msra.mxu0 0.0
        %3849 = vmatprep.subr.mxu0 0.0
        %3850 = vmatpush1.msra.mxu0 %v3042
        %3851 = vmatprep.subr.mxu0 0.0
        %3852 = vmatpush1.msra.mxu0 %v3041
        %3853 = vmatprep.subr.mxu0 0.0
        %3854 = vmatpush1.msra.mxu0 %v3040
        %3855 = vmatprep.subr.mxu0 0.0
        %3856 = vmatpush1.msra.mxu0 %v3039
        %3857 = vmatprep.subr.mxu0 0.0
        %3858 = vmatpush2.msra.mxu0 0.0
        %3859 = vmatprep.subr.mxu0 0.0
        %3860 = vmatpush2.msra.mxu0 0.0
        %3861 = vmatprep.subr.mxu0 0.0
        %3862 = vmatpush2.msra.mxu0 0.0
        %3863 = vmatprep.subr.mxu0 0.0
        %3864 = vmatpush2.msra.mxu0 0.0
        %3865 = vmatprep.subr.mxu0 0.0
        %3866 = vmatpush2.msra.mxu0 0.0
        %3867 = vmatprep.subr.mxu0 0.0
        %3868 = vmatpush2.msra.mxu0 0.0
        %3869 = vmatprep.subr.mxu0 0.0
        %3870 = vmatpush2.msra.mxu0 0.0
        %3871 = vmatprep.subr.mxu0 0.0
        %3872 = vmatpush2.msra.mxu0 0.0
        %3873 = vmatprep.subr.mxu0 0.0
        %3874 = vmatpush2.msra.mxu0 0.0
        %3875 = vmatprep.subr.mxu0 0.0
        %3876 = vmatpush2.msra.mxu0 0.0
        %3877 = vmatprep.subr.mxu0 0.0
        %3878 = vmatpush2.msra.mxu0 0.0
        %3879 = vmatprep.subr.mxu0 0.0
        %3880 = vmatpush2.msra.mxu0 0.0
        %3881 = vmatprep.subr.mxu0 0.0
        %3882 = vmatpush2.msra.mxu0 0.0
        %3883 = vmatprep.subr.mxu0 0.0
        %3884 = vmatpush2.msra.mxu0 0.0
        %3885 = vmatprep.subr.mxu0 0.0
        %3886 = vmatpush2.msra.mxu0 0.0
        %3887 = vmatprep.subr.mxu0 0.0
        %3888 = vmatpush2.msra.mxu0 0.0
        %3889 = vmatprep.mubr.f32.mxu0 0.0
        %3890 = vmatmul.mubr.f32.gmra.mxu0 %v3823
        %v3891 = vpop.f32.mrf.mxu0
        %v3892 = vadd.f32 %v3820, %v3891
        %v3893 = vpop.f32.mrf.mxu0
        %3894 = vdwg.mxu0
        %v3896 = vlaneseq
        %v3897 = vshrl.u32 %v3896, 7
        %v3898 = vsub.s32 0, %v3897
        %v3899 = vrot.slane %v663, %v3898
        %v3902 = vsel %vm3050, %v3892, 0
        %3904 = vmatprep.subr.mxu0 0.0
        %3905 = vmatpush1.msra.mxu0 0.0
        %3906 = vmatprep.subr.mxu0 0.0
        %3907 = vmatpush1.msra.mxu0 0.0
        %3908 = vmatprep.subr.mxu0 0.0
        %3909 = vmatpush1.msra.mxu0 0.0
        %3910 = vmatprep.subr.mxu0 0.0
        %3911 = vmatpush1.msra.mxu0 0.0
        %3912 = vmatprep.subr.mxu0 0.0
        %3913 = vmatpush1.msra.mxu0 0.0
        %3914 = vmatprep.subr.mxu0 0.0
        %3915 = vmatpush1.msra.mxu0 0.0
        %3916 = vmatprep.subr.mxu0 0.0
        %3917 = vmatpush1.msra.mxu0 0.0
        %3918 = vmatprep.subr.mxu0 0.0
        %3919 = vmatpush1.msra.mxu0 0.0
        %3920 = vmatprep.subr.mxu0 0.0
        %3921 = vmatpush1.msra.mxu0 0.0
        %3922 = vmatprep.subr.mxu0 0.0
        %3923 = vmatpush1.msra.mxu0 0.0
        %3924 = vmatprep.subr.mxu0 0.0
        %3925 = vmatpush1.msra.mxu0 0.0
        %3926 = vmatprep.subr.mxu0 0.0
        %3927 = vmatpush1.msra.mxu0 0.0
        %3928 = vmatprep.subr.mxu0 0.0
        %3929 = vmatpush1.msra.mxu0 %v662
        %3930 = vmatprep.subr.mxu0 0.0
        %3931 = vmatpush1.msra.mxu0 %v661
        %3932 = vmatprep.subr.mxu0 0.0
        %3933 = vmatpush1.msra.mxu0 %v660
        %3934 = vmatprep.subr.mxu0 0.0
        %3935 = vmatpush1.msra.mxu0 %v659
        %3936 = vmatprep.subr.mxu0 0.0
        %3937 = vmatpush2.msra.mxu0 0.0
        %3938 = vmatprep.subr.mxu0 0.0
        %3939 = vmatpush2.msra.mxu0 0.0
        %3940 = vmatprep.subr.mxu0 0.0
        %3941 = vmatpush2.msra.mxu0 0.0
        %3942 = vmatprep.subr.mxu0 0.0
        %3943 = vmatpush2.msra.mxu0 0.0
        %3944 = vmatprep.subr.mxu0 0.0
        %3945 = vmatpush2.msra.mxu0 0.0
        %3946 = vmatprep.subr.mxu0 0.0
        %3947 = vmatpush2.msra.mxu0 0.0
        %3948 = vmatprep.subr.mxu0 0.0
        %3949 = vmatpush2.msra.mxu0 0.0
        %3950 = vmatprep.subr.mxu0 0.0
        %3951 = vmatpush2.msra.mxu0 0.0
        %3952 = vmatprep.subr.mxu0 0.0
        %3953 = vmatpush2.msra.mxu0 0.0
        %3954 = vmatprep.subr.mxu0 0.0
        %3955 = vmatpush2.msra.mxu0 0.0
        %3956 = vmatprep.subr.mxu0 0.0
        %3957 = vmatpush2.msra.mxu0 0.0
        %3958 = vmatprep.subr.mxu0 0.0
        %3959 = vmatpush2.msra.mxu0 0.0
        %3960 = vmatprep.subr.mxu0 0.0
        %3961 = vmatpush2.msra.mxu0 0.0
        %3962 = vmatprep.subr.mxu0 0.0
        %3963 = vmatpush2.msra.mxu0 0.0
        %3964 = vmatprep.subr.mxu0 0.0
        %3965 = vmatpush2.msra.mxu0 0.0
        %3966 = vmatprep.subr.mxu0 0.0
        %3967 = vmatpush2.msra.mxu0 0.0
        %3968 = vmatprep.mubr.f32.mxu0 0.0
        %3969 = vmatmul.mubr.f32.gmra.mxu0 %v3902
        %v3970 = vpop.f32.mrf.mxu0
        %v3971 = vadd.f32 %v3899, %v3970
        %v3972 = vpop.f32.mrf.mxu0
        %3973 = vdwg.mxu0
        %v3974 = vmax.f32 %v3971, 0.0
        %s3975 = scalar_lea.vmem [#allocation2], %s3025
        %v3976 = vld [vmem:[%s3975] sm:$0xf]
        %v3977 = vmul.f32 %v3976, %v3976
        %vm3978 = vcmask 257024
        %v3979 = vsel %vm3978, %v3977, 0.0
        %3980 = vadd.xlane.f32.xlu0 %v3979
        %v3981 = vpop.xlane.xlu0 %3980
        %v3982 = vmax.f32 %v3981, 1e-24
        %v3983 = vrsqrt.pop %v3982
        %v3984 = vmul.f32 %v3976, %v3983
        %v3985 = vmul.f32 %v3974, %v3974
        %v3986 = vsel %vm3978, %v3985, 0.0
        %3987 = vadd.xlane.f32.xlu0 %v3986
        %v3988 = vpop.xlane.xlu0 %3987
        %v3989 = vmax.f32 %v3988, 1e-24
        %v3990 = vrsqrt.pop %v3989
        %v3991 = vmul.f32 %v3974, %v3990
        %v3992 = vadd.f32 %v3984, %v3991
        %s3993 = scalar_lea.vmem [#allocation3], %s3025
        %3994 = vst.msk [vmem:[%s3993] sm:$0xf] %vm3978, %v3992
        %p3995 = scmp.eq.s32.totalorder %s38, 4
        // Predicated region
        $region105: #{tpu_custom_call.1} parent=79 // pred_check
          %p3996 = pneg %p3995
        $region106: #{tpu_custom_call.1} parent=79 // pred_check_branch
          %3998 = sbr.rel (%p3996) target = $region108
        $region107: #{tpu_custom_call.1} parent=79 // pred_region
          %v3999 = vld [vmem:[#allocation3] sm:$0xff]
          %v4000 = vld [vmem:[#allocation3 + $0x8] sm:$0xff]
          %v4001 = vld [vmem:[#allocation3 + $0x10] sm:$0x3]
          %v4002 = vsel %vm3050, %v3999, 0.0
          %4003 = vadd.xlane.f32.xlu0 %v4002
          %v4004 = vpop.xlane.xlu0 %4003
          %v4005 = vsel %vm3050, %v4000, 0.0
          %4006 = vadd.xlane.f32.xlu0 %v4005
          %v4007 = vpop.xlane.xlu0 %4006
          %vm4008 = vcmask 254976
          %v4009 = vsel %vm4008, %v4001, 0.0
          %4010 = vadd.xlane.f32.xlu0 %v4009
          %v4011 = vpop.xlane.xlu0 %4010
          %v4012 = vrcp.pop 32.0
          %v4013 = vmul.f32 %v4004, %v4012
          %v4014 = vmul.f32 %v4007, %v4012
          %v4015 = vmul.f32 %v4011, %v4012
          %v4016 = vsub.f32 %v3999, %v4013
          %v4017 = vsub.f32 %v4000, %v4014
          %v4018 = vsub.f32 %v4001, %v4015
          %v4019 = vmul.f32 %v4016, %v4016
          %v4020 = vmul.f32 %v4017, %v4017
          %v4021 = vmul.f32 %v4018, %v4018
          %v4022 = vsel %vm3050, %v4019, 0.0
          %4023 = vadd.xlane.f32.xlu0 %v4022
          %v4024 = vpop.xlane.xlu0 %4023
          %v4025 = vsel %vm3050, %v4020, 0.0
          %4026 = vadd.xlane.f32.xlu0 %v4025
          %v4027 = vpop.xlane.xlu0 %4026
          %v4028 = vsel %vm4008, %v4021, 0.0
          %4029 = vadd.xlane.f32.xlu0 %v4028
          %v4030 = vpop.xlane.xlu0 %4029
          %v4031 = vmul.f32 %v4024, %v4012
          %v4032 = vmul.f32 %v4027, %v4012
          %v4033 = vmul.f32 %v4030, %v4012
          %v4034 = vadd.f32 %v4031, 1e-05
          %v4035 = vadd.f32 %v4032, 1e-05
          %v4036 = vadd.f32 %v4033, 1e-05
          %v4037 = vrsqrt.pop %v4034
          %v4038 = vrsqrt.pop %v4035
          %v4039 = vrsqrt.pop %v4036
          %v4040 = vmul.f32 %v4016, %v4037
          %v4041 = vmul.f32 %v4017, %v4038
          %v4042 = vmul.f32 %v4018, %v4039
          %v4043 = vld [vmem:[%s11] sm:$0x1]
          %v4045 = vlaneseq
          %v4046 = vshrl.u32 %v4045, 7
          %v4047 = vsub.s32 0, %v4046
          %v4048 = vrot.slane %v4043, %v4047
          %v4050 = vmul.f32 %v4040, %v4048
          %v4051 = vmul.f32 %v4041, %v4048
          %v4052 = vmul.f32 %v4042, %v4048
          %v4053 = vld [vmem:[%s12] sm:$0x1]
          %v4055 = vlaneseq
          %v4056 = vshrl.u32 %v4055, 7
          %v4057 = vsub.s32 0, %v4056
          %v4058 = vrot.slane %v4053, %v4057
          %v4060 = vadd.f32 %v4050, %v4058
          %v4061 = vadd.f32 %v4051, %v4058
          %v4062 = vadd.f32 %v4052, %v4058
          %v4063 = vld [vmem:[#allocation11] sm:$0xff]
          %v4064 = vld [vmem:[#allocation11 + $0x8] sm:$0xff]
          %v4065 = vld [vmem:[#allocation11 + $0x10] sm:$0xff]
          %v4066 = vld [vmem:[#allocation11 + $0x18] sm:$0xff]
          %v4067 = vld [vmem:[%s14] sm:$0x1]
          %v4069 = vlaneseq
          %v4070 = vshrl.u32 %v4069, 7
          %v4071 = vsub.s32 0, %v4070
          %v4072 = vrot.slane %v4067, %v4071
          %v4075 = vsel %vm3050, %v4060, 0
          %v4078 = vsel %vm3050, %v4061, 0
          %v4081 = vsel %vm3050, %v4062, 0
          %4083 = vmatprep.subr.mxu0 0.0
          %4084 = vmatpush1.msra.mxu0 0.0
          %4085 = vmatprep.subr.mxu0 0.0
          %4086 = vmatpush1.msra.mxu0 0.0
          %4087 = vmatprep.subr.mxu0 0.0
          %4088 = vmatpush1.msra.mxu0 0.0
          %4089 = vmatprep.subr.mxu0 0.0
          %4090 = vmatpush1.msra.mxu0 0.0
          %4091 = vmatprep.subr.mxu0 0.0
          %4092 = vmatpush1.msra.mxu0 0.0
          %4093 = vmatprep.subr.mxu0 0.0
          %4094 = vmatpush1.msra.mxu0 0.0
          %4095 = vmatprep.subr.mxu0 0.0
          %4096 = vmatpush1.msra.mxu0 0.0
          %4097 = vmatprep.subr.mxu0 0.0
          %4098 = vmatpush1.msra.mxu0 0.0
          %4099 = vmatprep.subr.mxu0 0.0
          %4100 = vmatpush1.msra.mxu0 0.0
          %4101 = vmatprep.subr.mxu0 0.0
          %4102 = vmatpush1.msra.mxu0 0.0
          %4103 = vmatprep.subr.mxu0 0.0
          %4104 = vmatpush1.msra.mxu0 0.0
          %4105 = vmatprep.subr.mxu0 0.0
          %4106 = vmatpush1.msra.mxu0 0.0
          %4107 = vmatprep.subr.mxu0 0.0
          %4108 = vmatpush1.msra.mxu0 %v4066
          %4109 = vmatprep.subr.mxu0 0.0
          %4110 = vmatpush1.msra.mxu0 %v4065
          %4111 = vmatprep.subr.mxu0 0.0
          %4112 = vmatpush1.msra.mxu0 %v4064
          %4113 = vmatprep.subr.mxu0 0.0
          %4114 = vmatpush1.msra.mxu0 %v4063
          %4115 = vmatprep.subr.mxu0 0.0
          %4116 = vmatpush2.msra.mxu0 0.0
          %4117 = vmatprep.subr.mxu0 0.0
          %4118 = vmatpush2.msra.mxu0 0.0
          %4119 = vmatprep.subr.mxu0 0.0
          %4120 = vmatpush2.msra.mxu0 0.0
          %4121 = vmatprep.subr.mxu0 0.0
          %4122 = vmatpush2.msra.mxu0 0.0
          %4123 = vmatprep.subr.mxu0 0.0
          %4124 = vmatpush2.msra.mxu0 0.0
          %4125 = vmatprep.subr.mxu0 0.0
          %4126 = vmatpush2.msra.mxu0 0.0
          %4127 = vmatprep.subr.mxu0 0.0
          %4128 = vmatpush2.msra.mxu0 0.0
          %4129 = vmatprep.subr.mxu0 0.0
          %4130 = vmatpush2.msra.mxu0 0.0
          %4131 = vmatprep.subr.mxu0 0.0
          %4132 = vmatpush2.msra.mxu0 0.0
          %4133 = vmatprep.subr.mxu0 0.0
          %4134 = vmatpush2.msra.mxu0 0.0
          %4135 = vmatprep.subr.mxu0 0.0
          %4136 = vmatpush2.msra.mxu0 0.0
          %4137 = vmatprep.subr.mxu0 0.0
          %4138 = vmatpush2.msra.mxu0 0.0
          %4139 = vmatprep.subr.mxu0 0.0
          %4140 = vmatpush2.msra.mxu0 0.0
          %4141 = vmatprep.subr.mxu0 0.0
          %4142 = vmatpush2.msra.mxu0 0.0
          %4143 = vmatprep.subr.mxu0 0.0
          %4144 = vmatpush2.msra.mxu0 0.0
          %4145 = vmatprep.subr.mxu0 0.0
          %4146 = vmatpush2.msra.mxu0 0.0
          %4147 = vmatprep.mubr.f32.mxu0 0.0
          %4148 = vmatmul.mubr.f32.gmra.mxu0 %v4075
          %v4149 = vpop.f32.mrf.mxu0
          %v4150 = vadd.f32 %v4072, %v4149
          %v4151 = vpop.f32.mrf.mxu0
          %4152 = vmatprep.mubr.f32.mxu0 0.0
          %4153 = vmatmul.mubr.f32.gmra.mxu0 %v4078
          %v4154 = vpop.f32.mrf.mxu0
          %v4155 = vadd.f32 %v4072, %v4154
          %v4156 = vpop.f32.mrf.mxu0
          %4157 = vmatprep.mubr.f32.mxu0 0.0
          %4158 = vmatmul.mubr.f32.gmra.mxu0 %v4081
          %v4159 = vpop.f32.mrf.mxu0
          %v4160 = vadd.f32 %v4072, %v4159
          %v4161 = vpop.f32.mrf.mxu0
          %4162 = vdwg.mxu0
          %v4163 = vmax.f32 %v4150, 0.0
          %v4164 = vmax.f32 %v4155, 0.0
          %v4165 = vmax.f32 %v4160, 0.0
          %4166 = vst.msk [vmem:[%s658] sm:$0xff] %vm3050, %v4163
          %4167 = vst.msk [vmem:[%s658 + $0x8] sm:$0xff] %vm3050, %v4164
          %4168 = vst.msk [vmem:[%s658 + $0x10] sm:$0x3] %vm4008, %v4165
        $region108: #{tpu_custom_call.1} parent=79 // pred_fallthru
          _
        %p4169 = scmp.lt.s32.totalorder %s37, 1
        %s4170 = scalar_select %p4169, %s37, 1
        %s4171 = smul.addr %s4170, 3
        %s4172 = smul.addr %s4171, 8
        %s4173 = scalar_lea.vmem %s15, %s4172
        // Predicated region
        $region109: #{tpu_custom_call.1} parent=79 // pred_check
          %p4174 = pneg %p403
        $region110: #{tpu_custom_call.1} parent=79 // pred_check_branch
          %4176 = sbr.rel (%p4174) target = $region112
        $region111: #{tpu_custom_call.1} parent=79 // pred_region
          _
        $region112: #{tpu_custom_call.1} parent=79 // pred_fallthru
          _
      $region80: #{tpu_custom_call.1} parent=5 // pred_fallthru
        _
      %p4177 = scmp.le.s32.totalorder 2, %s28
      // Predicated region
      $region113: #{tpu_custom_call.1} parent=5 // pred_check
        %p4178 = pneg %p4177
      $region114: #{tpu_custom_call.1} parent=5 // pred_check_branch
        %4180 = sbr.rel (%p4178) target = $region116
      $region115: #{tpu_custom_call.1} parent=5 // pred_region
        %s4181 = ssub.s32 %s28, 2
        // Predicated region
        $region117: #{tpu_custom_call.1} parent=115 // pred_check
          %p4182 = pneg %p409
        $region118: #{tpu_custom_call.1} parent=115 // pred_check_branch
          %4184 = sbr.rel (%p4182) target = $region120
        $region119: #{tpu_custom_call.1} parent=115 // pred_region
          %p4185 = scmp.lt.s32.totalorder %s39, 1
          %s4186 = scalar_select %p4185, %s39, 1
          %s4187 = smul.addr %s4186, 3
          %s4188 = smul.addr %s4187, 8
          %s4189 = scalar_lea.vmem %s15, %s4188
        $region120: #{tpu_custom_call.1} parent=115 // pred_fallthru
          _
      $region116: #{tpu_custom_call.1} parent=5 // pred_fallthru
        _
    $region6: #{tpu_custom_call.1} parent=1 // loop_footer
      %s32 = sadd.s32 1, %s28
    $region7: #{tpu_custom_call.1} parent=1 // loop_footer_branch
      %27 = sbr.rel target = $region3
    $region8: #{tpu_custom_call.1} parent=1 // loop_exit
      _
    %4190 = vsyncpa [#allocation5], 1
    %s4191 = scalar_lea.sflag [#allocation5], 1
    %4192 = vsyncpa %s4191, 1
    %4193 = vsyncpa [#allocation7], 1
    %s4194 = scalar_lea.sflag [#allocation7], 1
    %4195 = vsyncpa %s4194, 1
    %4196 = vsyncpa [#allocation10], 1
    %s4197 = scalar_lea.sflag [#allocation10], 1
    %4198 = vsyncpa %s4197, 1

</llo_original>
